<compile_context>
chip_gen: v5e
topology: v5e:2x2
jax: 0.10.0
libtpu: 0.0.40
codegen_flags: <defaults>
</compile_context>

<pallas_src>
import functools

import numpy as np
import jax
import jax.numpy as jnp
from jax.experimental import pallas as pl
from jax.experimental.pallas import tpu as pltpu


# ---------------------------------------------------------------------------
# Fused whole-network Pallas kernel (one batch tile per grid step)
# ---------------------------------------------------------------------------
def _cnn_kernel(xe_ref, xo_ref, w1t_ref, b1_ref, w2t_ref, b2_ref,
                fc1t_ref, fc1b_ref, fc21w_ref, fc21b_ref, fc24w_ref, fc24b_ref,
                out_ref, p1_s, m2_s, *, tb):
    f32, bf16 = jnp.float32, jnp.bfloat16

    # ---- conv1 + ReLU + maxpool1(H) -----------------------------------------------
    # Row-Toeplitz matmuls over the 5 kernel rows.  Even / odd conv1 output rows are
    # computed as two separate slabs (rows = (b, ph), lanes = ow*32+co) so pool1's
    # H-reduction is a plain elementwise max (no strided / sublane shuffles).
    acc_e = jnp.zeros((tb * 16, 768), f32)           # conv1 row 2*ph   (rows >=12 unused)
    acc_o = jnp.zeros((tb * 16, 768), f32)           # conv1 row 2*ph+1
    for i in range(5):
        se = xe_ref if i % 2 == 0 else xo_ref        # source row 2*ph + i
        lhs = se[:, i // 2:i // 2 + 16, :].reshape(tb * 16, 28)
        acc_e = acc_e + jnp.dot(lhs, w1t_ref[i], preferred_element_type=f32)
        so = xo_ref if i % 2 == 0 else xe_ref        # source row 2*ph + 1 + i
        lhs = so[:, (i + 1) // 2:(i + 1) // 2 + 16, :].reshape(tb * 16, 28)
        acc_o = acc_o + jnp.dot(lhs, w1t_ref[i], preferred_element_type=f32)
    b1 = b1_ref[...]
    m1 = jnp.maximum(jnp.maximum(acc_e + b1, 0.0),   # ReLU + pool1-H
                     jnp.maximum(acc_o + b1, 0.0))
    # pool1-W: pair adjacent 32-lane channel blocks (valid data lands in even blocks;
    # the odd "garbage" blocks hit zero rows of the conv2 Toeplitz weight).
    m1 = jnp.maximum(m1, jnp.concatenate([m1[:, 32:], m1[:, :32]], axis=1))
    p1_s[...] = m1.reshape(tb, 16, 768)              # rows 12..15 never read

    # ---- conv2 + ReLU --------------------------------------------------------------
    # 5 Toeplitz matmuls over the kernel rows; K = 768 (pool1 W-positions x Cin folded
    # into the contraction), N = 512 (ow2*64+co, lane dense), f32 accumulation.
    acc2 = jnp.zeros((tb * 8, 512), f32)
    for i in range(5):
        lhs = p1_s[:, i:i + 8, :].reshape(tb * 8, 768).astype(bf16)
        acc2 = acc2 + jnp.dot(lhs, w2t_ref[i], preferred_element_type=f32)
    h2 = jnp.maximum(acc2 + b2_ref[...], 0.0)        # (tb*8, 512), rows = (b, oh2)
    # pool2-W (uncompacted, absorbed into the fc1 weight layout).
    m2 = jnp.maximum(h2, jnp.concatenate([h2[:, 64:], h2[:, :64]], axis=1))
    m2_s[...] = m2.reshape(tb, 8, 512)

    # ---- maxpool2(H) fused with fc1 + ReLU  (4 matmuls, K = 512) --------------------
    acc3 = jnp.zeros((tb, 256), f32)
    for h in range(4):
        v = jnp.maximum(m2_s[:, 2 * h, :], m2_s[:, 2 * h + 1, :]).astype(bf16)
        acc3 = acc3 + jnp.dot(v, fc1t_ref[h], preferred_element_type=f32)
    hf1 = jnp.maximum(acc3 + fc1b_ref[...], 0.0).astype(bf16)       # (tb, 256)

    # ---- fc21 (200->200, padded 256) + ReLU ----------------------------------------
    hf2 = jnp.dot(hf1, fc21w_ref[...], preferred_element_type=f32)
    hf2 = jnp.maximum(hf2 + fc21b_ref[...], 0.0).astype(bf16)

    # ---- fc24 (200->10, padded 256->128) -------------------------------------------
    logits = jnp.dot(hf2, fc24w_ref[...], preferred_element_type=f32)
    out_ref[0] = logits + fc24b_ref[...]


# ---------------------------------------------------------------------------
# Parameters: torch-layout init + one-time kernel-layout preparation
# ---------------------------------------------------------------------------
def init_params(key):
    ks = jax.random.split(key, 10)
    s = 0.05
    return {
        "conv1_w": jax.random.normal(ks[0], (32, 1, 5, 5), jnp.float32) * s,
        "conv1_b": jax.random.normal(ks[1], (32,), jnp.float32) * s,
        "conv2_w": jax.random.normal(ks[2], (64, 32, 5, 5), jnp.float32) * s,
        "conv2_b": jax.random.normal(ks[3], (64,), jnp.float32) * s,
        "fc1_w": jax.random.normal(ks[4], (200, 1024), jnp.float32) * s,
        "fc1_b": jax.random.normal(ks[5], (200,), jnp.float32) * s,
        "fc21_w": jax.random.normal(ks[6], (200, 200), jnp.float32) * s,
        "fc21_b": jax.random.normal(ks[7], (200,), jnp.float32) * s,
        "fc24_w": jax.random.normal(ks[8], (10, 200), jnp.float32) * s,
        "fc24_b": jax.random.normal(ks[9], (10,), jnp.float32) * s,
    }


def prepare_params(p):
    """One-time host-side repack: Toeplitz expansion of the conv weights, NHWC-aware
    fc1 repack matching torch's NCHW flatten, lane padding to 256/128, bf16 casts."""
    # conv1 row-Toeplitz: w1t[ki, iw, ow*32+co] = conv1_w[co, 0, ki, iw-ow]
    w1 = np.asarray(p["conv1_w"], np.float32)[:, 0]                  # (32,5,5) [co,ki,kj]
    w1t = np.zeros((5, 28, 24, 32), np.float32)
    for ow in range(24):
        for kj in range(5):
            w1t[:, ow + kj, ow, :] = w1[:, :, kj].T                  # (5,32) [ki,co]
    w1t = w1t.reshape(5, 28, 768)
    b1 = np.tile(np.asarray(p["conv1_b"], np.float32), 24).reshape(1, 768)

    # conv2 row-Toeplitz over the un-compacted pool1 lane layout:
    # w2t[ki, ow1*32+ci, ow2*64+co] = conv2_w[co, ci, ki, ow1//2 - ow2]  (ow1 even only)
    w2 = np.asarray(p["conv2_w"], np.float32)                        # (64,32,5,5)
    w2t = np.zeros((5, 24, 32, 8, 64), np.float32)
    for ow2 in range(8):
        for kj in range(5):
            w2t[:, 2 * (ow2 + kj), :, ow2, :] = np.transpose(w2[:, :, :, kj], (2, 1, 0))
    w2t = w2t.reshape(5, 768, 512)
    b2 = np.tile(np.asarray(p["conv2_b"], np.float32), 8).reshape(1, 512)

    # fc1 per-pool2-row weights over the un-compacted conv2 lane layout:
    # fc1t[h, ow2*64+co, n] = fc1_w[n, co*16 + h*4 + ow2//2]  (ow2 even), N padded -> 256
    f1 = np.asarray(p["fc1_w"], np.float32).reshape(200, 64, 4, 4)   # [n, c, h, w]
    fc1t = np.zeros((4, 8, 64, 256), np.float32)
    for pw in range(4):
        fc1t[:, 2 * pw, :, :200] = np.transpose(f1[:, :, :, pw], (2, 1, 0))
    fc1t = fc1t.reshape(4, 512, 256)
    fc1b = np.zeros((1, 256), np.float32)
    fc1b[0, :200] = np.asarray(p["fc1_b"])

    f21 = np.zeros((256, 256), np.float32)
    f21[:200, :200] = np.asarray(p["fc21_w"]).T
    f21b = np.zeros((1, 256), np.float32)
    f21b[0, :200] = np.asarray(p["fc21_b"])
    f24 = np.zeros((256, 128), np.float32)
    f24[:200, :10] = np.asarray(p["fc24_w"]).T
    f24b = np.zeros((1, 128), np.float32)
    f24b[0, :10] = np.asarray(p["fc24_b"])

    bf16 = jnp.bfloat16
    return {
        "w1t": jnp.asarray(w1t), "b1": jnp.asarray(b1),
        "w2t": jnp.asarray(w2t, dtype=bf16), "b2": jnp.asarray(b2),
        "fc1t": jnp.asarray(fc1t, dtype=bf16), "fc1b": jnp.asarray(fc1b),
        "fc21w": jnp.asarray(f21, dtype=bf16), "fc21b": jnp.asarray(f21b),
        "fc24w": jnp.asarray(f24, dtype=bf16), "fc24b": jnp.asarray(f24b),
    }


# ---------------------------------------------------------------------------
# Forward pass (mirrors CNN_Net.forward; dropout = identity / eval mode)
# ---------------------------------------------------------------------------
def _pick_tb(batch):
    """Batch tile: large for MXU M-occupancy, but split so the grid has >=2 parallel
    steps (keeps both v7x TensorCores busy); capped so VMEM stays well under 64 MiB."""
    if batch <= 1:
        return 1
    if batch >= 128:
        return 64
    return (batch + 1) // 2


@jax.jit
def cnn_net_forward(kp, x_nchw):
    B = x_nchw.shape[0]
    tb = _pick_tb(B)
    nb = pl.cdiv(B, tb)
    bpad = nb * tb

    # Split the 28 input rows into even / odd parities on the host (layout plumbing);
    # pad rows to 24 (tile-aligned matmul M) and the batch to a multiple of tb.
    ximg = x_nchw[:, 0]                                   # (B, 28, 28)
    pad = ((0, bpad - B), (0, 10), (0, 0))
    xe = jnp.pad(ximg[:, 0::2, :], pad)                   # (bpad, 24, 28)
    xo = jnp.pad(ximg[:, 1::2, :], pad)                   # (bpad, 24, 28)

    out = pl.pallas_call(
        functools.partial(_cnn_kernel, tb=tb),
        out_shape=jax.ShapeDtypeStruct((nb, tb, 128), jnp.float32),
        grid_spec=pltpu.PrefetchScalarGridSpec(
            num_scalar_prefetch=0,
            grid=(nb,),
            in_specs=[
                pl.BlockSpec((tb, 24, 28), lambda b: (b, 0, 0)),      # x (even rows)
                pl.BlockSpec((tb, 24, 28), lambda b: (b, 0, 0)),      # x (odd rows)
                pl.BlockSpec((5, 28, 768), lambda b: (0, 0, 0)),      # conv1 Toeplitz w
                pl.BlockSpec((1, 768), lambda b: (0, 0)),             # conv1 bias (tiled)
                pl.BlockSpec((5, 768, 512), lambda b: (0, 0, 0)),     # conv2 Toeplitz w
                pl.BlockSpec((1, 512), lambda b: (0, 0)),             # conv2 bias (tiled)
                pl.BlockSpec((4, 512, 256), lambda b: (0, 0, 0)),     # fc1 (per pool row)
                pl.BlockSpec((1, 256), lambda b: (0, 0)),             # fc1 bias
                pl.BlockSpec((256, 256), lambda b: (0, 0)),           # fc21 w
                pl.BlockSpec((1, 256), lambda b: (0, 0)),             # fc21 bias
                pl.BlockSpec((256, 128), lambda b: (0, 0)),           # fc24 w
                pl.BlockSpec((1, 128), lambda b: (0, 0)),             # fc24 bias
            ],
            out_specs=pl.BlockSpec((1, tb, 128), lambda b: (b, 0, 0)),
            scratch_shapes=[
                pltpu.VMEM((tb, 16, 768), jnp.float32),   # pool1 out (W un-compacted)
                pltpu.VMEM((tb, 8, 512), jnp.float32),    # conv2 out (W un-compacted)
            ],
        ),
        compiler_params=pltpu.CompilerParams(
            dimension_semantics=("parallel",),
            vmem_limit_bytes=40 * 1024 * 1024,
        ),
    )(xe, xo, kp["w1t"], kp["b1"], kp["w2t"], kp["b2"],
      kp["fc1t"], kp["fc1b"], kp["fc21w"], kp["fc21b"], kp["fc24w"], kp["fc24b"])

    return out.reshape(bpad, 128)[:B, :10]                # drop batch / lane padding


# ---------------------------------------------------------------------------
# Pure-JAX reference (torch-layout params) for a correctness sanity check
# ---------------------------------------------------------------------------
def cnn_net_reference(p, x_nchw):
    dn = ("NCHW", "OIHW", "NCHW")
    x = jax.lax.conv_general_dilated(x_nchw, p["conv1_w"], (1, 1), "VALID",
                                     dimension_numbers=dn)
    x = jnp.maximum(x + p["conv1_b"].reshape(1, 32, 1, 1), 0.0)
    x = jax.lax.reduce_window(x, -jnp.inf, jax.lax.max,
                              (1, 1, 2, 2), (1, 1, 2, 2), "VALID")
    x = jax.lax.conv_general_dilated(x, p["conv2_w"], (1, 1), "VALID",
                                     dimension_numbers=dn)
    x = jnp.maximum(x + p["conv2_b"].reshape(1, 64, 1, 1), 0.0)
    x = jax.lax.reduce_window(x, -jnp.inf, jax.lax.max,
                              (1, 1, 2, 2), (1, 1, 2, 2), "VALID")
    x = x.reshape(x.shape[0], -1)                         # NCHW flatten (torch order)
    x = jnp.maximum(x @ p["fc1_w"].T + p["fc1_b"], 0.0)
    x = jnp.maximum(x @ p["fc21_w"].T + p["fc21_b"], 0.0)
    return x @ p["fc24_w"].T + p["fc24_b"]


# ---------------------------------------------------------------------------
if __name__ == "__main__":
    key = jax.random.PRNGKey(0)
    pkey, xkey = jax.random.split(key)
    params = init_params(pkey)
    kparams = prepare_params(params)

    # MNIST-like input implied by the module (fc1 expects 64*4*4 = 1024 features).
    x = jax.random.normal(xkey, (2, 1, 28, 28), jnp.float32)

    out = jax.block_until_ready(cnn_net_forward(kparams, x))
    assert out.shape == (2, 10), out.shape
    assert bool(jnp.all(jnp.isfinite(out)))

    ref = cnn_net_reference(params, x)
    err = float(jnp.max(jnp.abs(out - ref)))
    assert err < 0.05, f"max abs error vs reference: {err}"

    print("KERNEL_OK")
</pallas_src>

<mosaic_0001>
module attributes {stable_mosaic.version = 11 : i64} {
  func.func @_cnn_kernel(%arg0: i32, %arg1: memref<1x24x28xf32, #tpu.memory_space<vmem>>, %arg2: memref<1x24x28xf32, #tpu.memory_space<vmem>>, %arg3: memref<5x28x768xf32, #tpu.memory_space<vmem>>, %arg4: memref<1x768xf32, #tpu.memory_space<vmem>>, %arg5: memref<5x768x512xbf16, #tpu.memory_space<vmem>>, %arg6: memref<1x512xf32, #tpu.memory_space<vmem>>, %arg7: memref<4x512x256xbf16, #tpu.memory_space<vmem>>, %arg8: memref<1x256xf32, #tpu.memory_space<vmem>>, %arg9: memref<256x256xbf16, #tpu.memory_space<vmem>>, %arg10: memref<1x256xf32, #tpu.memory_space<vmem>>, %arg11: memref<256x128xbf16, #tpu.memory_space<vmem>>, %arg12: memref<1x128xf32, #tpu.memory_space<vmem>>, %arg13: memref<1x1x128xf32, #tpu.memory_space<vmem>>, %arg14: memref<1x16x768xf32, #tpu.memory_space<vmem>>, %arg15: memref<1x8x512xf32, #tpu.memory_space<vmem>>) attributes {dimension_semantics = [#tpu.dimension_semantics<parallel>], iteration_bounds = array<i64: 2>, scalar_prefetch = 0 : i64, scratch_operands = 2 : i64, tpu.core_type = #tpu.core_type<tc>, window_params = [{transform_indices = @transform_0, window_bounds = array<i64: 1, 24, 28>}, {transform_indices = @transform_1, window_bounds = array<i64: 1, 24, 28>}, {pipeline_mode = #tpu.pipeline_mode<synchronous>, transform_indices = @transform_2, window_bounds = array<i64: 5, 28, 768>}, {pipeline_mode = #tpu.pipeline_mode<synchronous>, transform_indices = @transform_3, window_bounds = array<i64: 1, 768>}, {pipeline_mode = #tpu.pipeline_mode<synchronous>, transform_indices = @transform_4, window_bounds = array<i64: 5, 768, 512>}, {pipeline_mode = #tpu.pipeline_mode<synchronous>, transform_indices = @transform_5, window_bounds = array<i64: 1, 512>}, {pipeline_mode = #tpu.pipeline_mode<synchronous>, transform_indices = @transform_6, window_bounds = array<i64: 4, 512, 256>}, {pipeline_mode = #tpu.pipeline_mode<synchronous>, transform_indices = @transform_7, window_bounds = array<i64: 1, 256>}, {pipeline_mode = #tpu.pipeline_mode<synchronous>, transform_indices = @transform_8, window_bounds = array<i64: 256, 256>}, {pipeline_mode = #tpu.pipeline_mode<synchronous>, transform_indices = @transform_9, window_bounds = array<i64: 1, 256>}, {pipeline_mode = #tpu.pipeline_mode<synchronous>, transform_indices = @transform_10, window_bounds = array<i64: 256, 128>}, {pipeline_mode = #tpu.pipeline_mode<synchronous>, transform_indices = @transform_11, window_bounds = array<i64: 1, 128>}, {transform_indices = @transform_12, window_bounds = array<i64: 1, 1, 128>}]} {
    %cst = arith.constant 0.000000e+00 : f32
    %0 = vector.broadcast %cst : f32 to vector<16x768xf32>
    %cst_0 = arith.constant 0.000000e+00 : f32
    %1 = vector.broadcast %cst_0 : f32 to vector<16x768xf32>
    %c0 = arith.constant 0 : index
    %c0_1 = arith.constant 0 : index
    %c0_2 = arith.constant 0 : index
    %2 = vector.load %arg1[%c0, %c0_1, %c0_2] : memref<1x24x28xf32, #tpu.memory_space<vmem>>, vector<1x16x28xf32>
    %3 = vector.shape_cast %2 : vector<1x16x28xf32> to vector<16x28xf32>
    %c0_3 = arith.constant 0 : index
    %c0_4 = arith.constant 0 : index
    %c0_5 = arith.constant 0 : index
    %4 = vector.load %arg3[%c0_3, %c0_4, %c0_5] : memref<5x28x768xf32, #tpu.memory_space<vmem>>, vector<1x28x768xf32>
    %5 = vector.shape_cast %4 : vector<1x28x768xf32> to vector<28x768xf32>
    %cst_6 = arith.constant dense<0.000000e+00> : vector<16x768xf32>
    %6 = tpu.matmul %3, %5, %cst_6 {dimension_numbers = #tpu.dot_dimension_numbers<[1], [0], [0], [1], [0, 0, 1, 1], [], []>} : vector<16x28xf32>, vector<28x768xf32>, vector<16x768xf32> -> vector<16x768xf32>
    %7 = arith.addf %0, %6 : vector<16x768xf32>
    %c0_7 = arith.constant 0 : index
    %c0_8 = arith.constant 0 : index
    %c0_9 = arith.constant 0 : index
    %8 = vector.load %arg2[%c0_7, %c0_8, %c0_9] : memref<1x24x28xf32, #tpu.memory_space<vmem>>, vector<1x16x28xf32>
    %9 = vector.shape_cast %8 : vector<1x16x28xf32> to vector<16x28xf32>
    %c0_10 = arith.constant 0 : index
    %c0_11 = arith.constant 0 : index
    %c0_12 = arith.constant 0 : index
    %10 = vector.load %arg3[%c0_10, %c0_11, %c0_12] : memref<5x28x768xf32, #tpu.memory_space<vmem>>, vector<1x28x768xf32>
    %11 = vector.shape_cast %10 : vector<1x28x768xf32> to vector<28x768xf32>
    %cst_13 = arith.constant dense<0.000000e+00> : vector<16x768xf32>
    %12 = tpu.matmul %9, %11, %cst_13 {dimension_numbers = #tpu.dot_dimension_numbers<[1], [0], [0], [1], [0, 0, 1, 1], [], []>} : vector<16x28xf32>, vector<28x768xf32>, vector<16x768xf32> -> vector<16x768xf32>
    %13 = arith.addf %1, %12 : vector<16x768xf32>
    %c0_14 = arith.constant 0 : index
    %c0_15 = arith.constant 0 : index
    %c0_16 = arith.constant 0 : index
    %14 = vector.load %arg2[%c0_14, %c0_15, %c0_16] : memref<1x24x28xf32, #tpu.memory_space<vmem>>, vector<1x16x28xf32>
    %15 = vector.shape_cast %14 : vector<1x16x28xf32> to vector<16x28xf32>
    %c1 = arith.constant 1 : index
    %c0_17 = arith.constant 0 : index
    %c0_18 = arith.constant 0 : index
    %16 = vector.load %arg3[%c1, %c0_17, %c0_18] : memref<5x28x768xf32, #tpu.memory_space<vmem>>, vector<1x28x768xf32>
    %17 = vector.shape_cast %16 : vector<1x28x768xf32> to vector<28x768xf32>
    %cst_19 = arith.constant dense<0.000000e+00> : vector<16x768xf32>
    %18 = tpu.matmul %15, %17, %cst_19 {dimension_numbers = #tpu.dot_dimension_numbers<[1], [0], [0], [1], [0, 0, 1, 1], [], []>} : vector<16x28xf32>, vector<28x768xf32>, vector<16x768xf32> -> vector<16x768xf32>
    %19 = arith.addf %7, %18 : vector<16x768xf32>
    %c0_20 = arith.constant 0 : index
    %c1_21 = arith.constant 1 : index
    %c0_22 = arith.constant 0 : index
    %20 = vector.load %arg1[%c0_20, %c1_21, %c0_22] : memref<1x24x28xf32, #tpu.memory_space<vmem>>, vector<1x16x28xf32>
    %21 = vector.shape_cast %20 : vector<1x16x28xf32> to vector<16x28xf32>
    %c1_23 = arith.constant 1 : index
    %c0_24 = arith.constant 0 : index
    %c0_25 = arith.constant 0 : index
    %22 = vector.load %arg3[%c1_23, %c0_24, %c0_25] : memref<5x28x768xf32, #tpu.memory_space<vmem>>, vector<1x28x768xf32>
    %23 = vector.shape_cast %22 : vector<1x28x768xf32> to vector<28x768xf32>
    %cst_26 = arith.constant dense<0.000000e+00> : vector<16x768xf32>
    %24 = tpu.matmul %21, %23, %cst_26 {dimension_numbers = #tpu.dot_dimension_numbers<[1], [0], [0], [1], [0, 0, 1, 1], [], []>} : vector<16x28xf32>, vector<28x768xf32>, vector<16x768xf32> -> vector<16x768xf32>
    %25 = arith.addf %13, %24 : vector<16x768xf32>
    %c0_27 = arith.constant 0 : index
    %c1_28 = arith.constant 1 : index
    %c0_29 = arith.constant 0 : index
    %26 = vector.load %arg1[%c0_27, %c1_28, %c0_29] : memref<1x24x28xf32, #tpu.memory_space<vmem>>, vector<1x16x28xf32>
    %27 = vector.shape_cast %26 : vector<1x16x28xf32> to vector<16x28xf32>
    %c2 = arith.constant 2 : index
    %c0_30 = arith.constant 0 : index
    %c0_31 = arith.constant 0 : index
    %28 = vector.load %arg3[%c2, %c0_30, %c0_31] : memref<5x28x768xf32, #tpu.memory_space<vmem>>, vector<1x28x768xf32>
    %29 = vector.shape_cast %28 : vector<1x28x768xf32> to vector<28x768xf32>
    %cst_32 = arith.constant dense<0.000000e+00> : vector<16x768xf32>
    %30 = tpu.matmul %27, %29, %cst_32 {dimension_numbers = #tpu.dot_dimension_numbers<[1], [0], [0], [1], [0, 0, 1, 1], [], []>} : vector<16x28xf32>, vector<28x768xf32>, vector<16x768xf32> -> vector<16x768xf32>
    %31 = arith.addf %19, %30 : vector<16x768xf32>
    %c0_33 = arith.constant 0 : index
    %c1_34 = arith.constant 1 : index
    %c0_35 = arith.constant 0 : index
    %32 = vector.load %arg2[%c0_33, %c1_34, %c0_35] : memref<1x24x28xf32, #tpu.memory_space<vmem>>, vector<1x16x28xf32>
    %33 = vector.shape_cast %32 : vector<1x16x28xf32> to vector<16x28xf32>
    %c2_36 = arith.constant 2 : index
    %c0_37 = arith.constant 0 : index
    %c0_38 = arith.constant 0 : index
    %34 = vector.load %arg3[%c2_36, %c0_37, %c0_38] : memref<5x28x768xf32, #tpu.memory_space<vmem>>, vector<1x28x768xf32>
    %35 = vector.shape_cast %34 : vector<1x28x768xf32> to vector<28x768xf32>
    %cst_39 = arith.constant dense<0.000000e+00> : vector<16x768xf32>
    %36 = tpu.matmul %33, %35, %cst_39 {dimension_numbers = #tpu.dot_dimension_numbers<[1], [0], [0], [1], [0, 0, 1, 1], [], []>} : vector<16x28xf32>, vector<28x768xf32>, vector<16x768xf32> -> vector<16x768xf32>
    %37 = arith.addf %25, %36 : vector<16x768xf32>
    %c0_40 = arith.constant 0 : index
    %c1_41 = arith.constant 1 : index
    %c0_42 = arith.constant 0 : index
    %38 = vector.load %arg2[%c0_40, %c1_41, %c0_42] : memref<1x24x28xf32, #tpu.memory_space<vmem>>, vector<1x16x28xf32>
    %39 = vector.shape_cast %38 : vector<1x16x28xf32> to vector<16x28xf32>
    %c3 = arith.constant 3 : index
    %c0_43 = arith.constant 0 : index
    %c0_44 = arith.constant 0 : index
    %40 = vector.load %arg3[%c3, %c0_43, %c0_44] : memref<5x28x768xf32, #tpu.memory_space<vmem>>, vector<1x28x768xf32>
    %41 = vector.shape_cast %40 : vector<1x28x768xf32> to vector<28x768xf32>
    %cst_45 = arith.constant dense<0.000000e+00> : vector<16x768xf32>
    %42 = tpu.matmul %39, %41, %cst_45 {dimension_numbers = #tpu.dot_dimension_numbers<[1], [0], [0], [1], [0, 0, 1, 1], [], []>} : vector<16x28xf32>, vector<28x768xf32>, vector<16x768xf32> -> vector<16x768xf32>
    %43 = arith.addf %31, %42 : vector<16x768xf32>
    %c0_46 = arith.constant 0 : index
    %c2_47 = arith.constant 2 : index
    %c0_48 = arith.constant 0 : index
    %44 = vector.load %arg1[%c0_46, %c2_47, %c0_48] : memref<1x24x28xf32, #tpu.memory_space<vmem>>, vector<1x16x28xf32>
    %45 = vector.shape_cast %44 : vector<1x16x28xf32> to vector<16x28xf32>
    %c3_49 = arith.constant 3 : index
    %c0_50 = arith.constant 0 : index
    %c0_51 = arith.constant 0 : index
    %46 = vector.load %arg3[%c3_49, %c0_50, %c0_51] : memref<5x28x768xf32, #tpu.memory_space<vmem>>, vector<1x28x768xf32>
    %47 = vector.shape_cast %46 : vector<1x28x768xf32> to vector<28x768xf32>
    %cst_52 = arith.constant dense<0.000000e+00> : vector<16x768xf32>
    %48 = tpu.matmul %45, %47, %cst_52 {dimension_numbers = #tpu.dot_dimension_numbers<[1], [0], [0], [1], [0, 0, 1, 1], [], []>} : vector<16x28xf32>, vector<28x768xf32>, vector<16x768xf32> -> vector<16x768xf32>
    %49 = arith.addf %37, %48 : vector<16x768xf32>
    %c0_53 = arith.constant 0 : index
    %c2_54 = arith.constant 2 : index
    %c0_55 = arith.constant 0 : index
    %50 = vector.load %arg1[%c0_53, %c2_54, %c0_55] : memref<1x24x28xf32, #tpu.memory_space<vmem>>, vector<1x16x28xf32>
    %51 = vector.shape_cast %50 : vector<1x16x28xf32> to vector<16x28xf32>
    %c4 = arith.constant 4 : index
    %c0_56 = arith.constant 0 : index
    %c0_57 = arith.constant 0 : index
    %52 = vector.load %arg3[%c4, %c0_56, %c0_57] : memref<5x28x768xf32, #tpu.memory_space<vmem>>, vector<1x28x768xf32>
    %53 = vector.shape_cast %52 : vector<1x28x768xf32> to vector<28x768xf32>
    %cst_58 = arith.constant dense<0.000000e+00> : vector<16x768xf32>
    %54 = tpu.matmul %51, %53, %cst_58 {dimension_numbers = #tpu.dot_dimension_numbers<[1], [0], [0], [1], [0, 0, 1, 1], [], []>} : vector<16x28xf32>, vector<28x768xf32>, vector<16x768xf32> -> vector<16x768xf32>
    %55 = arith.addf %43, %54 : vector<16x768xf32>
    %c0_59 = arith.constant 0 : index
    %c2_60 = arith.constant 2 : index
    %c0_61 = arith.constant 0 : index
    %56 = vector.load %arg2[%c0_59, %c2_60, %c0_61] : memref<1x24x28xf32, #tpu.memory_space<vmem>>, vector<1x16x28xf32>
    %57 = vector.shape_cast %56 : vector<1x16x28xf32> to vector<16x28xf32>
    %c4_62 = arith.constant 4 : index
    %c0_63 = arith.constant 0 : index
    %c0_64 = arith.constant 0 : index
    %58 = vector.load %arg3[%c4_62, %c0_63, %c0_64] : memref<5x28x768xf32, #tpu.memory_space<vmem>>, vector<1x28x768xf32>
    %59 = vector.shape_cast %58 : vector<1x28x768xf32> to vector<28x768xf32>
    %cst_65 = arith.constant dense<0.000000e+00> : vector<16x768xf32>
    %60 = tpu.matmul %57, %59, %cst_65 {dimension_numbers = #tpu.dot_dimension_numbers<[1], [0], [0], [1], [0, 0, 1, 1], [], []>} : vector<16x28xf32>, vector<28x768xf32>, vector<16x768xf32> -> vector<16x768xf32>
    %61 = arith.addf %49, %60 : vector<16x768xf32>
    %c0_66 = arith.constant 0 : index
    %c0_67 = arith.constant 0 : index
    %62 = vector.load %arg4[%c0_66, %c0_67] : memref<1x768xf32, #tpu.memory_space<vmem>>, vector<1x768xf32>
    %63 = vector.broadcast %62 : vector<1x768xf32> to vector<16x768xf32>
    %64 = arith.addf %55, %63 : vector<16x768xf32>
    %cst_68 = arith.constant 0.000000e+00 : f32
    %65 = vector.broadcast %cst_68 : f32 to vector<16x768xf32>
    %66 = arith.maximumf %64, %65 : vector<16x768xf32>
    %67 = vector.broadcast %62 : vector<1x768xf32> to vector<16x768xf32>
    %68 = arith.addf %61, %67 : vector<16x768xf32>
    %cst_69 = arith.constant 0.000000e+00 : f32
    %69 = vector.broadcast %cst_69 : f32 to vector<16x768xf32>
    %70 = arith.maximumf %68, %69 : vector<16x768xf32>
    %71 = arith.maximumf %66, %70 : vector<16x768xf32>
    %72 = vector.extract_strided_slice %71 {offsets = [0, 32], sizes = [16, 736], strides = [1, 1]} : vector<16x768xf32> to vector<16x736xf32>
    %73 = vector.extract_strided_slice %71 {offsets = [0, 0], sizes = [16, 32], strides = [1, 1]} : vector<16x768xf32> to vector<16x32xf32>
    %74 = tpu.concatenate %72, %73 in 1 : vector<16x736xf32>, vector<16x32xf32> -> vector<16x768xf32>
    %75 = arith.maximumf %71, %74 : vector<16x768xf32>
    %76 = vector.shape_cast %75 : vector<16x768xf32> to vector<1x16x768xf32>
    %c0_70 = arith.constant 0 : index
    %c0_71 = arith.constant 0 : index
    %c0_72 = arith.constant 0 : index
    %77 = vector.load %arg14[%c0_70, %c0_71, %c0_72] : memref<1x16x768xf32, #tpu.memory_space<vmem>>, vector<1x16x768xf32>
    tpu.vector_store %arg14[%c0_70, %c0_71, %c0_72], %76 {strides = array<i32>} : memref<1x16x768xf32, #tpu.memory_space<vmem>>, vector<1x16x768xf32>,
    %cst_73 = arith.constant 0.000000e+00 : f32
    %78 = vector.broadcast %cst_73 : f32 to vector<8x512xf32>
    %c0_74 = arith.constant 0 : index
    %c0_75 = arith.constant 0 : index
    %c0_76 = arith.constant 0 : index
    %79 = vector.load %arg14[%c0_74, %c0_75, %c0_76] : memref<1x16x768xf32, #tpu.memory_space<vmem>>, vector<1x8x768xf32>
    %80 = vector.shape_cast %79 : vector<1x8x768xf32> to vector<8x768xf32>
    %81 = arith.truncf %80 : vector<8x768xf32> to vector<8x768xbf16>
    %c0_77 = arith.constant 0 : index
    %c0_78 = arith.constant 0 : index
    %c0_79 = arith.constant 0 : index
    %82 = vector.load %arg5[%c0_77, %c0_78, %c0_79] : memref<5x768x512xbf16, #tpu.memory_space<vmem>>, vector<1x768x512xbf16>
    %83 = vector.shape_cast %82 : vector<1x768x512xbf16> to vector<768x512xbf16>
    %cst_80 = arith.constant dense<0.000000e+00> : vector<8x512xf32>
    %84 = tpu.matmul %81, %83, %cst_80 {dimension_numbers = #tpu.dot_dimension_numbers<[1], [0], [0], [1], [0, 0, 1, 1], [], []>} : vector<8x768xbf16>, vector<768x512xbf16>, vector<8x512xf32> -> vector<8x512xf32>
    %85 = arith.addf %78, %84 : vector<8x512xf32>
    %c0_81 = arith.constant 0 : index
    %c1_82 = arith.constant 1 : index
    %c0_83 = arith.constant 0 : index
    %86 = vector.load %arg14[%c0_81, %c1_82, %c0_83] : memref<1x16x768xf32, #tpu.memory_space<vmem>>, vector<1x8x768xf32>
    %87 = vector.shape_cast %86 : vector<1x8x768xf32> to vector<8x768xf32>
    %88 = arith.truncf %87 : vector<8x768xf32> to vector<8x768xbf16>
    %c1_84 = arith.constant 1 : index
    %c0_85 = arith.constant 0 : index
    %c0_86 = arith.constant 0 : index
    %89 = vector.load %arg5[%c1_84, %c0_85, %c0_86] : memref<5x768x512xbf16, #tpu.memory_space<vmem>>, vector<1x768x512xbf16>
    %90 = vector.shape_cast %89 : vector<1x768x512xbf16> to vector<768x512xbf16>
    %cst_87 = arith.constant dense<0.000000e+00> : vector<8x512xf32>
    %91 = tpu.matmul %88, %90, %cst_87 {dimension_numbers = #tpu.dot_dimension_numbers<[1], [0], [0], [1], [0, 0, 1, 1], [], []>} : vector<8x768xbf16>, vector<768x512xbf16>, vector<8x512xf32> -> vector<8x512xf32>
    %92 = arith.addf %85, %91 : vector<8x512xf32>
    %c0_88 = arith.constant 0 : index
    %c2_89 = arith.constant 2 : index
    %c0_90 = arith.constant 0 : index
    %93 = vector.load %arg14[%c0_88, %c2_89, %c0_90] : memref<1x16x768xf32, #tpu.memory_space<vmem>>, vector<1x8x768xf32>
    %94 = vector.shape_cast %93 : vector<1x8x768xf32> to vector<8x768xf32>
    %95 = arith.truncf %94 : vector<8x768xf32> to vector<8x768xbf16>
    %c2_91 = arith.constant 2 : index
    %c0_92 = arith.constant 0 : index
    %c0_93 = arith.constant 0 : index
    %96 = vector.load %arg5[%c2_91, %c0_92, %c0_93] : memref<5x768x512xbf16, #tpu.memory_space<vmem>>, vector<1x768x512xbf16>
    %97 = vector.shape_cast %96 : vector<1x768x512xbf16> to vector<768x512xbf16>
    %cst_94 = arith.constant dense<0.000000e+00> : vector<8x512xf32>
    %98 = tpu.matmul %95, %97, %cst_94 {dimension_numbers = #tpu.dot_dimension_numbers<[1], [0], [0], [1], [0, 0, 1, 1], [], []>} : vector<8x768xbf16>, vector<768x512xbf16>, vector<8x512xf32> -> vector<8x512xf32>
    %99 = arith.addf %92, %98 : vector<8x512xf32>
    %c0_95 = arith.constant 0 : index
    %c3_96 = arith.constant 3 : index
    %c0_97 = arith.constant 0 : index
    %100 = vector.load %arg14[%c0_95, %c3_96, %c0_97] : memref<1x16x768xf32, #tpu.memory_space<vmem>>, vector<1x8x768xf32>
    %101 = vector.shape_cast %100 : vector<1x8x768xf32> to vector<8x768xf32>
    %102 = arith.truncf %101 : vector<8x768xf32> to vector<8x768xbf16>
    %c3_98 = arith.constant 3 : index
    %c0_99 = arith.constant 0 : index
    %c0_100 = arith.constant 0 : index
    %103 = vector.load %arg5[%c3_98, %c0_99, %c0_100] : memref<5x768x512xbf16, #tpu.memory_space<vmem>>, vector<1x768x512xbf16>
    %104 = vector.shape_cast %103 : vector<1x768x512xbf16> to vector<768x512xbf16>
    %cst_101 = arith.constant dense<0.000000e+00> : vector<8x512xf32>
    %105 = tpu.matmul %102, %104, %cst_101 {dimension_numbers = #tpu.dot_dimension_numbers<[1], [0], [0], [1], [0, 0, 1, 1], [], []>} : vector<8x768xbf16>, vector<768x512xbf16>, vector<8x512xf32> -> vector<8x512xf32>
    %106 = arith.addf %99, %105 : vector<8x512xf32>
    %c0_102 = arith.constant 0 : index
    %c4_103 = arith.constant 4 : index
    %c0_104 = arith.constant 0 : index
    %107 = vector.load %arg14[%c0_102, %c4_103, %c0_104] : memref<1x16x768xf32, #tpu.memory_space<vmem>>, vector<1x8x768xf32>
    %108 = vector.shape_cast %107 : vector<1x8x768xf32> to vector<8x768xf32>
    %109 = arith.truncf %108 : vector<8x768xf32> to vector<8x768xbf16>
    %c4_105 = arith.constant 4 : index
    %c0_106 = arith.constant 0 : index
    %c0_107 = arith.constant 0 : index
    %110 = vector.load %arg5[%c4_105, %c0_106, %c0_107] : memref<5x768x512xbf16, #tpu.memory_space<vmem>>, vector<1x768x512xbf16>
    %111 = vector.shape_cast %110 : vector<1x768x512xbf16> to vector<768x512xbf16>
    %cst_108 = arith.constant dense<0.000000e+00> : vector<8x512xf32>
    %112 = tpu.matmul %109, %111, %cst_108 {dimension_numbers = #tpu.dot_dimension_numbers<[1], [0], [0], [1], [0, 0, 1, 1], [], []>} : vector<8x768xbf16>, vector<768x512xbf16>, vector<8x512xf32> -> vector<8x512xf32>
    %113 = arith.addf %106, %112 : vector<8x512xf32>
    %c0_109 = arith.constant 0 : index
    %c0_110 = arith.constant 0 : index
    %114 = vector.load %arg6[%c0_109, %c0_110] : memref<1x512xf32, #tpu.memory_space<vmem>>, vector<1x512xf32>
    %115 = vector.broadcast %114 : vector<1x512xf32> to vector<8x512xf32>
    %116 = arith.addf %113, %115 : vector<8x512xf32>
    %cst_111 = arith.constant 0.000000e+00 : f32
    %117 = vector.broadcast %cst_111 : f32 to vector<8x512xf32>
    %118 = arith.maximumf %116, %117 : vector<8x512xf32>
    %119 = vector.extract_strided_slice %118 {offsets = [0, 64], sizes = [8, 448], strides = [1, 1]} : vector<8x512xf32> to vector<8x448xf32>
    %120 = vector.extract_strided_slice %118 {offsets = [0, 0], sizes = [8, 64], strides = [1, 1]} : vector<8x512xf32> to vector<8x64xf32>
    %121 = tpu.concatenate %119, %120 in 1 : vector<8x448xf32>, vector<8x64xf32> -> vector<8x512xf32>
    %122 = arith.maximumf %118, %121 : vector<8x512xf32>
    %123 = vector.shape_cast %122 : vector<8x512xf32> to vector<1x8x512xf32>
    %c0_112 = arith.constant 0 : index
    %c0_113 = arith.constant 0 : index
    %c0_114 = arith.constant 0 : index
    %124 = vector.load %arg15[%c0_112, %c0_113, %c0_114] : memref<1x8x512xf32, #tpu.memory_space<vmem>>, vector<1x8x512xf32>
    tpu.vector_store %arg15[%c0_112, %c0_113, %c0_114], %123 {strides = array<i32>} : memref<1x8x512xf32, #tpu.memory_space<vmem>>, vector<1x8x512xf32>,
    %cst_115 = arith.constant 0.000000e+00 : f32
    %125 = vector.broadcast %cst_115 : f32 to vector<1x256xf32>
    %c0_116 = arith.constant 0 : index
    %c0_117 = arith.constant 0 : index
    %c0_118 = arith.constant 0 : index
    %126 = vector.load %arg15[%c0_116, %c0_117, %c0_118] : memref<1x8x512xf32, #tpu.memory_space<vmem>>, vector<1x1x512xf32>
    %127 = vector.shape_cast %126 : vector<1x1x512xf32> to vector<1x512xf32>
    %c0_119 = arith.constant 0 : index
    %c1_120 = arith.constant 1 : index
    %c0_121 = arith.constant 0 : index
    %128 = vector.load %arg15[%c0_119, %c1_120, %c0_121] : memref<1x8x512xf32, #tpu.memory_space<vmem>>, vector<1x1x512xf32>
    %129 = vector.shape_cast %128 : vector<1x1x512xf32> to vector<1x512xf32>
    %130 = arith.maximumf %127, %129 : vector<1x512xf32>
    %131 = arith.truncf %130 : vector<1x512xf32> to vector<1x512xbf16>
    %c0_122 = arith.constant 0 : index
    %c0_123 = arith.constant 0 : index
    %c0_124 = arith.constant 0 : index
    %132 = vector.load %arg7[%c0_122, %c0_123, %c0_124] : memref<4x512x256xbf16, #tpu.memory_space<vmem>>, vector<1x512x256xbf16>
    %133 = vector.shape_cast %132 : vector<1x512x256xbf16> to vector<512x256xbf16>
    %cst_125 = arith.constant dense<0.000000e+00> : vector<1x256xf32>
    %134 = tpu.matmul %131, %133, %cst_125 {dimension_numbers = #tpu.dot_dimension_numbers<[1], [0], [0], [1], [0, 0, 1, 1], [], []>} : vector<1x512xbf16>, vector<512x256xbf16>, vector<1x256xf32> -> vector<1x256xf32>
    %135 = arith.addf %125, %134 : vector<1x256xf32>
    %c0_126 = arith.constant 0 : index
    %c2_127 = arith.constant 2 : index
    %c0_128 = arith.constant 0 : index
    %136 = vector.load %arg15[%c0_126, %c2_127, %c0_128] : memref<1x8x512xf32, #tpu.memory_space<vmem>>, vector<1x1x512xf32>
    %137 = vector.shape_cast %136 : vector<1x1x512xf32> to vector<1x512xf32>
    %c0_129 = arith.constant 0 : index
    %c3_130 = arith.constant 3 : index
    %c0_131 = arith.constant 0 : index
    %138 = vector.load %arg15[%c0_129, %c3_130, %c0_131] : memref<1x8x512xf32, #tpu.memory_space<vmem>>, vector<1x1x512xf32>
    %139 = vector.shape_cast %138 : vector<1x1x512xf32> to vector<1x512xf32>
    %140 = arith.maximumf %137, %139 : vector<1x512xf32>
    %141 = arith.truncf %140 : vector<1x512xf32> to vector<1x512xbf16>
    %c1_132 = arith.constant 1 : index
    %c0_133 = arith.constant 0 : index
    %c0_134 = arith.constant 0 : index
    %142 = vector.load %arg7[%c1_132, %c0_133, %c0_134] : memref<4x512x256xbf16, #tpu.memory_space<vmem>>, vector<1x512x256xbf16>
    %143 = vector.shape_cast %142 : vector<1x512x256xbf16> to vector<512x256xbf16>
    %cst_135 = arith.constant dense<0.000000e+00> : vector<1x256xf32>
    %144 = tpu.matmul %141, %143, %cst_135 {dimension_numbers = #tpu.dot_dimension_numbers<[1], [0], [0], [1], [0, 0, 1, 1], [], []>} : vector<1x512xbf16>, vector<512x256xbf16>, vector<1x256xf32> -> vector<1x256xf32>
    %145 = arith.addf %135, %144 : vector<1x256xf32>
    %c0_136 = arith.constant 0 : index
    %c4_137 = arith.constant 4 : index
    %c0_138 = arith.constant 0 : index
    %146 = vector.load %arg15[%c0_136, %c4_137, %c0_138] : memref<1x8x512xf32, #tpu.memory_space<vmem>>, vector<1x1x512xf32>
    %147 = vector.shape_cast %146 : vector<1x1x512xf32> to vector<1x512xf32>
    %c0_139 = arith.constant 0 : index
    %c5 = arith.constant 5 : index
    %c0_140 = arith.constant 0 : index
    %148 = vector.load %arg15[%c0_139, %c5, %c0_140] : memref<1x8x512xf32, #tpu.memory_space<vmem>>, vector<1x1x512xf32>
    %149 = vector.shape_cast %148 : vector<1x1x512xf32> to vector<1x512xf32>
    %150 = arith.maximumf %147, %149 : vector<1x512xf32>
    %151 = arith.truncf %150 : vector<1x512xf32> to vector<1x512xbf16>
    %c2_141 = arith.constant 2 : index
    %c0_142 = arith.constant 0 : index
    %c0_143 = arith.constant 0 : index
    %152 = vector.load %arg7[%c2_141, %c0_142, %c0_143] : memref<4x512x256xbf16, #tpu.memory_space<vmem>>, vector<1x512x256xbf16>
    %153 = vector.shape_cast %152 : vector<1x512x256xbf16> to vector<512x256xbf16>
    %cst_144 = arith.constant dense<0.000000e+00> : vector<1x256xf32>
    %154 = tpu.matmul %151, %153, %cst_144 {dimension_numbers = #tpu.dot_dimension_numbers<[1], [0], [0], [1], [0, 0, 1, 1], [], []>} : vector<1x512xbf16>, vector<512x256xbf16>, vector<1x256xf32> -> vector<1x256xf32>
    %155 = arith.addf %145, %154 : vector<1x256xf32>
    %c0_145 = arith.constant 0 : index
    %c6 = arith.constant 6 : index
    %c0_146 = arith.constant 0 : index
    %156 = vector.load %arg15[%c0_145, %c6, %c0_146] : memref<1x8x512xf32, #tpu.memory_space<vmem>>, vector<1x1x512xf32>
    %157 = vector.shape_cast %156 : vector<1x1x512xf32> to vector<1x512xf32>
    %c0_147 = arith.constant 0 : index
    %c7 = arith.constant 7 : index
    %c0_148 = arith.constant 0 : index
    %158 = vector.load %arg15[%c0_147, %c7, %c0_148] : memref<1x8x512xf32, #tpu.memory_space<vmem>>, vector<1x1x512xf32>
    %159 = vector.shape_cast %158 : vector<1x1x512xf32> to vector<1x512xf32>
    %160 = arith.maximumf %157, %159 : vector<1x512xf32>
    %161 = arith.truncf %160 : vector<1x512xf32> to vector<1x512xbf16>
    %c3_149 = arith.constant 3 : index
    %c0_150 = arith.constant 0 : index
    %c0_151 = arith.constant 0 : index
    %162 = vector.load %arg7[%c3_149, %c0_150, %c0_151] : memref<4x512x256xbf16, #tpu.memory_space<vmem>>, vector<1x512x256xbf16>
    %163 = vector.shape_cast %162 : vector<1x512x256xbf16> to vector<512x256xbf16>
    %cst_152 = arith.constant dense<0.000000e+00> : vector<1x256xf32>
    %164 = tpu.matmul %161, %163, %cst_152 {dimension_numbers = #tpu.dot_dimension_numbers<[1], [0], [0], [1], [0, 0, 1, 1], [], []>} : vector<1x512xbf16>, vector<512x256xbf16>, vector<1x256xf32> -> vector<1x256xf32>
    %165 = arith.addf %155, %164 : vector<1x256xf32>
    %c0_153 = arith.constant 0 : index
    %c0_154 = arith.constant 0 : index
    %166 = vector.load %arg8[%c0_153, %c0_154] : memref<1x256xf32, #tpu.memory_space<vmem>>, vector<1x256xf32>
    %167 = arith.addf %165, %166 : vector<1x256xf32>
    %cst_155 = arith.constant 0.000000e+00 : f32
    %168 = vector.broadcast %cst_155 : f32 to vector<1x256xf32>
    %169 = arith.maximumf %167, %168 : vector<1x256xf32>
    %170 = arith.truncf %169 : vector<1x256xf32> to vector<1x256xbf16>
    %c0_156 = arith.constant 0 : index
    %c0_157 = arith.constant 0 : index
    %171 = vector.load %arg9[%c0_156, %c0_157] : memref<256x256xbf16, #tpu.memory_space<vmem>>, vector<256x256xbf16>
    %cst_158 = arith.constant dense<0.000000e+00> : vector<1x256xf32>
    %172 = tpu.matmul %170, %171, %cst_158 {dimension_numbers = #tpu.dot_dimension_numbers<[1], [0], [0], [1], [0, 0, 1, 1], [], []>} : vector<1x256xbf16>, vector<256x256xbf16>, vector<1x256xf32> -> vector<1x256xf32>
    %c0_159 = arith.constant 0 : index
    %c0_160 = arith.constant 0 : index
    %173 = vector.load %arg10[%c0_159, %c0_160] : memref<1x256xf32, #tpu.memory_space<vmem>>, vector<1x256xf32>
    %174 = arith.addf %172, %173 : vector<1x256xf32>
    %cst_161 = arith.constant 0.000000e+00 : f32
    %175 = vector.broadcast %cst_161 : f32 to vector<1x256xf32>
    %176 = arith.maximumf %174, %175 : vector<1x256xf32>
    %177 = arith.truncf %176 : vector<1x256xf32> to vector<1x256xbf16>
    %c0_162 = arith.constant 0 : index
    %c0_163 = arith.constant 0 : index
    %178 = vector.load %arg11[%c0_162, %c0_163] : memref<256x128xbf16, #tpu.memory_space<vmem>>, vector<256x128xbf16>
    %cst_164 = arith.constant dense<0.000000e+00> : vector<1x128xf32>
    %179 = tpu.matmul %177, %178, %cst_164 {dimension_numbers = #tpu.dot_dimension_numbers<[1], [0], [0], [1], [0, 0, 1, 1], [], []>} : vector<1x256xbf16>, vector<256x128xbf16>, vector<1x128xf32> -> vector<1x128xf32>
    %c0_165 = arith.constant 0 : index
    %c0_166 = arith.constant 0 : index
    %180 = vector.load %arg12[%c0_165, %c0_166] : memref<1x128xf32, #tpu.memory_space<vmem>>, vector<1x128xf32>
    %181 = arith.addf %179, %180 : vector<1x128xf32>
    %c0_167 = arith.constant 0 : index
    %c0_168 = arith.constant 0 : index
    %c0_169 = arith.constant 0 : index
    %182 = vector.load %arg13[%c0_167, %c0_168, %c0_169] : memref<1x1x128xf32, #tpu.memory_space<vmem>>, vector<1x1x128xf32>
    %183 = vector.shape_cast %182 : vector<1x1x128xf32> to vector<1x128xf32>
    %184 = vector.shape_cast %181 : vector<1x128xf32> to vector<1x1x128xf32>
    tpu.vector_store %arg13[%c0_167, %c0_168, %c0_169], %184 {strides = array<i32>} : memref<1x1x128xf32, #tpu.memory_space<vmem>>, vector<1x1x128xf32>,
    return
  }
  func.func @transform_0(%arg0: i32) -> (i32, i32, i32) {
    %c0_i32 = arith.constant 0 : i32
    %c0_i32_0 = arith.constant 0 : i32
    %c0_i32_1 = arith.constant 0 : i32
    return %arg0, %c0_i32, %c0_i32_0 : i32, i32, i32
  }
  func.func @transform_1(%arg0: i32) -> (i32, i32, i32) {
    %c0_i32 = arith.constant 0 : i32
    %c0_i32_0 = arith.constant 0 : i32
    %c0_i32_1 = arith.constant 0 : i32
    return %arg0, %c0_i32, %c0_i32_0 : i32, i32, i32
  }
  func.func @transform_2(%arg0: i32) -> (i32, i32, i32) {
    %c0_i32 = arith.constant 0 : i32
    %c0_i32_0 = arith.constant 0 : i32
    %c0_i32_1 = arith.constant 0 : i32
    %c0_i32_2 = arith.constant 0 : i32
    return %c0_i32, %c0_i32_0, %c0_i32_1 : i32, i32, i32
  }
  func.func @transform_3(%arg0: i32) -> (i32, i32) {
    %c0_i32 = arith.constant 0 : i32
    %c0_i32_0 = arith.constant 0 : i32
    %c0_i32_1 = arith.constant 0 : i32
    return %c0_i32, %c0_i32_0 : i32, i32
  }
  func.func @transform_4(%arg0: i32) -> (i32, i32, i32) {
    %c0_i32 = arith.constant 0 : i32
    %c0_i32_0 = arith.constant 0 : i32
    %c0_i32_1 = arith.constant 0 : i32
    %c0_i32_2 = arith.constant 0 : i32
    return %c0_i32, %c0_i32_0, %c0_i32_1 : i32, i32, i32
  }
  func.func @transform_5(%arg0: i32) -> (i32, i32) {
    %c0_i32 = arith.constant 0 : i32
    %c0_i32_0 = arith.constant 0 : i32
    %c0_i32_1 = arith.constant 0 : i32
    return %c0_i32, %c0_i32_0 : i32, i32
  }
  func.func @transform_6(%arg0: i32) -> (i32, i32, i32) {
    %c0_i32 = arith.constant 0 : i32
    %c0_i32_0 = arith.constant 0 : i32
    %c0_i32_1 = arith.constant 0 : i32
    %c0_i32_2 = arith.constant 0 : i32
    return %c0_i32, %c0_i32_0, %c0_i32_1 : i32, i32, i32
  }
  func.func @transform_7(%arg0: i32) -> (i32, i32) {
    %c0_i32 = arith.constant 0 : i32
    %c0_i32_0 = arith.constant 0 : i32
    %c0_i32_1 = arith.constant 0 : i32
    return %c0_i32, %c0_i32_0 : i32, i32
  }
  func.func @transform_8(%arg0: i32) -> (i32, i32) {
    %c0_i32 = arith.constant 0 : i32
    %c0_i32_0 = arith.constant 0 : i32
    %c0_i32_1 = arith.constant 0 : i32
    return %c0_i32, %c0_i32_0 : i32, i32
  }
  func.func @transform_9(%arg0: i32) -> (i32, i32) {
    %c0_i32 = arith.constant 0 : i32
    %c0_i32_0 = arith.constant 0 : i32
    %c0_i32_1 = arith.constant 0 : i32
    return %c0_i32, %c0_i32_0 : i32, i32
  }
  func.func @transform_10(%arg0: i32) -> (i32, i32) {
    %c0_i32 = arith.constant 0 : i32
    %c0_i32_0 = arith.constant 0 : i32
    %c0_i32_1 = arith.constant 0 : i32
    return %c0_i32, %c0_i32_0 : i32, i32
  }
  func.func @transform_11(%arg0: i32) -> (i32, i32) {
    %c0_i32 = arith.constant 0 : i32
    %c0_i32_0 = arith.constant 0 : i32
    %c0_i32_1 = arith.constant 0 : i32
    return %c0_i32, %c0_i32_0 : i32, i32
  }
  func.func @transform_12(%arg0: i32) -> (i32, i32, i32) {
    %c0_i32 = arith.constant 0 : i32
    %c0_i32_0 = arith.constant 0 : i32
    %c0_i32_1 = arith.constant 0 : i32
    return %arg0, %c0_i32, %c0_i32_0 : i32, i32, i32
  }
}

</mosaic_0001>

<llo_original>
// kernel: cnn_net_forward.1
$region0: #{cnn_net_forward.1}
  #allocation0 [shape = 'u32[]', space=smem, size = 0x4, offset = 0x4, fixed_abs, tag = 'smem constant byte address 0x4 - core index']
  #allocation1 [shape = 'u32[72,128]{1,0:T(1,128)}', space=vmem, size = 0x9000, scoped, tag = 'internal scratch']
  #allocation2 [shape = 'f32[1,16,768]{2,1,0:T(8,128)}', space=vmem, size = 0xc000, scoped, tag = 'scratch operand']
  #allocation3 [shape = 'f32[1,8,512]{2,1,0:T(8,128)}', space=vmem, size = 0x4000, scoped, tag = 'scratch operand']
  %s0 = inlined_call_operand.vmem [shape: f32[2,24,28], index: 0, kind: input, shape index: {}]
  %s1 = inlined_call_operand.vmem [shape: f32[2,24,28], index: 1, kind: input, shape index: {}]
  %s2 = inlined_call_operand.hbm [shape: f32[5,28,768], index: 2, kind: input, shape index: {}]
  %s3 = inlined_call_operand.hbm [shape: f32[1,768], index: 3, kind: input, shape index: {}]
  %s4 = inlined_call_operand.hbm [shape: bf16[5,768,512], index: 4, kind: input, shape index: {}]
  %s5 = inlined_call_operand.hbm [shape: f32[1,512], index: 5, kind: input, shape index: {}]
  %s6 = inlined_call_operand.hbm [shape: bf16[4,512,256], index: 6, kind: input, shape index: {}]
  %s7 = inlined_call_operand.hbm [shape: f32[1,256], index: 7, kind: input, shape index: {}]
  %s8 = inlined_call_operand.hbm [shape: bf16[256,256], index: 8, kind: input, shape index: {}]
  %s9 = inlined_call_operand.hbm [shape: f32[1,256], index: 9, kind: input, shape index: {}]
  %s10 = inlined_call_operand.hbm [shape: bf16[256,128], index: 10, kind: input, shape index: {}]
  %s11 = inlined_call_operand.hbm [shape: f32[1,128], index: 11, kind: input, shape index: {}]
  %s12 = inlined_call_operand.hbm [shape: f32[2,1,128], index: 12, kind: output, shape index: {}]
  %s13 = sld [smem:[#allocation0]]
  $region121: #{cnn_net_forward.1} parent=0
    _
  %s15 = ssub.s32 1, %s13
  %s16 = scalar_select 0, %s15, %s13
  $region1: #{cnn_net_forward.1} parent=0
    #allocation4 [shape = 'u8[491520]{0}', space=vmem, size = 0x78000, scoped, tag = 'input window, operand 2, single buffered']
    #allocation5 [shape = 's32[2]{0}', space=sflag, size = 0x8, scoped, tag = 'scoped memory for cnn_net_forward.1']
    #allocation6 [shape = 's32[2]{0}', space=sflag, size = 0x8, scoped, tag = 'scoped memory for cnn_net_forward.1']
    #allocation7 [shape = 'u8[3072]{0}', space=vmem, size = 0xc00, scoped, tag = 'input window, operand 3, single buffered']
    #allocation8 [shape = 's32[1]{0}', space=sflag, size = 0x4, scoped, tag = 'scoped memory for cnn_net_forward.1']
    #allocation9 [shape = 'u8[3932160]{0}', space=vmem, size = 0x3c0000, scoped, tag = 'input window, operand 4, single buffered']
    #allocation10 [shape = 'u8[2048]{0}', space=vmem, size = 0x800, scoped, tag = 'input window, operand 5, single buffered']
    #allocation11 [shape = 's32[1]{0}', space=sflag, size = 0x4, scoped, tag = 'scoped memory for cnn_net_forward.1']
    #allocation12 [shape = 'u8[1048576]{0}', space=vmem, size = 0x100000, scoped, tag = 'input window, operand 6, single buffered']
    #allocation13 [shape = 'u8[1024]{0}', space=vmem, size = 0x400, scoped, tag = 'input window, operand 7, single buffered']
    #allocation14 [shape = 's32[1]{0}', space=sflag, size = 0x4, scoped, tag = 'scoped memory for cnn_net_forward.1']
    #allocation15 [shape = 'u8[131072]{0}', space=vmem, size = 0x20000, scoped, tag = 'input window, operand 8, single buffered']
    #allocation16 [shape = 'u8[1024]{0}', space=vmem, size = 0x400, scoped, tag = 'input window, operand 9, single buffered']
    #allocation17 [shape = 's32[1]{0}', space=sflag, size = 0x4, scoped, tag = 'scoped memory for cnn_net_forward.1']
    #allocation18 [shape = 'u8[65536]{0}', space=vmem, size = 0x10000, scoped, tag = 'input window, operand 10, single buffered']
    #allocation19 [shape = 'u8[512]{0}', space=vmem, size = 0x400, scoped, tag = 'input window, operand 11, single buffered']
    #allocation20 [shape = 's32[1]{0}', space=sflag, size = 0x4, scoped, tag = 'scoped memory for cnn_net_forward.1']
    #allocation21 [shape = 'u8[1024]{0}', space=vmem, size = 0x400, scoped, tag = 'output window, operand 0']
    %17 = vsyncpa [#allocation5], 0
    %18 = vsyncpa [#allocation8], 0
    %19 = vsyncpa [#allocation11], 0
    %20 = vsyncpa [#allocation14], 0
    %21 = vsyncpa [#allocation17], 0
    %22 = vsyncpa [#allocation20], 0
    %23 = vsyncpa [#allocation6], 0
    %s24 = scalar_lea.sflag [#allocation6], 1
    %25 = vsyncpa %s24, 0
    loop: start=0, step=1, limit=4
    $region2: #{cnn_net_forward.1} parent=1 // loop_pre_header
      _
    $region3: #{cnn_net_forward.1} parent=1 // loop_header
      %s27 = sphi 0, %s31
      %p28 = scmp.ge.s32.totalorder %s27, 4
      %s37 = sphi 0, %s39
      %s40 = sphi 0, %s37
      %s41 = sphi 0, %s40
      %s57 = sphi 0, %s41
      %s63 = sphi 0, %s65
      %s66 = sphi 0, %s63
      %s67 = sphi 0, %s66
      %s83 = sphi 0, %s67
      %s87 = sphi 0, %s87
      %s89 = sphi 0, %s87
      %s90 = sphi 0, %s89
      %s104 = sphi 0, %s90
      %s108 = sphi 0, %s108
      %s110 = sphi 0, %s108
      %s111 = sphi 0, %s110
      %s125 = sphi 0, %s111
      %s129 = sphi 0, %s129
      %s131 = sphi 0, %s129
      %s132 = sphi 0, %s131
      %s146 = sphi 0, %s132
      %s150 = sphi 0, %s150
      %s152 = sphi 0, %s150
      %s153 = sphi 0, %s152
      %s167 = sphi 0, %s153
      %s171 = sphi 0, %s171
      %s173 = sphi 0, %s171
      %s174 = sphi 0, %s173
      %s188 = sphi 0, %s174
      %s192 = sphi 0, %s192
      %s194 = sphi 0, %s192
      %s195 = sphi 0, %s194
      %s209 = sphi 0, %s195
      %s213 = sphi 0, %s213
      %s215 = sphi 0, %s213
      %s216 = sphi 0, %s215
      %s230 = sphi 0, %s216
      %s234 = sphi 0, %s234
      %s236 = sphi 0, %s234
      %s237 = sphi 0, %s236
      %s251 = sphi 0, %s237
      %s255 = sphi 0, %s255
      %s257 = sphi 0, %s255
      %s258 = sphi 0, %s257
      %s272 = sphi 0, %s258
      %s276 = sphi 0, %s276
      %s278 = sphi 0, %s276
      %s279 = sphi 0, %s278
      %s293 = sphi 0, %s279
      %s299 = sphi 0, %s301
      %s302 = sphi 0, %s299
      %s303 = sphi 0, %s302
      %s319 = sphi 0, %s303
    $region4: #{cnn_net_forward.1} parent=1 // loop_header_branch
      %30 = sbr.rel (%p28) target = $region8
    $region5: #{cnn_net_forward.1} parent=1 // loop_body
      %s32 = ssub.s32 %s27, 1
      %s33 = ssub.s32 %s27, 2
      %s34 = sadd.s32 %s27, 1
      %s35 = ssub.s32 %s27, %s34
      %p36 = scmp.eq.s32.totalorder %s35, 0
      %s38 = sadd.s32 %s37, 1
      %s39 = scalar_select %p36, %s37, %s38
      %p42 = pneg %p36
      %p43 = scmp.eq.s32.totalorder %s27, 1
      %p44 = por %p42, %p43
      %p45 = scmp.ne.s32.totalorder %s37, %s40
      %p46 = scmp.eq.s32.totalorder %s27, 0
      %p47 = por %p45, %p46
      %p48 = scmp.ne.s32.totalorder %s37, %s40
      %p49 = scmp.eq.s32.totalorder %s32, 1
      %p50 = por %p48, %p49
      %p51 = scmp.ne.s32.totalorder %s40, %s41
      %p52 = scmp.eq.s32.totalorder %s32, 0
      %p53 = por %p51, %p52
      %p54 = scmp.ne.s32.totalorder %s40, %s41
      %p55 = scmp.eq.s32.totalorder %s33, 1
      %p56 = por %p54, %p55
      %p58 = scmp.ne.s32.totalorder %s41, %s57
      %p59 = scmp.eq.s32.totalorder %s33, 0
      %p60 = por %p58, %p59
      %s61 = ssub.s32 %s27, %s34
      %p62 = scmp.eq.s32.totalorder %s61, 0
      %s64 = sadd.s32 %s63, 1
      %s65 = scalar_select %p62, %s63, %s64
      %p68 = pneg %p62
      %p69 = scmp.eq.s32.totalorder %s27, 1
      %p70 = por %p68, %p69
      %p71 = scmp.ne.s32.totalorder %s63, %s66
      %p72 = scmp.eq.s32.totalorder %s27, 0
      %p73 = por %p71, %p72
      %p74 = scmp.ne.s32.totalorder %s63, %s66
      %p75 = scmp.eq.s32.totalorder %s32, 1
      %p76 = por %p74, %p75
      %p77 = scmp.ne.s32.totalorder %s66, %s67
      %p78 = scmp.eq.s32.totalorder %s32, 0
      %p79 = por %p77, %p78
      %p80 = scmp.ne.s32.totalorder %s66, %s67
      %p81 = scmp.eq.s32.totalorder %s33, 1
      %p82 = por %p80, %p81
      %p84 = scmp.ne.s32.totalorder %s67, %s83
      %p85 = scmp.eq.s32.totalorder %s33, 0
      %p86 = por %p84, %p85
      %s88 = sadd.s32 %s87, 1
      %p91 = scmp.eq.s32.totalorder %s27, 1
      %p92 = scmp.ne.s32.totalorder %s87, %s89
      %p93 = scmp.eq.s32.totalorder %s27, 0
      %p94 = por %p92, %p93
      %p95 = scmp.ne.s32.totalorder %s87, %s89
      %p96 = scmp.eq.s32.totalorder %s32, 1
      %p97 = por %p95, %p96
      %p98 = scmp.ne.s32.totalorder %s89, %s90
      %p99 = scmp.eq.s32.totalorder %s32, 0
      %p100 = por %p98, %p99
      %p101 = scmp.ne.s32.totalorder %s89, %s90
      %p102 = scmp.eq.s32.totalorder %s33, 1
      %p103 = por %p101, %p102
      %p105 = scmp.ne.s32.totalorder %s90, %s104
      %p106 = scmp.eq.s32.totalorder %s33, 0
      %p107 = por %p105, %p106
      %s109 = sadd.s32 %s108, 1
      %p112 = scmp.eq.s32.totalorder %s27, 1
      %p113 = scmp.ne.s32.totalorder %s108, %s110
      %p114 = scmp.eq.s32.totalorder %s27, 0
      %p115 = por %p113, %p114
      %p116 = scmp.ne.s32.totalorder %s108, %s110
      %p117 = scmp.eq.s32.totalorder %s32, 1
      %p118 = por %p116, %p117
      %p119 = scmp.ne.s32.totalorder %s110, %s111
      %p120 = scmp.eq.s32.totalorder %s32, 0
      %p121 = por %p119, %p120
      %p122 = scmp.ne.s32.totalorder %s110, %s111
      %p123 = scmp.eq.s32.totalorder %s33, 1
      %p124 = por %p122, %p123
      %p126 = scmp.ne.s32.totalorder %s111, %s125
      %p127 = scmp.eq.s32.totalorder %s33, 0
      %p128 = por %p126, %p127
      %s130 = sadd.s32 %s129, 1
      %p133 = scmp.eq.s32.totalorder %s27, 1
      %p134 = scmp.ne.s32.totalorder %s129, %s131
      %p135 = scmp.eq.s32.totalorder %s27, 0
      %p136 = por %p134, %p135
      %p137 = scmp.ne.s32.totalorder %s129, %s131
      %p138 = scmp.eq.s32.totalorder %s32, 1
      %p139 = por %p137, %p138
      %p140 = scmp.ne.s32.totalorder %s131, %s132
      %p141 = scmp.eq.s32.totalorder %s32, 0
      %p142 = por %p140, %p141
      %p143 = scmp.ne.s32.totalorder %s131, %s132
      %p144 = scmp.eq.s32.totalorder %s33, 1
      %p145 = por %p143, %p144
      %p147 = scmp.ne.s32.totalorder %s132, %s146
      %p148 = scmp.eq.s32.totalorder %s33, 0
      %p149 = por %p147, %p148
      %s151 = sadd.s32 %s150, 1
      %p154 = scmp.eq.s32.totalorder %s27, 1
      %p155 = scmp.ne.s32.totalorder %s150, %s152
      %p156 = scmp.eq.s32.totalorder %s27, 0
      %p157 = por %p155, %p156
      %p158 = scmp.ne.s32.totalorder %s150, %s152
      %p159 = scmp.eq.s32.totalorder %s32, 1
      %p160 = por %p158, %p159
      %p161 = scmp.ne.s32.totalorder %s152, %s153
      %p162 = scmp.eq.s32.totalorder %s32, 0
      %p163 = por %p161, %p162
      %p164 = scmp.ne.s32.totalorder %s152, %s153
      %p165 = scmp.eq.s32.totalorder %s33, 1
      %p166 = por %p164, %p165
      %p168 = scmp.ne.s32.totalorder %s153, %s167
      %p169 = scmp.eq.s32.totalorder %s33, 0
      %p170 = por %p168, %p169
      %s172 = sadd.s32 %s171, 1
      %p175 = scmp.eq.s32.totalorder %s27, 1
      %p176 = scmp.ne.s32.totalorder %s171, %s173
      %p177 = scmp.eq.s32.totalorder %s27, 0
      %p178 = por %p176, %p177
      %p179 = scmp.ne.s32.totalorder %s171, %s173
      %p180 = scmp.eq.s32.totalorder %s32, 1
      %p181 = por %p179, %p180
      %p182 = scmp.ne.s32.totalorder %s173, %s174
      %p183 = scmp.eq.s32.totalorder %s32, 0
      %p184 = por %p182, %p183
      %p185 = scmp.ne.s32.totalorder %s173, %s174
      %p186 = scmp.eq.s32.totalorder %s33, 1
      %p187 = por %p185, %p186
      %p189 = scmp.ne.s32.totalorder %s174, %s188
      %p190 = scmp.eq.s32.totalorder %s33, 0
      %p191 = por %p189, %p190
      %s193 = sadd.s32 %s192, 1
      %p196 = scmp.eq.s32.totalorder %s27, 1
      %p197 = scmp.ne.s32.totalorder %s192, %s194
      %p198 = scmp.eq.s32.totalorder %s27, 0
      %p199 = por %p197, %p198
      %p200 = scmp.ne.s32.totalorder %s192, %s194
      %p201 = scmp.eq.s32.totalorder %s32, 1
      %p202 = por %p200, %p201
      %p203 = scmp.ne.s32.totalorder %s194, %s195
      %p204 = scmp.eq.s32.totalorder %s32, 0
      %p205 = por %p203, %p204
      %p206 = scmp.ne.s32.totalorder %s194, %s195
      %p207 = scmp.eq.s32.totalorder %s33, 1
      %p208 = por %p206, %p207
      %p210 = scmp.ne.s32.totalorder %s195, %s209
      %p211 = scmp.eq.s32.totalorder %s33, 0
      %p212 = por %p210, %p211
      %s214 = sadd.s32 %s213, 1
      %p217 = scmp.eq.s32.totalorder %s27, 1
      %p218 = scmp.ne.s32.totalorder %s213, %s215
      %p219 = scmp.eq.s32.totalorder %s27, 0
      %p220 = por %p218, %p219
      %p221 = scmp.ne.s32.totalorder %s213, %s215
      %p222 = scmp.eq.s32.totalorder %s32, 1
      %p223 = por %p221, %p222
      %p224 = scmp.ne.s32.totalorder %s215, %s216
      %p225 = scmp.eq.s32.totalorder %s32, 0
      %p226 = por %p224, %p225
      %p227 = scmp.ne.s32.totalorder %s215, %s216
      %p228 = scmp.eq.s32.totalorder %s33, 1
      %p229 = por %p227, %p228
      %p231 = scmp.ne.s32.totalorder %s216, %s230
      %p232 = scmp.eq.s32.totalorder %s33, 0
      %p233 = por %p231, %p232
      %s235 = sadd.s32 %s234, 1
      %p238 = scmp.eq.s32.totalorder %s27, 1
      %p239 = scmp.ne.s32.totalorder %s234, %s236
      %p240 = scmp.eq.s32.totalorder %s27, 0
      %p241 = por %p239, %p240
      %p242 = scmp.ne.s32.totalorder %s234, %s236
      %p243 = scmp.eq.s32.totalorder %s32, 1
      %p244 = por %p242, %p243
      %p245 = scmp.ne.s32.totalorder %s236, %s237
      %p246 = scmp.eq.s32.totalorder %s32, 0
      %p247 = por %p245, %p246
      %p248 = scmp.ne.s32.totalorder %s236, %s237
      %p249 = scmp.eq.s32.totalorder %s33, 1
      %p250 = por %p248, %p249
      %p252 = scmp.ne.s32.totalorder %s237, %s251
      %p253 = scmp.eq.s32.totalorder %s33, 0
      %p254 = por %p252, %p253
      %s256 = sadd.s32 %s255, 1
      %p259 = scmp.eq.s32.totalorder %s27, 1
      %p260 = scmp.ne.s32.totalorder %s255, %s257
      %p261 = scmp.eq.s32.totalorder %s27, 0
      %p262 = por %p260, %p261
      %p263 = scmp.ne.s32.totalorder %s255, %s257
      %p264 = scmp.eq.s32.totalorder %s32, 1
      %p265 = por %p263, %p264
      %p266 = scmp.ne.s32.totalorder %s257, %s258
      %p267 = scmp.eq.s32.totalorder %s32, 0
      %p268 = por %p266, %p267
      %p269 = scmp.ne.s32.totalorder %s257, %s258
      %p270 = scmp.eq.s32.totalorder %s33, 1
      %p271 = por %p269, %p270
      %p273 = scmp.ne.s32.totalorder %s258, %s272
      %p274 = scmp.eq.s32.totalorder %s33, 0
      %p275 = por %p273, %p274
      %s277 = sadd.s32 %s276, 1
      %p280 = scmp.eq.s32.totalorder %s27, 1
      %p281 = scmp.ne.s32.totalorder %s276, %s278
      %p282 = scmp.eq.s32.totalorder %s27, 0
      %p283 = por %p281, %p282
      %p284 = scmp.ne.s32.totalorder %s276, %s278
      %p285 = scmp.eq.s32.totalorder %s32, 1
      %p286 = por %p284, %p285
      %p287 = scmp.ne.s32.totalorder %s278, %s279
      %p288 = scmp.eq.s32.totalorder %s32, 0
      %p289 = por %p287, %p288
      %p290 = scmp.ne.s32.totalorder %s278, %s279
      %p291 = scmp.eq.s32.totalorder %s33, 1
      %p292 = por %p290, %p291
      %p294 = scmp.ne.s32.totalorder %s279, %s293
      %p295 = scmp.eq.s32.totalorder %s33, 0
      %p296 = por %p294, %p295
      %s297 = ssub.s32 %s27, %s34
      %p298 = scmp.eq.s32.totalorder %s297, 0
      %s300 = sadd.s32 %s299, 1
      %s301 = scalar_select %p298, %s299, %s300
      %p304 = pneg %p298
      %p305 = scmp.eq.s32.totalorder %s27, 1
      %p306 = por %p304, %p305
      %p307 = scmp.ne.s32.totalorder %s299, %s302
      %p308 = scmp.eq.s32.totalorder %s27, 0
      %p309 = por %p307, %p308
      %p310 = scmp.ne.s32.totalorder %s299, %s302
      %p311 = scmp.eq.s32.totalorder %s32, 1
      %p312 = por %p310, %p311
      %p313 = scmp.ne.s32.totalorder %s302, %s303
      %p314 = scmp.eq.s32.totalorder %s32, 0
      %p315 = por %p313, %p314
      %p316 = scmp.ne.s32.totalorder %s302, %s303
      %p317 = scmp.eq.s32.totalorder %s33, 1
      %p318 = por %p316, %p317
      %p320 = scmp.ne.s32.totalorder %s303, %s319
      %p321 = scmp.eq.s32.totalorder %s33, 0
      %p322 = por %p320, %p321
      %p323 = scmp.le.s32.totalorder 1, %s27
      %p324 = scmp.lt.s32.totalorder %s27, 3
      %p325 = pnand %p323, %p324
      %p326 = pneg %p325
      // Predicated region
      $region9: #{cnn_net_forward.1} parent=5 // pred_check
        _
      $region10: #{cnn_net_forward.1} parent=5 // pred_check_branch
        %328 = sbr.rel (%p325) target = $region12
      $region11: #{cnn_net_forward.1} parent=5 // pred_region
        %s329 = ssub.s32 %s27, 1
        // Predicated region
        $region13: #{cnn_net_forward.1} parent=11 // pred_check
          %p330 = pneg %p100
        $region14: #{cnn_net_forward.1} parent=11 // pred_check_branch
          %332 = sbr.rel (%p330) target = $region16
        $region15: #{cnn_net_forward.1} parent=11 // pred_region
          %334 = vsyncadd [#allocation5], 0
          %s335 = sshll.u32 %s2, 4
          %s336 = int_to_ptr.hbm [resolvable:$true] %s335
          %s337 = sshll.u32 [#allocation4], 4
          %s338 = int_to_ptr.vmem [resolvable:$true] %s337
          %343 = dma.hbm_to_vmem [thread:$0]  %s336, 15360, %s338, [#allocation5], 768, 768, 48
        $region16: #{cnn_net_forward.1} parent=11 // pred_fallthru
          _
        // Predicated region
        $region17: #{cnn_net_forward.1} parent=11 // pred_check
          %p344 = pneg %p121
        $region18: #{cnn_net_forward.1} parent=11 // pred_check_branch
          %346 = sbr.rel (%p344) target = $region20
        $region19: #{cnn_net_forward.1} parent=11 // pred_region
          %348 = vsyncadd [#allocation8], 0
          %s350 = sshll.u32 %s3, 4
          %s351 = int_to_ptr.hbm [resolvable:$true] %s350
          %s352 = sshll.u32 [#allocation7], 4
          %s353 = int_to_ptr.vmem [resolvable:$true] %s352
          %355 = dma.hbm_to_vmem [thread:$0]  %s351, 96, %s353, [#allocation8]
        $region20: #{cnn_net_forward.1} parent=11 // pred_fallthru
          _
        // Predicated region
        $region21: #{cnn_net_forward.1} parent=11 // pred_check
          %p356 = pneg %p142
        $region22: #{cnn_net_forward.1} parent=11 // pred_check_branch
          %358 = sbr.rel (%p356) target = $region24
        $region23: #{cnn_net_forward.1} parent=11 // pred_region
          %360 = vsyncadd [#allocation8], 0
          %s361 = sshll.u32 %s4, 4
          %s362 = int_to_ptr.hbm [resolvable:$true] %s361
          %s363 = sshll.u32 [#allocation9], 4
          %s364 = int_to_ptr.vmem [resolvable:$true] %s363
          %369 = dma.hbm_to_vmem [thread:$0]  %s362, 122880, %s364, [#allocation8], 256, 256, 16
        $region24: #{cnn_net_forward.1} parent=11 // pred_fallthru
          _
        // Predicated region
        $region25: #{cnn_net_forward.1} parent=11 // pred_check
          %p370 = pneg %p163
        $region26: #{cnn_net_forward.1} parent=11 // pred_check_branch
          %372 = sbr.rel (%p370) target = $region28
        $region27: #{cnn_net_forward.1} parent=11 // pred_region
          %374 = vsyncadd [#allocation11], 0
          %s376 = sshll.u32 %s5, 4
          %s377 = int_to_ptr.hbm [resolvable:$true] %s376
          %s378 = sshll.u32 [#allocation10], 4
          %s379 = int_to_ptr.vmem [resolvable:$true] %s378
          %381 = dma.hbm_to_vmem [thread:$0]  %s377, 64, %s379, [#allocation11]
        $region28: #{cnn_net_forward.1} parent=11 // pred_fallthru
          _
        // Predicated region
        $region29: #{cnn_net_forward.1} parent=11 // pred_check
          %p382 = pneg %p184
        $region30: #{cnn_net_forward.1} parent=11 // pred_check_branch
          %384 = sbr.rel (%p382) target = $region32
        $region31: #{cnn_net_forward.1} parent=11 // pred_region
          %386 = vsyncadd [#allocation11], 0
          %s387 = sshll.u32 %s6, 4
          %s388 = int_to_ptr.hbm [resolvable:$true] %s387
          %s389 = sshll.u32 [#allocation12], 4
          %s390 = int_to_ptr.vmem [resolvable:$true] %s389
          %395 = dma.hbm_to_vmem [thread:$0]  %s388, 32768, %s390, [#allocation11], 128, 128, 8
        $region32: #{cnn_net_forward.1} parent=11 // pred_fallthru
          _
        // Predicated region
        $region33: #{cnn_net_forward.1} parent=11 // pred_check
          %p396 = pneg %p205
        $region34: #{cnn_net_forward.1} parent=11 // pred_check_branch
          %398 = sbr.rel (%p396) target = $region36
        $region35: #{cnn_net_forward.1} parent=11 // pred_region
          %400 = vsyncadd [#allocation14], 0
          %s402 = sshll.u32 %s7, 4
          %s403 = int_to_ptr.hbm [resolvable:$true] %s402
          %s404 = sshll.u32 [#allocation13], 4
          %s405 = int_to_ptr.vmem [resolvable:$true] %s404
          %407 = dma.hbm_to_vmem [thread:$0]  %s403, 32, %s405, [#allocation14]
        $region36: #{cnn_net_forward.1} parent=11 // pred_fallthru
          _
        // Predicated region
        $region37: #{cnn_net_forward.1} parent=11 // pred_check
          %p408 = pneg %p226
        $region38: #{cnn_net_forward.1} parent=11 // pred_check_branch
          %410 = sbr.rel (%p408) target = $region40
        $region39: #{cnn_net_forward.1} parent=11 // pred_region
          %412 = vsyncadd [#allocation14], 0
          %s413 = sshll.u32 %s8, 4
          %s414 = int_to_ptr.hbm [resolvable:$true] %s413
          %s415 = sshll.u32 [#allocation15], 4
          %s416 = int_to_ptr.vmem [resolvable:$true] %s415
          %421 = dma.hbm_to_vmem [thread:$0]  %s414, 4096, %s416, [#allocation14], 128, 128, 8
        $region40: #{cnn_net_forward.1} parent=11 // pred_fallthru
          _
        // Predicated region
        $region41: #{cnn_net_forward.1} parent=11 // pred_check
          %p422 = pneg %p247
        $region42: #{cnn_net_forward.1} parent=11 // pred_check_branch
          %424 = sbr.rel (%p422) target = $region44
        $region43: #{cnn_net_forward.1} parent=11 // pred_region
          %426 = vsyncadd [#allocation17], 0
          %s428 = sshll.u32 %s9, 4
          %s429 = int_to_ptr.hbm [resolvable:$true] %s428
          %s430 = sshll.u32 [#allocation16], 4
          %s431 = int_to_ptr.vmem [resolvable:$true] %s430
          %433 = dma.hbm_to_vmem [thread:$0]  %s429, 32, %s431, [#allocation17]
        $region44: #{cnn_net_forward.1} parent=11 // pred_fallthru
          _
        // Predicated region
        $region45: #{cnn_net_forward.1} parent=11 // pred_check
          %p434 = pneg %p268
        $region46: #{cnn_net_forward.1} parent=11 // pred_check_branch
          %436 = sbr.rel (%p434) target = $region48
        $region47: #{cnn_net_forward.1} parent=11 // pred_region
          %438 = vsyncadd [#allocation17], 0
          %s439 = sshll.u32 %s10, 4
          %s440 = int_to_ptr.hbm [resolvable:$true] %s439
          %s441 = sshll.u32 [#allocation18], 4
          %s442 = int_to_ptr.vmem [resolvable:$true] %s441
          %447 = dma.hbm_to_vmem [thread:$0]  %s440, 2048, %s442, [#allocation17], 64, 64, 4
        $region48: #{cnn_net_forward.1} parent=11 // pred_fallthru
          _
        // Predicated region
        $region49: #{cnn_net_forward.1} parent=11 // pred_check
          %p448 = pneg %p289
        $region50: #{cnn_net_forward.1} parent=11 // pred_check_branch
          %450 = sbr.rel (%p448) target = $region52
        $region51: #{cnn_net_forward.1} parent=11 // pred_region
          %452 = vsyncadd [#allocation20], 0
          %s454 = sshll.u32 %s11, 4
          %s455 = int_to_ptr.hbm [resolvable:$true] %s454
          %s456 = sshll.u32 [#allocation19], 4
          %s457 = int_to_ptr.vmem [resolvable:$true] %s456
          %459 = dma.hbm_to_vmem [thread:$0]  %s455, 16, %s457, [#allocation20]
        $region52: #{cnn_net_forward.1} parent=11 // pred_fallthru
          _
      $region12: #{cnn_net_forward.1} parent=5 // pred_fallthru
        _
      %p460 = scmp.lt.s32.totalorder %s27, 2
      // Predicated region
      $region53: #{cnn_net_forward.1} parent=5 // pred_check
        %p461 = pneg %p460
      $region54: #{cnn_net_forward.1} parent=5 // pred_check_branch
        %463 = sbr.rel (%p461) target = $region56
      $region55: #{cnn_net_forward.1} parent=5 // pred_region
        // Predicated region
        $region57: #{cnn_net_forward.1} parent=55 // pred_check
          %p464 = pneg %p47
        $region58: #{cnn_net_forward.1} parent=55 // pred_check_branch
          %466 = sbr.rel (%p464) target = $region60
        $region59: #{cnn_net_forward.1} parent=55 // pred_region
          %p467 = scmp.lt.s32.totalorder %s27, 1
          %s468 = scalar_select %p467, %s27, 1
          %s469 = smul.addr %s468, 3
          %s470 = smul.addr %s469, 8
          %s471 = scalar_lea.vmem %s0, %s470
        $region60: #{cnn_net_forward.1} parent=55 // pred_fallthru
          _
        // Predicated region
        $region61: #{cnn_net_forward.1} parent=55 // pred_check
          %p472 = pneg %p73
        $region62: #{cnn_net_forward.1} parent=55 // pred_check_branch
          %474 = sbr.rel (%p472) target = $region64
        $region63: #{cnn_net_forward.1} parent=55 // pred_region
          %p475 = scmp.lt.s32.totalorder %s27, 1
          %s476 = scalar_select %p475, %s27, 1
          %s477 = smul.addr %s476, 3
          %s478 = smul.addr %s477, 8
          %s479 = scalar_lea.vmem %s1, %s478
        $region64: #{cnn_net_forward.1} parent=55 // pred_fallthru
          _
      $region56: #{cnn_net_forward.1} parent=5 // pred_fallthru
        _
      %p480 = scmp.le.s32.totalorder 1, %s27
      %p481 = scmp.lt.s32.totalorder %s27, 3
      %p482 = pnand %p480, %p481
      %p483 = pneg %p482
      // Predicated region
      $region65: #{cnn_net_forward.1} parent=5 // pred_check
        _
      $region66: #{cnn_net_forward.1} parent=5 // pred_check_branch
        %485 = sbr.rel (%p482) target = $region68
      $region67: #{cnn_net_forward.1} parent=5 // pred_region
        %s486 = ssub.s32 %s27, 1
        // Predicated region
        $region69: #{cnn_net_forward.1} parent=67 // pred_check
          %p487 = pneg %p100
        $region70: #{cnn_net_forward.1} parent=67 // pred_check_branch
          %489 = sbr.rel (%p487) target = $region72
        $region71: #{cnn_net_forward.1} parent=67 // pred_region
          %491 = dma.done [#allocation5], 15360
        $region72: #{cnn_net_forward.1} parent=67 // pred_fallthru
          _
        // Predicated region
        $region73: #{cnn_net_forward.1} parent=67 // pred_check
          %p492 = pneg %p121
        $region74: #{cnn_net_forward.1} parent=67 // pred_check_branch
          %494 = sbr.rel (%p492) target = $region76
        $region75: #{cnn_net_forward.1} parent=67 // pred_region
          %496 = dma.done [#allocation8], 96
        $region76: #{cnn_net_forward.1} parent=67 // pred_fallthru
          _
        // Predicated region
        $region77: #{cnn_net_forward.1} parent=67 // pred_check
          %p497 = pneg %p142
        $region78: #{cnn_net_forward.1} parent=67 // pred_check_branch
          %499 = sbr.rel (%p497) target = $region80
        $region79: #{cnn_net_forward.1} parent=67 // pred_region
          %501 = dma.done [#allocation8], 122880
        $region80: #{cnn_net_forward.1} parent=67 // pred_fallthru
          _
        // Predicated region
        $region81: #{cnn_net_forward.1} parent=67 // pred_check
          %p502 = pneg %p163
        $region82: #{cnn_net_forward.1} parent=67 // pred_check_branch
          %504 = sbr.rel (%p502) target = $region84
        $region83: #{cnn_net_forward.1} parent=67 // pred_region
          %506 = dma.done [#allocation11], 64
        $region84: #{cnn_net_forward.1} parent=67 // pred_fallthru
          _
        // Predicated region
        $region85: #{cnn_net_forward.1} parent=67 // pred_check
          %p507 = pneg %p184
        $region86: #{cnn_net_forward.1} parent=67 // pred_check_branch
          %509 = sbr.rel (%p507) target = $region88
        $region87: #{cnn_net_forward.1} parent=67 // pred_region
          %511 = dma.done [#allocation11], 32768
        $region88: #{cnn_net_forward.1} parent=67 // pred_fallthru
          _
        // Predicated region
        $region89: #{cnn_net_forward.1} parent=67 // pred_check
          %p512 = pneg %p205
        $region90: #{cnn_net_forward.1} parent=67 // pred_check_branch
          %514 = sbr.rel (%p512) target = $region92
        $region91: #{cnn_net_forward.1} parent=67 // pred_region
          %516 = dma.done [#allocation14], 32
        $region92: #{cnn_net_forward.1} parent=67 // pred_fallthru
          _
        // Predicated region
        $region93: #{cnn_net_forward.1} parent=67 // pred_check
          %p517 = pneg %p226
        $region94: #{cnn_net_forward.1} parent=67 // pred_check_branch
          %519 = sbr.rel (%p517) target = $region96
        $region95: #{cnn_net_forward.1} parent=67 // pred_region
          %521 = dma.done [#allocation14], 4096
        $region96: #{cnn_net_forward.1} parent=67 // pred_fallthru
          _
        // Predicated region
        $region97: #{cnn_net_forward.1} parent=67 // pred_check
          %p522 = pneg %p247
        $region98: #{cnn_net_forward.1} parent=67 // pred_check_branch
          %524 = sbr.rel (%p522) target = $region100
        $region99: #{cnn_net_forward.1} parent=67 // pred_region
          %526 = dma.done [#allocation17], 32
        $region100: #{cnn_net_forward.1} parent=67 // pred_fallthru
          _
        // Predicated region
        $region101: #{cnn_net_forward.1} parent=67 // pred_check
          %p527 = pneg %p268
        $region102: #{cnn_net_forward.1} parent=67 // pred_check_branch
          %529 = sbr.rel (%p527) target = $region104
        $region103: #{cnn_net_forward.1} parent=67 // pred_region
          %531 = dma.done [#allocation17], 2048
        $region104: #{cnn_net_forward.1} parent=67 // pred_fallthru
          _
        // Predicated region
        $region105: #{cnn_net_forward.1} parent=67 // pred_check
          %p532 = pneg %p289
        $region106: #{cnn_net_forward.1} parent=67 // pred_check_branch
          %534 = sbr.rel (%p532) target = $region108
        $region107: #{cnn_net_forward.1} parent=67 // pred_region
          %536 = dma.done [#allocation20], 16
        $region108: #{cnn_net_forward.1} parent=67 // pred_fallthru
          _
        %p537 = scmp.lt.s32.totalorder %s32, 1
        %s538 = scalar_select %p537, %s32, 1
        %s539 = smul.addr %s538, 3
        %s540 = smul.addr %s539, 8
        %s541 = scalar_lea.vmem %s0, %s540
        %p542 = pneg %p53
        %p543 = pneg %p50
        %p544 = scmp.lt.s32.totalorder %s32, 1
        %s545 = scalar_select %p544, %s32, 1
        %s546 = smul.addr %s545, 3
        %s547 = smul.addr %s546, 8
        %s548 = scalar_lea.vmem %s1, %s547
        %p549 = pneg %p79
        %p550 = pneg %p76
        %p551 = pneg %p100
        %p552 = pneg %p97
        %p553 = pneg %p121
        %p554 = pneg %p118
        %p555 = pneg %p142
        %p556 = pneg %p139
        %p557 = pneg %p163
        %p558 = pneg %p160
        %p559 = pneg %p184
        %p560 = pneg %p181
        %p561 = pneg %p205
        %p562 = pneg %p202
        %p563 = pneg %p226
        %p564 = pneg %p223
        %p565 = pneg %p247
        %p566 = pneg %p244
        %p567 = pneg %p268
        %p568 = pneg %p265
        %p569 = pneg %p289
        %p570 = pneg %p286
        %p571 = pneg %p315
        %p572 = pneg %p312
        %s573 = sand.u32 %s302, 1
        %s574 = scalar_lea.sflag [#allocation6], %s573
        %s575 = sand.u32 %s302, 1
        %s576 = scalar_lea.vmem [#allocation21], %s575
        %p577 = scmp.lt.s32.totalorder %s32, 1
        %s578 = scalar_select %p577, %s32, 1
        %s579 = smul.addr %s578, 3
        %s580 = smul.addr %s579, 8
        %s581 = scalar_lea.vmem %s0, %s580
        %p582 = scmp.lt.s32.totalorder %s32, 1
        %s583 = scalar_select %p582, %s32, 1
        %s584 = smul.addr %s583, 3
        %s585 = smul.addr %s584, 8
        %s586 = scalar_lea.vmem %s1, %s585
        %v587 = vld [vmem:[%s581] sm:$0xff]
        %v588 = vld [vmem:[%s581 + $0x8] sm:$0xff]
        %v589 = vld [vmem:[#allocation4] sm:$0xff]
        %v590 = vld [vmem:[#allocation4 + $0x8] sm:$0xff]
        %v591 = vld [vmem:[#allocation4 + $0x10] sm:$0xff]
        %v592 = vld [vmem:[#allocation4 + $0x18] sm:$0xff]
        %v593 = vld [vmem:[#allocation4 + $0x20] sm:$0xff]
        %v594 = vld [vmem:[#allocation4 + $0x28] sm:$0xff]
        %v595 = vld [vmem:[#allocation4 + $0x30] sm:$0xff]
        %v596 = vld [vmem:[#allocation4 + $0x38] sm:$0xff]
        %v597 = vld [vmem:[#allocation4 + $0x40] sm:$0xff]
        %v598 = vld [vmem:[#allocation4 + $0x48] sm:$0xff]
        %v599 = vld [vmem:[#allocation4 + $0x50] sm:$0xff]
        %v600 = vld [vmem:[#allocation4 + $0x58] sm:$0xff]
        %v601 = vld [vmem:[#allocation4 + $0x60] sm:$0xff]
        %v602 = vld [vmem:[#allocation4 + $0x68] sm:$0xff]
        %v603 = vld [vmem:[#allocation4 + $0x70] sm:$0xff]
        %v604 = vld [vmem:[#allocation4 + $0x78] sm:$0xff]
        %v605 = vld [vmem:[#allocation4 + $0x80] sm:$0xff]
        %v606 = vld [vmem:[#allocation4 + $0x88] sm:$0xff]
        %v607 = vld [vmem:[#allocation4 + $0x90] sm:$0xf]
        %v608 = vld [vmem:[#allocation4 + $0x98] sm:$0xf]
        %v609 = vld [vmem:[#allocation4 + $0xa0] sm:$0xf]
        %v610 = vld [vmem:[#allocation4 + $0xa8] sm:$0xf]
        %v611 = vld [vmem:[#allocation4 + $0xb0] sm:$0xf]
        %v612 = vld [vmem:[#allocation4 + $0xb8] sm:$0xf]
        %v613 = vld [vmem:[%s586] sm:$0xff]
        %v614 = vld [vmem:[%s586 + $0x8] sm:$0xff]
        %s615 = scalar_lea.vmem [#allocation4], 192
        %v616 = vld [vmem:[%s615] sm:$0xff]
        %v617 = vld [vmem:[%s615 + $0x8] sm:$0xff]
        %v618 = vld [vmem:[%s615 + $0x10] sm:$0xff]
        %v619 = vld [vmem:[%s615 + $0x18] sm:$0xff]
        %v620 = vld [vmem:[%s615 + $0x20] sm:$0xff]
        %v621 = vld [vmem:[%s615 + $0x28] sm:$0xff]
        %v622 = vld [vmem:[%s615 + $0x30] sm:$0xff]
        %v623 = vld [vmem:[%s615 + $0x38] sm:$0xff]
        %v624 = vld [vmem:[%s615 + $0x40] sm:$0xff]
        %v625 = vld [vmem:[%s615 + $0x48] sm:$0xff]
        %v626 = vld [vmem:[%s615 + $0x50] sm:$0xff]
        %v627 = vld [vmem:[%s615 + $0x58] sm:$0xff]
        %v628 = vld [vmem:[%s615 + $0x60] sm:$0xff]
        %v629 = vld [vmem:[%s615 + $0x68] sm:$0xff]
        %v630 = vld [vmem:[%s615 + $0x70] sm:$0xff]
        %v631 = vld [vmem:[%s615 + $0x78] sm:$0xff]
        %v632 = vld [vmem:[%s615 + $0x80] sm:$0xff]
        %v633 = vld [vmem:[%s615 + $0x88] sm:$0xff]
        %v634 = vld [vmem:[%s615 + $0x90] sm:$0xf]
        %v635 = vld [vmem:[%s615 + $0x98] sm:$0xf]
        %v636 = vld [vmem:[%s615 + $0xa0] sm:$0xf]
        %v637 = vld [vmem:[%s615 + $0xa8] sm:$0xf]
        %v638 = vld [vmem:[%s615 + $0xb0] sm:$0xf]
        %v639 = vld [vmem:[%s615 + $0xb8] sm:$0xf]
        %vm640 = vcmask 228352
        %v642 = vsel %vm640, %v613, 0
        %v645 = vsel %vm640, %v614, 0
        %vm647 = vcmask 1043456
        %v649 = vsel %vm647, %v634, 0
        %v652 = vsel %vm647, %v635, 0
        %v655 = vsel %vm647, %v636, 0
        %v658 = vsel %vm647, %v637, 0
        %v661 = vsel %vm647, %v638, 0
        %v664 = vsel %vm647, %v639, 0
        %666 = vmatpush.msra.mxu0 0.0
        %667 = vmatpush.msra.mxu0 0.0
        %668 = vmatpush.msra.mxu0 0.0
        %669 = vmatpush.msra.mxu0 0.0
        %670 = vmatpush.msra.mxu0 0.0
        %671 = vmatpush.msra.mxu0 0.0
        %672 = vmatpush.msra.mxu0 0.0
        %673 = vmatpush.msra.mxu0 0.0
        %674 = vmatpush.msra.mxu0 0.0
        %675 = vmatpush.msra.mxu0 0.0
        %676 = vmatpush.msra.mxu0 0.0
        %677 = vmatpush.msra.mxu0 0.0
        %678 = vmatpush.msra.mxu0 %v649
        %679 = vmatpush.msra.mxu0 %v628
        %680 = vmatpush.msra.mxu0 %v622
        %681 = vmatpush.msra.mxu0 %v616
        %682 = vmatmul.f32.gmra.mxu0 %v642
        %v683 = vpop.f32.mrf.mxu0
        %v684 = vadd.f32 0.0, %v683
        %685 = vmatmul.f32.gmra.mxu0 %v645
        %v686 = vpop.f32.mrf.mxu0
        %v687 = vadd.f32 0.0, %v686
        %688 = vdwg.mxu0
        %689 = vmatpush.msra.mxu0 0.0
        %690 = vmatpush.msra.mxu0 0.0
        %691 = vmatpush.msra.mxu0 0.0
        %692 = vmatpush.msra.mxu0 0.0
        %693 = vmatpush.msra.mxu0 0.0
        %694 = vmatpush.msra.mxu0 0.0
        %695 = vmatpush.msra.mxu0 0.0
        %696 = vmatpush.msra.mxu0 0.0
        %697 = vmatpush.msra.mxu0 0.0
        %698 = vmatpush.msra.mxu0 0.0
        %699 = vmatpush.msra.mxu0 0.0
        %700 = vmatpush.msra.mxu0 0.0
        %701 = vmatpush.msra.mxu0 %v652
        %702 = vmatpush.msra.mxu0 %v629
        %703 = vmatpush.msra.mxu0 %v623
        %704 = vmatpush.msra.mxu0 %v617
        %705 = vmatmul.f32.gmra.mxu0 %v642
        %v706 = vpop.f32.mrf.mxu0
        %v707 = vadd.f32 0.0, %v706
        %708 = vmatmul.f32.gmra.mxu0 %v645
        %v709 = vpop.f32.mrf.mxu0
        %v710 = vadd.f32 0.0, %v709
        %711 = vdwg.mxu0
        %712 = vmatpush.msra.mxu0 0.0
        %713 = vmatpush.msra.mxu0 0.0
        %714 = vmatpush.msra.mxu0 0.0
        %715 = vmatpush.msra.mxu0 0.0
        %716 = vmatpush.msra.mxu0 0.0
        %717 = vmatpush.msra.mxu0 0.0
        %718 = vmatpush.msra.mxu0 0.0
        %719 = vmatpush.msra.mxu0 0.0
        %720 = vmatpush.msra.mxu0 0.0
        %721 = vmatpush.msra.mxu0 0.0
        %722 = vmatpush.msra.mxu0 0.0
        %723 = vmatpush.msra.mxu0 0.0
        %724 = vmatpush.msra.mxu0 %v655
        %725 = vmatpush.msra.mxu0 %v630
        %726 = vmatpush.msra.mxu0 %v624
        %727 = vmatpush.msra.mxu0 %v618
        %728 = vmatmul.f32.gmra.mxu0 %v642
        %v729 = vpop.f32.mrf.mxu0
        %v730 = vadd.f32 0.0, %v729
        %731 = vmatmul.f32.gmra.mxu0 %v645
        %v732 = vpop.f32.mrf.mxu0
        %v733 = vadd.f32 0.0, %v732
        %734 = vdwg.mxu0
        %735 = vmatpush.msra.mxu0 0.0
        %736 = vmatpush.msra.mxu0 0.0
        %737 = vmatpush.msra.mxu0 0.0
        %738 = vmatpush.msra.mxu0 0.0
        %739 = vmatpush.msra.mxu0 0.0
        %740 = vmatpush.msra.mxu0 0.0
        %741 = vmatpush.msra.mxu0 0.0
        %742 = vmatpush.msra.mxu0 0.0
        %743 = vmatpush.msra.mxu0 0.0
        %744 = vmatpush.msra.mxu0 0.0
        %745 = vmatpush.msra.mxu0 0.0
        %746 = vmatpush.msra.mxu0 0.0
        %747 = vmatpush.msra.mxu0 %v658
        %748 = vmatpush.msra.mxu0 %v631
        %749 = vmatpush.msra.mxu0 %v625
        %750 = vmatpush.msra.mxu0 %v619
        %751 = vmatmul.f32.gmra.mxu0 %v642
        %v752 = vpop.f32.mrf.mxu0
        %v753 = vadd.f32 0.0, %v752
        %754 = vmatmul.f32.gmra.mxu0 %v645
        %v755 = vpop.f32.mrf.mxu0
        %v756 = vadd.f32 0.0, %v755
        %757 = vdwg.mxu0
        %758 = vmatpush.msra.mxu0 0.0
        %759 = vmatpush.msra.mxu0 0.0
        %760 = vmatpush.msra.mxu0 0.0
        %761 = vmatpush.msra.mxu0 0.0
        %762 = vmatpush.msra.mxu0 0.0
        %763 = vmatpush.msra.mxu0 0.0
        %764 = vmatpush.msra.mxu0 0.0
        %765 = vmatpush.msra.mxu0 0.0
        %766 = vmatpush.msra.mxu0 0.0
        %767 = vmatpush.msra.mxu0 0.0
        %768 = vmatpush.msra.mxu0 0.0
        %769 = vmatpush.msra.mxu0 0.0
        %770 = vmatpush.msra.mxu0 %v661
        %771 = vmatpush.msra.mxu0 %v632
        %772 = vmatpush.msra.mxu0 %v626
        %773 = vmatpush.msra.mxu0 %v620
        %774 = vmatmul.f32.gmra.mxu0 %v642
        %v775 = vpop.f32.mrf.mxu0
        %v776 = vadd.f32 0.0, %v775
        %777 = vmatmul.f32.gmra.mxu0 %v645
        %v778 = vpop.f32.mrf.mxu0
        %v779 = vadd.f32 0.0, %v778
        %780 = vdwg.mxu0
        %781 = vmatpush.msra.mxu0 0.0
        %782 = vmatpush.msra.mxu0 0.0
        %783 = vmatpush.msra.mxu0 0.0
        %784 = vmatpush.msra.mxu0 0.0
        %785 = vmatpush.msra.mxu0 0.0
        %786 = vmatpush.msra.mxu0 0.0
        %787 = vmatpush.msra.mxu0 0.0
        %788 = vmatpush.msra.mxu0 0.0
        %789 = vmatpush.msra.mxu0 0.0
        %790 = vmatpush.msra.mxu0 0.0
        %791 = vmatpush.msra.mxu0 0.0
        %792 = vmatpush.msra.mxu0 0.0
        %793 = vmatpush.msra.mxu0 %v664
        %794 = vmatpush.msra.mxu0 %v633
        %795 = vmatpush.msra.mxu0 %v627
        %796 = vmatpush.msra.mxu0 %v621
        %797 = vmatmul.f32.gmra.mxu0 %v642
        %v798 = vpop.f32.mrf.mxu0
        %v799 = vadd.f32 0.0, %v798
        %800 = vmatmul.f32.gmra.mxu0 %v645
        %v801 = vpop.f32.mrf.mxu0
        %v802 = vadd.f32 0.0, %v801
        %803 = vdwg.mxu0
        %v805 = vsel %vm640, %v587, 0
        %v808 = vsel %vm640, %v588, 0
        %v811 = vsel %vm647, %v607, 0
        %v814 = vsel %vm647, %v608, 0
        %v817 = vsel %vm647, %v609, 0
        %v820 = vsel %vm647, %v610, 0
        %v823 = vsel %vm647, %v611, 0
        %v826 = vsel %vm647, %v612, 0
        %828 = vmatpush.msra.mxu0 0.0
        %829 = vmatpush.msra.mxu0 0.0
        %830 = vmatpush.msra.mxu0 0.0
        %831 = vmatpush.msra.mxu0 0.0
        %832 = vmatpush.msra.mxu0 0.0
        %833 = vmatpush.msra.mxu0 0.0
        %834 = vmatpush.msra.mxu0 0.0
        %835 = vmatpush.msra.mxu0 0.0
        %836 = vmatpush.msra.mxu0 0.0
        %837 = vmatpush.msra.mxu0 0.0
        %838 = vmatpush.msra.mxu0 0.0
        %839 = vmatpush.msra.mxu0 0.0
        %840 = vmatpush.msra.mxu0 %v811
        %841 = vmatpush.msra.mxu0 %v601
        %842 = vmatpush.msra.mxu0 %v595
        %843 = vmatpush.msra.mxu0 %v589
        %844 = vmatmul.f32.gmra.mxu0 %v805
        %v845 = vpop.f32.mrf.mxu0
        %v846 = vadd.f32 %v684, %v845
        %847 = vmatmul.f32.gmra.mxu0 %v808
        %v848 = vpop.f32.mrf.mxu0
        %v849 = vadd.f32 %v687, %v848
        %850 = vdwg.mxu0
        %851 = vmatpush.msra.mxu0 0.0
        %852 = vmatpush.msra.mxu0 0.0
        %853 = vmatpush.msra.mxu0 0.0
        %854 = vmatpush.msra.mxu0 0.0
        %855 = vmatpush.msra.mxu0 0.0
        %856 = vmatpush.msra.mxu0 0.0
        %857 = vmatpush.msra.mxu0 0.0
        %858 = vmatpush.msra.mxu0 0.0
        %859 = vmatpush.msra.mxu0 0.0
        %860 = vmatpush.msra.mxu0 0.0
        %861 = vmatpush.msra.mxu0 0.0
        %862 = vmatpush.msra.mxu0 0.0
        %863 = vmatpush.msra.mxu0 %v814
        %864 = vmatpush.msra.mxu0 %v602
        %865 = vmatpush.msra.mxu0 %v596
        %866 = vmatpush.msra.mxu0 %v590
        %867 = vmatmul.f32.gmra.mxu0 %v805
        %v868 = vpop.f32.mrf.mxu0
        %v869 = vadd.f32 %v707, %v868
        %870 = vmatmul.f32.gmra.mxu0 %v808
        %v871 = vpop.f32.mrf.mxu0
        %v872 = vadd.f32 %v710, %v871
        %873 = vdwg.mxu0
        %874 = vmatpush.msra.mxu0 0.0
        %875 = vmatpush.msra.mxu0 0.0
        %876 = vmatpush.msra.mxu0 0.0
        %877 = vmatpush.msra.mxu0 0.0
        %878 = vmatpush.msra.mxu0 0.0
        %879 = vmatpush.msra.mxu0 0.0
        %880 = vmatpush.msra.mxu0 0.0
        %881 = vmatpush.msra.mxu0 0.0
        %882 = vmatpush.msra.mxu0 0.0
        %883 = vmatpush.msra.mxu0 0.0
        %884 = vmatpush.msra.mxu0 0.0
        %885 = vmatpush.msra.mxu0 0.0
        %886 = vmatpush.msra.mxu0 %v817
        %887 = vmatpush.msra.mxu0 %v603
        %888 = vmatpush.msra.mxu0 %v597
        %889 = vmatpush.msra.mxu0 %v591
        %890 = vmatmul.f32.gmra.mxu0 %v805
        %v891 = vpop.f32.mrf.mxu0
        %v892 = vadd.f32 %v730, %v891
        %893 = vmatmul.f32.gmra.mxu0 %v808
        %v894 = vpop.f32.mrf.mxu0
        %v895 = vadd.f32 %v733, %v894
        %896 = vdwg.mxu0
        %897 = vmatpush.msra.mxu0 0.0
        %898 = vmatpush.msra.mxu0 0.0
        %899 = vmatpush.msra.mxu0 0.0
        %900 = vmatpush.msra.mxu0 0.0
        %901 = vmatpush.msra.mxu0 0.0
        %902 = vmatpush.msra.mxu0 0.0
        %903 = vmatpush.msra.mxu0 0.0
        %904 = vmatpush.msra.mxu0 0.0
        %905 = vmatpush.msra.mxu0 0.0
        %906 = vmatpush.msra.mxu0 0.0
        %907 = vmatpush.msra.mxu0 0.0
        %908 = vmatpush.msra.mxu0 0.0
        %909 = vmatpush.msra.mxu0 %v820
        %910 = vmatpush.msra.mxu0 %v604
        %911 = vmatpush.msra.mxu0 %v598
        %912 = vmatpush.msra.mxu0 %v592
        %913 = vmatmul.f32.gmra.mxu0 %v805
        %v914 = vpop.f32.mrf.mxu0
        %v915 = vadd.f32 %v753, %v914
        %916 = vmatmul.f32.gmra.mxu0 %v808
        %v917 = vpop.f32.mrf.mxu0
        %v918 = vadd.f32 %v756, %v917
        %919 = vdwg.mxu0
        %920 = vmatpush.msra.mxu0 0.0
        %921 = vmatpush.msra.mxu0 0.0
        %922 = vmatpush.msra.mxu0 0.0
        %923 = vmatpush.msra.mxu0 0.0
        %924 = vmatpush.msra.mxu0 0.0
        %925 = vmatpush.msra.mxu0 0.0
        %926 = vmatpush.msra.mxu0 0.0
        %927 = vmatpush.msra.mxu0 0.0
        %928 = vmatpush.msra.mxu0 0.0
        %929 = vmatpush.msra.mxu0 0.0
        %930 = vmatpush.msra.mxu0 0.0
        %931 = vmatpush.msra.mxu0 0.0
        %932 = vmatpush.msra.mxu0 %v823
        %933 = vmatpush.msra.mxu0 %v605
        %934 = vmatpush.msra.mxu0 %v599
        %935 = vmatpush.msra.mxu0 %v593
        %936 = vmatmul.f32.gmra.mxu0 %v805
        %v937 = vpop.f32.mrf.mxu0
        %v938 = vadd.f32 %v776, %v937
        %939 = vmatmul.f32.gmra.mxu0 %v808
        %v940 = vpop.f32.mrf.mxu0
        %v941 = vadd.f32 %v779, %v940
        %942 = vdwg.mxu0
        %943 = vmatpush.msra.mxu0 0.0
        %944 = vmatpush.msra.mxu0 0.0
        %945 = vmatpush.msra.mxu0 0.0
        %946 = vmatpush.msra.mxu0 0.0
        %947 = vmatpush.msra.mxu0 0.0
        %948 = vmatpush.msra.mxu0 0.0
        %949 = vmatpush.msra.mxu0 0.0
        %950 = vmatpush.msra.mxu0 0.0
        %951 = vmatpush.msra.mxu0 0.0
        %952 = vmatpush.msra.mxu0 0.0
        %953 = vmatpush.msra.mxu0 0.0
        %954 = vmatpush.msra.mxu0 0.0
        %955 = vmatpush.msra.mxu0 %v826
        %956 = vmatpush.msra.mxu0 %v606
        %957 = vmatpush.msra.mxu0 %v600
        %958 = vmatpush.msra.mxu0 %v594
        %959 = vmatmul.f32.gmra.mxu0 %v805
        %v960 = vpop.f32.mrf.mxu0
        %v961 = vadd.f32 %v799, %v960
        %962 = vmatmul.f32.gmra.mxu0 %v808
        %v963 = vpop.f32.mrf.mxu0
        %v964 = vadd.f32 %v802, %v963
        %965 = vdwg.mxu0
        %v966 = vld [vmem:[%s581 + $0x1] sm:$0xff]
        %v967 = vld [vmem:[%s581 + $0x9] sm:$0xff]
        %v969 = vsel %vm640, %v966, 0
        %v972 = vsel %vm640, %v967, 0
        %974 = vmatpush.msra.mxu0 0.0
        %975 = vmatpush.msra.mxu0 0.0
        %976 = vmatpush.msra.mxu0 0.0
        %977 = vmatpush.msra.mxu0 0.0
        %978 = vmatpush.msra.mxu0 0.0
        %979 = vmatpush.msra.mxu0 0.0
        %980 = vmatpush.msra.mxu0 0.0
        %981 = vmatpush.msra.mxu0 0.0
        %982 = vmatpush.msra.mxu0 0.0
        %983 = vmatpush.msra.mxu0 0.0
        %984 = vmatpush.msra.mxu0 0.0
        %985 = vmatpush.msra.mxu0 0.0
        %986 = vmatpush.msra.mxu0 %v649
        %987 = vmatpush.msra.mxu0 %v628
        %988 = vmatpush.msra.mxu0 %v622
        %989 = vmatpush.msra.mxu0 %v616
        %990 = vmatmul.f32.gmra.mxu0 %v969
        %v991 = vpop.f32.mrf.mxu0
        %v992 = vadd.f32 0.0, %v991
        %993 = vmatmul.f32.gmra.mxu0 %v972
        %v994 = vpop.f32.mrf.mxu0
        %v995 = vadd.f32 0.0, %v994
        %996 = vdwg.mxu0
        %997 = vmatpush.msra.mxu0 0.0
        %998 = vmatpush.msra.mxu0 0.0
        %999 = vmatpush.msra.mxu0 0.0
        %1000 = vmatpush.msra.mxu0 0.0
        %1001 = vmatpush.msra.mxu0 0.0
        %1002 = vmatpush.msra.mxu0 0.0
        %1003 = vmatpush.msra.mxu0 0.0
        %1004 = vmatpush.msra.mxu0 0.0
        %1005 = vmatpush.msra.mxu0 0.0
        %1006 = vmatpush.msra.mxu0 0.0
        %1007 = vmatpush.msra.mxu0 0.0
        %1008 = vmatpush.msra.mxu0 0.0
        %1009 = vmatpush.msra.mxu0 %v652
        %1010 = vmatpush.msra.mxu0 %v629
        %1011 = vmatpush.msra.mxu0 %v623
        %1012 = vmatpush.msra.mxu0 %v617
        %1013 = vmatmul.f32.gmra.mxu0 %v969
        %v1014 = vpop.f32.mrf.mxu0
        %v1015 = vadd.f32 0.0, %v1014
        %1016 = vmatmul.f32.gmra.mxu0 %v972
        %v1017 = vpop.f32.mrf.mxu0
        %v1018 = vadd.f32 0.0, %v1017
        %1019 = vdwg.mxu0
        %1020 = vmatpush.msra.mxu0 0.0
        %1021 = vmatpush.msra.mxu0 0.0
        %1022 = vmatpush.msra.mxu0 0.0
        %1023 = vmatpush.msra.mxu0 0.0
        %1024 = vmatpush.msra.mxu0 0.0
        %1025 = vmatpush.msra.mxu0 0.0
        %1026 = vmatpush.msra.mxu0 0.0
        %1027 = vmatpush.msra.mxu0 0.0
        %1028 = vmatpush.msra.mxu0 0.0
        %1029 = vmatpush.msra.mxu0 0.0
        %1030 = vmatpush.msra.mxu0 0.0
        %1031 = vmatpush.msra.mxu0 0.0
        %1032 = vmatpush.msra.mxu0 %v655
        %1033 = vmatpush.msra.mxu0 %v630
        %1034 = vmatpush.msra.mxu0 %v624
        %1035 = vmatpush.msra.mxu0 %v618
        %1036 = vmatmul.f32.gmra.mxu0 %v969
        %v1037 = vpop.f32.mrf.mxu0
        %v1038 = vadd.f32 0.0, %v1037
        %1039 = vmatmul.f32.gmra.mxu0 %v972
        %v1040 = vpop.f32.mrf.mxu0
        %v1041 = vadd.f32 0.0, %v1040
        %1042 = vdwg.mxu0
        %1043 = vmatpush.msra.mxu0 0.0
        %1044 = vmatpush.msra.mxu0 0.0
        %1045 = vmatpush.msra.mxu0 0.0
        %1046 = vmatpush.msra.mxu0 0.0
        %1047 = vmatpush.msra.mxu0 0.0
        %1048 = vmatpush.msra.mxu0 0.0
        %1049 = vmatpush.msra.mxu0 0.0
        %1050 = vmatpush.msra.mxu0 0.0
        %1051 = vmatpush.msra.mxu0 0.0
        %1052 = vmatpush.msra.mxu0 0.0
        %1053 = vmatpush.msra.mxu0 0.0
        %1054 = vmatpush.msra.mxu0 0.0
        %1055 = vmatpush.msra.mxu0 %v658
        %1056 = vmatpush.msra.mxu0 %v631
        %1057 = vmatpush.msra.mxu0 %v625
        %1058 = vmatpush.msra.mxu0 %v619
        %1059 = vmatmul.f32.gmra.mxu0 %v969
        %v1060 = vpop.f32.mrf.mxu0
        %v1061 = vadd.f32 0.0, %v1060
        %1062 = vmatmul.f32.gmra.mxu0 %v972
        %v1063 = vpop.f32.mrf.mxu0
        %v1064 = vadd.f32 0.0, %v1063
        %1065 = vdwg.mxu0
        %1066 = vmatpush.msra.mxu0 0.0
        %1067 = vmatpush.msra.mxu0 0.0
        %1068 = vmatpush.msra.mxu0 0.0
        %1069 = vmatpush.msra.mxu0 0.0
        %1070 = vmatpush.msra.mxu0 0.0
        %1071 = vmatpush.msra.mxu0 0.0
        %1072 = vmatpush.msra.mxu0 0.0
        %1073 = vmatpush.msra.mxu0 0.0
        %1074 = vmatpush.msra.mxu0 0.0
        %1075 = vmatpush.msra.mxu0 0.0
        %1076 = vmatpush.msra.mxu0 0.0
        %1077 = vmatpush.msra.mxu0 0.0
        %1078 = vmatpush.msra.mxu0 %v661
        %1079 = vmatpush.msra.mxu0 %v632
        %1080 = vmatpush.msra.mxu0 %v626
        %1081 = vmatpush.msra.mxu0 %v620
        %1082 = vmatmul.f32.gmra.mxu0 %v969
        %v1083 = vpop.f32.mrf.mxu0
        %v1084 = vadd.f32 0.0, %v1083
        %1085 = vmatmul.f32.gmra.mxu0 %v972
        %v1086 = vpop.f32.mrf.mxu0
        %v1087 = vadd.f32 0.0, %v1086
        %1088 = vdwg.mxu0
        %1089 = vmatpush.msra.mxu0 0.0
        %1090 = vmatpush.msra.mxu0 0.0
        %1091 = vmatpush.msra.mxu0 0.0
        %1092 = vmatpush.msra.mxu0 0.0
        %1093 = vmatpush.msra.mxu0 0.0
        %1094 = vmatpush.msra.mxu0 0.0
        %1095 = vmatpush.msra.mxu0 0.0
        %1096 = vmatpush.msra.mxu0 0.0
        %1097 = vmatpush.msra.mxu0 0.0
        %1098 = vmatpush.msra.mxu0 0.0
        %1099 = vmatpush.msra.mxu0 0.0
        %1100 = vmatpush.msra.mxu0 0.0
        %1101 = vmatpush.msra.mxu0 %v664
        %1102 = vmatpush.msra.mxu0 %v633
        %1103 = vmatpush.msra.mxu0 %v627
        %1104 = vmatpush.msra.mxu0 %v621
        %1105 = vmatmul.f32.gmra.mxu0 %v969
        %v1106 = vpop.f32.mrf.mxu0
        %v1107 = vadd.f32 0.0, %v1106
        %1108 = vmatmul.f32.gmra.mxu0 %v972
        %v1109 = vpop.f32.mrf.mxu0
        %v1110 = vadd.f32 0.0, %v1109
        %1111 = vdwg.mxu0
        %1112 = vmatpush.msra.mxu0 0.0
        %1113 = vmatpush.msra.mxu0 0.0
        %1114 = vmatpush.msra.mxu0 0.0
        %1115 = vmatpush.msra.mxu0 0.0
        %1116 = vmatpush.msra.mxu0 0.0
        %1117 = vmatpush.msra.mxu0 0.0
        %1118 = vmatpush.msra.mxu0 0.0
        %1119 = vmatpush.msra.mxu0 0.0
        %1120 = vmatpush.msra.mxu0 0.0
        %1121 = vmatpush.msra.mxu0 0.0
        %1122 = vmatpush.msra.mxu0 0.0
        %1123 = vmatpush.msra.mxu0 0.0
        %1124 = vmatpush.msra.mxu0 %v811
        %1125 = vmatpush.msra.mxu0 %v601
        %1126 = vmatpush.msra.mxu0 %v595
        %1127 = vmatpush.msra.mxu0 %v589
        %1128 = vmatmul.f32.gmra.mxu0 %v642
        %v1129 = vpop.f32.mrf.mxu0
        %v1130 = vadd.f32 %v992, %v1129
        %1131 = vmatmul.f32.gmra.mxu0 %v645
        %v1132 = vpop.f32.mrf.mxu0
        %v1133 = vadd.f32 %v995, %v1132
        %1134 = vdwg.mxu0
        %1135 = vmatpush.msra.mxu0 0.0
        %1136 = vmatpush.msra.mxu0 0.0
        %1137 = vmatpush.msra.mxu0 0.0
        %1138 = vmatpush.msra.mxu0 0.0
        %1139 = vmatpush.msra.mxu0 0.0
        %1140 = vmatpush.msra.mxu0 0.0
        %1141 = vmatpush.msra.mxu0 0.0
        %1142 = vmatpush.msra.mxu0 0.0
        %1143 = vmatpush.msra.mxu0 0.0
        %1144 = vmatpush.msra.mxu0 0.0
        %1145 = vmatpush.msra.mxu0 0.0
        %1146 = vmatpush.msra.mxu0 0.0
        %1147 = vmatpush.msra.mxu0 %v814
        %1148 = vmatpush.msra.mxu0 %v602
        %1149 = vmatpush.msra.mxu0 %v596
        %1150 = vmatpush.msra.mxu0 %v590
        %1151 = vmatmul.f32.gmra.mxu0 %v642
        %v1152 = vpop.f32.mrf.mxu0
        %v1153 = vadd.f32 %v1015, %v1152
        %1154 = vmatmul.f32.gmra.mxu0 %v645
        %v1155 = vpop.f32.mrf.mxu0
        %v1156 = vadd.f32 %v1018, %v1155
        %1157 = vdwg.mxu0
        %1158 = vmatpush.msra.mxu0 0.0
        %1159 = vmatpush.msra.mxu0 0.0
        %1160 = vmatpush.msra.mxu0 0.0
        %1161 = vmatpush.msra.mxu0 0.0
        %1162 = vmatpush.msra.mxu0 0.0
        %1163 = vmatpush.msra.mxu0 0.0
        %1164 = vmatpush.msra.mxu0 0.0
        %1165 = vmatpush.msra.mxu0 0.0
        %1166 = vmatpush.msra.mxu0 0.0
        %1167 = vmatpush.msra.mxu0 0.0
        %1168 = vmatpush.msra.mxu0 0.0
        %1169 = vmatpush.msra.mxu0 0.0
        %1170 = vmatpush.msra.mxu0 %v817
        %1171 = vmatpush.msra.mxu0 %v603
        %1172 = vmatpush.msra.mxu0 %v597
        %1173 = vmatpush.msra.mxu0 %v591
        %1174 = vmatmul.f32.gmra.mxu0 %v642
        %v1175 = vpop.f32.mrf.mxu0
        %v1176 = vadd.f32 %v1038, %v1175
        %1177 = vmatmul.f32.gmra.mxu0 %v645
        %v1178 = vpop.f32.mrf.mxu0
        %v1179 = vadd.f32 %v1041, %v1178
        %1180 = vdwg.mxu0
        %1181 = vmatpush.msra.mxu0 0.0
        %1182 = vmatpush.msra.mxu0 0.0
        %1183 = vmatpush.msra.mxu0 0.0
        %1184 = vmatpush.msra.mxu0 0.0
        %1185 = vmatpush.msra.mxu0 0.0
        %1186 = vmatpush.msra.mxu0 0.0
        %1187 = vmatpush.msra.mxu0 0.0
        %1188 = vmatpush.msra.mxu0 0.0
        %1189 = vmatpush.msra.mxu0 0.0
        %1190 = vmatpush.msra.mxu0 0.0
        %1191 = vmatpush.msra.mxu0 0.0
        %1192 = vmatpush.msra.mxu0 0.0
        %1193 = vmatpush.msra.mxu0 %v820
        %1194 = vmatpush.msra.mxu0 %v604
        %1195 = vmatpush.msra.mxu0 %v598
        %1196 = vmatpush.msra.mxu0 %v592
        %1197 = vmatmul.f32.gmra.mxu0 %v642
        %v1198 = vpop.f32.mrf.mxu0
        %v1199 = vadd.f32 %v1061, %v1198
        %1200 = vmatmul.f32.gmra.mxu0 %v645
        %v1201 = vpop.f32.mrf.mxu0
        %v1202 = vadd.f32 %v1064, %v1201
        %1203 = vdwg.mxu0
        %1204 = vmatpush.msra.mxu0 0.0
        %1205 = vmatpush.msra.mxu0 0.0
        %1206 = vmatpush.msra.mxu0 0.0
        %1207 = vmatpush.msra.mxu0 0.0
        %1208 = vmatpush.msra.mxu0 0.0
        %1209 = vmatpush.msra.mxu0 0.0
        %1210 = vmatpush.msra.mxu0 0.0
        %1211 = vmatpush.msra.mxu0 0.0
        %1212 = vmatpush.msra.mxu0 0.0
        %1213 = vmatpush.msra.mxu0 0.0
        %1214 = vmatpush.msra.mxu0 0.0
        %1215 = vmatpush.msra.mxu0 0.0
        %1216 = vmatpush.msra.mxu0 %v823
        %1217 = vmatpush.msra.mxu0 %v605
        %1218 = vmatpush.msra.mxu0 %v599
        %1219 = vmatpush.msra.mxu0 %v593
        %1220 = vmatmul.f32.gmra.mxu0 %v642
        %v1221 = vpop.f32.mrf.mxu0
        %v1222 = vadd.f32 %v1084, %v1221
        %1223 = vmatmul.f32.gmra.mxu0 %v645
        %v1224 = vpop.f32.mrf.mxu0
        %v1225 = vadd.f32 %v1087, %v1224
        %1226 = vdwg.mxu0
        %1227 = vmatpush.msra.mxu0 0.0
        %1228 = vmatpush.msra.mxu0 0.0
        %1229 = vmatpush.msra.mxu0 0.0
        %1230 = vmatpush.msra.mxu0 0.0
        %1231 = vmatpush.msra.mxu0 0.0
        %1232 = vmatpush.msra.mxu0 0.0
        %1233 = vmatpush.msra.mxu0 0.0
        %1234 = vmatpush.msra.mxu0 0.0
        %1235 = vmatpush.msra.mxu0 0.0
        %1236 = vmatpush.msra.mxu0 0.0
        %1237 = vmatpush.msra.mxu0 0.0
        %1238 = vmatpush.msra.mxu0 0.0
        %1239 = vmatpush.msra.mxu0 %v826
        %1240 = vmatpush.msra.mxu0 %v606
        %1241 = vmatpush.msra.mxu0 %v600
        %1242 = vmatpush.msra.mxu0 %v594
        %1243 = vmatmul.f32.gmra.mxu0 %v642
        %v1244 = vpop.f32.mrf.mxu0
        %v1245 = vadd.f32 %v1107, %v1244
        %1246 = vmatmul.f32.gmra.mxu0 %v645
        %v1247 = vpop.f32.mrf.mxu0
        %v1248 = vadd.f32 %v1110, %v1247
        %1249 = vdwg.mxu0
        %s1250 = scalar_lea.vmem [#allocation4], 384
        %v1251 = vld [vmem:[%s1250] sm:$0xff]
        %v1252 = vld [vmem:[%s1250 + $0x8] sm:$0xff]
        %v1253 = vld [vmem:[%s1250 + $0x10] sm:$0xff]
        %v1254 = vld [vmem:[%s1250 + $0x18] sm:$0xff]
        %v1255 = vld [vmem:[%s1250 + $0x20] sm:$0xff]
        %v1256 = vld [vmem:[%s1250 + $0x28] sm:$0xff]
        %v1257 = vld [vmem:[%s1250 + $0x30] sm:$0xff]
        %v1258 = vld [vmem:[%s1250 + $0x38] sm:$0xff]
        %v1259 = vld [vmem:[%s1250 + $0x40] sm:$0xff]
        %v1260 = vld [vmem:[%s1250 + $0x48] sm:$0xff]
        %v1261 = vld [vmem:[%s1250 + $0x50] sm:$0xff]
        %v1262 = vld [vmem:[%s1250 + $0x58] sm:$0xff]
        %v1263 = vld [vmem:[%s1250 + $0x60] sm:$0xff]
        %v1264 = vld [vmem:[%s1250 + $0x68] sm:$0xff]
        %v1265 = vld [vmem:[%s1250 + $0x70] sm:$0xff]
        %v1266 = vld [vmem:[%s1250 + $0x78] sm:$0xff]
        %v1267 = vld [vmem:[%s1250 + $0x80] sm:$0xff]
        %v1268 = vld [vmem:[%s1250 + $0x88] sm:$0xff]
        %v1269 = vld [vmem:[%s1250 + $0x90] sm:$0xf]
        %v1270 = vld [vmem:[%s1250 + $0x98] sm:$0xf]
        %v1271 = vld [vmem:[%s1250 + $0xa0] sm:$0xf]
        %v1272 = vld [vmem:[%s1250 + $0xa8] sm:$0xf]
        %v1273 = vld [vmem:[%s1250 + $0xb0] sm:$0xf]
        %v1274 = vld [vmem:[%s1250 + $0xb8] sm:$0xf]
        %v1276 = vsel %vm647, %v1269, 0
        %v1279 = vsel %vm647, %v1270, 0
        %v1282 = vsel %vm647, %v1271, 0
        %v1285 = vsel %vm647, %v1272, 0
        %v1288 = vsel %vm647, %v1273, 0
        %v1291 = vsel %vm647, %v1274, 0
        %1293 = vmatpush.msra.mxu0 0.0
        %1294 = vmatpush.msra.mxu0 0.0
        %1295 = vmatpush.msra.mxu0 0.0
        %1296 = vmatpush.msra.mxu0 0.0
        %1297 = vmatpush.msra.mxu0 0.0
        %1298 = vmatpush.msra.mxu0 0.0
        %1299 = vmatpush.msra.mxu0 0.0
        %1300 = vmatpush.msra.mxu0 0.0
        %1301 = vmatpush.msra.mxu0 0.0
        %1302 = vmatpush.msra.mxu0 0.0
        %1303 = vmatpush.msra.mxu0 0.0
        %1304 = vmatpush.msra.mxu0 0.0
        %1305 = vmatpush.msra.mxu0 %v1276
        %1306 = vmatpush.msra.mxu0 %v1263
        %1307 = vmatpush.msra.mxu0 %v1257
        %1308 = vmatpush.msra.mxu0 %v1251
        %1309 = vmatmul.f32.gmra.mxu0 %v969
        %v1310 = vpop.f32.mrf.mxu0
        %v1311 = vadd.f32 0.0, %v1310
        %1312 = vmatmul.f32.gmra.mxu0 %v972
        %v1313 = vpop.f32.mrf.mxu0
        %v1314 = vadd.f32 0.0, %v1313
        %1315 = vdwg.mxu0
        %1316 = vmatpush.msra.mxu0 0.0
        %1317 = vmatpush.msra.mxu0 0.0
        %1318 = vmatpush.msra.mxu0 0.0
        %1319 = vmatpush.msra.mxu0 0.0
        %1320 = vmatpush.msra.mxu0 0.0
        %1321 = vmatpush.msra.mxu0 0.0
        %1322 = vmatpush.msra.mxu0 0.0
        %1323 = vmatpush.msra.mxu0 0.0
        %1324 = vmatpush.msra.mxu0 0.0
        %1325 = vmatpush.msra.mxu0 0.0
        %1326 = vmatpush.msra.mxu0 0.0
        %1327 = vmatpush.msra.mxu0 0.0
        %1328 = vmatpush.msra.mxu0 %v1279
        %1329 = vmatpush.msra.mxu0 %v1264
        %1330 = vmatpush.msra.mxu0 %v1258
        %1331 = vmatpush.msra.mxu0 %v1252
        %1332 = vmatmul.f32.gmra.mxu0 %v969
        %v1333 = vpop.f32.mrf.mxu0
        %v1334 = vadd.f32 0.0, %v1333
        %1335 = vmatmul.f32.gmra.mxu0 %v972
        %v1336 = vpop.f32.mrf.mxu0
        %v1337 = vadd.f32 0.0, %v1336
        %1338 = vdwg.mxu0
        %1339 = vmatpush.msra.mxu0 0.0
        %1340 = vmatpush.msra.mxu0 0.0
        %1341 = vmatpush.msra.mxu0 0.0
        %1342 = vmatpush.msra.mxu0 0.0
        %1343 = vmatpush.msra.mxu0 0.0
        %1344 = vmatpush.msra.mxu0 0.0
        %1345 = vmatpush.msra.mxu0 0.0
        %1346 = vmatpush.msra.mxu0 0.0
        %1347 = vmatpush.msra.mxu0 0.0
        %1348 = vmatpush.msra.mxu0 0.0
        %1349 = vmatpush.msra.mxu0 0.0
        %1350 = vmatpush.msra.mxu0 0.0
        %1351 = vmatpush.msra.mxu0 %v1282
        %1352 = vmatpush.msra.mxu0 %v1265
        %1353 = vmatpush.msra.mxu0 %v1259
        %1354 = vmatpush.msra.mxu0 %v1253
        %1355 = vmatmul.f32.gmra.mxu0 %v969
        %v1356 = vpop.f32.mrf.mxu0
        %v1357 = vadd.f32 0.0, %v1356
        %1358 = vmatmul.f32.gmra.mxu0 %v972
        %v1359 = vpop.f32.mrf.mxu0
        %v1360 = vadd.f32 0.0, %v1359
        %1361 = vdwg.mxu0
        %1362 = vmatpush.msra.mxu0 0.0
        %1363 = vmatpush.msra.mxu0 0.0
        %1364 = vmatpush.msra.mxu0 0.0
        %1365 = vmatpush.msra.mxu0 0.0
        %1366 = vmatpush.msra.mxu0 0.0
        %1367 = vmatpush.msra.mxu0 0.0
        %1368 = vmatpush.msra.mxu0 0.0
        %1369 = vmatpush.msra.mxu0 0.0
        %1370 = vmatpush.msra.mxu0 0.0
        %1371 = vmatpush.msra.mxu0 0.0
        %1372 = vmatpush.msra.mxu0 0.0
        %1373 = vmatpush.msra.mxu0 0.0
        %1374 = vmatpush.msra.mxu0 %v1285
        %1375 = vmatpush.msra.mxu0 %v1266
        %1376 = vmatpush.msra.mxu0 %v1260
        %1377 = vmatpush.msra.mxu0 %v1254
        %1378 = vmatmul.f32.gmra.mxu0 %v969
        %v1379 = vpop.f32.mrf.mxu0
        %v1380 = vadd.f32 0.0, %v1379
        %1381 = vmatmul.f32.gmra.mxu0 %v972
        %v1382 = vpop.f32.mrf.mxu0
        %v1383 = vadd.f32 0.0, %v1382
        %1384 = vdwg.mxu0
        %1385 = vmatpush.msra.mxu0 0.0
        %1386 = vmatpush.msra.mxu0 0.0
        %1387 = vmatpush.msra.mxu0 0.0
        %1388 = vmatpush.msra.mxu0 0.0
        %1389 = vmatpush.msra.mxu0 0.0
        %1390 = vmatpush.msra.mxu0 0.0
        %1391 = vmatpush.msra.mxu0 0.0
        %1392 = vmatpush.msra.mxu0 0.0
        %1393 = vmatpush.msra.mxu0 0.0
        %1394 = vmatpush.msra.mxu0 0.0
        %1395 = vmatpush.msra.mxu0 0.0
        %1396 = vmatpush.msra.mxu0 0.0
        %1397 = vmatpush.msra.mxu0 %v1288
        %1398 = vmatpush.msra.mxu0 %v1267
        %1399 = vmatpush.msra.mxu0 %v1261
        %1400 = vmatpush.msra.mxu0 %v1255
        %1401 = vmatmul.f32.gmra.mxu0 %v969
        %v1402 = vpop.f32.mrf.mxu0
        %v1403 = vadd.f32 0.0, %v1402
        %1404 = vmatmul.f32.gmra.mxu0 %v972
        %v1405 = vpop.f32.mrf.mxu0
        %v1406 = vadd.f32 0.0, %v1405
        %1407 = vdwg.mxu0
        %1408 = vmatpush.msra.mxu0 0.0
        %1409 = vmatpush.msra.mxu0 0.0
        %1410 = vmatpush.msra.mxu0 0.0
        %1411 = vmatpush.msra.mxu0 0.0
        %1412 = vmatpush.msra.mxu0 0.0
        %1413 = vmatpush.msra.mxu0 0.0
        %1414 = vmatpush.msra.mxu0 0.0
        %1415 = vmatpush.msra.mxu0 0.0
        %1416 = vmatpush.msra.mxu0 0.0
        %1417 = vmatpush.msra.mxu0 0.0
        %1418 = vmatpush.msra.mxu0 0.0
        %1419 = vmatpush.msra.mxu0 0.0
        %1420 = vmatpush.msra.mxu0 %v1291
        %1421 = vmatpush.msra.mxu0 %v1268
        %1422 = vmatpush.msra.mxu0 %v1262
        %1423 = vmatpush.msra.mxu0 %v1256
        %1424 = vmatmul.f32.gmra.mxu0 %v969
        %v1425 = vpop.f32.mrf.mxu0
        %v1426 = vadd.f32 0.0, %v1425
        %1427 = vmatmul.f32.gmra.mxu0 %v972
        %v1428 = vpop.f32.mrf.mxu0
        %v1429 = vadd.f32 0.0, %v1428
        %1430 = vdwg.mxu0
        %v1431 = vadd.f32 %v846, %v1311
        %v1432 = vadd.f32 %v869, %v1334
        %v1433 = vadd.f32 %v892, %v1357
        %v1434 = vadd.f32 %v915, %v1380
        %v1435 = vadd.f32 %v938, %v1403
        %v1436 = vadd.f32 %v961, %v1426
        %v1437 = vadd.f32 %v849, %v1314
        %v1438 = vadd.f32 %v872, %v1337
        %v1439 = vadd.f32 %v895, %v1360
        %v1440 = vadd.f32 %v918, %v1383
        %v1441 = vadd.f32 %v941, %v1406
        %v1442 = vadd.f32 %v964, %v1429
        %v1443 = vld [vmem:[%s586 + $0x1] sm:$0xff]
        %v1444 = vld [vmem:[%s586 + $0x9] sm:$0xff]
        %v1446 = vsel %vm640, %v1443, 0
        %v1449 = vsel %vm640, %v1444, 0
        %1451 = vmatpush.msra.mxu0 0.0
        %1452 = vmatpush.msra.mxu0 0.0
        %1453 = vmatpush.msra.mxu0 0.0
        %1454 = vmatpush.msra.mxu0 0.0
        %1455 = vmatpush.msra.mxu0 0.0
        %1456 = vmatpush.msra.mxu0 0.0
        %1457 = vmatpush.msra.mxu0 0.0
        %1458 = vmatpush.msra.mxu0 0.0
        %1459 = vmatpush.msra.mxu0 0.0
        %1460 = vmatpush.msra.mxu0 0.0
        %1461 = vmatpush.msra.mxu0 0.0
        %1462 = vmatpush.msra.mxu0 0.0
        %1463 = vmatpush.msra.mxu0 %v1276
        %1464 = vmatpush.msra.mxu0 %v1263
        %1465 = vmatpush.msra.mxu0 %v1257
        %1466 = vmatpush.msra.mxu0 %v1251
        %1467 = vmatmul.f32.gmra.mxu0 %v1446
        %v1468 = vpop.f32.mrf.mxu0
        %v1469 = vadd.f32 0.0, %v1468
        %1470 = vmatmul.f32.gmra.mxu0 %v1449
        %v1471 = vpop.f32.mrf.mxu0
        %v1472 = vadd.f32 0.0, %v1471
        %1473 = vdwg.mxu0
        %1474 = vmatpush.msra.mxu0 0.0
        %1475 = vmatpush.msra.mxu0 0.0
        %1476 = vmatpush.msra.mxu0 0.0
        %1477 = vmatpush.msra.mxu0 0.0
        %1478 = vmatpush.msra.mxu0 0.0
        %1479 = vmatpush.msra.mxu0 0.0
        %1480 = vmatpush.msra.mxu0 0.0
        %1481 = vmatpush.msra.mxu0 0.0
        %1482 = vmatpush.msra.mxu0 0.0
        %1483 = vmatpush.msra.mxu0 0.0
        %1484 = vmatpush.msra.mxu0 0.0
        %1485 = vmatpush.msra.mxu0 0.0
        %1486 = vmatpush.msra.mxu0 %v1279
        %1487 = vmatpush.msra.mxu0 %v1264
        %1488 = vmatpush.msra.mxu0 %v1258
        %1489 = vmatpush.msra.mxu0 %v1252
        %1490 = vmatmul.f32.gmra.mxu0 %v1446
        %v1491 = vpop.f32.mrf.mxu0
        %v1492 = vadd.f32 0.0, %v1491
        %1493 = vmatmul.f32.gmra.mxu0 %v1449
        %v1494 = vpop.f32.mrf.mxu0
        %v1495 = vadd.f32 0.0, %v1494
        %1496 = vdwg.mxu0
        %1497 = vmatpush.msra.mxu0 0.0
        %1498 = vmatpush.msra.mxu0 0.0
        %1499 = vmatpush.msra.mxu0 0.0
        %1500 = vmatpush.msra.mxu0 0.0
        %1501 = vmatpush.msra.mxu0 0.0
        %1502 = vmatpush.msra.mxu0 0.0
        %1503 = vmatpush.msra.mxu0 0.0
        %1504 = vmatpush.msra.mxu0 0.0
        %1505 = vmatpush.msra.mxu0 0.0
        %1506 = vmatpush.msra.mxu0 0.0
        %1507 = vmatpush.msra.mxu0 0.0
        %1508 = vmatpush.msra.mxu0 0.0
        %1509 = vmatpush.msra.mxu0 %v1282
        %1510 = vmatpush.msra.mxu0 %v1265
        %1511 = vmatpush.msra.mxu0 %v1259
        %1512 = vmatpush.msra.mxu0 %v1253
        %1513 = vmatmul.f32.gmra.mxu0 %v1446
        %v1514 = vpop.f32.mrf.mxu0
        %v1515 = vadd.f32 0.0, %v1514
        %1516 = vmatmul.f32.gmra.mxu0 %v1449
        %v1517 = vpop.f32.mrf.mxu0
        %v1518 = vadd.f32 0.0, %v1517
        %1519 = vdwg.mxu0
        %1520 = vmatpush.msra.mxu0 0.0
        %1521 = vmatpush.msra.mxu0 0.0
        %1522 = vmatpush.msra.mxu0 0.0
        %1523 = vmatpush.msra.mxu0 0.0
        %1524 = vmatpush.msra.mxu0 0.0
        %1525 = vmatpush.msra.mxu0 0.0
        %1526 = vmatpush.msra.mxu0 0.0
        %1527 = vmatpush.msra.mxu0 0.0
        %1528 = vmatpush.msra.mxu0 0.0
        %1529 = vmatpush.msra.mxu0 0.0
        %1530 = vmatpush.msra.mxu0 0.0
        %1531 = vmatpush.msra.mxu0 0.0
        %1532 = vmatpush.msra.mxu0 %v1285
        %1533 = vmatpush.msra.mxu0 %v1266
        %1534 = vmatpush.msra.mxu0 %v1260
        %1535 = vmatpush.msra.mxu0 %v1254
        %1536 = vmatmul.f32.gmra.mxu0 %v1446
        %v1537 = vpop.f32.mrf.mxu0
        %v1538 = vadd.f32 0.0, %v1537
        %1539 = vmatmul.f32.gmra.mxu0 %v1449
        %v1540 = vpop.f32.mrf.mxu0
        %v1541 = vadd.f32 0.0, %v1540
        %1542 = vdwg.mxu0
        %1543 = vmatpush.msra.mxu0 0.0
        %1544 = vmatpush.msra.mxu0 0.0
        %1545 = vmatpush.msra.mxu0 0.0
        %1546 = vmatpush.msra.mxu0 0.0
        %1547 = vmatpush.msra.mxu0 0.0
        %1548 = vmatpush.msra.mxu0 0.0
        %1549 = vmatpush.msra.mxu0 0.0
        %1550 = vmatpush.msra.mxu0 0.0
        %1551 = vmatpush.msra.mxu0 0.0
        %1552 = vmatpush.msra.mxu0 0.0
        %1553 = vmatpush.msra.mxu0 0.0
        %1554 = vmatpush.msra.mxu0 0.0
        %1555 = vmatpush.msra.mxu0 %v1288
        %1556 = vmatpush.msra.mxu0 %v1267
        %1557 = vmatpush.msra.mxu0 %v1261
        %1558 = vmatpush.msra.mxu0 %v1255
        %1559 = vmatmul.f32.gmra.mxu0 %v1446
        %v1560 = vpop.f32.mrf.mxu0
        %v1561 = vadd.f32 0.0, %v1560
        %1562 = vmatmul.f32.gmra.mxu0 %v1449
        %v1563 = vpop.f32.mrf.mxu0
        %v1564 = vadd.f32 0.0, %v1563
        %1565 = vdwg.mxu0
        %1566 = vmatpush.msra.mxu0 0.0
        %1567 = vmatpush.msra.mxu0 0.0
        %1568 = vmatpush.msra.mxu0 0.0
        %1569 = vmatpush.msra.mxu0 0.0
        %1570 = vmatpush.msra.mxu0 0.0
        %1571 = vmatpush.msra.mxu0 0.0
        %1572 = vmatpush.msra.mxu0 0.0
        %1573 = vmatpush.msra.mxu0 0.0
        %1574 = vmatpush.msra.mxu0 0.0
        %1575 = vmatpush.msra.mxu0 0.0
        %1576 = vmatpush.msra.mxu0 0.0
        %1577 = vmatpush.msra.mxu0 0.0
        %1578 = vmatpush.msra.mxu0 %v1291
        %1579 = vmatpush.msra.mxu0 %v1268
        %1580 = vmatpush.msra.mxu0 %v1262
        %1581 = vmatpush.msra.mxu0 %v1256
        %1582 = vmatmul.f32.gmra.mxu0 %v1446
        %v1583 = vpop.f32.mrf.mxu0
        %v1584 = vadd.f32 0.0, %v1583
        %1585 = vmatmul.f32.gmra.mxu0 %v1449
        %v1586 = vpop.f32.mrf.mxu0
        %v1587 = vadd.f32 0.0, %v1586
        %1588 = vdwg.mxu0
        %v1589 = vadd.f32 %v1130, %v1469
        %v1590 = vadd.f32 %v1153, %v1492
        %v1591 = vadd.f32 %v1176, %v1515
        %v1592 = vadd.f32 %v1199, %v1538
        %v1593 = vadd.f32 %v1222, %v1561
        %v1594 = vadd.f32 %v1245, %v1584
        %v1595 = vadd.f32 %v1133, %v1472
        %v1596 = vadd.f32 %v1156, %v1495
        %v1597 = vadd.f32 %v1179, %v1518
        %v1598 = vadd.f32 %v1202, %v1541
        %v1599 = vadd.f32 %v1225, %v1564
        %v1600 = vadd.f32 %v1248, %v1587
        %s1601 = scalar_lea.vmem [#allocation4], 576
        %v1602 = vld [vmem:[%s1601] sm:$0xff]
        %v1603 = vld [vmem:[%s1601 + $0x8] sm:$0xff]
        %v1604 = vld [vmem:[%s1601 + $0x10] sm:$0xff]
        %v1605 = vld [vmem:[%s1601 + $0x18] sm:$0xff]
        %v1606 = vld [vmem:[%s1601 + $0x20] sm:$0xff]
        %v1607 = vld [vmem:[%s1601 + $0x28] sm:$0xff]
        %v1608 = vld [vmem:[%s1601 + $0x30] sm:$0xff]
        %v1609 = vld [vmem:[%s1601 + $0x38] sm:$0xff]
        %v1610 = vld [vmem:[%s1601 + $0x40] sm:$0xff]
        %v1611 = vld [vmem:[%s1601 + $0x48] sm:$0xff]
        %v1612 = vld [vmem:[%s1601 + $0x50] sm:$0xff]
        %v1613 = vld [vmem:[%s1601 + $0x58] sm:$0xff]
        %v1614 = vld [vmem:[%s1601 + $0x60] sm:$0xff]
        %v1615 = vld [vmem:[%s1601 + $0x68] sm:$0xff]
        %v1616 = vld [vmem:[%s1601 + $0x70] sm:$0xff]
        %v1617 = vld [vmem:[%s1601 + $0x78] sm:$0xff]
        %v1618 = vld [vmem:[%s1601 + $0x80] sm:$0xff]
        %v1619 = vld [vmem:[%s1601 + $0x88] sm:$0xff]
        %v1620 = vld [vmem:[%s1601 + $0x90] sm:$0xf]
        %v1621 = vld [vmem:[%s1601 + $0x98] sm:$0xf]
        %v1622 = vld [vmem:[%s1601 + $0xa0] sm:$0xf]
        %v1623 = vld [vmem:[%s1601 + $0xa8] sm:$0xf]
        %v1624 = vld [vmem:[%s1601 + $0xb0] sm:$0xf]
        %v1625 = vld [vmem:[%s1601 + $0xb8] sm:$0xf]
        %v1627 = vsel %vm647, %v1620, 0
        %v1630 = vsel %vm647, %v1621, 0
        %v1633 = vsel %vm647, %v1622, 0
        %v1636 = vsel %vm647, %v1623, 0
        %v1639 = vsel %vm647, %v1624, 0
        %v1642 = vsel %vm647, %v1625, 0
        %1644 = vmatpush.msra.mxu0 0.0
        %1645 = vmatpush.msra.mxu0 0.0
        %1646 = vmatpush.msra.mxu0 0.0
        %1647 = vmatpush.msra.mxu0 0.0
        %1648 = vmatpush.msra.mxu0 0.0
        %1649 = vmatpush.msra.mxu0 0.0
        %1650 = vmatpush.msra.mxu0 0.0
        %1651 = vmatpush.msra.mxu0 0.0
        %1652 = vmatpush.msra.mxu0 0.0
        %1653 = vmatpush.msra.mxu0 0.0
        %1654 = vmatpush.msra.mxu0 0.0
        %1655 = vmatpush.msra.mxu0 0.0
        %1656 = vmatpush.msra.mxu0 %v1627
        %1657 = vmatpush.msra.mxu0 %v1614
        %1658 = vmatpush.msra.mxu0 %v1608
        %1659 = vmatpush.msra.mxu0 %v1602
        %1660 = vmatmul.f32.gmra.mxu0 %v1446
        %v1661 = vpop.f32.mrf.mxu0
        %v1662 = vadd.f32 0.0, %v1661
        %1663 = vmatmul.f32.gmra.mxu0 %v1449
        %v1664 = vpop.f32.mrf.mxu0
        %v1665 = vadd.f32 0.0, %v1664
        %1666 = vdwg.mxu0
        %1667 = vmatpush.msra.mxu0 0.0
        %1668 = vmatpush.msra.mxu0 0.0
        %1669 = vmatpush.msra.mxu0 0.0
        %1670 = vmatpush.msra.mxu0 0.0
        %1671 = vmatpush.msra.mxu0 0.0
        %1672 = vmatpush.msra.mxu0 0.0
        %1673 = vmatpush.msra.mxu0 0.0
        %1674 = vmatpush.msra.mxu0 0.0
        %1675 = vmatpush.msra.mxu0 0.0
        %1676 = vmatpush.msra.mxu0 0.0
        %1677 = vmatpush.msra.mxu0 0.0
        %1678 = vmatpush.msra.mxu0 0.0
        %1679 = vmatpush.msra.mxu0 %v1630
        %1680 = vmatpush.msra.mxu0 %v1615
        %1681 = vmatpush.msra.mxu0 %v1609
        %1682 = vmatpush.msra.mxu0 %v1603
        %1683 = vmatmul.f32.gmra.mxu0 %v1446
        %v1684 = vpop.f32.mrf.mxu0
        %v1685 = vadd.f32 0.0, %v1684
        %1686 = vmatmul.f32.gmra.mxu0 %v1449
        %v1687 = vpop.f32.mrf.mxu0
        %v1688 = vadd.f32 0.0, %v1687
        %1689 = vdwg.mxu0
        %1690 = vmatpush.msra.mxu0 0.0
        %1691 = vmatpush.msra.mxu0 0.0
        %1692 = vmatpush.msra.mxu0 0.0
        %1693 = vmatpush.msra.mxu0 0.0
        %1694 = vmatpush.msra.mxu0 0.0
        %1695 = vmatpush.msra.mxu0 0.0
        %1696 = vmatpush.msra.mxu0 0.0
        %1697 = vmatpush.msra.mxu0 0.0
        %1698 = vmatpush.msra.mxu0 0.0
        %1699 = vmatpush.msra.mxu0 0.0
        %1700 = vmatpush.msra.mxu0 0.0
        %1701 = vmatpush.msra.mxu0 0.0
        %1702 = vmatpush.msra.mxu0 %v1633
        %1703 = vmatpush.msra.mxu0 %v1616
        %1704 = vmatpush.msra.mxu0 %v1610
        %1705 = vmatpush.msra.mxu0 %v1604
        %1706 = vmatmul.f32.gmra.mxu0 %v1446
        %v1707 = vpop.f32.mrf.mxu0
        %v1708 = vadd.f32 0.0, %v1707
        %1709 = vmatmul.f32.gmra.mxu0 %v1449
        %v1710 = vpop.f32.mrf.mxu0
        %v1711 = vadd.f32 0.0, %v1710
        %1712 = vdwg.mxu0
        %1713 = vmatpush.msra.mxu0 0.0
        %1714 = vmatpush.msra.mxu0 0.0
        %1715 = vmatpush.msra.mxu0 0.0
        %1716 = vmatpush.msra.mxu0 0.0
        %1717 = vmatpush.msra.mxu0 0.0
        %1718 = vmatpush.msra.mxu0 0.0
        %1719 = vmatpush.msra.mxu0 0.0
        %1720 = vmatpush.msra.mxu0 0.0
        %1721 = vmatpush.msra.mxu0 0.0
        %1722 = vmatpush.msra.mxu0 0.0
        %1723 = vmatpush.msra.mxu0 0.0
        %1724 = vmatpush.msra.mxu0 0.0
        %1725 = vmatpush.msra.mxu0 %v1636
        %1726 = vmatpush.msra.mxu0 %v1617
        %1727 = vmatpush.msra.mxu0 %v1611
        %1728 = vmatpush.msra.mxu0 %v1605
        %1729 = vmatmul.f32.gmra.mxu0 %v1446
        %v1730 = vpop.f32.mrf.mxu0
        %v1731 = vadd.f32 0.0, %v1730
        %1732 = vmatmul.f32.gmra.mxu0 %v1449
        %v1733 = vpop.f32.mrf.mxu0
        %v1734 = vadd.f32 0.0, %v1733
        %1735 = vdwg.mxu0
        %1736 = vmatpush.msra.mxu0 0.0
        %1737 = vmatpush.msra.mxu0 0.0
        %1738 = vmatpush.msra.mxu0 0.0
        %1739 = vmatpush.msra.mxu0 0.0
        %1740 = vmatpush.msra.mxu0 0.0
        %1741 = vmatpush.msra.mxu0 0.0
        %1742 = vmatpush.msra.mxu0 0.0
        %1743 = vmatpush.msra.mxu0 0.0
        %1744 = vmatpush.msra.mxu0 0.0
        %1745 = vmatpush.msra.mxu0 0.0
        %1746 = vmatpush.msra.mxu0 0.0
        %1747 = vmatpush.msra.mxu0 0.0
        %1748 = vmatpush.msra.mxu0 %v1639
        %1749 = vmatpush.msra.mxu0 %v1618
        %1750 = vmatpush.msra.mxu0 %v1612
        %1751 = vmatpush.msra.mxu0 %v1606
        %1752 = vmatmul.f32.gmra.mxu0 %v1446
        %v1753 = vpop.f32.mrf.mxu0
        %v1754 = vadd.f32 0.0, %v1753
        %1755 = vmatmul.f32.gmra.mxu0 %v1449
        %v1756 = vpop.f32.mrf.mxu0
        %v1757 = vadd.f32 0.0, %v1756
        %1758 = vdwg.mxu0
        %1759 = vmatpush.msra.mxu0 0.0
        %1760 = vmatpush.msra.mxu0 0.0
        %1761 = vmatpush.msra.mxu0 0.0
        %1762 = vmatpush.msra.mxu0 0.0
        %1763 = vmatpush.msra.mxu0 0.0
        %1764 = vmatpush.msra.mxu0 0.0
        %1765 = vmatpush.msra.mxu0 0.0
        %1766 = vmatpush.msra.mxu0 0.0
        %1767 = vmatpush.msra.mxu0 0.0
        %1768 = vmatpush.msra.mxu0 0.0
        %1769 = vmatpush.msra.mxu0 0.0
        %1770 = vmatpush.msra.mxu0 0.0
        %1771 = vmatpush.msra.mxu0 %v1642
        %1772 = vmatpush.msra.mxu0 %v1619
        %1773 = vmatpush.msra.mxu0 %v1613
        %1774 = vmatpush.msra.mxu0 %v1607
        %1775 = vmatmul.f32.gmra.mxu0 %v1446
        %v1776 = vpop.f32.mrf.mxu0
        %v1777 = vadd.f32 0.0, %v1776
        %1778 = vmatmul.f32.gmra.mxu0 %v1449
        %v1779 = vpop.f32.mrf.mxu0
        %v1780 = vadd.f32 0.0, %v1779
        %1781 = vdwg.mxu0
        %v1782 = vadd.f32 %v1431, %v1662
        %v1783 = vadd.f32 %v1432, %v1685
        %v1784 = vadd.f32 %v1433, %v1708
        %v1785 = vadd.f32 %v1434, %v1731
        %v1786 = vadd.f32 %v1435, %v1754
        %v1787 = vadd.f32 %v1436, %v1777
        %v1788 = vadd.f32 %v1437, %v1665
        %v1789 = vadd.f32 %v1438, %v1688
        %v1790 = vadd.f32 %v1439, %v1711
        %v1791 = vadd.f32 %v1440, %v1734
        %v1792 = vadd.f32 %v1441, %v1757
        %v1793 = vadd.f32 %v1442, %v1780
        %v1794 = vld [vmem:[%s581 + $0x2] sm:$0xff]
        %v1795 = vld [vmem:[%s581 + $0xa] sm:$0xff]
        %v1797 = vsel %vm640, %v1794, 0
        %v1800 = vsel %vm640, %v1795, 0
        %1802 = vmatpush.msra.mxu0 0.0
        %1803 = vmatpush.msra.mxu0 0.0
        %1804 = vmatpush.msra.mxu0 0.0
        %1805 = vmatpush.msra.mxu0 0.0
        %1806 = vmatpush.msra.mxu0 0.0
        %1807 = vmatpush.msra.mxu0 0.0
        %1808 = vmatpush.msra.mxu0 0.0
        %1809 = vmatpush.msra.mxu0 0.0
        %1810 = vmatpush.msra.mxu0 0.0
        %1811 = vmatpush.msra.mxu0 0.0
        %1812 = vmatpush.msra.mxu0 0.0
        %1813 = vmatpush.msra.mxu0 0.0
        %1814 = vmatpush.msra.mxu0 %v1627
        %1815 = vmatpush.msra.mxu0 %v1614
        %1816 = vmatpush.msra.mxu0 %v1608
        %1817 = vmatpush.msra.mxu0 %v1602
        %1818 = vmatmul.f32.gmra.mxu0 %v1797
        %v1819 = vpop.f32.mrf.mxu0
        %v1820 = vadd.f32 0.0, %v1819
        %1821 = vmatmul.f32.gmra.mxu0 %v1800
        %v1822 = vpop.f32.mrf.mxu0
        %v1823 = vadd.f32 0.0, %v1822
        %1824 = vdwg.mxu0
        %1825 = vmatpush.msra.mxu0 0.0
        %1826 = vmatpush.msra.mxu0 0.0
        %1827 = vmatpush.msra.mxu0 0.0
        %1828 = vmatpush.msra.mxu0 0.0
        %1829 = vmatpush.msra.mxu0 0.0
        %1830 = vmatpush.msra.mxu0 0.0
        %1831 = vmatpush.msra.mxu0 0.0
        %1832 = vmatpush.msra.mxu0 0.0
        %1833 = vmatpush.msra.mxu0 0.0
        %1834 = vmatpush.msra.mxu0 0.0
        %1835 = vmatpush.msra.mxu0 0.0
        %1836 = vmatpush.msra.mxu0 0.0
        %1837 = vmatpush.msra.mxu0 %v1630
        %1838 = vmatpush.msra.mxu0 %v1615
        %1839 = vmatpush.msra.mxu0 %v1609
        %1840 = vmatpush.msra.mxu0 %v1603
        %1841 = vmatmul.f32.gmra.mxu0 %v1797
        %v1842 = vpop.f32.mrf.mxu0
        %v1843 = vadd.f32 0.0, %v1842
        %1844 = vmatmul.f32.gmra.mxu0 %v1800
        %v1845 = vpop.f32.mrf.mxu0
        %v1846 = vadd.f32 0.0, %v1845
        %1847 = vdwg.mxu0
        %1848 = vmatpush.msra.mxu0 0.0
        %1849 = vmatpush.msra.mxu0 0.0
        %1850 = vmatpush.msra.mxu0 0.0
        %1851 = vmatpush.msra.mxu0 0.0
        %1852 = vmatpush.msra.mxu0 0.0
        %1853 = vmatpush.msra.mxu0 0.0
        %1854 = vmatpush.msra.mxu0 0.0
        %1855 = vmatpush.msra.mxu0 0.0
        %1856 = vmatpush.msra.mxu0 0.0
        %1857 = vmatpush.msra.mxu0 0.0
        %1858 = vmatpush.msra.mxu0 0.0
        %1859 = vmatpush.msra.mxu0 0.0
        %1860 = vmatpush.msra.mxu0 %v1633
        %1861 = vmatpush.msra.mxu0 %v1616
        %1862 = vmatpush.msra.mxu0 %v1610
        %1863 = vmatpush.msra.mxu0 %v1604
        %1864 = vmatmul.f32.gmra.mxu0 %v1797
        %v1865 = vpop.f32.mrf.mxu0
        %v1866 = vadd.f32 0.0, %v1865
        %1867 = vmatmul.f32.gmra.mxu0 %v1800
        %v1868 = vpop.f32.mrf.mxu0
        %v1869 = vadd.f32 0.0, %v1868
        %1870 = vdwg.mxu0
        %1871 = vmatpush.msra.mxu0 0.0
        %1872 = vmatpush.msra.mxu0 0.0
        %1873 = vmatpush.msra.mxu0 0.0
        %1874 = vmatpush.msra.mxu0 0.0
        %1875 = vmatpush.msra.mxu0 0.0
        %1876 = vmatpush.msra.mxu0 0.0
        %1877 = vmatpush.msra.mxu0 0.0
        %1878 = vmatpush.msra.mxu0 0.0
        %1879 = vmatpush.msra.mxu0 0.0
        %1880 = vmatpush.msra.mxu0 0.0
        %1881 = vmatpush.msra.mxu0 0.0
        %1882 = vmatpush.msra.mxu0 0.0
        %1883 = vmatpush.msra.mxu0 %v1636
        %1884 = vmatpush.msra.mxu0 %v1617
        %1885 = vmatpush.msra.mxu0 %v1611
        %1886 = vmatpush.msra.mxu0 %v1605
        %1887 = vmatmul.f32.gmra.mxu0 %v1797
        %v1888 = vpop.f32.mrf.mxu0
        %v1889 = vadd.f32 0.0, %v1888
        %1890 = vmatmul.f32.gmra.mxu0 %v1800
        %v1891 = vpop.f32.mrf.mxu0
        %v1892 = vadd.f32 0.0, %v1891
        %1893 = vdwg.mxu0
        %1894 = vmatpush.msra.mxu0 0.0
        %1895 = vmatpush.msra.mxu0 0.0
        %1896 = vmatpush.msra.mxu0 0.0
        %1897 = vmatpush.msra.mxu0 0.0
        %1898 = vmatpush.msra.mxu0 0.0
        %1899 = vmatpush.msra.mxu0 0.0
        %1900 = vmatpush.msra.mxu0 0.0
        %1901 = vmatpush.msra.mxu0 0.0
        %1902 = vmatpush.msra.mxu0 0.0
        %1903 = vmatpush.msra.mxu0 0.0
        %1904 = vmatpush.msra.mxu0 0.0
        %1905 = vmatpush.msra.mxu0 0.0
        %1906 = vmatpush.msra.mxu0 %v1639
        %1907 = vmatpush.msra.mxu0 %v1618
        %1908 = vmatpush.msra.mxu0 %v1612
        %1909 = vmatpush.msra.mxu0 %v1606
        %1910 = vmatmul.f32.gmra.mxu0 %v1797
        %v1911 = vpop.f32.mrf.mxu0
        %v1912 = vadd.f32 0.0, %v1911
        %1913 = vmatmul.f32.gmra.mxu0 %v1800
        %v1914 = vpop.f32.mrf.mxu0
        %v1915 = vadd.f32 0.0, %v1914
        %1916 = vdwg.mxu0
        %1917 = vmatpush.msra.mxu0 0.0
        %1918 = vmatpush.msra.mxu0 0.0
        %1919 = vmatpush.msra.mxu0 0.0
        %1920 = vmatpush.msra.mxu0 0.0
        %1921 = vmatpush.msra.mxu0 0.0
        %1922 = vmatpush.msra.mxu0 0.0
        %1923 = vmatpush.msra.mxu0 0.0
        %1924 = vmatpush.msra.mxu0 0.0
        %1925 = vmatpush.msra.mxu0 0.0
        %1926 = vmatpush.msra.mxu0 0.0
        %1927 = vmatpush.msra.mxu0 0.0
        %1928 = vmatpush.msra.mxu0 0.0
        %1929 = vmatpush.msra.mxu0 %v1642
        %1930 = vmatpush.msra.mxu0 %v1619
        %1931 = vmatpush.msra.mxu0 %v1613
        %1932 = vmatpush.msra.mxu0 %v1607
        %1933 = vmatmul.f32.gmra.mxu0 %v1797
        %v1934 = vpop.f32.mrf.mxu0
        %v1935 = vadd.f32 0.0, %v1934
        %1936 = vmatmul.f32.gmra.mxu0 %v1800
        %v1937 = vpop.f32.mrf.mxu0
        %v1938 = vadd.f32 0.0, %v1937
        %1939 = vdwg.mxu0
        %v1940 = vadd.f32 %v1589, %v1820
        %v1941 = vadd.f32 %v1590, %v1843
        %v1942 = vadd.f32 %v1591, %v1866
        %v1943 = vadd.f32 %v1592, %v1889
        %v1944 = vadd.f32 %v1593, %v1912
        %v1945 = vadd.f32 %v1594, %v1935
        %v1946 = vadd.f32 %v1595, %v1823
        %v1947 = vadd.f32 %v1596, %v1846
        %v1948 = vadd.f32 %v1597, %v1869
        %v1949 = vadd.f32 %v1598, %v1892
        %v1950 = vadd.f32 %v1599, %v1915
        %v1951 = vadd.f32 %v1600, %v1938
        %s1952 = scalar_lea.vmem [#allocation4], 768
        %v1953 = vld [vmem:[%s1952] sm:$0xff]
        %v1954 = vld [vmem:[%s1952 + $0x8] sm:$0xff]
        %v1955 = vld [vmem:[%s1952 + $0x10] sm:$0xff]
        %v1956 = vld [vmem:[%s1952 + $0x18] sm:$0xff]
        %v1957 = vld [vmem:[%s1952 + $0x20] sm:$0xff]
        %v1958 = vld [vmem:[%s1952 + $0x28] sm:$0xff]
        %v1959 = vld [vmem:[%s1952 + $0x30] sm:$0xff]
        %v1960 = vld [vmem:[%s1952 + $0x38] sm:$0xff]
        %v1961 = vld [vmem:[%s1952 + $0x40] sm:$0xff]
        %v1962 = vld [vmem:[%s1952 + $0x48] sm:$0xff]
        %v1963 = vld [vmem:[%s1952 + $0x50] sm:$0xff]
        %v1964 = vld [vmem:[%s1952 + $0x58] sm:$0xff]
        %v1965 = vld [vmem:[%s1952 + $0x60] sm:$0xff]
        %v1966 = vld [vmem:[%s1952 + $0x68] sm:$0xff]
        %v1967 = vld [vmem:[%s1952 + $0x70] sm:$0xff]
        %v1968 = vld [vmem:[%s1952 + $0x78] sm:$0xff]
        %v1969 = vld [vmem:[%s1952 + $0x80] sm:$0xff]
        %v1970 = vld [vmem:[%s1952 + $0x88] sm:$0xff]
        %v1971 = vld [vmem:[%s1952 + $0x90] sm:$0xf]
        %v1972 = vld [vmem:[%s1952 + $0x98] sm:$0xf]
        %v1973 = vld [vmem:[%s1952 + $0xa0] sm:$0xf]
        %v1974 = vld [vmem:[%s1952 + $0xa8] sm:$0xf]
        %v1975 = vld [vmem:[%s1952 + $0xb0] sm:$0xf]
        %v1976 = vld [vmem:[%s1952 + $0xb8] sm:$0xf]
        %v1978 = vsel %vm647, %v1971, 0
        %v1981 = vsel %vm647, %v1972, 0
        %v1984 = vsel %vm647, %v1973, 0
        %v1987 = vsel %vm647, %v1974, 0
        %v1990 = vsel %vm647, %v1975, 0
        %v1993 = vsel %vm647, %v1976, 0
        %1995 = vmatpush.msra.mxu0 0.0
        %1996 = vmatpush.msra.mxu0 0.0
        %1997 = vmatpush.msra.mxu0 0.0
        %1998 = vmatpush.msra.mxu0 0.0
        %1999 = vmatpush.msra.mxu0 0.0
        %2000 = vmatpush.msra.mxu0 0.0
        %2001 = vmatpush.msra.mxu0 0.0
        %2002 = vmatpush.msra.mxu0 0.0
        %2003 = vmatpush.msra.mxu0 0.0
        %2004 = vmatpush.msra.mxu0 0.0
        %2005 = vmatpush.msra.mxu0 0.0
        %2006 = vmatpush.msra.mxu0 0.0
        %2007 = vmatpush.msra.mxu0 %v1978
        %2008 = vmatpush.msra.mxu0 %v1965
        %2009 = vmatpush.msra.mxu0 %v1959
        %2010 = vmatpush.msra.mxu0 %v1953
        %2011 = vmatmul.f32.gmra.mxu0 %v1797
        %v2012 = vpop.f32.mrf.mxu0
        %v2013 = vadd.f32 0.0, %v2012
        %2014 = vmatmul.f32.gmra.mxu0 %v1800
        %v2015 = vpop.f32.mrf.mxu0
        %v2016 = vadd.f32 0.0, %v2015
        %2017 = vdwg.mxu0
        %2018 = vmatpush.msra.mxu0 0.0
        %2019 = vmatpush.msra.mxu0 0.0
        %2020 = vmatpush.msra.mxu0 0.0
        %2021 = vmatpush.msra.mxu0 0.0
        %2022 = vmatpush.msra.mxu0 0.0
        %2023 = vmatpush.msra.mxu0 0.0
        %2024 = vmatpush.msra.mxu0 0.0
        %2025 = vmatpush.msra.mxu0 0.0
        %2026 = vmatpush.msra.mxu0 0.0
        %2027 = vmatpush.msra.mxu0 0.0
        %2028 = vmatpush.msra.mxu0 0.0
        %2029 = vmatpush.msra.mxu0 0.0
        %2030 = vmatpush.msra.mxu0 %v1981
        %2031 = vmatpush.msra.mxu0 %v1966
        %2032 = vmatpush.msra.mxu0 %v1960
        %2033 = vmatpush.msra.mxu0 %v1954
        %2034 = vmatmul.f32.gmra.mxu0 %v1797
        %v2035 = vpop.f32.mrf.mxu0
        %v2036 = vadd.f32 0.0, %v2035
        %2037 = vmatmul.f32.gmra.mxu0 %v1800
        %v2038 = vpop.f32.mrf.mxu0
        %v2039 = vadd.f32 0.0, %v2038
        %2040 = vdwg.mxu0
        %2041 = vmatpush.msra.mxu0 0.0
        %2042 = vmatpush.msra.mxu0 0.0
        %2043 = vmatpush.msra.mxu0 0.0
        %2044 = vmatpush.msra.mxu0 0.0
        %2045 = vmatpush.msra.mxu0 0.0
        %2046 = vmatpush.msra.mxu0 0.0
        %2047 = vmatpush.msra.mxu0 0.0
        %2048 = vmatpush.msra.mxu0 0.0
        %2049 = vmatpush.msra.mxu0 0.0
        %2050 = vmatpush.msra.mxu0 0.0
        %2051 = vmatpush.msra.mxu0 0.0
        %2052 = vmatpush.msra.mxu0 0.0
        %2053 = vmatpush.msra.mxu0 %v1984
        %2054 = vmatpush.msra.mxu0 %v1967
        %2055 = vmatpush.msra.mxu0 %v1961
        %2056 = vmatpush.msra.mxu0 %v1955
        %2057 = vmatmul.f32.gmra.mxu0 %v1797
        %v2058 = vpop.f32.mrf.mxu0
        %v2059 = vadd.f32 0.0, %v2058
        %2060 = vmatmul.f32.gmra.mxu0 %v1800
        %v2061 = vpop.f32.mrf.mxu0
        %v2062 = vadd.f32 0.0, %v2061
        %2063 = vdwg.mxu0
        %2064 = vmatpush.msra.mxu0 0.0
        %2065 = vmatpush.msra.mxu0 0.0
        %2066 = vmatpush.msra.mxu0 0.0
        %2067 = vmatpush.msra.mxu0 0.0
        %2068 = vmatpush.msra.mxu0 0.0
        %2069 = vmatpush.msra.mxu0 0.0
        %2070 = vmatpush.msra.mxu0 0.0
        %2071 = vmatpush.msra.mxu0 0.0
        %2072 = vmatpush.msra.mxu0 0.0
        %2073 = vmatpush.msra.mxu0 0.0
        %2074 = vmatpush.msra.mxu0 0.0
        %2075 = vmatpush.msra.mxu0 0.0
        %2076 = vmatpush.msra.mxu0 %v1987
        %2077 = vmatpush.msra.mxu0 %v1968
        %2078 = vmatpush.msra.mxu0 %v1962
        %2079 = vmatpush.msra.mxu0 %v1956
        %2080 = vmatmul.f32.gmra.mxu0 %v1797
        %v2081 = vpop.f32.mrf.mxu0
        %v2082 = vadd.f32 0.0, %v2081
        %2083 = vmatmul.f32.gmra.mxu0 %v1800
        %v2084 = vpop.f32.mrf.mxu0
        %v2085 = vadd.f32 0.0, %v2084
        %2086 = vdwg.mxu0
        %2087 = vmatpush.msra.mxu0 0.0
        %2088 = vmatpush.msra.mxu0 0.0
        %2089 = vmatpush.msra.mxu0 0.0
        %2090 = vmatpush.msra.mxu0 0.0
        %2091 = vmatpush.msra.mxu0 0.0
        %2092 = vmatpush.msra.mxu0 0.0
        %2093 = vmatpush.msra.mxu0 0.0
        %2094 = vmatpush.msra.mxu0 0.0
        %2095 = vmatpush.msra.mxu0 0.0
        %2096 = vmatpush.msra.mxu0 0.0
        %2097 = vmatpush.msra.mxu0 0.0
        %2098 = vmatpush.msra.mxu0 0.0
        %2099 = vmatpush.msra.mxu0 %v1990
        %2100 = vmatpush.msra.mxu0 %v1969
        %2101 = vmatpush.msra.mxu0 %v1963
        %2102 = vmatpush.msra.mxu0 %v1957
        %2103 = vmatmul.f32.gmra.mxu0 %v1797
        %v2104 = vpop.f32.mrf.mxu0
        %v2105 = vadd.f32 0.0, %v2104
        %2106 = vmatmul.f32.gmra.mxu0 %v1800
        %v2107 = vpop.f32.mrf.mxu0
        %v2108 = vadd.f32 0.0, %v2107
        %2109 = vdwg.mxu0
        %2110 = vmatpush.msra.mxu0 0.0
        %2111 = vmatpush.msra.mxu0 0.0
        %2112 = vmatpush.msra.mxu0 0.0
        %2113 = vmatpush.msra.mxu0 0.0
        %2114 = vmatpush.msra.mxu0 0.0
        %2115 = vmatpush.msra.mxu0 0.0
        %2116 = vmatpush.msra.mxu0 0.0
        %2117 = vmatpush.msra.mxu0 0.0
        %2118 = vmatpush.msra.mxu0 0.0
        %2119 = vmatpush.msra.mxu0 0.0
        %2120 = vmatpush.msra.mxu0 0.0
        %2121 = vmatpush.msra.mxu0 0.0
        %2122 = vmatpush.msra.mxu0 %v1993
        %2123 = vmatpush.msra.mxu0 %v1970
        %2124 = vmatpush.msra.mxu0 %v1964
        %2125 = vmatpush.msra.mxu0 %v1958
        %2126 = vmatmul.f32.gmra.mxu0 %v1797
        %v2127 = vpop.f32.mrf.mxu0
        %v2128 = vadd.f32 0.0, %v2127
        %2129 = vmatmul.f32.gmra.mxu0 %v1800
        %v2130 = vpop.f32.mrf.mxu0
        %v2131 = vadd.f32 0.0, %v2130
        %2132 = vdwg.mxu0
        %v2133 = vadd.f32 %v1782, %v2013
        %v2134 = vadd.f32 %v1783, %v2036
        %v2135 = vadd.f32 %v1784, %v2059
        %v2136 = vadd.f32 %v1785, %v2082
        %v2137 = vadd.f32 %v1786, %v2105
        %v2138 = vadd.f32 %v1787, %v2128
        %v2139 = vadd.f32 %v1788, %v2016
        %v2140 = vadd.f32 %v1789, %v2039
        %v2141 = vadd.f32 %v1790, %v2062
        %v2142 = vadd.f32 %v1791, %v2085
        %v2143 = vadd.f32 %v1792, %v2108
        %v2144 = vadd.f32 %v1793, %v2131
        %v2145 = vld [vmem:[%s586 + $0x2] sm:$0xff]
        %v2146 = vld [vmem:[%s586 + $0xa] sm:$0xff]
        %v2148 = vsel %vm640, %v2145, 0
        %v2151 = vsel %vm640, %v2146, 0
        %2153 = vmatpush.msra.mxu0 0.0
        %2154 = vmatpush.msra.mxu0 0.0
        %2155 = vmatpush.msra.mxu0 0.0
        %2156 = vmatpush.msra.mxu0 0.0
        %2157 = vmatpush.msra.mxu0 0.0
        %2158 = vmatpush.msra.mxu0 0.0
        %2159 = vmatpush.msra.mxu0 0.0
        %2160 = vmatpush.msra.mxu0 0.0
        %2161 = vmatpush.msra.mxu0 0.0
        %2162 = vmatpush.msra.mxu0 0.0
        %2163 = vmatpush.msra.mxu0 0.0
        %2164 = vmatpush.msra.mxu0 0.0
        %2165 = vmatpush.msra.mxu0 %v1978
        %2166 = vmatpush.msra.mxu0 %v1965
        %2167 = vmatpush.msra.mxu0 %v1959
        %2168 = vmatpush.msra.mxu0 %v1953
        %2169 = vmatmul.f32.gmra.mxu0 %v2148
        %v2170 = vpop.f32.mrf.mxu0
        %v2171 = vadd.f32 0.0, %v2170
        %2172 = vmatmul.f32.gmra.mxu0 %v2151
        %v2173 = vpop.f32.mrf.mxu0
        %v2174 = vadd.f32 0.0, %v2173
        %2175 = vdwg.mxu0
        %2176 = vmatpush.msra.mxu0 0.0
        %2177 = vmatpush.msra.mxu0 0.0
        %2178 = vmatpush.msra.mxu0 0.0
        %2179 = vmatpush.msra.mxu0 0.0
        %2180 = vmatpush.msra.mxu0 0.0
        %2181 = vmatpush.msra.mxu0 0.0
        %2182 = vmatpush.msra.mxu0 0.0
        %2183 = vmatpush.msra.mxu0 0.0
        %2184 = vmatpush.msra.mxu0 0.0
        %2185 = vmatpush.msra.mxu0 0.0
        %2186 = vmatpush.msra.mxu0 0.0
        %2187 = vmatpush.msra.mxu0 0.0
        %2188 = vmatpush.msra.mxu0 %v1981
        %2189 = vmatpush.msra.mxu0 %v1966
        %2190 = vmatpush.msra.mxu0 %v1960
        %2191 = vmatpush.msra.mxu0 %v1954
        %2192 = vmatmul.f32.gmra.mxu0 %v2148
        %v2193 = vpop.f32.mrf.mxu0
        %v2194 = vadd.f32 0.0, %v2193
        %2195 = vmatmul.f32.gmra.mxu0 %v2151
        %v2196 = vpop.f32.mrf.mxu0
        %v2197 = vadd.f32 0.0, %v2196
        %2198 = vdwg.mxu0
        %2199 = vmatpush.msra.mxu0 0.0
        %2200 = vmatpush.msra.mxu0 0.0
        %2201 = vmatpush.msra.mxu0 0.0
        %2202 = vmatpush.msra.mxu0 0.0
        %2203 = vmatpush.msra.mxu0 0.0
        %2204 = vmatpush.msra.mxu0 0.0
        %2205 = vmatpush.msra.mxu0 0.0
        %2206 = vmatpush.msra.mxu0 0.0
        %2207 = vmatpush.msra.mxu0 0.0
        %2208 = vmatpush.msra.mxu0 0.0
        %2209 = vmatpush.msra.mxu0 0.0
        %2210 = vmatpush.msra.mxu0 0.0
        %2211 = vmatpush.msra.mxu0 %v1984
        %2212 = vmatpush.msra.mxu0 %v1967
        %2213 = vmatpush.msra.mxu0 %v1961
        %2214 = vmatpush.msra.mxu0 %v1955
        %2215 = vmatmul.f32.gmra.mxu0 %v2148
        %v2216 = vpop.f32.mrf.mxu0
        %v2217 = vadd.f32 0.0, %v2216
        %2218 = vmatmul.f32.gmra.mxu0 %v2151
        %v2219 = vpop.f32.mrf.mxu0
        %v2220 = vadd.f32 0.0, %v2219
        %2221 = vdwg.mxu0
        %2222 = vmatpush.msra.mxu0 0.0
        %2223 = vmatpush.msra.mxu0 0.0
        %2224 = vmatpush.msra.mxu0 0.0
        %2225 = vmatpush.msra.mxu0 0.0
        %2226 = vmatpush.msra.mxu0 0.0
        %2227 = vmatpush.msra.mxu0 0.0
        %2228 = vmatpush.msra.mxu0 0.0
        %2229 = vmatpush.msra.mxu0 0.0
        %2230 = vmatpush.msra.mxu0 0.0
        %2231 = vmatpush.msra.mxu0 0.0
        %2232 = vmatpush.msra.mxu0 0.0
        %2233 = vmatpush.msra.mxu0 0.0
        %2234 = vmatpush.msra.mxu0 %v1987
        %2235 = vmatpush.msra.mxu0 %v1968
        %2236 = vmatpush.msra.mxu0 %v1962
        %2237 = vmatpush.msra.mxu0 %v1956
        %2238 = vmatmul.f32.gmra.mxu0 %v2148
        %v2239 = vpop.f32.mrf.mxu0
        %v2240 = vadd.f32 0.0, %v2239
        %2241 = vmatmul.f32.gmra.mxu0 %v2151
        %v2242 = vpop.f32.mrf.mxu0
        %v2243 = vadd.f32 0.0, %v2242
        %2244 = vdwg.mxu0
        %2245 = vmatpush.msra.mxu0 0.0
        %2246 = vmatpush.msra.mxu0 0.0
        %2247 = vmatpush.msra.mxu0 0.0
        %2248 = vmatpush.msra.mxu0 0.0
        %2249 = vmatpush.msra.mxu0 0.0
        %2250 = vmatpush.msra.mxu0 0.0
        %2251 = vmatpush.msra.mxu0 0.0
        %2252 = vmatpush.msra.mxu0 0.0
        %2253 = vmatpush.msra.mxu0 0.0
        %2254 = vmatpush.msra.mxu0 0.0
        %2255 = vmatpush.msra.mxu0 0.0
        %2256 = vmatpush.msra.mxu0 0.0
        %2257 = vmatpush.msra.mxu0 %v1990
        %2258 = vmatpush.msra.mxu0 %v1969
        %2259 = vmatpush.msra.mxu0 %v1963
        %2260 = vmatpush.msra.mxu0 %v1957
        %2261 = vmatmul.f32.gmra.mxu0 %v2148
        %v2262 = vpop.f32.mrf.mxu0
        %v2263 = vadd.f32 0.0, %v2262
        %2264 = vmatmul.f32.gmra.mxu0 %v2151
        %v2265 = vpop.f32.mrf.mxu0
        %v2266 = vadd.f32 0.0, %v2265
        %2267 = vdwg.mxu0
        %2268 = vmatpush.msra.mxu0 0.0
        %2269 = vmatpush.msra.mxu0 0.0
        %2270 = vmatpush.msra.mxu0 0.0
        %2271 = vmatpush.msra.mxu0 0.0
        %2272 = vmatpush.msra.mxu0 0.0
        %2273 = vmatpush.msra.mxu0 0.0
        %2274 = vmatpush.msra.mxu0 0.0
        %2275 = vmatpush.msra.mxu0 0.0
        %2276 = vmatpush.msra.mxu0 0.0
        %2277 = vmatpush.msra.mxu0 0.0
        %2278 = vmatpush.msra.mxu0 0.0
        %2279 = vmatpush.msra.mxu0 0.0
        %2280 = vmatpush.msra.mxu0 %v1993
        %2281 = vmatpush.msra.mxu0 %v1970
        %2282 = vmatpush.msra.mxu0 %v1964
        %2283 = vmatpush.msra.mxu0 %v1958
        %2284 = vmatmul.f32.gmra.mxu0 %v2148
        %v2285 = vpop.f32.mrf.mxu0
        %v2286 = vadd.f32 0.0, %v2285
        %2287 = vmatmul.f32.gmra.mxu0 %v2151
        %v2288 = vpop.f32.mrf.mxu0
        %v2289 = vadd.f32 0.0, %v2288
        %2290 = vdwg.mxu0
        %v2291 = vadd.f32 %v1940, %v2171
        %v2292 = vadd.f32 %v1941, %v2194
        %v2293 = vadd.f32 %v1942, %v2217
        %v2294 = vadd.f32 %v1943, %v2240
        %v2295 = vadd.f32 %v1944, %v2263
        %v2296 = vadd.f32 %v1945, %v2286
        %v2297 = vadd.f32 %v1946, %v2174
        %v2298 = vadd.f32 %v1947, %v2197
        %v2299 = vadd.f32 %v1948, %v2220
        %v2300 = vadd.f32 %v1949, %v2243
        %v2301 = vadd.f32 %v1950, %v2266
        %v2302 = vadd.f32 %v1951, %v2289
        %v2303 = vld [vmem:[#allocation7] sm:$0x3f]
        %v2305 = vperm.slane %v2303, 0
        %v2306 = vperm.slane %v2303, 1
        %v2307 = vperm.slane %v2303, 2
        %v2308 = vperm.slane %v2303, 3
        %v2309 = vperm.slane %v2303, 4
        %v2310 = vperm.slane %v2303, 5
        %v2317 = vadd.f32 %v2133, %v2305
        %v2318 = vadd.f32 %v2134, %v2306
        %v2319 = vadd.f32 %v2135, %v2307
        %v2320 = vadd.f32 %v2136, %v2308
        %v2321 = vadd.f32 %v2137, %v2309
        %v2322 = vadd.f32 %v2138, %v2310
        %v2323 = vadd.f32 %v2139, %v2305
        %v2324 = vadd.f32 %v2140, %v2306
        %v2325 = vadd.f32 %v2141, %v2307
        %v2326 = vadd.f32 %v2142, %v2308
        %v2327 = vadd.f32 %v2143, %v2309
        %v2328 = vadd.f32 %v2144, %v2310
        %v2329 = vmax.f32 %v2317, 0.0
        %v2330 = vmax.f32 %v2318, 0.0
        %v2331 = vmax.f32 %v2319, 0.0
        %v2332 = vmax.f32 %v2320, 0.0
        %v2333 = vmax.f32 %v2321, 0.0
        %v2334 = vmax.f32 %v2322, 0.0
        %v2335 = vmax.f32 %v2323, 0.0
        %v2336 = vmax.f32 %v2324, 0.0
        %v2337 = vmax.f32 %v2325, 0.0
        %v2338 = vmax.f32 %v2326, 0.0
        %v2339 = vmax.f32 %v2327, 0.0
        %v2340 = vmax.f32 %v2328, 0.0
        %v2341 = vadd.f32 %v2291, %v2305
        %v2342 = vadd.f32 %v2292, %v2306
        %v2343 = vadd.f32 %v2293, %v2307
        %v2344 = vadd.f32 %v2294, %v2308
        %v2345 = vadd.f32 %v2295, %v2309
        %v2346 = vadd.f32 %v2296, %v2310
        %v2347 = vadd.f32 %v2297, %v2305
        %v2348 = vadd.f32 %v2298, %v2306
        %v2349 = vadd.f32 %v2299, %v2307
        %v2350 = vadd.f32 %v2300, %v2308
        %v2351 = vadd.f32 %v2301, %v2309
        %v2352 = vadd.f32 %v2302, %v2310
        %v2353 = vmax.f32 %v2341, 0.0
        %v2354 = vmax.f32 %v2342, 0.0
        %v2355 = vmax.f32 %v2343, 0.0
        %v2356 = vmax.f32 %v2344, 0.0
        %v2357 = vmax.f32 %v2345, 0.0
        %v2358 = vmax.f32 %v2346, 0.0
        %v2359 = vmax.f32 %v2347, 0.0
        %v2360 = vmax.f32 %v2348, 0.0
        %v2361 = vmax.f32 %v2349, 0.0
        %v2362 = vmax.f32 %v2350, 0.0
        %v2363 = vmax.f32 %v2351, 0.0
        %v2364 = vmax.f32 %v2352, 0.0
        %v2365 = vmax.f32 %v2329, %v2353
        %v2366 = vmax.f32 %v2330, %v2354
        %v2367 = vmax.f32 %v2331, %v2355
        %v2368 = vmax.f32 %v2332, %v2356
        %v2369 = vmax.f32 %v2333, %v2357
        %v2370 = vmax.f32 %v2334, %v2358
        %v2371 = vmax.f32 %v2335, %v2359
        %v2372 = vmax.f32 %v2336, %v2360
        %v2373 = vmax.f32 %v2337, %v2361
        %v2374 = vmax.f32 %v2338, %v2362
        %v2375 = vmax.f32 %v2339, %v2363
        %v2376 = vmax.f32 %v2340, %v2364
        %2389 = vrot.lane.b32.xlu0 %v2365, 96
        %v2390 = vpop.permute.xlu0 %2389
        %2391 = vrot.lane.b32.xlu0 %v2366, 96
        %v2392 = vpop.permute.xlu0 %2391
        %2393 = vrot.lane.b32.xlu0 %v2367, 96
        %v2394 = vpop.permute.xlu0 %2393
        %2395 = vrot.lane.b32.xlu0 %v2368, 96
        %v2396 = vpop.permute.xlu0 %2395
        %2397 = vrot.lane.b32.xlu0 %v2369, 96
        %v2398 = vpop.permute.xlu0 %2397
        %2399 = vrot.lane.b32.xlu0 %v2370, 96
        %v2400 = vpop.permute.xlu0 %2399
        %2401 = vrot.lane.b32.xlu0 %v2371, 96
        %v2402 = vpop.permute.xlu0 %2401
        %2403 = vrot.lane.b32.xlu0 %v2372, 96
        %v2404 = vpop.permute.xlu0 %2403
        %2405 = vrot.lane.b32.xlu0 %v2373, 96
        %v2406 = vpop.permute.xlu0 %2405
        %2407 = vrot.lane.b32.xlu0 %v2374, 96
        %v2408 = vpop.permute.xlu0 %2407
        %2409 = vrot.lane.b32.xlu0 %v2375, 96
        %v2410 = vpop.permute.xlu0 %2409
        %2411 = vrot.lane.b32.xlu0 %v2376, 96
        %v2412 = vpop.permute.xlu0 %2411
        %vm2413 = vcmask 785408
        %v2414 = vsel %vm2413, %v2390, %v2392
        %v2415 = vsel %vm2413, %v2392, %v2394
        %v2416 = vsel %vm2413, %v2394, %v2396
        %v2417 = vsel %vm2413, %v2396, %v2398
        %v2418 = vsel %vm2413, %v2398, %v2400
        %v2419 = vsel %vm2413, %v2402, %v2404
        %v2420 = vsel %vm2413, %v2404, %v2406
        %v2421 = vsel %vm2413, %v2406, %v2408
        %v2422 = vsel %vm2413, %v2408, %v2410
        %v2423 = vsel %vm2413, %v2410, %v2412
        %v2438 = vsel %vm2413, %v2400, %v2390
        %v2439 = vsel %vm2413, %v2412, %v2402
        %v2440 = vmax.f32 %v2365, %v2414
        %v2441 = vmax.f32 %v2366, %v2415
        %v2442 = vmax.f32 %v2367, %v2416
        %v2443 = vmax.f32 %v2368, %v2417
        %v2444 = vmax.f32 %v2369, %v2418
        %v2445 = vmax.f32 %v2370, %v2438
        %v2446 = vmax.f32 %v2371, %v2419
        %v2447 = vmax.f32 %v2372, %v2420
        %v2448 = vmax.f32 %v2373, %v2421
        %v2449 = vmax.f32 %v2374, %v2422
        %v2450 = vmax.f32 %v2375, %v2423
        %v2451 = vmax.f32 %v2376, %v2439
        %2452 = vst [vmem:[#allocation2] sm:$0xff] %v2440
        %2453 = vst [vmem:[#allocation2 + $0x8] sm:$0xff] %v2441
        %2454 = vst [vmem:[#allocation2 + $0x10] sm:$0xff] %v2442
        %2455 = vst [vmem:[#allocation2 + $0x18] sm:$0xff] %v2443
        %2456 = vst [vmem:[#allocation2 + $0x20] sm:$0xff] %v2444
        %2457 = vst [vmem:[#allocation2 + $0x28] sm:$0xff] %v2445
        %2458 = vst [vmem:[#allocation2 + $0x30] sm:$0xff] %v2446
        %2459 = vst [vmem:[#allocation2 + $0x38] sm:$0xff] %v2447
        %2460 = vst [vmem:[#allocation2 + $0x40] sm:$0xff] %v2448
        %2461 = vst [vmem:[#allocation2 + $0x48] sm:$0xff] %v2449
        %2462 = vst [vmem:[#allocation2 + $0x50] sm:$0xff] %v2450
        %2463 = vst [vmem:[#allocation2 + $0x58] sm:$0xff] %v2451
        %v2464 = vld [vmem:[#allocation2] sm:$0xff]
        %v2465 = vld [vmem:[#allocation2 + $0x8] sm:$0xff]
        %v2466 = vld [vmem:[#allocation2 + $0x10] sm:$0xff]
        %v2467 = vld [vmem:[#allocation2 + $0x18] sm:$0xff]
        %v2468 = vld [vmem:[#allocation2 + $0x20] sm:$0xff]
        %v2469 = vld [vmem:[#allocation2 + $0x28] sm:$0xff]
        %v2470 = vpack.c.bf16 %v2464, %v2464
        %v2471 = vpack.c.bf16 %v2465, %v2465
        %v2472 = vpack.c.bf16 %v2466, %v2466
        %v2473 = vpack.c.bf16 %v2467, %v2467
        %v2474 = vpack.c.bf16 %v2468, %v2468
        %v2475 = vpack.c.bf16 %v2469, %v2469
        %v2476 = vld [vmem:[#allocation9] sm:$0xff]
        %v2477 = vld [vmem:[#allocation9 + $0x8] sm:$0xff]
        %v2478 = vld [vmem:[#allocation9 + $0x10] sm:$0xff]
        %v2479 = vld [vmem:[#allocation9 + $0x18] sm:$0xff]
        %v2480 = vld [vmem:[#allocation9 + $0x20] sm:$0xff]
        %v2481 = vld [vmem:[#allocation9 + $0x28] sm:$0xff]
        %v2482 = vld [vmem:[#allocation9 + $0x30] sm:$0xff]
        %v2483 = vld [vmem:[#allocation9 + $0x38] sm:$0xff]
        %v2484 = vld [vmem:[#allocation9 + $0x40] sm:$0xff]
        %v2485 = vld [vmem:[#allocation9 + $0x48] sm:$0xff]
        %v2486 = vld [vmem:[#allocation9 + $0x50] sm:$0xff]
        %v2487 = vld [vmem:[#allocation9 + $0x58] sm:$0xff]
        %v2488 = vld [vmem:[#allocation9 + $0x60] sm:$0xff]
        %v2489 = vld [vmem:[#allocation9 + $0x68] sm:$0xff]
        %v2490 = vld [vmem:[#allocation9 + $0x70] sm:$0xff]
        %v2491 = vld [vmem:[#allocation9 + $0x78] sm:$0xff]
        %v2492 = vld [vmem:[#allocation9 + $0x80] sm:$0xff]
        %v2493 = vld [vmem:[#allocation9 + $0x88] sm:$0xff]
        %v2494 = vld [vmem:[#allocation9 + $0x90] sm:$0xff]
        %v2495 = vld [vmem:[#allocation9 + $0x98] sm:$0xff]
        %v2496 = vld [vmem:[#allocation9 + $0xa0] sm:$0xff]
        %v2497 = vld [vmem:[#allocation9 + $0xa8] sm:$0xff]
        %v2498 = vld [vmem:[#allocation9 + $0xb0] sm:$0xff]
        %v2499 = vld [vmem:[#allocation9 + $0xb8] sm:$0xff]
        %v2500 = vld [vmem:[#allocation9 + $0xc0] sm:$0xff]
        %v2501 = vld [vmem:[#allocation9 + $0xc8] sm:$0xff]
        %v2502 = vld [vmem:[#allocation9 + $0xd0] sm:$0xff]
        %v2503 = vld [vmem:[#allocation9 + $0xd8] sm:$0xff]
        %v2504 = vld [vmem:[#allocation9 + $0xe0] sm:$0xff]
        %v2505 = vld [vmem:[#allocation9 + $0xe8] sm:$0xff]
        %v2506 = vld [vmem:[#allocation9 + $0xf0] sm:$0xff]
        %v2507 = vld [vmem:[#allocation9 + $0xf8] sm:$0xff]
        %v2508 = vld [vmem:[#allocation9 + $0x100] sm:$0xff]
        %v2509 = vld [vmem:[#allocation9 + $0x108] sm:$0xff]
        %v2510 = vld [vmem:[#allocation9 + $0x110] sm:$0xff]
        %v2511 = vld [vmem:[#allocation9 + $0x118] sm:$0xff]
        %v2512 = vld [vmem:[#allocation9 + $0x120] sm:$0xff]
        %v2513 = vld [vmem:[#allocation9 + $0x128] sm:$0xff]
        %v2514 = vld [vmem:[#allocation9 + $0x130] sm:$0xff]
        %v2515 = vld [vmem:[#allocation9 + $0x138] sm:$0xff]
        %v2516 = vld [vmem:[#allocation9 + $0x140] sm:$0xff]
        %v2517 = vld [vmem:[#allocation9 + $0x148] sm:$0xff]
        %v2518 = vld [vmem:[#allocation9 + $0x150] sm:$0xff]
        %v2519 = vld [vmem:[#allocation9 + $0x158] sm:$0xff]
        %v2520 = vld [vmem:[#allocation9 + $0x160] sm:$0xff]
        %v2521 = vld [vmem:[#allocation9 + $0x168] sm:$0xff]
        %v2522 = vld [vmem:[#allocation9 + $0x170] sm:$0xff]
        %v2523 = vld [vmem:[#allocation9 + $0x178] sm:$0xff]
        %v2524 = vld [vmem:[#allocation9 + $0x180] sm:$0xff]
        %v2525 = vld [vmem:[#allocation9 + $0x188] sm:$0xff]
        %v2526 = vld [vmem:[#allocation9 + $0x190] sm:$0xff]
        %v2527 = vld [vmem:[#allocation9 + $0x198] sm:$0xff]
        %v2528 = vld [vmem:[#allocation9 + $0x1a0] sm:$0xff]
        %v2529 = vld [vmem:[#allocation9 + $0x1a8] sm:$0xff]
        %v2530 = vld [vmem:[#allocation9 + $0x1b0] sm:$0xff]
        %v2531 = vld [vmem:[#allocation9 + $0x1b8] sm:$0xff]
        %v2532 = vld [vmem:[#allocation9 + $0x1c0] sm:$0xff]
        %v2533 = vld [vmem:[#allocation9 + $0x1c8] sm:$0xff]
        %v2534 = vld [vmem:[#allocation9 + $0x1d0] sm:$0xff]
        %v2535 = vld [vmem:[#allocation9 + $0x1d8] sm:$0xff]
        %v2536 = vld [vmem:[#allocation9 + $0x1e0] sm:$0xff]
        %v2537 = vld [vmem:[#allocation9 + $0x1e8] sm:$0xff]
        %v2538 = vld [vmem:[#allocation9 + $0x1f0] sm:$0xff]
        %v2539 = vld [vmem:[#allocation9 + $0x1f8] sm:$0xff]
        %v2540 = vld [vmem:[#allocation9 + $0x200] sm:$0xff]
        %v2541 = vld [vmem:[#allocation9 + $0x208] sm:$0xff]
        %v2542 = vld [vmem:[#allocation9 + $0x210] sm:$0xff]
        %v2543 = vld [vmem:[#allocation9 + $0x218] sm:$0xff]
        %v2544 = vld [vmem:[#allocation9 + $0x220] sm:$0xff]
        %v2545 = vld [vmem:[#allocation9 + $0x228] sm:$0xff]
        %v2546 = vld [vmem:[#allocation9 + $0x230] sm:$0xff]
        %v2547 = vld [vmem:[#allocation9 + $0x238] sm:$0xff]
        %v2548 = vld [vmem:[#allocation9 + $0x240] sm:$0xff]
        %v2549 = vld [vmem:[#allocation9 + $0x248] sm:$0xff]
        %v2550 = vld [vmem:[#allocation9 + $0x250] sm:$0xff]
        %v2551 = vld [vmem:[#allocation9 + $0x258] sm:$0xff]
        %v2552 = vld [vmem:[#allocation9 + $0x260] sm:$0xff]
        %v2553 = vld [vmem:[#allocation9 + $0x268] sm:$0xff]
        %v2554 = vld [vmem:[#allocation9 + $0x270] sm:$0xff]
        %v2555 = vld [vmem:[#allocation9 + $0x278] sm:$0xff]
        %v2556 = vld [vmem:[#allocation9 + $0x280] sm:$0xff]
        %v2557 = vld [vmem:[#allocation9 + $0x288] sm:$0xff]
        %v2558 = vld [vmem:[#allocation9 + $0x290] sm:$0xff]
        %v2559 = vld [vmem:[#allocation9 + $0x298] sm:$0xff]
        %v2560 = vld [vmem:[#allocation9 + $0x2a0] sm:$0xff]
        %v2561 = vld [vmem:[#allocation9 + $0x2a8] sm:$0xff]
        %v2562 = vld [vmem:[#allocation9 + $0x2b0] sm:$0xff]
        %v2563 = vld [vmem:[#allocation9 + $0x2b8] sm:$0xff]
        %v2564 = vld [vmem:[#allocation9 + $0x2c0] sm:$0xff]
        %v2565 = vld [vmem:[#allocation9 + $0x2c8] sm:$0xff]
        %v2566 = vld [vmem:[#allocation9 + $0x2d0] sm:$0xff]
        %v2567 = vld [vmem:[#allocation9 + $0x2d8] sm:$0xff]
        %v2568 = vld [vmem:[#allocation9 + $0x2e0] sm:$0xff]
        %v2569 = vld [vmem:[#allocation9 + $0x2e8] sm:$0xff]
        %v2570 = vld [vmem:[#allocation9 + $0x2f0] sm:$0xff]
        %v2571 = vld [vmem:[#allocation9 + $0x2f8] sm:$0xff]
        %v2572 = vld [vmem:[#allocation9 + $0x300] sm:$0xff]
        %v2573 = vld [vmem:[#allocation9 + $0x308] sm:$0xff]
        %v2574 = vld [vmem:[#allocation9 + $0x310] sm:$0xff]
        %v2575 = vld [vmem:[#allocation9 + $0x318] sm:$0xff]
        %v2576 = vld [vmem:[#allocation9 + $0x320] sm:$0xff]
        %v2577 = vld [vmem:[#allocation9 + $0x328] sm:$0xff]
        %v2578 = vld [vmem:[#allocation9 + $0x330] sm:$0xff]
        %v2579 = vld [vmem:[#allocation9 + $0x338] sm:$0xff]
        %v2580 = vld [vmem:[#allocation9 + $0x340] sm:$0xff]
        %v2581 = vld [vmem:[#allocation9 + $0x348] sm:$0xff]
        %v2582 = vld [vmem:[#allocation9 + $0x350] sm:$0xff]
        %v2583 = vld [vmem:[#allocation9 + $0x358] sm:$0xff]
        %v2584 = vld [vmem:[#allocation9 + $0x360] sm:$0xff]
        %v2585 = vld [vmem:[#allocation9 + $0x368] sm:$0xff]
        %v2586 = vld [vmem:[#allocation9 + $0x370] sm:$0xff]
        %v2587 = vld [vmem:[#allocation9 + $0x378] sm:$0xff]
        %v2588 = vld [vmem:[#allocation9 + $0x380] sm:$0xff]
        %v2589 = vld [vmem:[#allocation9 + $0x388] sm:$0xff]
        %v2590 = vld [vmem:[#allocation9 + $0x390] sm:$0xff]
        %v2591 = vld [vmem:[#allocation9 + $0x398] sm:$0xff]
        %v2592 = vld [vmem:[#allocation9 + $0x3a0] sm:$0xff]
        %v2593 = vld [vmem:[#allocation9 + $0x3a8] sm:$0xff]
        %v2594 = vld [vmem:[#allocation9 + $0x3b0] sm:$0xff]
        %v2595 = vld [vmem:[#allocation9 + $0x3b8] sm:$0xff]
        %v2596 = vld [vmem:[#allocation9 + $0x3c0] sm:$0xff]
        %v2597 = vld [vmem:[#allocation9 + $0x3c8] sm:$0xff]
        %v2598 = vld [vmem:[#allocation9 + $0x3d0] sm:$0xff]
        %v2599 = vld [vmem:[#allocation9 + $0x3d8] sm:$0xff]
        %v2600 = vld [vmem:[#allocation9 + $0x3e0] sm:$0xff]
        %v2601 = vld [vmem:[#allocation9 + $0x3e8] sm:$0xff]
        %v2602 = vld [vmem:[#allocation9 + $0x3f0] sm:$0xff]
        %v2603 = vld [vmem:[#allocation9 + $0x3f8] sm:$0xff]
        %v2604 = vld [vmem:[#allocation9 + $0x400] sm:$0xff]
        %v2605 = vld [vmem:[#allocation9 + $0x408] sm:$0xff]
        %v2606 = vld [vmem:[#allocation9 + $0x410] sm:$0xff]
        %v2607 = vld [vmem:[#allocation9 + $0x418] sm:$0xff]
        %v2608 = vld [vmem:[#allocation9 + $0x420] sm:$0xff]
        %v2609 = vld [vmem:[#allocation9 + $0x428] sm:$0xff]
        %v2610 = vld [vmem:[#allocation9 + $0x430] sm:$0xff]
        %v2611 = vld [vmem:[#allocation9 + $0x438] sm:$0xff]
        %v2612 = vld [vmem:[#allocation9 + $0x440] sm:$0xff]
        %v2613 = vld [vmem:[#allocation9 + $0x448] sm:$0xff]
        %v2614 = vld [vmem:[#allocation9 + $0x450] sm:$0xff]
        %v2615 = vld [vmem:[#allocation9 + $0x458] sm:$0xff]
        %v2616 = vld [vmem:[#allocation9 + $0x460] sm:$0xff]
        %v2617 = vld [vmem:[#allocation9 + $0x468] sm:$0xff]
        %v2618 = vld [vmem:[#allocation9 + $0x470] sm:$0xff]
        %v2619 = vld [vmem:[#allocation9 + $0x478] sm:$0xff]
        %v2620 = vld [vmem:[#allocation9 + $0x480] sm:$0xff]
        %v2621 = vld [vmem:[#allocation9 + $0x488] sm:$0xff]
        %v2622 = vld [vmem:[#allocation9 + $0x490] sm:$0xff]
        %v2623 = vld [vmem:[#allocation9 + $0x498] sm:$0xff]
        %v2624 = vld [vmem:[#allocation9 + $0x4a0] sm:$0xff]
        %v2625 = vld [vmem:[#allocation9 + $0x4a8] sm:$0xff]
        %v2626 = vld [vmem:[#allocation9 + $0x4b0] sm:$0xff]
        %v2627 = vld [vmem:[#allocation9 + $0x4b8] sm:$0xff]
        %v2628 = vld [vmem:[#allocation9 + $0x4c0] sm:$0xff]
        %v2629 = vld [vmem:[#allocation9 + $0x4c8] sm:$0xff]
        %v2630 = vld [vmem:[#allocation9 + $0x4d0] sm:$0xff]
        %v2631 = vld [vmem:[#allocation9 + $0x4d8] sm:$0xff]
        %v2632 = vld [vmem:[#allocation9 + $0x4e0] sm:$0xff]
        %v2633 = vld [vmem:[#allocation9 + $0x4e8] sm:$0xff]
        %v2634 = vld [vmem:[#allocation9 + $0x4f0] sm:$0xff]
        %v2635 = vld [vmem:[#allocation9 + $0x4f8] sm:$0xff]
        %v2636 = vld [vmem:[#allocation9 + $0x500] sm:$0xff]
        %v2637 = vld [vmem:[#allocation9 + $0x508] sm:$0xff]
        %v2638 = vld [vmem:[#allocation9 + $0x510] sm:$0xff]
        %v2639 = vld [vmem:[#allocation9 + $0x518] sm:$0xff]
        %v2640 = vld [vmem:[#allocation9 + $0x520] sm:$0xff]
        %v2641 = vld [vmem:[#allocation9 + $0x528] sm:$0xff]
        %v2642 = vld [vmem:[#allocation9 + $0x530] sm:$0xff]
        %v2643 = vld [vmem:[#allocation9 + $0x538] sm:$0xff]
        %v2644 = vld [vmem:[#allocation9 + $0x540] sm:$0xff]
        %v2645 = vld [vmem:[#allocation9 + $0x548] sm:$0xff]
        %v2646 = vld [vmem:[#allocation9 + $0x550] sm:$0xff]
        %v2647 = vld [vmem:[#allocation9 + $0x558] sm:$0xff]
        %v2648 = vld [vmem:[#allocation9 + $0x560] sm:$0xff]
        %v2649 = vld [vmem:[#allocation9 + $0x568] sm:$0xff]
        %v2650 = vld [vmem:[#allocation9 + $0x570] sm:$0xff]
        %v2651 = vld [vmem:[#allocation9 + $0x578] sm:$0xff]
        %v2652 = vld [vmem:[#allocation9 + $0x580] sm:$0xff]
        %v2653 = vld [vmem:[#allocation9 + $0x588] sm:$0xff]
        %v2654 = vld [vmem:[#allocation9 + $0x590] sm:$0xff]
        %v2655 = vld [vmem:[#allocation9 + $0x598] sm:$0xff]
        %v2656 = vld [vmem:[#allocation9 + $0x5a0] sm:$0xff]
        %v2657 = vld [vmem:[#allocation9 + $0x5a8] sm:$0xff]
        %v2658 = vld [vmem:[#allocation9 + $0x5b0] sm:$0xff]
        %v2659 = vld [vmem:[#allocation9 + $0x5b8] sm:$0xff]
        %v2660 = vld [vmem:[#allocation9 + $0x5c0] sm:$0xff]
        %v2661 = vld [vmem:[#allocation9 + $0x5c8] sm:$0xff]
        %v2662 = vld [vmem:[#allocation9 + $0x5d0] sm:$0xff]
        %v2663 = vld [vmem:[#allocation9 + $0x5d8] sm:$0xff]
        %v2664 = vld [vmem:[#allocation9 + $0x5e0] sm:$0xff]
        %v2665 = vld [vmem:[#allocation9 + $0x5e8] sm:$0xff]
        %v2666 = vld [vmem:[#allocation9 + $0x5f0] sm:$0xff]
        %v2667 = vld [vmem:[#allocation9 + $0x5f8] sm:$0xff]
        %v2668 = vld [vmem:[#allocation2] sm:$0xfe]
        %v2669 = vld [vmem:[#allocation2 + $0x8] sm:$0xfe]
        %v2670 = vld [vmem:[#allocation2 + $0x10] sm:$0xfe]
        %v2671 = vld [vmem:[#allocation2 + $0x18] sm:$0xfe]
        %v2672 = vld [vmem:[#allocation2 + $0x20] sm:$0xfe]
        %v2673 = vld [vmem:[#allocation2 + $0x28] sm:$0xfe]
        %v2674 = vld [vmem:[#allocation2 + $0x30] sm:$0x1]
        %v2675 = vld [vmem:[#allocation2 + $0x38] sm:$0x1]
        %v2676 = vld [vmem:[#allocation2 + $0x40] sm:$0x1]
        %v2677 = vld [vmem:[#allocation2 + $0x48] sm:$0x1]
        %v2678 = vld [vmem:[#allocation2 + $0x50] sm:$0x1]
        %v2679 = vld [vmem:[#allocation2 + $0x58] sm:$0x1]
        %v2680 = vpack.c.bf16 %v2674, %v2668
        %v2681 = vpack.c.bf16 %v2675, %v2669
        %v2682 = vpack.c.bf16 %v2676, %v2670
        %v2683 = vpack.c.bf16 %v2677, %v2671
        %v2684 = vpack.c.bf16 %v2678, %v2672
        %v2685 = vpack.c.bf16 %v2679, %v2673
        %s2686 = scalar_lea.vmem [#allocation9], 1536
        %v2687 = vld [vmem:[%s2686] sm:$0xff]
        %v2688 = vld [vmem:[%s2686 + $0x8] sm:$0xff]
        %v2689 = vld [vmem:[%s2686 + $0x10] sm:$0xff]
        %v2690 = vld [vmem:[%s2686 + $0x18] sm:$0xff]
        %v2691 = vld [vmem:[%s2686 + $0x20] sm:$0xff]
        %v2692 = vld [vmem:[%s2686 + $0x28] sm:$0xff]
        %v2693 = vld [vmem:[%s2686 + $0x30] sm:$0xff]
        %v2694 = vld [vmem:[%s2686 + $0x38] sm:$0xff]
        %v2695 = vld [vmem:[%s2686 + $0x40] sm:$0xff]
        %v2696 = vld [vmem:[%s2686 + $0x48] sm:$0xff]
        %v2697 = vld [vmem:[%s2686 + $0x50] sm:$0xff]
        %v2698 = vld [vmem:[%s2686 + $0x58] sm:$0xff]
        %v2699 = vld [vmem:[%s2686 + $0x60] sm:$0xff]
        %v2700 = vld [vmem:[%s2686 + $0x68] sm:$0xff]
        %v2701 = vld [vmem:[%s2686 + $0x70] sm:$0xff]
        %v2702 = vld [vmem:[%s2686 + $0x78] sm:$0xff]
        %v2703 = vld [vmem:[%s2686 + $0x80] sm:$0xff]
        %v2704 = vld [vmem:[%s2686 + $0x88] sm:$0xff]
        %v2705 = vld [vmem:[%s2686 + $0x90] sm:$0xff]
        %v2706 = vld [vmem:[%s2686 + $0x98] sm:$0xff]
        %v2707 = vld [vmem:[%s2686 + $0xa0] sm:$0xff]
        %v2708 = vld [vmem:[%s2686 + $0xa8] sm:$0xff]
        %v2709 = vld [vmem:[%s2686 + $0xb0] sm:$0xff]
        %v2710 = vld [vmem:[%s2686 + $0xb8] sm:$0xff]
        %v2711 = vld [vmem:[%s2686 + $0xc0] sm:$0xff]
        %v2712 = vld [vmem:[%s2686 + $0xc8] sm:$0xff]
        %v2713 = vld [vmem:[%s2686 + $0xd0] sm:$0xff]
        %v2714 = vld [vmem:[%s2686 + $0xd8] sm:$0xff]
        %v2715 = vld [vmem:[%s2686 + $0xe0] sm:$0xff]
        %v2716 = vld [vmem:[%s2686 + $0xe8] sm:$0xff]
        %v2717 = vld [vmem:[%s2686 + $0xf0] sm:$0xff]
        %v2718 = vld [vmem:[%s2686 + $0xf8] sm:$0xff]
        %v2719 = vld [vmem:[%s2686 + $0x100] sm:$0xff]
        %v2720 = vld [vmem:[%s2686 + $0x108] sm:$0xff]
        %v2721 = vld [vmem:[%s2686 + $0x110] sm:$0xff]
        %v2722 = vld [vmem:[%s2686 + $0x118] sm:$0xff]
        %v2723 = vld [vmem:[%s2686 + $0x120] sm:$0xff]
        %v2724 = vld [vmem:[%s2686 + $0x128] sm:$0xff]
        %v2725 = vld [vmem:[%s2686 + $0x130] sm:$0xff]
        %v2726 = vld [vmem:[%s2686 + $0x138] sm:$0xff]
        %v2727 = vld [vmem:[%s2686 + $0x140] sm:$0xff]
        %v2728 = vld [vmem:[%s2686 + $0x148] sm:$0xff]
        %v2729 = vld [vmem:[%s2686 + $0x150] sm:$0xff]
        %v2730 = vld [vmem:[%s2686 + $0x158] sm:$0xff]
        %v2731 = vld [vmem:[%s2686 + $0x160] sm:$0xff]
        %v2732 = vld [vmem:[%s2686 + $0x168] sm:$0xff]
        %v2733 = vld [vmem:[%s2686 + $0x170] sm:$0xff]
        %v2734 = vld [vmem:[%s2686 + $0x178] sm:$0xff]
        %v2735 = vld [vmem:[%s2686 + $0x180] sm:$0xff]
        %v2736 = vld [vmem:[%s2686 + $0x188] sm:$0xff]
        %v2737 = vld [vmem:[%s2686 + $0x190] sm:$0xff]
        %v2738 = vld [vmem:[%s2686 + $0x198] sm:$0xff]
        %v2739 = vld [vmem:[%s2686 + $0x1a0] sm:$0xff]
        %v2740 = vld [vmem:[%s2686 + $0x1a8] sm:$0xff]
        %v2741 = vld [vmem:[%s2686 + $0x1b0] sm:$0xff]
        %v2742 = vld [vmem:[%s2686 + $0x1b8] sm:$0xff]
        %v2743 = vld [vmem:[%s2686 + $0x1c0] sm:$0xff]
        %v2744 = vld [vmem:[%s2686 + $0x1c8] sm:$0xff]
        %v2745 = vld [vmem:[%s2686 + $0x1d0] sm:$0xff]
        %v2746 = vld [vmem:[%s2686 + $0x1d8] sm:$0xff]
        %v2747 = vld [vmem:[%s2686 + $0x1e0] sm:$0xff]
        %v2748 = vld [vmem:[%s2686 + $0x1e8] sm:$0xff]
        %v2749 = vld [vmem:[%s2686 + $0x1f0] sm:$0xff]
        %v2750 = vld [vmem:[%s2686 + $0x1f8] sm:$0xff]
        %v2751 = vld [vmem:[%s2686 + $0x200] sm:$0xff]
        %v2752 = vld [vmem:[%s2686 + $0x208] sm:$0xff]
        %v2753 = vld [vmem:[%s2686 + $0x210] sm:$0xff]
        %v2754 = vld [vmem:[%s2686 + $0x218] sm:$0xff]
        %v2755 = vld [vmem:[%s2686 + $0x220] sm:$0xff]
        %v2756 = vld [vmem:[%s2686 + $0x228] sm:$0xff]
        %v2757 = vld [vmem:[%s2686 + $0x230] sm:$0xff]
        %v2758 = vld [vmem:[%s2686 + $0x238] sm:$0xff]
        %v2759 = vld [vmem:[%s2686 + $0x240] sm:$0xff]
        %v2760 = vld [vmem:[%s2686 + $0x248] sm:$0xff]
        %v2761 = vld [vmem:[%s2686 + $0x250] sm:$0xff]
        %v2762 = vld [vmem:[%s2686 + $0x258] sm:$0xff]
        %v2763 = vld [vmem:[%s2686 + $0x260] sm:$0xff]
        %v2764 = vld [vmem:[%s2686 + $0x268] sm:$0xff]
        %v2765 = vld [vmem:[%s2686 + $0x270] sm:$0xff]
        %v2766 = vld [vmem:[%s2686 + $0x278] sm:$0xff]
        %v2767 = vld [vmem:[%s2686 + $0x280] sm:$0xff]
        %v2768 = vld [vmem:[%s2686 + $0x288] sm:$0xff]
        %v2769 = vld [vmem:[%s2686 + $0x290] sm:$0xff]
        %v2770 = vld [vmem:[%s2686 + $0x298] sm:$0xff]
        %v2771 = vld [vmem:[%s2686 + $0x2a0] sm:$0xff]
        %v2772 = vld [vmem:[%s2686 + $0x2a8] sm:$0xff]
        %v2773 = vld [vmem:[%s2686 + $0x2b0] sm:$0xff]
        %v2774 = vld [vmem:[%s2686 + $0x2b8] sm:$0xff]
        %v2775 = vld [vmem:[%s2686 + $0x2c0] sm:$0xff]
        %v2776 = vld [vmem:[%s2686 + $0x2c8] sm:$0xff]
        %v2777 = vld [vmem:[%s2686 + $0x2d0] sm:$0xff]
        %v2778 = vld [vmem:[%s2686 + $0x2d8] sm:$0xff]
        %v2779 = vld [vmem:[%s2686 + $0x2e0] sm:$0xff]
        %v2780 = vld [vmem:[%s2686 + $0x2e8] sm:$0xff]
        %v2781 = vld [vmem:[%s2686 + $0x2f0] sm:$0xff]
        %v2782 = vld [vmem:[%s2686 + $0x2f8] sm:$0xff]
        %v2783 = vld [vmem:[%s2686 + $0x300] sm:$0xff]
        %v2784 = vld [vmem:[%s2686 + $0x308] sm:$0xff]
        %v2785 = vld [vmem:[%s2686 + $0x310] sm:$0xff]
        %v2786 = vld [vmem:[%s2686 + $0x318] sm:$0xff]
        %v2787 = vld [vmem:[%s2686 + $0x320] sm:$0xff]
        %v2788 = vld [vmem:[%s2686 + $0x328] sm:$0xff]
        %v2789 = vld [vmem:[%s2686 + $0x330] sm:$0xff]
        %v2790 = vld [vmem:[%s2686 + $0x338] sm:$0xff]
        %v2791 = vld [vmem:[%s2686 + $0x340] sm:$0xff]
        %v2792 = vld [vmem:[%s2686 + $0x348] sm:$0xff]
        %v2793 = vld [vmem:[%s2686 + $0x350] sm:$0xff]
        %v2794 = vld [vmem:[%s2686 + $0x358] sm:$0xff]
        %v2795 = vld [vmem:[%s2686 + $0x360] sm:$0xff]
        %v2796 = vld [vmem:[%s2686 + $0x368] sm:$0xff]
        %v2797 = vld [vmem:[%s2686 + $0x370] sm:$0xff]
        %v2798 = vld [vmem:[%s2686 + $0x378] sm:$0xff]
        %v2799 = vld [vmem:[%s2686 + $0x380] sm:$0xff]
        %v2800 = vld [vmem:[%s2686 + $0x388] sm:$0xff]
        %v2801 = vld [vmem:[%s2686 + $0x390] sm:$0xff]
        %v2802 = vld [vmem:[%s2686 + $0x398] sm:$0xff]
        %v2803 = vld [vmem:[%s2686 + $0x3a0] sm:$0xff]
        %v2804 = vld [vmem:[%s2686 + $0x3a8] sm:$0xff]
        %v2805 = vld [vmem:[%s2686 + $0x3b0] sm:$0xff]
        %v2806 = vld [vmem:[%s2686 + $0x3b8] sm:$0xff]
        %v2807 = vld [vmem:[%s2686 + $0x3c0] sm:$0xff]
        %v2808 = vld [vmem:[%s2686 + $0x3c8] sm:$0xff]
        %v2809 = vld [vmem:[%s2686 + $0x3d0] sm:$0xff]
        %v2810 = vld [vmem:[%s2686 + $0x3d8] sm:$0xff]
        %v2811 = vld [vmem:[%s2686 + $0x3e0] sm:$0xff]
        %v2812 = vld [vmem:[%s2686 + $0x3e8] sm:$0xff]
        %v2813 = vld [vmem:[%s2686 + $0x3f0] sm:$0xff]
        %v2814 = vld [vmem:[%s2686 + $0x3f8] sm:$0xff]
        %v2815 = vld [vmem:[%s2686 + $0x400] sm:$0xff]
        %v2816 = vld [vmem:[%s2686 + $0x408] sm:$0xff]
        %v2817 = vld [vmem:[%s2686 + $0x410] sm:$0xff]
        %v2818 = vld [vmem:[%s2686 + $0x418] sm:$0xff]
        %v2819 = vld [vmem:[%s2686 + $0x420] sm:$0xff]
        %v2820 = vld [vmem:[%s2686 + $0x428] sm:$0xff]
        %v2821 = vld [vmem:[%s2686 + $0x430] sm:$0xff]
        %v2822 = vld [vmem:[%s2686 + $0x438] sm:$0xff]
        %v2823 = vld [vmem:[%s2686 + $0x440] sm:$0xff]
        %v2824 = vld [vmem:[%s2686 + $0x448] sm:$0xff]
        %v2825 = vld [vmem:[%s2686 + $0x450] sm:$0xff]
        %v2826 = vld [vmem:[%s2686 + $0x458] sm:$0xff]
        %v2827 = vld [vmem:[%s2686 + $0x460] sm:$0xff]
        %v2828 = vld [vmem:[%s2686 + $0x468] sm:$0xff]
        %v2829 = vld [vmem:[%s2686 + $0x470] sm:$0xff]
        %v2830 = vld [vmem:[%s2686 + $0x478] sm:$0xff]
        %v2831 = vld [vmem:[%s2686 + $0x480] sm:$0xff]
        %v2832 = vld [vmem:[%s2686 + $0x488] sm:$0xff]
        %v2833 = vld [vmem:[%s2686 + $0x490] sm:$0xff]
        %v2834 = vld [vmem:[%s2686 + $0x498] sm:$0xff]
        %v2835 = vld [vmem:[%s2686 + $0x4a0] sm:$0xff]
        %v2836 = vld [vmem:[%s2686 + $0x4a8] sm:$0xff]
        %v2837 = vld [vmem:[%s2686 + $0x4b0] sm:$0xff]
        %v2838 = vld [vmem:[%s2686 + $0x4b8] sm:$0xff]
        %v2839 = vld [vmem:[%s2686 + $0x4c0] sm:$0xff]
        %v2840 = vld [vmem:[%s2686 + $0x4c8] sm:$0xff]
        %v2841 = vld [vmem:[%s2686 + $0x4d0] sm:$0xff]
        %v2842 = vld [vmem:[%s2686 + $0x4d8] sm:$0xff]
        %v2843 = vld [vmem:[%s2686 + $0x4e0] sm:$0xff]
        %v2844 = vld [vmem:[%s2686 + $0x4e8] sm:$0xff]
        %v2845 = vld [vmem:[%s2686 + $0x4f0] sm:$0xff]
        %v2846 = vld [vmem:[%s2686 + $0x4f8] sm:$0xff]
        %v2847 = vld [vmem:[%s2686 + $0x500] sm:$0xff]
        %v2848 = vld [vmem:[%s2686 + $0x508] sm:$0xff]
        %v2849 = vld [vmem:[%s2686 + $0x510] sm:$0xff]
        %v2850 = vld [vmem:[%s2686 + $0x518] sm:$0xff]
        %v2851 = vld [vmem:[%s2686 + $0x520] sm:$0xff]
        %v2852 = vld [vmem:[%s2686 + $0x528] sm:$0xff]
        %v2853 = vld [vmem:[%s2686 + $0x530] sm:$0xff]
        %v2854 = vld [vmem:[%s2686 + $0x538] sm:$0xff]
        %v2855 = vld [vmem:[%s2686 + $0x540] sm:$0xff]
        %v2856 = vld [vmem:[%s2686 + $0x548] sm:$0xff]
        %v2857 = vld [vmem:[%s2686 + $0x550] sm:$0xff]
        %v2858 = vld [vmem:[%s2686 + $0x558] sm:$0xff]
        %v2859 = vld [vmem:[%s2686 + $0x560] sm:$0xff]
        %v2860 = vld [vmem:[%s2686 + $0x568] sm:$0xff]
        %v2861 = vld [vmem:[%s2686 + $0x570] sm:$0xff]
        %v2862 = vld [vmem:[%s2686 + $0x578] sm:$0xff]
        %v2863 = vld [vmem:[%s2686 + $0x580] sm:$0xff]
        %v2864 = vld [vmem:[%s2686 + $0x588] sm:$0xff]
        %v2865 = vld [vmem:[%s2686 + $0x590] sm:$0xff]
        %v2866 = vld [vmem:[%s2686 + $0x598] sm:$0xff]
        %v2867 = vld [vmem:[%s2686 + $0x5a0] sm:$0xff]
        %v2868 = vld [vmem:[%s2686 + $0x5a8] sm:$0xff]
        %v2869 = vld [vmem:[%s2686 + $0x5b0] sm:$0xff]
        %v2870 = vld [vmem:[%s2686 + $0x5b8] sm:$0xff]
        %v2871 = vld [vmem:[%s2686 + $0x5c0] sm:$0xff]
        %v2872 = vld [vmem:[%s2686 + $0x5c8] sm:$0xff]
        %v2873 = vld [vmem:[%s2686 + $0x5d0] sm:$0xff]
        %v2874 = vld [vmem:[%s2686 + $0x5d8] sm:$0xff]
        %v2875 = vld [vmem:[%s2686 + $0x5e0] sm:$0xff]
        %v2876 = vld [vmem:[%s2686 + $0x5e8] sm:$0xff]
        %v2877 = vld [vmem:[%s2686 + $0x5f0] sm:$0xff]
        %v2878 = vld [vmem:[%s2686 + $0x5f8] sm:$0xff]
        %v2880 = vshrl.u32 %v2680, 16
        %v2882 = vshll.u32 %v2680, 16
        %v2884 = vrot.slane %v2882, 1
        %v2885 = vor.u32 %v2880, %v2884
        %v2887 = vshrl.u32 %v2681, 16
        %v2889 = vshll.u32 %v2681, 16
        %v2891 = vrot.slane %v2889, 1
        %v2892 = vor.u32 %v2887, %v2891
        %v2894 = vshrl.u32 %v2682, 16
        %v2896 = vshll.u32 %v2682, 16
        %v2898 = vrot.slane %v2896, 1
        %v2899 = vor.u32 %v2894, %v2898
        %v2901 = vshrl.u32 %v2683, 16
        %v2903 = vshll.u32 %v2683, 16
        %v2905 = vrot.slane %v2903, 1
        %v2906 = vor.u32 %v2901, %v2905
        %v2908 = vshrl.u32 %v2684, 16
        %v2910 = vshll.u32 %v2684, 16
        %v2912 = vrot.slane %v2910, 1
        %v2913 = vor.u32 %v2908, %v2912
        %v2915 = vshrl.u32 %v2685, 16
        %v2917 = vshll.u32 %v2685, 16
        %v2919 = vrot.slane %v2917, 1
        %v2920 = vor.u32 %v2915, %v2919
        %v3119 = vunpack.c.l.b16 %v2687
        %v3120 = vunpack.c.h.b16 %v2687
        %v3121 = vunpack.c.l.b16 %v2688
        %v3122 = vunpack.c.h.b16 %v2688
        %v3123 = vunpack.c.l.b16 %v2689
        %v3124 = vunpack.c.h.b16 %v2689
        %v3125 = vunpack.c.l.b16 %v2690
        %v3126 = vunpack.c.h.b16 %v2690
        %v3127 = vunpack.c.l.b16 %v2691
        %v3128 = vunpack.c.h.b16 %v2691
        %v3129 = vunpack.c.l.b16 %v2692
        %v3130 = vunpack.c.h.b16 %v2692
        %v3131 = vunpack.c.l.b16 %v2693
        %v3132 = vunpack.c.h.b16 %v2693
        %v3133 = vunpack.c.l.b16 %v2694
        %v3134 = vunpack.c.h.b16 %v2694
        %v3135 = vunpack.c.l.b16 %v2695
        %v3136 = vunpack.c.h.b16 %v2695
        %v3137 = vunpack.c.l.b16 %v2696
        %v3138 = vunpack.c.h.b16 %v2696
        %v3139 = vunpack.c.l.b16 %v2697
        %v3140 = vunpack.c.h.b16 %v2697
        %v3141 = vunpack.c.l.b16 %v2698
        %v3142 = vunpack.c.h.b16 %v2698
        %v3143 = vunpack.c.l.b16 %v2699
        %v3144 = vunpack.c.h.b16 %v2699
        %v3145 = vunpack.c.l.b16 %v2700
        %v3146 = vunpack.c.h.b16 %v2700
        %v3147 = vunpack.c.l.b16 %v2701
        %v3148 = vunpack.c.h.b16 %v2701
        %v3149 = vunpack.c.l.b16 %v2702
        %v3150 = vunpack.c.h.b16 %v2702
        %v3151 = vunpack.c.l.b16 %v2703
        %v3152 = vunpack.c.h.b16 %v2703
        %v3153 = vunpack.c.l.b16 %v2704
        %v3154 = vunpack.c.h.b16 %v2704
        %v3155 = vunpack.c.l.b16 %v2705
        %v3156 = vunpack.c.h.b16 %v2705
        %v3157 = vunpack.c.l.b16 %v2706
        %v3158 = vunpack.c.h.b16 %v2706
        %v3159 = vunpack.c.l.b16 %v2707
        %v3160 = vunpack.c.h.b16 %v2707
        %v3161 = vunpack.c.l.b16 %v2708
        %v3162 = vunpack.c.h.b16 %v2708
        %v3163 = vunpack.c.l.b16 %v2709
        %v3164 = vunpack.c.h.b16 %v2709
        %v3165 = vunpack.c.l.b16 %v2710
        %v3166 = vunpack.c.h.b16 %v2710
        %v3167 = vunpack.c.l.b16 %v2711
        %v3168 = vunpack.c.h.b16 %v2711
        %v3169 = vunpack.c.l.b16 %v2712
        %v3170 = vunpack.c.h.b16 %v2712
        %v3171 = vunpack.c.l.b16 %v2713
        %v3172 = vunpack.c.h.b16 %v2713
        %v3173 = vunpack.c.l.b16 %v2714
        %v3174 = vunpack.c.h.b16 %v2714
        %v3175 = vunpack.c.l.b16 %v2715
        %v3176 = vunpack.c.h.b16 %v2715
        %v3177 = vunpack.c.l.b16 %v2716
        %v3178 = vunpack.c.h.b16 %v2716
        %v3179 = vunpack.c.l.b16 %v2717
        %v3180 = vunpack.c.h.b16 %v2717
        %v3181 = vunpack.c.l.b16 %v2718
        %v3182 = vunpack.c.h.b16 %v2718
        %v3183 = vunpack.c.l.b16 %v2719
        %v3184 = vunpack.c.h.b16 %v2719
        %v3185 = vunpack.c.l.b16 %v2720
        %v3186 = vunpack.c.h.b16 %v2720
        %v3187 = vunpack.c.l.b16 %v2721
        %v3188 = vunpack.c.h.b16 %v2721
        %v3189 = vunpack.c.l.b16 %v2722
        %v3190 = vunpack.c.h.b16 %v2722
        %v3191 = vunpack.c.l.b16 %v2723
        %v3192 = vunpack.c.h.b16 %v2723
        %v3193 = vunpack.c.l.b16 %v2724
        %v3194 = vunpack.c.h.b16 %v2724
        %v3195 = vunpack.c.l.b16 %v2725
        %v3196 = vunpack.c.h.b16 %v2725
        %v3197 = vunpack.c.l.b16 %v2726
        %v3198 = vunpack.c.h.b16 %v2726
        %v3199 = vunpack.c.l.b16 %v2727
        %v3200 = vunpack.c.h.b16 %v2727
        %v3201 = vunpack.c.l.b16 %v2728
        %v3202 = vunpack.c.h.b16 %v2728
        %v3203 = vunpack.c.l.b16 %v2729
        %v3204 = vunpack.c.h.b16 %v2729
        %v3205 = vunpack.c.l.b16 %v2730
        %v3206 = vunpack.c.h.b16 %v2730
        %v3207 = vunpack.c.l.b16 %v2731
        %v3208 = vunpack.c.h.b16 %v2731
        %v3209 = vunpack.c.l.b16 %v2732
        %v3210 = vunpack.c.h.b16 %v2732
        %v3211 = vunpack.c.l.b16 %v2733
        %v3212 = vunpack.c.h.b16 %v2733
        %v3213 = vunpack.c.l.b16 %v2734
        %v3214 = vunpack.c.h.b16 %v2734
        %v3215 = vunpack.c.l.b16 %v2735
        %v3216 = vunpack.c.h.b16 %v2735
        %v3217 = vunpack.c.l.b16 %v2736
        %v3218 = vunpack.c.h.b16 %v2736
        %v3219 = vunpack.c.l.b16 %v2737
        %v3220 = vunpack.c.h.b16 %v2737
        %v3221 = vunpack.c.l.b16 %v2738
        %v3222 = vunpack.c.h.b16 %v2738
        %v3223 = vunpack.c.l.b16 %v2739
        %v3224 = vunpack.c.h.b16 %v2739
        %v3225 = vunpack.c.l.b16 %v2740
        %v3226 = vunpack.c.h.b16 %v2740
        %v3227 = vunpack.c.l.b16 %v2741
        %v3228 = vunpack.c.h.b16 %v2741
        %v3229 = vunpack.c.l.b16 %v2742
        %v3230 = vunpack.c.h.b16 %v2742
        %v3231 = vunpack.c.l.b16 %v2743
        %v3232 = vunpack.c.h.b16 %v2743
        %v3233 = vunpack.c.l.b16 %v2744
        %v3234 = vunpack.c.h.b16 %v2744
        %v3235 = vunpack.c.l.b16 %v2745
        %v3236 = vunpack.c.h.b16 %v2745
        %v3237 = vunpack.c.l.b16 %v2746
        %v3238 = vunpack.c.h.b16 %v2746
        %v3239 = vunpack.c.l.b16 %v2747
        %v3240 = vunpack.c.h.b16 %v2747
        %v3241 = vunpack.c.l.b16 %v2748
        %v3242 = vunpack.c.h.b16 %v2748
        %v3243 = vunpack.c.l.b16 %v2749
        %v3244 = vunpack.c.h.b16 %v2749
        %v3245 = vunpack.c.l.b16 %v2750
        %v3246 = vunpack.c.h.b16 %v2750
        %v3247 = vunpack.c.l.b16 %v2751
        %v3248 = vunpack.c.h.b16 %v2751
        %v3249 = vunpack.c.l.b16 %v2752
        %v3250 = vunpack.c.h.b16 %v2752
        %v3251 = vunpack.c.l.b16 %v2753
        %v3252 = vunpack.c.h.b16 %v2753
        %v3253 = vunpack.c.l.b16 %v2754
        %v3254 = vunpack.c.h.b16 %v2754
        %v3255 = vunpack.c.l.b16 %v2755
        %v3256 = vunpack.c.h.b16 %v2755
        %v3257 = vunpack.c.l.b16 %v2756
        %v3258 = vunpack.c.h.b16 %v2756
        %v3259 = vunpack.c.l.b16 %v2757
        %v3260 = vunpack.c.h.b16 %v2757
        %v3261 = vunpack.c.l.b16 %v2758
        %v3262 = vunpack.c.h.b16 %v2758
        %v3263 = vunpack.c.l.b16 %v2759
        %v3264 = vunpack.c.h.b16 %v2759
        %v3265 = vunpack.c.l.b16 %v2760
        %v3266 = vunpack.c.h.b16 %v2760
        %v3267 = vunpack.c.l.b16 %v2761
        %v3268 = vunpack.c.h.b16 %v2761
        %v3269 = vunpack.c.l.b16 %v2762
        %v3270 = vunpack.c.h.b16 %v2762
        %v3271 = vunpack.c.l.b16 %v2763
        %v3272 = vunpack.c.h.b16 %v2763
        %v3273 = vunpack.c.l.b16 %v2764
        %v3274 = vunpack.c.h.b16 %v2764
        %v3275 = vunpack.c.l.b16 %v2765
        %v3276 = vunpack.c.h.b16 %v2765
        %v3277 = vunpack.c.l.b16 %v2766
        %v3278 = vunpack.c.h.b16 %v2766
        %v3279 = vunpack.c.l.b16 %v2767
        %v3280 = vunpack.c.h.b16 %v2767
        %v3281 = vunpack.c.l.b16 %v2768
        %v3282 = vunpack.c.h.b16 %v2768
        %v3283 = vunpack.c.l.b16 %v2769
        %v3284 = vunpack.c.h.b16 %v2769
        %v3285 = vunpack.c.l.b16 %v2770
        %v3286 = vunpack.c.h.b16 %v2770
        %v3287 = vunpack.c.l.b16 %v2771
        %v3288 = vunpack.c.h.b16 %v2771
        %v3289 = vunpack.c.l.b16 %v2772
        %v3290 = vunpack.c.h.b16 %v2772
        %v3291 = vunpack.c.l.b16 %v2773
        %v3292 = vunpack.c.h.b16 %v2773
        %v3293 = vunpack.c.l.b16 %v2774
        %v3294 = vunpack.c.h.b16 %v2774
        %v3295 = vunpack.c.l.b16 %v2775
        %v3296 = vunpack.c.h.b16 %v2775
        %v3297 = vunpack.c.l.b16 %v2776
        %v3298 = vunpack.c.h.b16 %v2776
        %v3299 = vunpack.c.l.b16 %v2777
        %v3300 = vunpack.c.h.b16 %v2777
        %v3301 = vunpack.c.l.b16 %v2778
        %v3302 = vunpack.c.h.b16 %v2778
        %v3303 = vunpack.c.l.b16 %v2779
        %v3304 = vunpack.c.h.b16 %v2779
        %v3305 = vunpack.c.l.b16 %v2780
        %v3306 = vunpack.c.h.b16 %v2780
        %v3307 = vunpack.c.l.b16 %v2781
        %v3308 = vunpack.c.h.b16 %v2781
        %v3309 = vunpack.c.l.b16 %v2782
        %v3310 = vunpack.c.h.b16 %v2782
        %v3311 = vunpack.c.l.b16 %v2783
        %v3312 = vunpack.c.h.b16 %v2783
        %v3313 = vunpack.c.l.b16 %v2784
        %v3314 = vunpack.c.h.b16 %v2784
        %v3315 = vunpack.c.l.b16 %v2785
        %v3316 = vunpack.c.h.b16 %v2785
        %v3317 = vunpack.c.l.b16 %v2786
        %v3318 = vunpack.c.h.b16 %v2786
        %v3319 = vunpack.c.l.b16 %v2787
        %v3320 = vunpack.c.h.b16 %v2787
        %v3321 = vunpack.c.l.b16 %v2788
        %v3322 = vunpack.c.h.b16 %v2788
        %v3323 = vunpack.c.l.b16 %v2789
        %v3324 = vunpack.c.h.b16 %v2789
        %v3325 = vunpack.c.l.b16 %v2790
        %v3326 = vunpack.c.h.b16 %v2790
        %v3327 = vunpack.c.l.b16 %v2791
        %v3328 = vunpack.c.h.b16 %v2791
        %v3329 = vunpack.c.l.b16 %v2792
        %v3330 = vunpack.c.h.b16 %v2792
        %v3331 = vunpack.c.l.b16 %v2793
        %v3332 = vunpack.c.h.b16 %v2793
        %v3333 = vunpack.c.l.b16 %v2794
        %v3334 = vunpack.c.h.b16 %v2794
        %v3335 = vunpack.c.l.b16 %v2795
        %v3336 = vunpack.c.h.b16 %v2795
        %v3337 = vunpack.c.l.b16 %v2796
        %v3338 = vunpack.c.h.b16 %v2796
        %v3339 = vunpack.c.l.b16 %v2797
        %v3340 = vunpack.c.h.b16 %v2797
        %v3341 = vunpack.c.l.b16 %v2798
        %v3342 = vunpack.c.h.b16 %v2798
        %v3343 = vunpack.c.l.b16 %v2799
        %v3344 = vunpack.c.h.b16 %v2799
        %v3345 = vunpack.c.l.b16 %v2800
        %v3346 = vunpack.c.h.b16 %v2800
        %v3347 = vunpack.c.l.b16 %v2801
        %v3348 = vunpack.c.h.b16 %v2801
        %v3349 = vunpack.c.l.b16 %v2802
        %v3350 = vunpack.c.h.b16 %v2802
        %v3351 = vunpack.c.l.b16 %v2803
        %v3352 = vunpack.c.h.b16 %v2803
        %v3353 = vunpack.c.l.b16 %v2804
        %v3354 = vunpack.c.h.b16 %v2804
        %v3355 = vunpack.c.l.b16 %v2805
        %v3356 = vunpack.c.h.b16 %v2805
        %v3357 = vunpack.c.l.b16 %v2806
        %v3358 = vunpack.c.h.b16 %v2806
        %v3359 = vunpack.c.l.b16 %v2807
        %v3360 = vunpack.c.h.b16 %v2807
        %v3361 = vunpack.c.l.b16 %v2808
        %v3362 = vunpack.c.h.b16 %v2808
        %v3363 = vunpack.c.l.b16 %v2809
        %v3364 = vunpack.c.h.b16 %v2809
        %v3365 = vunpack.c.l.b16 %v2810
        %v3366 = vunpack.c.h.b16 %v2810
        %v3367 = vunpack.c.l.b16 %v2811
        %v3368 = vunpack.c.h.b16 %v2811
        %v3369 = vunpack.c.l.b16 %v2812
        %v3370 = vunpack.c.h.b16 %v2812
        %v3371 = vunpack.c.l.b16 %v2813
        %v3372 = vunpack.c.h.b16 %v2813
        %v3373 = vunpack.c.l.b16 %v2814
        %v3374 = vunpack.c.h.b16 %v2814
        %v3375 = vunpack.c.l.b16 %v2815
        %v3376 = vunpack.c.h.b16 %v2815
        %v3377 = vunpack.c.l.b16 %v2816
        %v3378 = vunpack.c.h.b16 %v2816
        %v3379 = vunpack.c.l.b16 %v2817
        %v3380 = vunpack.c.h.b16 %v2817
        %v3381 = vunpack.c.l.b16 %v2818
        %v3382 = vunpack.c.h.b16 %v2818
        %v3383 = vunpack.c.l.b16 %v2819
        %v3384 = vunpack.c.h.b16 %v2819
        %v3385 = vunpack.c.l.b16 %v2820
        %v3386 = vunpack.c.h.b16 %v2820
        %v3387 = vunpack.c.l.b16 %v2821
        %v3388 = vunpack.c.h.b16 %v2821
        %v3389 = vunpack.c.l.b16 %v2822
        %v3390 = vunpack.c.h.b16 %v2822
        %v3391 = vunpack.c.l.b16 %v2823
        %v3392 = vunpack.c.h.b16 %v2823
        %v3393 = vunpack.c.l.b16 %v2824
        %v3394 = vunpack.c.h.b16 %v2824
        %v3395 = vunpack.c.l.b16 %v2825
        %v3396 = vunpack.c.h.b16 %v2825
        %v3397 = vunpack.c.l.b16 %v2826
        %v3398 = vunpack.c.h.b16 %v2826
        %v3399 = vunpack.c.l.b16 %v2827
        %v3400 = vunpack.c.h.b16 %v2827
        %v3401 = vunpack.c.l.b16 %v2828
        %v3402 = vunpack.c.h.b16 %v2828
        %v3403 = vunpack.c.l.b16 %v2829
        %v3404 = vunpack.c.h.b16 %v2829
        %v3405 = vunpack.c.l.b16 %v2830
        %v3406 = vunpack.c.h.b16 %v2830
        %v3407 = vunpack.c.l.b16 %v2831
        %v3408 = vunpack.c.h.b16 %v2831
        %v3409 = vunpack.c.l.b16 %v2832
        %v3410 = vunpack.c.h.b16 %v2832
        %v3411 = vunpack.c.l.b16 %v2833
        %v3412 = vunpack.c.h.b16 %v2833
        %v3413 = vunpack.c.l.b16 %v2834
        %v3414 = vunpack.c.h.b16 %v2834
        %v3415 = vunpack.c.l.b16 %v2835
        %v3416 = vunpack.c.h.b16 %v2835
        %v3417 = vunpack.c.l.b16 %v2836
        %v3418 = vunpack.c.h.b16 %v2836
        %v3419 = vunpack.c.l.b16 %v2837
        %v3420 = vunpack.c.h.b16 %v2837
        %v3421 = vunpack.c.l.b16 %v2838
        %v3422 = vunpack.c.h.b16 %v2838
        %v3423 = vunpack.c.l.b16 %v2839
        %v3424 = vunpack.c.h.b16 %v2839
        %v3425 = vunpack.c.l.b16 %v2840
        %v3426 = vunpack.c.h.b16 %v2840
        %v3427 = vunpack.c.l.b16 %v2841
        %v3428 = vunpack.c.h.b16 %v2841
        %v3429 = vunpack.c.l.b16 %v2842
        %v3430 = vunpack.c.h.b16 %v2842
        %v3431 = vunpack.c.l.b16 %v2843
        %v3432 = vunpack.c.h.b16 %v2843
        %v3433 = vunpack.c.l.b16 %v2844
        %v3434 = vunpack.c.h.b16 %v2844
        %v3435 = vunpack.c.l.b16 %v2845
        %v3436 = vunpack.c.h.b16 %v2845
        %v3437 = vunpack.c.l.b16 %v2846
        %v3438 = vunpack.c.h.b16 %v2846
        %v3439 = vunpack.c.l.b16 %v2847
        %v3440 = vunpack.c.h.b16 %v2847
        %v3441 = vunpack.c.l.b16 %v2848
        %v3442 = vunpack.c.h.b16 %v2848
        %v3443 = vunpack.c.l.b16 %v2849
        %v3444 = vunpack.c.h.b16 %v2849
        %v3445 = vunpack.c.l.b16 %v2850
        %v3446 = vunpack.c.h.b16 %v2850
        %v3447 = vunpack.c.l.b16 %v2851
        %v3448 = vunpack.c.h.b16 %v2851
        %v3449 = vunpack.c.l.b16 %v2852
        %v3450 = vunpack.c.h.b16 %v2852
        %v3451 = vunpack.c.l.b16 %v2853
        %v3452 = vunpack.c.h.b16 %v2853
        %v3453 = vunpack.c.l.b16 %v2854
        %v3454 = vunpack.c.h.b16 %v2854
        %v3455 = vunpack.c.l.b16 %v2855
        %v3456 = vunpack.c.h.b16 %v2855
        %v3457 = vunpack.c.l.b16 %v2856
        %v3458 = vunpack.c.h.b16 %v2856
        %v3459 = vunpack.c.l.b16 %v2857
        %v3460 = vunpack.c.h.b16 %v2857
        %v3461 = vunpack.c.l.b16 %v2858
        %v3462 = vunpack.c.h.b16 %v2858
        %v3463 = vunpack.c.l.b16 %v2859
        %v3464 = vunpack.c.h.b16 %v2859
        %v3465 = vunpack.c.l.b16 %v2860
        %v3466 = vunpack.c.h.b16 %v2860
        %v3467 = vunpack.c.l.b16 %v2861
        %v3468 = vunpack.c.h.b16 %v2861
        %v3469 = vunpack.c.l.b16 %v2862
        %v3470 = vunpack.c.h.b16 %v2862
        %v3471 = vunpack.c.l.b16 %v2863
        %v3472 = vunpack.c.h.b16 %v2863
        %v3473 = vunpack.c.l.b16 %v2864
        %v3474 = vunpack.c.h.b16 %v2864
        %v3475 = vunpack.c.l.b16 %v2865
        %v3476 = vunpack.c.h.b16 %v2865
        %v3477 = vunpack.c.l.b16 %v2866
        %v3478 = vunpack.c.h.b16 %v2866
        %v3479 = vunpack.c.l.b16 %v2867
        %v3480 = vunpack.c.h.b16 %v2867
        %v3481 = vunpack.c.l.b16 %v2868
        %v3482 = vunpack.c.h.b16 %v2868
        %v3483 = vunpack.c.l.b16 %v2869
        %v3484 = vunpack.c.h.b16 %v2869
        %v3485 = vunpack.c.l.b16 %v2870
        %v3486 = vunpack.c.h.b16 %v2870
        %v3487 = vunpack.c.l.b16 %v2871
        %v3488 = vunpack.c.h.b16 %v2871
        %v3489 = vunpack.c.l.b16 %v2872
        %v3490 = vunpack.c.h.b16 %v2872
        %v3491 = vunpack.c.l.b16 %v2873
        %v3492 = vunpack.c.h.b16 %v2873
        %v3493 = vunpack.c.l.b16 %v2874
        %v3494 = vunpack.c.h.b16 %v2874
        %v3495 = vunpack.c.l.b16 %v2875
        %v3496 = vunpack.c.h.b16 %v2875
        %v3497 = vunpack.c.l.b16 %v2876
        %v3498 = vunpack.c.h.b16 %v2876
        %v3499 = vunpack.c.l.b16 %v2877
        %v3500 = vunpack.c.h.b16 %v2877
        %v3501 = vunpack.c.l.b16 %v2878
        %v3502 = vunpack.c.h.b16 %v2878
        %v3503 = vpack.c.b16 %v3123, %v3119
        %v3504 = vpack.c.b16 %v3124, %v3120
        %v3505 = vpack.c.b16 %v3125, %v3121
        %v3506 = vpack.c.b16 %v3126, %v3122
        %v3507 = vpack.c.b16 %v3131, %v3127
        %v3508 = vpack.c.b16 %v3132, %v3128
        %v3509 = vpack.c.b16 %v3133, %v3129
        %v3510 = vpack.c.b16 %v3134, %v3130
        %v3511 = vpack.c.b16 %v3139, %v3135
        %v3512 = vpack.c.b16 %v3140, %v3136
        %v3513 = vpack.c.b16 %v3141, %v3137
        %v3514 = vpack.c.b16 %v3142, %v3138
        %v3515 = vpack.c.b16 %v3147, %v3143
        %v3516 = vpack.c.b16 %v3148, %v3144
        %v3517 = vpack.c.b16 %v3149, %v3145
        %v3518 = vpack.c.b16 %v3150, %v3146
        %v3519 = vpack.c.b16 %v3155, %v3151
        %v3520 = vpack.c.b16 %v3156, %v3152
        %v3521 = vpack.c.b16 %v3157, %v3153
        %v3522 = vpack.c.b16 %v3158, %v3154
        %v3523 = vpack.c.b16 %v3163, %v3159
        %v3524 = vpack.c.b16 %v3164, %v3160
        %v3525 = vpack.c.b16 %v3165, %v3161
        %v3526 = vpack.c.b16 %v3166, %v3162
        %v3527 = vpack.c.b16 %v3171, %v3167
        %v3528 = vpack.c.b16 %v3172, %v3168
        %v3529 = vpack.c.b16 %v3173, %v3169
        %v3530 = vpack.c.b16 %v3174, %v3170
        %v3531 = vpack.c.b16 %v3179, %v3175
        %v3532 = vpack.c.b16 %v3180, %v3176
        %v3533 = vpack.c.b16 %v3181, %v3177
        %v3534 = vpack.c.b16 %v3182, %v3178
        %v3535 = vpack.c.b16 %v3187, %v3183
        %v3536 = vpack.c.b16 %v3188, %v3184
        %v3537 = vpack.c.b16 %v3189, %v3185
        %v3538 = vpack.c.b16 %v3190, %v3186
        %v3539 = vpack.c.b16 %v3195, %v3191
        %v3540 = vpack.c.b16 %v3196, %v3192
        %v3541 = vpack.c.b16 %v3197, %v3193
        %v3542 = vpack.c.b16 %v3198, %v3194
        %v3543 = vpack.c.b16 %v3203, %v3199
        %v3544 = vpack.c.b16 %v3204, %v3200
        %v3545 = vpack.c.b16 %v3205, %v3201
        %v3546 = vpack.c.b16 %v3206, %v3202
        %v3547 = vpack.c.b16 %v3211, %v3207
        %v3548 = vpack.c.b16 %v3212, %v3208
        %v3549 = vpack.c.b16 %v3213, %v3209
        %v3550 = vpack.c.b16 %v3214, %v3210
        %v3551 = vpack.c.b16 %v3219, %v3215
        %v3552 = vpack.c.b16 %v3220, %v3216
        %v3553 = vpack.c.b16 %v3221, %v3217
        %v3554 = vpack.c.b16 %v3222, %v3218
        %v3555 = vpack.c.b16 %v3227, %v3223
        %v3556 = vpack.c.b16 %v3228, %v3224
        %v3557 = vpack.c.b16 %v3229, %v3225
        %v3558 = vpack.c.b16 %v3230, %v3226
        %v3559 = vpack.c.b16 %v3235, %v3231
        %v3560 = vpack.c.b16 %v3236, %v3232
        %v3561 = vpack.c.b16 %v3237, %v3233
        %v3562 = vpack.c.b16 %v3238, %v3234
        %v3563 = vpack.c.b16 %v3243, %v3239
        %v3564 = vpack.c.b16 %v3244, %v3240
        %v3565 = vpack.c.b16 %v3245, %v3241
        %v3566 = vpack.c.b16 %v3246, %v3242
        %v3567 = vpack.c.b16 %v3251, %v3247
        %v3568 = vpack.c.b16 %v3252, %v3248
        %v3569 = vpack.c.b16 %v3253, %v3249
        %v3570 = vpack.c.b16 %v3254, %v3250
        %v3571 = vpack.c.b16 %v3259, %v3255
        %v3572 = vpack.c.b16 %v3260, %v3256
        %v3573 = vpack.c.b16 %v3261, %v3257
        %v3574 = vpack.c.b16 %v3262, %v3258
        %v3575 = vpack.c.b16 %v3267, %v3263
        %v3576 = vpack.c.b16 %v3268, %v3264
        %v3577 = vpack.c.b16 %v3269, %v3265
        %v3578 = vpack.c.b16 %v3270, %v3266
        %v3579 = vpack.c.b16 %v3275, %v3271
        %v3580 = vpack.c.b16 %v3276, %v3272
        %v3581 = vpack.c.b16 %v3277, %v3273
        %v3582 = vpack.c.b16 %v3278, %v3274
        %v3583 = vpack.c.b16 %v3283, %v3279
        %v3584 = vpack.c.b16 %v3284, %v3280
        %v3585 = vpack.c.b16 %v3285, %v3281
        %v3586 = vpack.c.b16 %v3286, %v3282
        %v3587 = vpack.c.b16 %v3291, %v3287
        %v3588 = vpack.c.b16 %v3292, %v3288
        %v3589 = vpack.c.b16 %v3293, %v3289
        %v3590 = vpack.c.b16 %v3294, %v3290
        %v3591 = vpack.c.b16 %v3299, %v3295
        %v3592 = vpack.c.b16 %v3300, %v3296
        %v3593 = vpack.c.b16 %v3301, %v3297
        %v3594 = vpack.c.b16 %v3302, %v3298
        %v3595 = vpack.c.b16 %v3307, %v3303
        %v3596 = vpack.c.b16 %v3308, %v3304
        %v3597 = vpack.c.b16 %v3309, %v3305
        %v3598 = vpack.c.b16 %v3310, %v3306
        %v3599 = vpack.c.b16 %v3315, %v3311
        %v3600 = vpack.c.b16 %v3316, %v3312
        %v3601 = vpack.c.b16 %v3317, %v3313
        %v3602 = vpack.c.b16 %v3318, %v3314
        %v3603 = vpack.c.b16 %v3323, %v3319
        %v3604 = vpack.c.b16 %v3324, %v3320
        %v3605 = vpack.c.b16 %v3325, %v3321
        %v3606 = vpack.c.b16 %v3326, %v3322
        %v3607 = vpack.c.b16 %v3331, %v3327
        %v3608 = vpack.c.b16 %v3332, %v3328
        %v3609 = vpack.c.b16 %v3333, %v3329
        %v3610 = vpack.c.b16 %v3334, %v3330
        %v3611 = vpack.c.b16 %v3339, %v3335
        %v3612 = vpack.c.b16 %v3340, %v3336
        %v3613 = vpack.c.b16 %v3341, %v3337
        %v3614 = vpack.c.b16 %v3342, %v3338
        %v3615 = vpack.c.b16 %v3347, %v3343
        %v3616 = vpack.c.b16 %v3348, %v3344
        %v3617 = vpack.c.b16 %v3349, %v3345
        %v3618 = vpack.c.b16 %v3350, %v3346
        %v3619 = vpack.c.b16 %v3355, %v3351
        %v3620 = vpack.c.b16 %v3356, %v3352
        %v3621 = vpack.c.b16 %v3357, %v3353
        %v3622 = vpack.c.b16 %v3358, %v3354
        %v3623 = vpack.c.b16 %v3363, %v3359
        %v3624 = vpack.c.b16 %v3364, %v3360
        %v3625 = vpack.c.b16 %v3365, %v3361
        %v3626 = vpack.c.b16 %v3366, %v3362
        %v3627 = vpack.c.b16 %v3371, %v3367
        %v3628 = vpack.c.b16 %v3372, %v3368
        %v3629 = vpack.c.b16 %v3373, %v3369
        %v3630 = vpack.c.b16 %v3374, %v3370
        %v3631 = vpack.c.b16 %v3379, %v3375
        %v3632 = vpack.c.b16 %v3380, %v3376
        %v3633 = vpack.c.b16 %v3381, %v3377
        %v3634 = vpack.c.b16 %v3382, %v3378
        %v3635 = vpack.c.b16 %v3387, %v3383
        %v3636 = vpack.c.b16 %v3388, %v3384
        %v3637 = vpack.c.b16 %v3389, %v3385
        %v3638 = vpack.c.b16 %v3390, %v3386
        %v3639 = vpack.c.b16 %v3395, %v3391
        %v3640 = vpack.c.b16 %v3396, %v3392
        %v3641 = vpack.c.b16 %v3397, %v3393
        %v3642 = vpack.c.b16 %v3398, %v3394
        %v3643 = vpack.c.b16 %v3403, %v3399
        %v3644 = vpack.c.b16 %v3404, %v3400
        %v3645 = vpack.c.b16 %v3405, %v3401
        %v3646 = vpack.c.b16 %v3406, %v3402
        %v3647 = vpack.c.b16 %v3411, %v3407
        %v3648 = vpack.c.b16 %v3412, %v3408
        %v3649 = vpack.c.b16 %v3413, %v3409
        %v3650 = vpack.c.b16 %v3414, %v3410
        %v3651 = vpack.c.b16 %v3419, %v3415
        %v3652 = vpack.c.b16 %v3420, %v3416
        %v3653 = vpack.c.b16 %v3421, %v3417
        %v3654 = vpack.c.b16 %v3422, %v3418
        %v3655 = vpack.c.b16 %v3427, %v3423
        %v3656 = vpack.c.b16 %v3428, %v3424
        %v3657 = vpack.c.b16 %v3429, %v3425
        %v3658 = vpack.c.b16 %v3430, %v3426
        %v3659 = vpack.c.b16 %v3435, %v3431
        %v3660 = vpack.c.b16 %v3436, %v3432
        %v3661 = vpack.c.b16 %v3437, %v3433
        %v3662 = vpack.c.b16 %v3438, %v3434
        %v3663 = vpack.c.b16 %v3443, %v3439
        %v3664 = vpack.c.b16 %v3444, %v3440
        %v3665 = vpack.c.b16 %v3445, %v3441
        %v3666 = vpack.c.b16 %v3446, %v3442
        %v3667 = vpack.c.b16 %v3451, %v3447
        %v3668 = vpack.c.b16 %v3452, %v3448
        %v3669 = vpack.c.b16 %v3453, %v3449
        %v3670 = vpack.c.b16 %v3454, %v3450
        %v3671 = vpack.c.b16 %v3459, %v3455
        %v3672 = vpack.c.b16 %v3460, %v3456
        %v3673 = vpack.c.b16 %v3461, %v3457
        %v3674 = vpack.c.b16 %v3462, %v3458
        %v3675 = vpack.c.b16 %v3467, %v3463
        %v3676 = vpack.c.b16 %v3468, %v3464
        %v3677 = vpack.c.b16 %v3469, %v3465
        %v3678 = vpack.c.b16 %v3470, %v3466
        %v3679 = vpack.c.b16 %v3475, %v3471
        %v3680 = vpack.c.b16 %v3476, %v3472
        %v3681 = vpack.c.b16 %v3477, %v3473
        %v3682 = vpack.c.b16 %v3478, %v3474
        %v3683 = vpack.c.b16 %v3483, %v3479
        %v3684 = vpack.c.b16 %v3484, %v3480
        %v3685 = vpack.c.b16 %v3485, %v3481
        %v3686 = vpack.c.b16 %v3486, %v3482
        %v3687 = vpack.c.b16 %v3491, %v3487
        %v3688 = vpack.c.b16 %v3492, %v3488
        %v3689 = vpack.c.b16 %v3493, %v3489
        %v3690 = vpack.c.b16 %v3494, %v3490
        %v3691 = vpack.c.b16 %v3499, %v3495
        %v3692 = vpack.c.b16 %v3500, %v3496
        %v3693 = vpack.c.b16 %v3501, %v3497
        %v3694 = vpack.c.b16 %v3502, %v3498
        %3887 = vmatpush.bf16.msra.mxu0 %v3531
        %3888 = vmatpush.bf16.msra.mxu0 %v3527
        %3889 = vmatpush.bf16.msra.mxu0 %v3523
        %3890 = vmatpush.bf16.msra.mxu0 %v3519
        %3891 = vmatpush.bf16.msra.mxu0 %v3515
        %3892 = vmatpush.bf16.msra.mxu0 %v3511
        %3893 = vmatpush.bf16.msra.mxu0 %v3507
        %3894 = vmatpush.bf16.msra.mxu0 %v3503
        %3895 = vmatmul.bf16.gmra.mxu0 %v2885
        %v3896 = vpop.f32.mrf.mxu0
        %v3897 = vadd.f32 0.0, %v3896
        %v3898 = vpop.f32.mrf.mxu0
        %3899 = vdwg.mxu0
        %3900 = vmatpush.bf16.msra.mxu0 %v3563
        %3901 = vmatpush.bf16.msra.mxu0 %v3559
        %3902 = vmatpush.bf16.msra.mxu0 %v3555
        %3903 = vmatpush.bf16.msra.mxu0 %v3551
        %3904 = vmatpush.bf16.msra.mxu0 %v3547
        %3905 = vmatpush.bf16.msra.mxu0 %v3543
        %3906 = vmatpush.bf16.msra.mxu0 %v3539
        %3907 = vmatpush.bf16.msra.mxu0 %v3535
        %3908 = vmatmul.bf16.gmra.mxu0 %v2892
        %v3909 = vpop.f32.mrf.mxu0
        %v3910 = vadd.f32 %v3897, %v3909
        %v3911 = vpop.f32.mrf.mxu0
        %3912 = vdwg.mxu0
        %3913 = vmatpush.bf16.msra.mxu0 %v3595
        %3914 = vmatpush.bf16.msra.mxu0 %v3591
        %3915 = vmatpush.bf16.msra.mxu0 %v3587
        %3916 = vmatpush.bf16.msra.mxu0 %v3583
        %3917 = vmatpush.bf16.msra.mxu0 %v3579
        %3918 = vmatpush.bf16.msra.mxu0 %v3575
        %3919 = vmatpush.bf16.msra.mxu0 %v3571
        %3920 = vmatpush.bf16.msra.mxu0 %v3567
        %3921 = vmatmul.bf16.gmra.mxu0 %v2899
        %v3922 = vpop.f32.mrf.mxu0
        %v3923 = vadd.f32 %v3910, %v3922
        %v3924 = vpop.f32.mrf.mxu0
        %3925 = vdwg.mxu0
        %3926 = vmatpush.bf16.msra.mxu0 %v3627
        %3927 = vmatpush.bf16.msra.mxu0 %v3623
        %3928 = vmatpush.bf16.msra.mxu0 %v3619
        %3929 = vmatpush.bf16.msra.mxu0 %v3615
        %3930 = vmatpush.bf16.msra.mxu0 %v3611
        %3931 = vmatpush.bf16.msra.mxu0 %v3607
        %3932 = vmatpush.bf16.msra.mxu0 %v3603
        %3933 = vmatpush.bf16.msra.mxu0 %v3599
        %3934 = vmatmul.bf16.gmra.mxu0 %v2906
        %v3935 = vpop.f32.mrf.mxu0
        %v3936 = vadd.f32 %v3923, %v3935
        %v3937 = vpop.f32.mrf.mxu0
        %3938 = vdwg.mxu0
        %3939 = vmatpush.bf16.msra.mxu0 %v3659
        %3940 = vmatpush.bf16.msra.mxu0 %v3655
        %3941 = vmatpush.bf16.msra.mxu0 %v3651
        %3942 = vmatpush.bf16.msra.mxu0 %v3647
        %3943 = vmatpush.bf16.msra.mxu0 %v3643
        %3944 = vmatpush.bf16.msra.mxu0 %v3639
        %3945 = vmatpush.bf16.msra.mxu0 %v3635
        %3946 = vmatpush.bf16.msra.mxu0 %v3631
        %3947 = vmatmul.bf16.gmra.mxu0 %v2913
        %v3948 = vpop.f32.mrf.mxu0
        %v3949 = vadd.f32 %v3936, %v3948
        %v3950 = vpop.f32.mrf.mxu0
        %3951 = vdwg.mxu0
        %3952 = vmatpush.bf16.msra.mxu0 %v3691
        %3953 = vmatpush.bf16.msra.mxu0 %v3687
        %3954 = vmatpush.bf16.msra.mxu0 %v3683
        %3955 = vmatpush.bf16.msra.mxu0 %v3679
        %3956 = vmatpush.bf16.msra.mxu0 %v3675
        %3957 = vmatpush.bf16.msra.mxu0 %v3671
        %3958 = vmatpush.bf16.msra.mxu0 %v3667
        %3959 = vmatpush.bf16.msra.mxu0 %v3663
        %3960 = vmatmul.bf16.gmra.mxu0 %v2920
        %v3961 = vpop.f32.mrf.mxu0
        %v3962 = vadd.f32 %v3949, %v3961
        %v3963 = vpop.f32.mrf.mxu0
        %3964 = vdwg.mxu0
        %3965 = vmatpush.bf16.msra.mxu0 %v3532
        %3966 = vmatpush.bf16.msra.mxu0 %v3528
        %3967 = vmatpush.bf16.msra.mxu0 %v3524
        %3968 = vmatpush.bf16.msra.mxu0 %v3520
        %3969 = vmatpush.bf16.msra.mxu0 %v3516
        %3970 = vmatpush.bf16.msra.mxu0 %v3512
        %3971 = vmatpush.bf16.msra.mxu0 %v3508
        %3972 = vmatpush.bf16.msra.mxu0 %v3504
        %3973 = vmatmul.bf16.gmra.mxu0 %v2885
        %v3974 = vpop.f32.mrf.mxu0
        %v3975 = vadd.f32 0.0, %v3974
        %v3976 = vpop.f32.mrf.mxu0
        %3977 = vdwg.mxu0
        %3978 = vmatpush.bf16.msra.mxu0 %v3564
        %3979 = vmatpush.bf16.msra.mxu0 %v3560
        %3980 = vmatpush.bf16.msra.mxu0 %v3556
        %3981 = vmatpush.bf16.msra.mxu0 %v3552
        %3982 = vmatpush.bf16.msra.mxu0 %v3548
        %3983 = vmatpush.bf16.msra.mxu0 %v3544
        %3984 = vmatpush.bf16.msra.mxu0 %v3540
        %3985 = vmatpush.bf16.msra.mxu0 %v3536
        %3986 = vmatmul.bf16.gmra.mxu0 %v2892
        %v3987 = vpop.f32.mrf.mxu0
        %v3988 = vadd.f32 %v3975, %v3987
        %v3989 = vpop.f32.mrf.mxu0
        %3990 = vdwg.mxu0
        %3991 = vmatpush.bf16.msra.mxu0 %v3596
        %3992 = vmatpush.bf16.msra.mxu0 %v3592
        %3993 = vmatpush.bf16.msra.mxu0 %v3588
        %3994 = vmatpush.bf16.msra.mxu0 %v3584
        %3995 = vmatpush.bf16.msra.mxu0 %v3580
        %3996 = vmatpush.bf16.msra.mxu0 %v3576
        %3997 = vmatpush.bf16.msra.mxu0 %v3572
        %3998 = vmatpush.bf16.msra.mxu0 %v3568
        %3999 = vmatmul.bf16.gmra.mxu0 %v2899
        %v4000 = vpop.f32.mrf.mxu0
        %v4001 = vadd.f32 %v3988, %v4000
        %v4002 = vpop.f32.mrf.mxu0
        %4003 = vdwg.mxu0
        %4004 = vmatpush.bf16.msra.mxu0 %v3628
        %4005 = vmatpush.bf16.msra.mxu0 %v3624
        %4006 = vmatpush.bf16.msra.mxu0 %v3620
        %4007 = vmatpush.bf16.msra.mxu0 %v3616
        %4008 = vmatpush.bf16.msra.mxu0 %v3612
        %4009 = vmatpush.bf16.msra.mxu0 %v3608
        %4010 = vmatpush.bf16.msra.mxu0 %v3604
        %4011 = vmatpush.bf16.msra.mxu0 %v3600
        %4012 = vmatmul.bf16.gmra.mxu0 %v2906
        %v4013 = vpop.f32.mrf.mxu0
        %v4014 = vadd.f32 %v4001, %v4013
        %v4015 = vpop.f32.mrf.mxu0
        %4016 = vdwg.mxu0
        %4017 = vmatpush.bf16.msra.mxu0 %v3660
        %4018 = vmatpush.bf16.msra.mxu0 %v3656
        %4019 = vmatpush.bf16.msra.mxu0 %v3652
        %4020 = vmatpush.bf16.msra.mxu0 %v3648
        %4021 = vmatpush.bf16.msra.mxu0 %v3644
        %4022 = vmatpush.bf16.msra.mxu0 %v3640
        %4023 = vmatpush.bf16.msra.mxu0 %v3636
        %4024 = vmatpush.bf16.msra.mxu0 %v3632
        %4025 = vmatmul.bf16.gmra.mxu0 %v2913
        %v4026 = vpop.f32.mrf.mxu0
        %v4027 = vadd.f32 %v4014, %v4026
        %v4028 = vpop.f32.mrf.mxu0
        %4029 = vdwg.mxu0
        %4030 = vmatpush.bf16.msra.mxu0 %v3692
        %4031 = vmatpush.bf16.msra.mxu0 %v3688
        %4032 = vmatpush.bf16.msra.mxu0 %v3684
        %4033 = vmatpush.bf16.msra.mxu0 %v3680
        %4034 = vmatpush.bf16.msra.mxu0 %v3676
        %4035 = vmatpush.bf16.msra.mxu0 %v3672
        %4036 = vmatpush.bf16.msra.mxu0 %v3668
        %4037 = vmatpush.bf16.msra.mxu0 %v3664
        %4038 = vmatmul.bf16.gmra.mxu0 %v2920
        %v4039 = vpop.f32.mrf.mxu0
        %v4040 = vadd.f32 %v4027, %v4039
        %v4041 = vpop.f32.mrf.mxu0
        %4042 = vdwg.mxu0
        %4043 = vmatpush.bf16.msra.mxu0 %v3533
        %4044 = vmatpush.bf16.msra.mxu0 %v3529
        %4045 = vmatpush.bf16.msra.mxu0 %v3525
        %4046 = vmatpush.bf16.msra.mxu0 %v3521
        %4047 = vmatpush.bf16.msra.mxu0 %v3517
        %4048 = vmatpush.bf16.msra.mxu0 %v3513
        %4049 = vmatpush.bf16.msra.mxu0 %v3509
        %4050 = vmatpush.bf16.msra.mxu0 %v3505
        %4051 = vmatmul.bf16.gmra.mxu0 %v2885
        %v4052 = vpop.f32.mrf.mxu0
        %v4053 = vadd.f32 0.0, %v4052
        %v4054 = vpop.f32.mrf.mxu0
        %4055 = vdwg.mxu0
        %4056 = vmatpush.bf16.msra.mxu0 %v3565
        %4057 = vmatpush.bf16.msra.mxu0 %v3561
        %4058 = vmatpush.bf16.msra.mxu0 %v3557
        %4059 = vmatpush.bf16.msra.mxu0 %v3553
        %4060 = vmatpush.bf16.msra.mxu0 %v3549
        %4061 = vmatpush.bf16.msra.mxu0 %v3545
        %4062 = vmatpush.bf16.msra.mxu0 %v3541
        %4063 = vmatpush.bf16.msra.mxu0 %v3537
        %4064 = vmatmul.bf16.gmra.mxu0 %v2892
        %v4065 = vpop.f32.mrf.mxu0
        %v4066 = vadd.f32 %v4053, %v4065
        %v4067 = vpop.f32.mrf.mxu0
        %4068 = vdwg.mxu0
        %4069 = vmatpush.bf16.msra.mxu0 %v3597
        %4070 = vmatpush.bf16.msra.mxu0 %v3593
        %4071 = vmatpush.bf16.msra.mxu0 %v3589
        %4072 = vmatpush.bf16.msra.mxu0 %v3585
        %4073 = vmatpush.bf16.msra.mxu0 %v3581
        %4074 = vmatpush.bf16.msra.mxu0 %v3577
        %4075 = vmatpush.bf16.msra.mxu0 %v3573
        %4076 = vmatpush.bf16.msra.mxu0 %v3569
        %4077 = vmatmul.bf16.gmra.mxu0 %v2899
        %v4078 = vpop.f32.mrf.mxu0
        %v4079 = vadd.f32 %v4066, %v4078
        %v4080 = vpop.f32.mrf.mxu0
        %4081 = vdwg.mxu0
        %4082 = vmatpush.bf16.msra.mxu0 %v3629
        %4083 = vmatpush.bf16.msra.mxu0 %v3625
        %4084 = vmatpush.bf16.msra.mxu0 %v3621
        %4085 = vmatpush.bf16.msra.mxu0 %v3617
        %4086 = vmatpush.bf16.msra.mxu0 %v3613
        %4087 = vmatpush.bf16.msra.mxu0 %v3609
        %4088 = vmatpush.bf16.msra.mxu0 %v3605
        %4089 = vmatpush.bf16.msra.mxu0 %v3601
        %4090 = vmatmul.bf16.gmra.mxu0 %v2906
        %v4091 = vpop.f32.mrf.mxu0
        %v4092 = vadd.f32 %v4079, %v4091
        %v4093 = vpop.f32.mrf.mxu0
        %4094 = vdwg.mxu0
        %4095 = vmatpush.bf16.msra.mxu0 %v3661
        %4096 = vmatpush.bf16.msra.mxu0 %v3657
        %4097 = vmatpush.bf16.msra.mxu0 %v3653
        %4098 = vmatpush.bf16.msra.mxu0 %v3649
        %4099 = vmatpush.bf16.msra.mxu0 %v3645
        %4100 = vmatpush.bf16.msra.mxu0 %v3641
        %4101 = vmatpush.bf16.msra.mxu0 %v3637
        %4102 = vmatpush.bf16.msra.mxu0 %v3633
        %4103 = vmatmul.bf16.gmra.mxu0 %v2913
        %v4104 = vpop.f32.mrf.mxu0
        %v4105 = vadd.f32 %v4092, %v4104
        %v4106 = vpop.f32.mrf.mxu0
        %4107 = vdwg.mxu0
        %4108 = vmatpush.bf16.msra.mxu0 %v3693
        %4109 = vmatpush.bf16.msra.mxu0 %v3689
        %4110 = vmatpush.bf16.msra.mxu0 %v3685
        %4111 = vmatpush.bf16.msra.mxu0 %v3681
        %4112 = vmatpush.bf16.msra.mxu0 %v3677
        %4113 = vmatpush.bf16.msra.mxu0 %v3673
        %4114 = vmatpush.bf16.msra.mxu0 %v3669
        %4115 = vmatpush.bf16.msra.mxu0 %v3665
        %4116 = vmatmul.bf16.gmra.mxu0 %v2920
        %v4117 = vpop.f32.mrf.mxu0
        %v4118 = vadd.f32 %v4105, %v4117
        %v4119 = vpop.f32.mrf.mxu0
        %4120 = vdwg.mxu0
        %4121 = vmatpush.bf16.msra.mxu0 %v3534
        %4122 = vmatpush.bf16.msra.mxu0 %v3530
        %4123 = vmatpush.bf16.msra.mxu0 %v3526
        %4124 = vmatpush.bf16.msra.mxu0 %v3522
        %4125 = vmatpush.bf16.msra.mxu0 %v3518
        %4126 = vmatpush.bf16.msra.mxu0 %v3514
        %4127 = vmatpush.bf16.msra.mxu0 %v3510
        %4128 = vmatpush.bf16.msra.mxu0 %v3506
        %4129 = vmatmul.bf16.gmra.mxu0 %v2885
        %v4130 = vpop.f32.mrf.mxu0
        %v4131 = vadd.f32 0.0, %v4130
        %v4132 = vpop.f32.mrf.mxu0
        %4133 = vdwg.mxu0
        %4134 = vmatpush.bf16.msra.mxu0 %v3566
        %4135 = vmatpush.bf16.msra.mxu0 %v3562
        %4136 = vmatpush.bf16.msra.mxu0 %v3558
        %4137 = vmatpush.bf16.msra.mxu0 %v3554
        %4138 = vmatpush.bf16.msra.mxu0 %v3550
        %4139 = vmatpush.bf16.msra.mxu0 %v3546
        %4140 = vmatpush.bf16.msra.mxu0 %v3542
        %4141 = vmatpush.bf16.msra.mxu0 %v3538
        %4142 = vmatmul.bf16.gmra.mxu0 %v2892
        %v4143 = vpop.f32.mrf.mxu0
        %v4144 = vadd.f32 %v4131, %v4143
        %v4145 = vpop.f32.mrf.mxu0
        %4146 = vdwg.mxu0
        %4147 = vmatpush.bf16.msra.mxu0 %v3598
        %4148 = vmatpush.bf16.msra.mxu0 %v3594
        %4149 = vmatpush.bf16.msra.mxu0 %v3590
        %4150 = vmatpush.bf16.msra.mxu0 %v3586
        %4151 = vmatpush.bf16.msra.mxu0 %v3582
        %4152 = vmatpush.bf16.msra.mxu0 %v3578
        %4153 = vmatpush.bf16.msra.mxu0 %v3574
        %4154 = vmatpush.bf16.msra.mxu0 %v3570
        %4155 = vmatmul.bf16.gmra.mxu0 %v2899
        %v4156 = vpop.f32.mrf.mxu0
        %v4157 = vadd.f32 %v4144, %v4156
        %v4158 = vpop.f32.mrf.mxu0
        %4159 = vdwg.mxu0
        %4160 = vmatpush.bf16.msra.mxu0 %v3630
        %4161 = vmatpush.bf16.msra.mxu0 %v3626
        %4162 = vmatpush.bf16.msra.mxu0 %v3622
        %4163 = vmatpush.bf16.msra.mxu0 %v3618
        %4164 = vmatpush.bf16.msra.mxu0 %v3614
        %4165 = vmatpush.bf16.msra.mxu0 %v3610
        %4166 = vmatpush.bf16.msra.mxu0 %v3606
        %4167 = vmatpush.bf16.msra.mxu0 %v3602
        %4168 = vmatmul.bf16.gmra.mxu0 %v2906
        %v4169 = vpop.f32.mrf.mxu0
        %v4170 = vadd.f32 %v4157, %v4169
        %v4171 = vpop.f32.mrf.mxu0
        %4172 = vdwg.mxu0
        %4173 = vmatpush.bf16.msra.mxu0 %v3662
        %4174 = vmatpush.bf16.msra.mxu0 %v3658
        %4175 = vmatpush.bf16.msra.mxu0 %v3654
        %4176 = vmatpush.bf16.msra.mxu0 %v3650
        %4177 = vmatpush.bf16.msra.mxu0 %v3646
        %4178 = vmatpush.bf16.msra.mxu0 %v3642
        %4179 = vmatpush.bf16.msra.mxu0 %v3638
        %4180 = vmatpush.bf16.msra.mxu0 %v3634
        %4181 = vmatmul.bf16.gmra.mxu0 %v2913
        %v4182 = vpop.f32.mrf.mxu0
        %v4183 = vadd.f32 %v4170, %v4182
        %v4184 = vpop.f32.mrf.mxu0
        %4185 = vdwg.mxu0
        %4186 = vmatpush.bf16.msra.mxu0 %v3694
        %4187 = vmatpush.bf16.msra.mxu0 %v3690
        %4188 = vmatpush.bf16.msra.mxu0 %v3686
        %4189 = vmatpush.bf16.msra.mxu0 %v3682
        %4190 = vmatpush.bf16.msra.mxu0 %v3678
        %4191 = vmatpush.bf16.msra.mxu0 %v3674
        %4192 = vmatpush.bf16.msra.mxu0 %v3670
        %4193 = vmatpush.bf16.msra.mxu0 %v3666
        %4194 = vmatmul.bf16.gmra.mxu0 %v2920
        %v4195 = vpop.f32.mrf.mxu0
        %v4196 = vadd.f32 %v4183, %v4195
        %v4197 = vpop.f32.mrf.mxu0
        %4198 = vdwg.mxu0
        %v4391 = vunpack.c.l.b16 %v2476
        %v4392 = vunpack.c.h.b16 %v2476
        %v4393 = vunpack.c.l.b16 %v2477
        %v4394 = vunpack.c.h.b16 %v2477
        %v4395 = vunpack.c.l.b16 %v2478
        %v4396 = vunpack.c.h.b16 %v2478
        %v4397 = vunpack.c.l.b16 %v2479
        %v4398 = vunpack.c.h.b16 %v2479
        %v4399 = vunpack.c.l.b16 %v2480
        %v4400 = vunpack.c.h.b16 %v2480
        %v4401 = vunpack.c.l.b16 %v2481
        %v4402 = vunpack.c.h.b16 %v2481
        %v4403 = vunpack.c.l.b16 %v2482
        %v4404 = vunpack.c.h.b16 %v2482
        %v4405 = vunpack.c.l.b16 %v2483
        %v4406 = vunpack.c.h.b16 %v2483
        %v4407 = vunpack.c.l.b16 %v2484
        %v4408 = vunpack.c.h.b16 %v2484
        %v4409 = vunpack.c.l.b16 %v2485
        %v4410 = vunpack.c.h.b16 %v2485
        %v4411 = vunpack.c.l.b16 %v2486
        %v4412 = vunpack.c.h.b16 %v2486
        %v4413 = vunpack.c.l.b16 %v2487
        %v4414 = vunpack.c.h.b16 %v2487
        %v4415 = vunpack.c.l.b16 %v2488
        %v4416 = vunpack.c.h.b16 %v2488
        %v4417 = vunpack.c.l.b16 %v2489
        %v4418 = vunpack.c.h.b16 %v2489
        %v4419 = vunpack.c.l.b16 %v2490
        %v4420 = vunpack.c.h.b16 %v2490
        %v4421 = vunpack.c.l.b16 %v2491
        %v4422 = vunpack.c.h.b16 %v2491
        %v4423 = vunpack.c.l.b16 %v2492
        %v4424 = vunpack.c.h.b16 %v2492
        %v4425 = vunpack.c.l.b16 %v2493
        %v4426 = vunpack.c.h.b16 %v2493
        %v4427 = vunpack.c.l.b16 %v2494
        %v4428 = vunpack.c.h.b16 %v2494
        %v4429 = vunpack.c.l.b16 %v2495
        %v4430 = vunpack.c.h.b16 %v2495
        %v4431 = vunpack.c.l.b16 %v2496
        %v4432 = vunpack.c.h.b16 %v2496
        %v4433 = vunpack.c.l.b16 %v2497
        %v4434 = vunpack.c.h.b16 %v2497
        %v4435 = vunpack.c.l.b16 %v2498
        %v4436 = vunpack.c.h.b16 %v2498
        %v4437 = vunpack.c.l.b16 %v2499
        %v4438 = vunpack.c.h.b16 %v2499
        %v4439 = vunpack.c.l.b16 %v2500
        %v4440 = vunpack.c.h.b16 %v2500
        %v4441 = vunpack.c.l.b16 %v2501
        %v4442 = vunpack.c.h.b16 %v2501
        %v4443 = vunpack.c.l.b16 %v2502
        %v4444 = vunpack.c.h.b16 %v2502
        %v4445 = vunpack.c.l.b16 %v2503
        %v4446 = vunpack.c.h.b16 %v2503
        %v4447 = vunpack.c.l.b16 %v2504
        %v4448 = vunpack.c.h.b16 %v2504
        %v4449 = vunpack.c.l.b16 %v2505
        %v4450 = vunpack.c.h.b16 %v2505
        %v4451 = vunpack.c.l.b16 %v2506
        %v4452 = vunpack.c.h.b16 %v2506
        %v4453 = vunpack.c.l.b16 %v2507
        %v4454 = vunpack.c.h.b16 %v2507
        %v4455 = vunpack.c.l.b16 %v2508
        %v4456 = vunpack.c.h.b16 %v2508
        %v4457 = vunpack.c.l.b16 %v2509
        %v4458 = vunpack.c.h.b16 %v2509
        %v4459 = vunpack.c.l.b16 %v2510
        %v4460 = vunpack.c.h.b16 %v2510
        %v4461 = vunpack.c.l.b16 %v2511
        %v4462 = vunpack.c.h.b16 %v2511
        %v4463 = vunpack.c.l.b16 %v2512
        %v4464 = vunpack.c.h.b16 %v2512
        %v4465 = vunpack.c.l.b16 %v2513
        %v4466 = vunpack.c.h.b16 %v2513
        %v4467 = vunpack.c.l.b16 %v2514
        %v4468 = vunpack.c.h.b16 %v2514
        %v4469 = vunpack.c.l.b16 %v2515
        %v4470 = vunpack.c.h.b16 %v2515
        %v4471 = vunpack.c.l.b16 %v2516
        %v4472 = vunpack.c.h.b16 %v2516
        %v4473 = vunpack.c.l.b16 %v2517
        %v4474 = vunpack.c.h.b16 %v2517
        %v4475 = vunpack.c.l.b16 %v2518
        %v4476 = vunpack.c.h.b16 %v2518
        %v4477 = vunpack.c.l.b16 %v2519
        %v4478 = vunpack.c.h.b16 %v2519
        %v4479 = vunpack.c.l.b16 %v2520
        %v4480 = vunpack.c.h.b16 %v2520
        %v4481 = vunpack.c.l.b16 %v2521
        %v4482 = vunpack.c.h.b16 %v2521
        %v4483 = vunpack.c.l.b16 %v2522
        %v4484 = vunpack.c.h.b16 %v2522
        %v4485 = vunpack.c.l.b16 %v2523
        %v4486 = vunpack.c.h.b16 %v2523
        %v4487 = vunpack.c.l.b16 %v2524
        %v4488 = vunpack.c.h.b16 %v2524
        %v4489 = vunpack.c.l.b16 %v2525
        %v4490 = vunpack.c.h.b16 %v2525
        %v4491 = vunpack.c.l.b16 %v2526
        %v4492 = vunpack.c.h.b16 %v2526
        %v4493 = vunpack.c.l.b16 %v2527
        %v4494 = vunpack.c.h.b16 %v2527
        %v4495 = vunpack.c.l.b16 %v2528
        %v4496 = vunpack.c.h.b16 %v2528
        %v4497 = vunpack.c.l.b16 %v2529
        %v4498 = vunpack.c.h.b16 %v2529
        %v4499 = vunpack.c.l.b16 %v2530
        %v4500 = vunpack.c.h.b16 %v2530
        %v4501 = vunpack.c.l.b16 %v2531
        %v4502 = vunpack.c.h.b16 %v2531
        %v4503 = vunpack.c.l.b16 %v2532
        %v4504 = vunpack.c.h.b16 %v2532
        %v4505 = vunpack.c.l.b16 %v2533
        %v4506 = vunpack.c.h.b16 %v2533
        %v4507 = vunpack.c.l.b16 %v2534
        %v4508 = vunpack.c.h.b16 %v2534
        %v4509 = vunpack.c.l.b16 %v2535
        %v4510 = vunpack.c.h.b16 %v2535
        %v4511 = vunpack.c.l.b16 %v2536
        %v4512 = vunpack.c.h.b16 %v2536
        %v4513 = vunpack.c.l.b16 %v2537
        %v4514 = vunpack.c.h.b16 %v2537
        %v4515 = vunpack.c.l.b16 %v2538
        %v4516 = vunpack.c.h.b16 %v2538
        %v4517 = vunpack.c.l.b16 %v2539
        %v4518 = vunpack.c.h.b16 %v2539
        %v4519 = vunpack.c.l.b16 %v2540
        %v4520 = vunpack.c.h.b16 %v2540
        %v4521 = vunpack.c.l.b16 %v2541
        %v4522 = vunpack.c.h.b16 %v2541
        %v4523 = vunpack.c.l.b16 %v2542
        %v4524 = vunpack.c.h.b16 %v2542
        %v4525 = vunpack.c.l.b16 %v2543
        %v4526 = vunpack.c.h.b16 %v2543
        %v4527 = vunpack.c.l.b16 %v2544
        %v4528 = vunpack.c.h.b16 %v2544
        %v4529 = vunpack.c.l.b16 %v2545
        %v4530 = vunpack.c.h.b16 %v2545
        %v4531 = vunpack.c.l.b16 %v2546
        %v4532 = vunpack.c.h.b16 %v2546
        %v4533 = vunpack.c.l.b16 %v2547
        %v4534 = vunpack.c.h.b16 %v2547
        %v4535 = vunpack.c.l.b16 %v2548
        %v4536 = vunpack.c.h.b16 %v2548
        %v4537 = vunpack.c.l.b16 %v2549
        %v4538 = vunpack.c.h.b16 %v2549
        %v4539 = vunpack.c.l.b16 %v2550
        %v4540 = vunpack.c.h.b16 %v2550
        %v4541 = vunpack.c.l.b16 %v2551
        %v4542 = vunpack.c.h.b16 %v2551
        %v4543 = vunpack.c.l.b16 %v2552
        %v4544 = vunpack.c.h.b16 %v2552
        %v4545 = vunpack.c.l.b16 %v2553
        %v4546 = vunpack.c.h.b16 %v2553
        %v4547 = vunpack.c.l.b16 %v2554
        %v4548 = vunpack.c.h.b16 %v2554
        %v4549 = vunpack.c.l.b16 %v2555
        %v4550 = vunpack.c.h.b16 %v2555
        %v4551 = vunpack.c.l.b16 %v2556
        %v4552 = vunpack.c.h.b16 %v2556
        %v4553 = vunpack.c.l.b16 %v2557
        %v4554 = vunpack.c.h.b16 %v2557
        %v4555 = vunpack.c.l.b16 %v2558
        %v4556 = vunpack.c.h.b16 %v2558
        %v4557 = vunpack.c.l.b16 %v2559
        %v4558 = vunpack.c.h.b16 %v2559
        %v4559 = vunpack.c.l.b16 %v2560
        %v4560 = vunpack.c.h.b16 %v2560
        %v4561 = vunpack.c.l.b16 %v2561
        %v4562 = vunpack.c.h.b16 %v2561
        %v4563 = vunpack.c.l.b16 %v2562
        %v4564 = vunpack.c.h.b16 %v2562
        %v4565 = vunpack.c.l.b16 %v2563
        %v4566 = vunpack.c.h.b16 %v2563
        %v4567 = vunpack.c.l.b16 %v2564
        %v4568 = vunpack.c.h.b16 %v2564
        %v4569 = vunpack.c.l.b16 %v2565
        %v4570 = vunpack.c.h.b16 %v2565
        %v4571 = vunpack.c.l.b16 %v2566
        %v4572 = vunpack.c.h.b16 %v2566
        %v4573 = vunpack.c.l.b16 %v2567
        %v4574 = vunpack.c.h.b16 %v2567
        %v4575 = vunpack.c.l.b16 %v2568
        %v4576 = vunpack.c.h.b16 %v2568
        %v4577 = vunpack.c.l.b16 %v2569
        %v4578 = vunpack.c.h.b16 %v2569
        %v4579 = vunpack.c.l.b16 %v2570
        %v4580 = vunpack.c.h.b16 %v2570
        %v4581 = vunpack.c.l.b16 %v2571
        %v4582 = vunpack.c.h.b16 %v2571
        %v4583 = vunpack.c.l.b16 %v2572
        %v4584 = vunpack.c.h.b16 %v2572
        %v4585 = vunpack.c.l.b16 %v2573
        %v4586 = vunpack.c.h.b16 %v2573
        %v4587 = vunpack.c.l.b16 %v2574
        %v4588 = vunpack.c.h.b16 %v2574
        %v4589 = vunpack.c.l.b16 %v2575
        %v4590 = vunpack.c.h.b16 %v2575
        %v4591 = vunpack.c.l.b16 %v2576
        %v4592 = vunpack.c.h.b16 %v2576
        %v4593 = vunpack.c.l.b16 %v2577
        %v4594 = vunpack.c.h.b16 %v2577
        %v4595 = vunpack.c.l.b16 %v2578
        %v4596 = vunpack.c.h.b16 %v2578
        %v4597 = vunpack.c.l.b16 %v2579
        %v4598 = vunpack.c.h.b16 %v2579
        %v4599 = vunpack.c.l.b16 %v2580
        %v4600 = vunpack.c.h.b16 %v2580
        %v4601 = vunpack.c.l.b16 %v2581
        %v4602 = vunpack.c.h.b16 %v2581
        %v4603 = vunpack.c.l.b16 %v2582
        %v4604 = vunpack.c.h.b16 %v2582
        %v4605 = vunpack.c.l.b16 %v2583
        %v4606 = vunpack.c.h.b16 %v2583
        %v4607 = vunpack.c.l.b16 %v2584
        %v4608 = vunpack.c.h.b16 %v2584
        %v4609 = vunpack.c.l.b16 %v2585
        %v4610 = vunpack.c.h.b16 %v2585
        %v4611 = vunpack.c.l.b16 %v2586
        %v4612 = vunpack.c.h.b16 %v2586
        %v4613 = vunpack.c.l.b16 %v2587
        %v4614 = vunpack.c.h.b16 %v2587
        %v4615 = vunpack.c.l.b16 %v2588
        %v4616 = vunpack.c.h.b16 %v2588
        %v4617 = vunpack.c.l.b16 %v2589
        %v4618 = vunpack.c.h.b16 %v2589
        %v4619 = vunpack.c.l.b16 %v2590
        %v4620 = vunpack.c.h.b16 %v2590
        %v4621 = vunpack.c.l.b16 %v2591
        %v4622 = vunpack.c.h.b16 %v2591
        %v4623 = vunpack.c.l.b16 %v2592
        %v4624 = vunpack.c.h.b16 %v2592
        %v4625 = vunpack.c.l.b16 %v2593
        %v4626 = vunpack.c.h.b16 %v2593
        %v4627 = vunpack.c.l.b16 %v2594
        %v4628 = vunpack.c.h.b16 %v2594
        %v4629 = vunpack.c.l.b16 %v2595
        %v4630 = vunpack.c.h.b16 %v2595
        %v4631 = vunpack.c.l.b16 %v2596
        %v4632 = vunpack.c.h.b16 %v2596
        %v4633 = vunpack.c.l.b16 %v2597
        %v4634 = vunpack.c.h.b16 %v2597
        %v4635 = vunpack.c.l.b16 %v2598
        %v4636 = vunpack.c.h.b16 %v2598
        %v4637 = vunpack.c.l.b16 %v2599
        %v4638 = vunpack.c.h.b16 %v2599
        %v4639 = vunpack.c.l.b16 %v2600
        %v4640 = vunpack.c.h.b16 %v2600
        %v4641 = vunpack.c.l.b16 %v2601
        %v4642 = vunpack.c.h.b16 %v2601
        %v4643 = vunpack.c.l.b16 %v2602
        %v4644 = vunpack.c.h.b16 %v2602
        %v4645 = vunpack.c.l.b16 %v2603
        %v4646 = vunpack.c.h.b16 %v2603
        %v4647 = vunpack.c.l.b16 %v2604
        %v4648 = vunpack.c.h.b16 %v2604
        %v4649 = vunpack.c.l.b16 %v2605
        %v4650 = vunpack.c.h.b16 %v2605
        %v4651 = vunpack.c.l.b16 %v2606
        %v4652 = vunpack.c.h.b16 %v2606
        %v4653 = vunpack.c.l.b16 %v2607
        %v4654 = vunpack.c.h.b16 %v2607
        %v4655 = vunpack.c.l.b16 %v2608
        %v4656 = vunpack.c.h.b16 %v2608
        %v4657 = vunpack.c.l.b16 %v2609
        %v4658 = vunpack.c.h.b16 %v2609
        %v4659 = vunpack.c.l.b16 %v2610
        %v4660 = vunpack.c.h.b16 %v2610
        %v4661 = vunpack.c.l.b16 %v2611
        %v4662 = vunpack.c.h.b16 %v2611
        %v4663 = vunpack.c.l.b16 %v2612
        %v4664 = vunpack.c.h.b16 %v2612
        %v4665 = vunpack.c.l.b16 %v2613
        %v4666 = vunpack.c.h.b16 %v2613
        %v4667 = vunpack.c.l.b16 %v2614
        %v4668 = vunpack.c.h.b16 %v2614
        %v4669 = vunpack.c.l.b16 %v2615
        %v4670 = vunpack.c.h.b16 %v2615
        %v4671 = vunpack.c.l.b16 %v2616
        %v4672 = vunpack.c.h.b16 %v2616
        %v4673 = vunpack.c.l.b16 %v2617
        %v4674 = vunpack.c.h.b16 %v2617
        %v4675 = vunpack.c.l.b16 %v2618
        %v4676 = vunpack.c.h.b16 %v2618
        %v4677 = vunpack.c.l.b16 %v2619
        %v4678 = vunpack.c.h.b16 %v2619
        %v4679 = vunpack.c.l.b16 %v2620
        %v4680 = vunpack.c.h.b16 %v2620
        %v4681 = vunpack.c.l.b16 %v2621
        %v4682 = vunpack.c.h.b16 %v2621
        %v4683 = vunpack.c.l.b16 %v2622
        %v4684 = vunpack.c.h.b16 %v2622
        %v4685 = vunpack.c.l.b16 %v2623
        %v4686 = vunpack.c.h.b16 %v2623
        %v4687 = vunpack.c.l.b16 %v2624
        %v4688 = vunpack.c.h.b16 %v2624
        %v4689 = vunpack.c.l.b16 %v2625
        %v4690 = vunpack.c.h.b16 %v2625
        %v4691 = vunpack.c.l.b16 %v2626
        %v4692 = vunpack.c.h.b16 %v2626
        %v4693 = vunpack.c.l.b16 %v2627
        %v4694 = vunpack.c.h.b16 %v2627
        %v4695 = vunpack.c.l.b16 %v2628
        %v4696 = vunpack.c.h.b16 %v2628
        %v4697 = vunpack.c.l.b16 %v2629
        %v4698 = vunpack.c.h.b16 %v2629
        %v4699 = vunpack.c.l.b16 %v2630
        %v4700 = vunpack.c.h.b16 %v2630
        %v4701 = vunpack.c.l.b16 %v2631
        %v4702 = vunpack.c.h.b16 %v2631
        %v4703 = vunpack.c.l.b16 %v2632
        %v4704 = vunpack.c.h.b16 %v2632
        %v4705 = vunpack.c.l.b16 %v2633
        %v4706 = vunpack.c.h.b16 %v2633
        %v4707 = vunpack.c.l.b16 %v2634
        %v4708 = vunpack.c.h.b16 %v2634
        %v4709 = vunpack.c.l.b16 %v2635
        %v4710 = vunpack.c.h.b16 %v2635
        %v4711 = vunpack.c.l.b16 %v2636
        %v4712 = vunpack.c.h.b16 %v2636
        %v4713 = vunpack.c.l.b16 %v2637
        %v4714 = vunpack.c.h.b16 %v2637
        %v4715 = vunpack.c.l.b16 %v2638
        %v4716 = vunpack.c.h.b16 %v2638
        %v4717 = vunpack.c.l.b16 %v2639
        %v4718 = vunpack.c.h.b16 %v2639
        %v4719 = vunpack.c.l.b16 %v2640
        %v4720 = vunpack.c.h.b16 %v2640
        %v4721 = vunpack.c.l.b16 %v2641
        %v4722 = vunpack.c.h.b16 %v2641
        %v4723 = vunpack.c.l.b16 %v2642
        %v4724 = vunpack.c.h.b16 %v2642
        %v4725 = vunpack.c.l.b16 %v2643
        %v4726 = vunpack.c.h.b16 %v2643
        %v4727 = vunpack.c.l.b16 %v2644
        %v4728 = vunpack.c.h.b16 %v2644
        %v4729 = vunpack.c.l.b16 %v2645
        %v4730 = vunpack.c.h.b16 %v2645
        %v4731 = vunpack.c.l.b16 %v2646
        %v4732 = vunpack.c.h.b16 %v2646
        %v4733 = vunpack.c.l.b16 %v2647
        %v4734 = vunpack.c.h.b16 %v2647
        %v4735 = vunpack.c.l.b16 %v2648
        %v4736 = vunpack.c.h.b16 %v2648
        %v4737 = vunpack.c.l.b16 %v2649
        %v4738 = vunpack.c.h.b16 %v2649
        %v4739 = vunpack.c.l.b16 %v2650
        %v4740 = vunpack.c.h.b16 %v2650
        %v4741 = vunpack.c.l.b16 %v2651
        %v4742 = vunpack.c.h.b16 %v2651
        %v4743 = vunpack.c.l.b16 %v2652
        %v4744 = vunpack.c.h.b16 %v2652
        %v4745 = vunpack.c.l.b16 %v2653
        %v4746 = vunpack.c.h.b16 %v2653
        %v4747 = vunpack.c.l.b16 %v2654
        %v4748 = vunpack.c.h.b16 %v2654
        %v4749 = vunpack.c.l.b16 %v2655
        %v4750 = vunpack.c.h.b16 %v2655
        %v4751 = vunpack.c.l.b16 %v2656
        %v4752 = vunpack.c.h.b16 %v2656
        %v4753 = vunpack.c.l.b16 %v2657
        %v4754 = vunpack.c.h.b16 %v2657
        %v4755 = vunpack.c.l.b16 %v2658
        %v4756 = vunpack.c.h.b16 %v2658
        %v4757 = vunpack.c.l.b16 %v2659
        %v4758 = vunpack.c.h.b16 %v2659
        %v4759 = vunpack.c.l.b16 %v2660
        %v4760 = vunpack.c.h.b16 %v2660
        %v4761 = vunpack.c.l.b16 %v2661
        %v4762 = vunpack.c.h.b16 %v2661
        %v4763 = vunpack.c.l.b16 %v2662
        %v4764 = vunpack.c.h.b16 %v2662
        %v4765 = vunpack.c.l.b16 %v2663
        %v4766 = vunpack.c.h.b16 %v2663
        %v4767 = vunpack.c.l.b16 %v2664
        %v4768 = vunpack.c.h.b16 %v2664
        %v4769 = vunpack.c.l.b16 %v2665
        %v4770 = vunpack.c.h.b16 %v2665
        %v4771 = vunpack.c.l.b16 %v2666
        %v4772 = vunpack.c.h.b16 %v2666
        %v4773 = vunpack.c.l.b16 %v2667
        %v4774 = vunpack.c.h.b16 %v2667
        %v4775 = vpack.c.b16 %v4395, %v4391
        %v4776 = vpack.c.b16 %v4396, %v4392
        %v4777 = vpack.c.b16 %v4397, %v4393
        %v4778 = vpack.c.b16 %v4398, %v4394
        %v4779 = vpack.c.b16 %v4403, %v4399
        %v4780 = vpack.c.b16 %v4404, %v4400
        %v4781 = vpack.c.b16 %v4405, %v4401
        %v4782 = vpack.c.b16 %v4406, %v4402
        %v4783 = vpack.c.b16 %v4411, %v4407
        %v4784 = vpack.c.b16 %v4412, %v4408
        %v4785 = vpack.c.b16 %v4413, %v4409
        %v4786 = vpack.c.b16 %v4414, %v4410
        %v4787 = vpack.c.b16 %v4419, %v4415
        %v4788 = vpack.c.b16 %v4420, %v4416
        %v4789 = vpack.c.b16 %v4421, %v4417
        %v4790 = vpack.c.b16 %v4422, %v4418
        %v4791 = vpack.c.b16 %v4427, %v4423
        %v4792 = vpack.c.b16 %v4428, %v4424
        %v4793 = vpack.c.b16 %v4429, %v4425
        %v4794 = vpack.c.b16 %v4430, %v4426
        %v4795 = vpack.c.b16 %v4435, %v4431
        %v4796 = vpack.c.b16 %v4436, %v4432
        %v4797 = vpack.c.b16 %v4437, %v4433
        %v4798 = vpack.c.b16 %v4438, %v4434
        %v4799 = vpack.c.b16 %v4443, %v4439
        %v4800 = vpack.c.b16 %v4444, %v4440
        %v4801 = vpack.c.b16 %v4445, %v4441
        %v4802 = vpack.c.b16 %v4446, %v4442
        %v4803 = vpack.c.b16 %v4451, %v4447
        %v4804 = vpack.c.b16 %v4452, %v4448
        %v4805 = vpack.c.b16 %v4453, %v4449
        %v4806 = vpack.c.b16 %v4454, %v4450
        %v4807 = vpack.c.b16 %v4459, %v4455
        %v4808 = vpack.c.b16 %v4460, %v4456
        %v4809 = vpack.c.b16 %v4461, %v4457
        %v4810 = vpack.c.b16 %v4462, %v4458
        %v4811 = vpack.c.b16 %v4467, %v4463
        %v4812 = vpack.c.b16 %v4468, %v4464
        %v4813 = vpack.c.b16 %v4469, %v4465
        %v4814 = vpack.c.b16 %v4470, %v4466
        %v4815 = vpack.c.b16 %v4475, %v4471
        %v4816 = vpack.c.b16 %v4476, %v4472
        %v4817 = vpack.c.b16 %v4477, %v4473
        %v4818 = vpack.c.b16 %v4478, %v4474
        %v4819 = vpack.c.b16 %v4483, %v4479
        %v4820 = vpack.c.b16 %v4484, %v4480
        %v4821 = vpack.c.b16 %v4485, %v4481
        %v4822 = vpack.c.b16 %v4486, %v4482
        %v4823 = vpack.c.b16 %v4491, %v4487
        %v4824 = vpack.c.b16 %v4492, %v4488
        %v4825 = vpack.c.b16 %v4493, %v4489
        %v4826 = vpack.c.b16 %v4494, %v4490
        %v4827 = vpack.c.b16 %v4499, %v4495
        %v4828 = vpack.c.b16 %v4500, %v4496
        %v4829 = vpack.c.b16 %v4501, %v4497
        %v4830 = vpack.c.b16 %v4502, %v4498
        %v4831 = vpack.c.b16 %v4507, %v4503
        %v4832 = vpack.c.b16 %v4508, %v4504
        %v4833 = vpack.c.b16 %v4509, %v4505
        %v4834 = vpack.c.b16 %v4510, %v4506
        %v4835 = vpack.c.b16 %v4515, %v4511
        %v4836 = vpack.c.b16 %v4516, %v4512
        %v4837 = vpack.c.b16 %v4517, %v4513
        %v4838 = vpack.c.b16 %v4518, %v4514
        %v4839 = vpack.c.b16 %v4523, %v4519
        %v4840 = vpack.c.b16 %v4524, %v4520
        %v4841 = vpack.c.b16 %v4525, %v4521
        %v4842 = vpack.c.b16 %v4526, %v4522
        %v4843 = vpack.c.b16 %v4531, %v4527
        %v4844 = vpack.c.b16 %v4532, %v4528
        %v4845 = vpack.c.b16 %v4533, %v4529
        %v4846 = vpack.c.b16 %v4534, %v4530
        %v4847 = vpack.c.b16 %v4539, %v4535
        %v4848 = vpack.c.b16 %v4540, %v4536
        %v4849 = vpack.c.b16 %v4541, %v4537
        %v4850 = vpack.c.b16 %v4542, %v4538
        %v4851 = vpack.c.b16 %v4547, %v4543
        %v4852 = vpack.c.b16 %v4548, %v4544
        %v4853 = vpack.c.b16 %v4549, %v4545
        %v4854 = vpack.c.b16 %v4550, %v4546
        %v4855 = vpack.c.b16 %v4555, %v4551
        %v4856 = vpack.c.b16 %v4556, %v4552
        %v4857 = vpack.c.b16 %v4557, %v4553
        %v4858 = vpack.c.b16 %v4558, %v4554
        %v4859 = vpack.c.b16 %v4563, %v4559
        %v4860 = vpack.c.b16 %v4564, %v4560
        %v4861 = vpack.c.b16 %v4565, %v4561
        %v4862 = vpack.c.b16 %v4566, %v4562
        %v4863 = vpack.c.b16 %v4571, %v4567
        %v4864 = vpack.c.b16 %v4572, %v4568
        %v4865 = vpack.c.b16 %v4573, %v4569
        %v4866 = vpack.c.b16 %v4574, %v4570
        %v4867 = vpack.c.b16 %v4579, %v4575
        %v4868 = vpack.c.b16 %v4580, %v4576
        %v4869 = vpack.c.b16 %v4581, %v4577
        %v4870 = vpack.c.b16 %v4582, %v4578
        %v4871 = vpack.c.b16 %v4587, %v4583
        %v4872 = vpack.c.b16 %v4588, %v4584
        %v4873 = vpack.c.b16 %v4589, %v4585
        %v4874 = vpack.c.b16 %v4590, %v4586
        %v4875 = vpack.c.b16 %v4595, %v4591
        %v4876 = vpack.c.b16 %v4596, %v4592
        %v4877 = vpack.c.b16 %v4597, %v4593
        %v4878 = vpack.c.b16 %v4598, %v4594
        %v4879 = vpack.c.b16 %v4603, %v4599
        %v4880 = vpack.c.b16 %v4604, %v4600
        %v4881 = vpack.c.b16 %v4605, %v4601
        %v4882 = vpack.c.b16 %v4606, %v4602
        %v4883 = vpack.c.b16 %v4611, %v4607
        %v4884 = vpack.c.b16 %v4612, %v4608
        %v4885 = vpack.c.b16 %v4613, %v4609
        %v4886 = vpack.c.b16 %v4614, %v4610
        %v4887 = vpack.c.b16 %v4619, %v4615
        %v4888 = vpack.c.b16 %v4620, %v4616
        %v4889 = vpack.c.b16 %v4621, %v4617
        %v4890 = vpack.c.b16 %v4622, %v4618
        %v4891 = vpack.c.b16 %v4627, %v4623
        %v4892 = vpack.c.b16 %v4628, %v4624
        %v4893 = vpack.c.b16 %v4629, %v4625
        %v4894 = vpack.c.b16 %v4630, %v4626
        %v4895 = vpack.c.b16 %v4635, %v4631
        %v4896 = vpack.c.b16 %v4636, %v4632
        %v4897 = vpack.c.b16 %v4637, %v4633
        %v4898 = vpack.c.b16 %v4638, %v4634
        %v4899 = vpack.c.b16 %v4643, %v4639
        %v4900 = vpack.c.b16 %v4644, %v4640
        %v4901 = vpack.c.b16 %v4645, %v4641
        %v4902 = vpack.c.b16 %v4646, %v4642
        %v4903 = vpack.c.b16 %v4651, %v4647
        %v4904 = vpack.c.b16 %v4652, %v4648
        %v4905 = vpack.c.b16 %v4653, %v4649
        %v4906 = vpack.c.b16 %v4654, %v4650
        %v4907 = vpack.c.b16 %v4659, %v4655
        %v4908 = vpack.c.b16 %v4660, %v4656
        %v4909 = vpack.c.b16 %v4661, %v4657
        %v4910 = vpack.c.b16 %v4662, %v4658
        %v4911 = vpack.c.b16 %v4667, %v4663
        %v4912 = vpack.c.b16 %v4668, %v4664
        %v4913 = vpack.c.b16 %v4669, %v4665
        %v4914 = vpack.c.b16 %v4670, %v4666
        %v4915 = vpack.c.b16 %v4675, %v4671
        %v4916 = vpack.c.b16 %v4676, %v4672
        %v4917 = vpack.c.b16 %v4677, %v4673
        %v4918 = vpack.c.b16 %v4678, %v4674
        %v4919 = vpack.c.b16 %v4683, %v4679
        %v4920 = vpack.c.b16 %v4684, %v4680
        %v4921 = vpack.c.b16 %v4685, %v4681
        %v4922 = vpack.c.b16 %v4686, %v4682
        %v4923 = vpack.c.b16 %v4691, %v4687
        %v4924 = vpack.c.b16 %v4692, %v4688
        %v4925 = vpack.c.b16 %v4693, %v4689
        %v4926 = vpack.c.b16 %v4694, %v4690
        %v4927 = vpack.c.b16 %v4699, %v4695
        %v4928 = vpack.c.b16 %v4700, %v4696
        %v4929 = vpack.c.b16 %v4701, %v4697
        %v4930 = vpack.c.b16 %v4702, %v4698
        %v4931 = vpack.c.b16 %v4707, %v4703
        %v4932 = vpack.c.b16 %v4708, %v4704
        %v4933 = vpack.c.b16 %v4709, %v4705
        %v4934 = vpack.c.b16 %v4710, %v4706
        %v4935 = vpack.c.b16 %v4715, %v4711
        %v4936 = vpack.c.b16 %v4716, %v4712
        %v4937 = vpack.c.b16 %v4717, %v4713
        %v4938 = vpack.c.b16 %v4718, %v4714
        %v4939 = vpack.c.b16 %v4723, %v4719
        %v4940 = vpack.c.b16 %v4724, %v4720
        %v4941 = vpack.c.b16 %v4725, %v4721
        %v4942 = vpack.c.b16 %v4726, %v4722
        %v4943 = vpack.c.b16 %v4731, %v4727
        %v4944 = vpack.c.b16 %v4732, %v4728
        %v4945 = vpack.c.b16 %v4733, %v4729
        %v4946 = vpack.c.b16 %v4734, %v4730
        %v4947 = vpack.c.b16 %v4739, %v4735
        %v4948 = vpack.c.b16 %v4740, %v4736
        %v4949 = vpack.c.b16 %v4741, %v4737
        %v4950 = vpack.c.b16 %v4742, %v4738
        %v4951 = vpack.c.b16 %v4747, %v4743
        %v4952 = vpack.c.b16 %v4748, %v4744
        %v4953 = vpack.c.b16 %v4749, %v4745
        %v4954 = vpack.c.b16 %v4750, %v4746
        %v4955 = vpack.c.b16 %v4755, %v4751
        %v4956 = vpack.c.b16 %v4756, %v4752
        %v4957 = vpack.c.b16 %v4757, %v4753
        %v4958 = vpack.c.b16 %v4758, %v4754
        %v4959 = vpack.c.b16 %v4763, %v4759
        %v4960 = vpack.c.b16 %v4764, %v4760
        %v4961 = vpack.c.b16 %v4765, %v4761
        %v4962 = vpack.c.b16 %v4766, %v4762
        %v4963 = vpack.c.b16 %v4771, %v4767
        %v4964 = vpack.c.b16 %v4772, %v4768
        %v4965 = vpack.c.b16 %v4773, %v4769
        %v4966 = vpack.c.b16 %v4774, %v4770
        %5159 = vmatpush.bf16.msra.mxu0 %v4803
        %5160 = vmatpush.bf16.msra.mxu0 %v4799
        %5161 = vmatpush.bf16.msra.mxu0 %v4795
        %5162 = vmatpush.bf16.msra.mxu0 %v4791
        %5163 = vmatpush.bf16.msra.mxu0 %v4787
        %5164 = vmatpush.bf16.msra.mxu0 %v4783
        %5165 = vmatpush.bf16.msra.mxu0 %v4779
        %5166 = vmatpush.bf16.msra.mxu0 %v4775
        %5167 = vmatmul.bf16.gmra.mxu0 %v2470
        %v5168 = vpop.f32.mrf.mxu0
        %v5169 = vadd.f32 %v3962, %v5168
        %v5170 = vpop.f32.mrf.mxu0
        %5171 = vdwg.mxu0
        %5172 = vmatpush.bf16.msra.mxu0 %v4835
        %5173 = vmatpush.bf16.msra.mxu0 %v4831
        %5174 = vmatpush.bf16.msra.mxu0 %v4827
        %5175 = vmatpush.bf16.msra.mxu0 %v4823
        %5176 = vmatpush.bf16.msra.mxu0 %v4819
        %5177 = vmatpush.bf16.msra.mxu0 %v4815
        %5178 = vmatpush.bf16.msra.mxu0 %v4811
        %5179 = vmatpush.bf16.msra.mxu0 %v4807
        %5180 = vmatmul.bf16.gmra.mxu0 %v2471
        %v5181 = vpop.f32.mrf.mxu0
        %v5182 = vadd.f32 %v5169, %v5181
        %v5183 = vpop.f32.mrf.mxu0
        %5184 = vdwg.mxu0
        %5185 = vmatpush.bf16.msra.mxu0 %v4867
        %5186 = vmatpush.bf16.msra.mxu0 %v4863
        %5187 = vmatpush.bf16.msra.mxu0 %v4859
        %5188 = vmatpush.bf16.msra.mxu0 %v4855
        %5189 = vmatpush.bf16.msra.mxu0 %v4851
        %5190 = vmatpush.bf16.msra.mxu0 %v4847
        %5191 = vmatpush.bf16.msra.mxu0 %v4843
        %5192 = vmatpush.bf16.msra.mxu0 %v4839
        %5193 = vmatmul.bf16.gmra.mxu0 %v2472
        %v5194 = vpop.f32.mrf.mxu0
        %v5195 = vadd.f32 %v5182, %v5194
        %v5196 = vpop.f32.mrf.mxu0
        %5197 = vdwg.mxu0
        %5198 = vmatpush.bf16.msra.mxu0 %v4899
        %5199 = vmatpush.bf16.msra.mxu0 %v4895
        %5200 = vmatpush.bf16.msra.mxu0 %v4891
        %5201 = vmatpush.bf16.msra.mxu0 %v4887
        %5202 = vmatpush.bf16.msra.mxu0 %v4883
        %5203 = vmatpush.bf16.msra.mxu0 %v4879
        %5204 = vmatpush.bf16.msra.mxu0 %v4875
        %5205 = vmatpush.bf16.msra.mxu0 %v4871
        %5206 = vmatmul.bf16.gmra.mxu0 %v2473
        %v5207 = vpop.f32.mrf.mxu0
        %v5208 = vadd.f32 %v5195, %v5207
        %v5209 = vpop.f32.mrf.mxu0
        %5210 = vdwg.mxu0
        %5211 = vmatpush.bf16.msra.mxu0 %v4931
        %5212 = vmatpush.bf16.msra.mxu0 %v4927
        %5213 = vmatpush.bf16.msra.mxu0 %v4923
        %5214 = vmatpush.bf16.msra.mxu0 %v4919
        %5215 = vmatpush.bf16.msra.mxu0 %v4915
        %5216 = vmatpush.bf16.msra.mxu0 %v4911
        %5217 = vmatpush.bf16.msra.mxu0 %v4907
        %5218 = vmatpush.bf16.msra.mxu0 %v4903
        %5219 = vmatmul.bf16.gmra.mxu0 %v2474
        %v5220 = vpop.f32.mrf.mxu0
        %v5221 = vadd.f32 %v5208, %v5220
        %v5222 = vpop.f32.mrf.mxu0
        %5223 = vdwg.mxu0
        %5224 = vmatpush.bf16.msra.mxu0 %v4963
        %5225 = vmatpush.bf16.msra.mxu0 %v4959
        %5226 = vmatpush.bf16.msra.mxu0 %v4955
        %5227 = vmatpush.bf16.msra.mxu0 %v4951
        %5228 = vmatpush.bf16.msra.mxu0 %v4947
        %5229 = vmatpush.bf16.msra.mxu0 %v4943
        %5230 = vmatpush.bf16.msra.mxu0 %v4939
        %5231 = vmatpush.bf16.msra.mxu0 %v4935
        %5232 = vmatmul.bf16.gmra.mxu0 %v2475
        %v5233 = vpop.f32.mrf.mxu0
        %v5234 = vadd.f32 %v5221, %v5233
        %v5235 = vpop.f32.mrf.mxu0
        %5236 = vdwg.mxu0
        %5237 = vmatpush.bf16.msra.mxu0 %v4804
        %5238 = vmatpush.bf16.msra.mxu0 %v4800
        %5239 = vmatpush.bf16.msra.mxu0 %v4796
        %5240 = vmatpush.bf16.msra.mxu0 %v4792
        %5241 = vmatpush.bf16.msra.mxu0 %v4788
        %5242 = vmatpush.bf16.msra.mxu0 %v4784
        %5243 = vmatpush.bf16.msra.mxu0 %v4780
        %5244 = vmatpush.bf16.msra.mxu0 %v4776
        %5245 = vmatmul.bf16.gmra.mxu0 %v2470
        %v5246 = vpop.f32.mrf.mxu0
        %v5247 = vadd.f32 %v4040, %v5246
        %v5248 = vpop.f32.mrf.mxu0
        %5249 = vdwg.mxu0
        %5250 = vmatpush.bf16.msra.mxu0 %v4836
        %5251 = vmatpush.bf16.msra.mxu0 %v4832
        %5252 = vmatpush.bf16.msra.mxu0 %v4828
        %5253 = vmatpush.bf16.msra.mxu0 %v4824
        %5254 = vmatpush.bf16.msra.mxu0 %v4820
        %5255 = vmatpush.bf16.msra.mxu0 %v4816
        %5256 = vmatpush.bf16.msra.mxu0 %v4812
        %5257 = vmatpush.bf16.msra.mxu0 %v4808
        %5258 = vmatmul.bf16.gmra.mxu0 %v2471
        %v5259 = vpop.f32.mrf.mxu0
        %v5260 = vadd.f32 %v5247, %v5259
        %v5261 = vpop.f32.mrf.mxu0
        %5262 = vdwg.mxu0
        %5263 = vmatpush.bf16.msra.mxu0 %v4868
        %5264 = vmatpush.bf16.msra.mxu0 %v4864
        %5265 = vmatpush.bf16.msra.mxu0 %v4860
        %5266 = vmatpush.bf16.msra.mxu0 %v4856
        %5267 = vmatpush.bf16.msra.mxu0 %v4852
        %5268 = vmatpush.bf16.msra.mxu0 %v4848
        %5269 = vmatpush.bf16.msra.mxu0 %v4844
        %5270 = vmatpush.bf16.msra.mxu0 %v4840
        %5271 = vmatmul.bf16.gmra.mxu0 %v2472
        %v5272 = vpop.f32.mrf.mxu0
        %v5273 = vadd.f32 %v5260, %v5272
        %v5274 = vpop.f32.mrf.mxu0
        %5275 = vdwg.mxu0
        %5276 = vmatpush.bf16.msra.mxu0 %v4900
        %5277 = vmatpush.bf16.msra.mxu0 %v4896
        %5278 = vmatpush.bf16.msra.mxu0 %v4892
        %5279 = vmatpush.bf16.msra.mxu0 %v4888
        %5280 = vmatpush.bf16.msra.mxu0 %v4884
        %5281 = vmatpush.bf16.msra.mxu0 %v4880
        %5282 = vmatpush.bf16.msra.mxu0 %v4876
        %5283 = vmatpush.bf16.msra.mxu0 %v4872
        %5284 = vmatmul.bf16.gmra.mxu0 %v2473
        %v5285 = vpop.f32.mrf.mxu0
        %v5286 = vadd.f32 %v5273, %v5285
        %v5287 = vpop.f32.mrf.mxu0
        %5288 = vdwg.mxu0
        %5289 = vmatpush.bf16.msra.mxu0 %v4932
        %5290 = vmatpush.bf16.msra.mxu0 %v4928
        %5291 = vmatpush.bf16.msra.mxu0 %v4924
        %5292 = vmatpush.bf16.msra.mxu0 %v4920
        %5293 = vmatpush.bf16.msra.mxu0 %v4916
        %5294 = vmatpush.bf16.msra.mxu0 %v4912
        %5295 = vmatpush.bf16.msra.mxu0 %v4908
        %5296 = vmatpush.bf16.msra.mxu0 %v4904
        %5297 = vmatmul.bf16.gmra.mxu0 %v2474
        %v5298 = vpop.f32.mrf.mxu0
        %v5299 = vadd.f32 %v5286, %v5298
        %v5300 = vpop.f32.mrf.mxu0
        %5301 = vdwg.mxu0
        %5302 = vmatpush.bf16.msra.mxu0 %v4964
        %5303 = vmatpush.bf16.msra.mxu0 %v4960
        %5304 = vmatpush.bf16.msra.mxu0 %v4956
        %5305 = vmatpush.bf16.msra.mxu0 %v4952
        %5306 = vmatpush.bf16.msra.mxu0 %v4948
        %5307 = vmatpush.bf16.msra.mxu0 %v4944
        %5308 = vmatpush.bf16.msra.mxu0 %v4940
        %5309 = vmatpush.bf16.msra.mxu0 %v4936
        %5310 = vmatmul.bf16.gmra.mxu0 %v2475
        %v5311 = vpop.f32.mrf.mxu0
        %v5312 = vadd.f32 %v5299, %v5311
        %v5313 = vpop.f32.mrf.mxu0
        %5314 = vdwg.mxu0
        %5315 = vmatpush.bf16.msra.mxu0 %v4805
        %5316 = vmatpush.bf16.msra.mxu0 %v4801
        %5317 = vmatpush.bf16.msra.mxu0 %v4797
        %5318 = vmatpush.bf16.msra.mxu0 %v4793
        %5319 = vmatpush.bf16.msra.mxu0 %v4789
        %5320 = vmatpush.bf16.msra.mxu0 %v4785
        %5321 = vmatpush.bf16.msra.mxu0 %v4781
        %5322 = vmatpush.bf16.msra.mxu0 %v4777
        %5323 = vmatmul.bf16.gmra.mxu0 %v2470
        %v5324 = vpop.f32.mrf.mxu0
        %v5325 = vadd.f32 %v4118, %v5324
        %v5326 = vpop.f32.mrf.mxu0
        %5327 = vdwg.mxu0
        %5328 = vmatpush.bf16.msra.mxu0 %v4837
        %5329 = vmatpush.bf16.msra.mxu0 %v4833
        %5330 = vmatpush.bf16.msra.mxu0 %v4829
        %5331 = vmatpush.bf16.msra.mxu0 %v4825
        %5332 = vmatpush.bf16.msra.mxu0 %v4821
        %5333 = vmatpush.bf16.msra.mxu0 %v4817
        %5334 = vmatpush.bf16.msra.mxu0 %v4813
        %5335 = vmatpush.bf16.msra.mxu0 %v4809
        %5336 = vmatmul.bf16.gmra.mxu0 %v2471
        %v5337 = vpop.f32.mrf.mxu0
        %v5338 = vadd.f32 %v5325, %v5337
        %v5339 = vpop.f32.mrf.mxu0
        %5340 = vdwg.mxu0
        %5341 = vmatpush.bf16.msra.mxu0 %v4869
        %5342 = vmatpush.bf16.msra.mxu0 %v4865
        %5343 = vmatpush.bf16.msra.mxu0 %v4861
        %5344 = vmatpush.bf16.msra.mxu0 %v4857
        %5345 = vmatpush.bf16.msra.mxu0 %v4853
        %5346 = vmatpush.bf16.msra.mxu0 %v4849
        %5347 = vmatpush.bf16.msra.mxu0 %v4845
        %5348 = vmatpush.bf16.msra.mxu0 %v4841
        %5349 = vmatmul.bf16.gmra.mxu0 %v2472
        %v5350 = vpop.f32.mrf.mxu0
        %v5351 = vadd.f32 %v5338, %v5350
        %v5352 = vpop.f32.mrf.mxu0
        %5353 = vdwg.mxu0
        %5354 = vmatpush.bf16.msra.mxu0 %v4901
        %5355 = vmatpush.bf16.msra.mxu0 %v4897
        %5356 = vmatpush.bf16.msra.mxu0 %v4893
        %5357 = vmatpush.bf16.msra.mxu0 %v4889
        %5358 = vmatpush.bf16.msra.mxu0 %v4885
        %5359 = vmatpush.bf16.msra.mxu0 %v4881
        %5360 = vmatpush.bf16.msra.mxu0 %v4877
        %5361 = vmatpush.bf16.msra.mxu0 %v4873
        %5362 = vmatmul.bf16.gmra.mxu0 %v2473
        %v5363 = vpop.f32.mrf.mxu0
        %v5364 = vadd.f32 %v5351, %v5363
        %v5365 = vpop.f32.mrf.mxu0
        %5366 = vdwg.mxu0
        %5367 = vmatpush.bf16.msra.mxu0 %v4933
        %5368 = vmatpush.bf16.msra.mxu0 %v4929
        %5369 = vmatpush.bf16.msra.mxu0 %v4925
        %5370 = vmatpush.bf16.msra.mxu0 %v4921
        %5371 = vmatpush.bf16.msra.mxu0 %v4917
        %5372 = vmatpush.bf16.msra.mxu0 %v4913
        %5373 = vmatpush.bf16.msra.mxu0 %v4909
        %5374 = vmatpush.bf16.msra.mxu0 %v4905
        %5375 = vmatmul.bf16.gmra.mxu0 %v2474
        %v5376 = vpop.f32.mrf.mxu0
        %v5377 = vadd.f32 %v5364, %v5376
        %v5378 = vpop.f32.mrf.mxu0
        %5379 = vdwg.mxu0
        %5380 = vmatpush.bf16.msra.mxu0 %v4965
        %5381 = vmatpush.bf16.msra.mxu0 %v4961
        %5382 = vmatpush.bf16.msra.mxu0 %v4957
        %5383 = vmatpush.bf16.msra.mxu0 %v4953
        %5384 = vmatpush.bf16.msra.mxu0 %v4949
        %5385 = vmatpush.bf16.msra.mxu0 %v4945
        %5386 = vmatpush.bf16.msra.mxu0 %v4941
        %5387 = vmatpush.bf16.msra.mxu0 %v4937
        %5388 = vmatmul.bf16.gmra.mxu0 %v2475
        %v5389 = vpop.f32.mrf.mxu0
        %v5390 = vadd.f32 %v5377, %v5389
        %v5391 = vpop.f32.mrf.mxu0
        %5392 = vdwg.mxu0
        %5393 = vmatpush.bf16.msra.mxu0 %v4806
        %5394 = vmatpush.bf16.msra.mxu0 %v4802
        %5395 = vmatpush.bf16.msra.mxu0 %v4798
        %5396 = vmatpush.bf16.msra.mxu0 %v4794
        %5397 = vmatpush.bf16.msra.mxu0 %v4790
        %5398 = vmatpush.bf16.msra.mxu0 %v4786
        %5399 = vmatpush.bf16.msra.mxu0 %v4782
        %5400 = vmatpush.bf16.msra.mxu0 %v4778
        %5401 = vmatmul.bf16.gmra.mxu0 %v2470
        %v5402 = vpop.f32.mrf.mxu0
        %v5403 = vadd.f32 %v4196, %v5402
        %v5404 = vpop.f32.mrf.mxu0
        %5405 = vdwg.mxu0
        %5406 = vmatpush.bf16.msra.mxu0 %v4838
        %5407 = vmatpush.bf16.msra.mxu0 %v4834
        %5408 = vmatpush.bf16.msra.mxu0 %v4830
        %5409 = vmatpush.bf16.msra.mxu0 %v4826
        %5410 = vmatpush.bf16.msra.mxu0 %v4822
        %5411 = vmatpush.bf16.msra.mxu0 %v4818
        %5412 = vmatpush.bf16.msra.mxu0 %v4814
        %5413 = vmatpush.bf16.msra.mxu0 %v4810
        %5414 = vmatmul.bf16.gmra.mxu0 %v2471
        %v5415 = vpop.f32.mrf.mxu0
        %v5416 = vadd.f32 %v5403, %v5415
        %v5417 = vpop.f32.mrf.mxu0
        %5418 = vdwg.mxu0
        %5419 = vmatpush.bf16.msra.mxu0 %v4870
        %5420 = vmatpush.bf16.msra.mxu0 %v4866
        %5421 = vmatpush.bf16.msra.mxu0 %v4862
        %5422 = vmatpush.bf16.msra.mxu0 %v4858
        %5423 = vmatpush.bf16.msra.mxu0 %v4854
        %5424 = vmatpush.bf16.msra.mxu0 %v4850
        %5425 = vmatpush.bf16.msra.mxu0 %v4846
        %5426 = vmatpush.bf16.msra.mxu0 %v4842
        %5427 = vmatmul.bf16.gmra.mxu0 %v2472
        %v5428 = vpop.f32.mrf.mxu0
        %v5429 = vadd.f32 %v5416, %v5428
        %v5430 = vpop.f32.mrf.mxu0
        %5431 = vdwg.mxu0
        %5432 = vmatpush.bf16.msra.mxu0 %v4902
        %5433 = vmatpush.bf16.msra.mxu0 %v4898
        %5434 = vmatpush.bf16.msra.mxu0 %v4894
        %5435 = vmatpush.bf16.msra.mxu0 %v4890
        %5436 = vmatpush.bf16.msra.mxu0 %v4886
        %5437 = vmatpush.bf16.msra.mxu0 %v4882
        %5438 = vmatpush.bf16.msra.mxu0 %v4878
        %5439 = vmatpush.bf16.msra.mxu0 %v4874
        %5440 = vmatmul.bf16.gmra.mxu0 %v2473
        %v5441 = vpop.f32.mrf.mxu0
        %v5442 = vadd.f32 %v5429, %v5441
        %v5443 = vpop.f32.mrf.mxu0
        %5444 = vdwg.mxu0
        %5445 = vmatpush.bf16.msra.mxu0 %v4934
        %5446 = vmatpush.bf16.msra.mxu0 %v4930
        %5447 = vmatpush.bf16.msra.mxu0 %v4926
        %5448 = vmatpush.bf16.msra.mxu0 %v4922
        %5449 = vmatpush.bf16.msra.mxu0 %v4918
        %5450 = vmatpush.bf16.msra.mxu0 %v4914
        %5451 = vmatpush.bf16.msra.mxu0 %v4910
        %5452 = vmatpush.bf16.msra.mxu0 %v4906
        %5453 = vmatmul.bf16.gmra.mxu0 %v2474
        %v5454 = vpop.f32.mrf.mxu0
        %v5455 = vadd.f32 %v5442, %v5454
        %v5456 = vpop.f32.mrf.mxu0
        %5457 = vdwg.mxu0
        %5458 = vmatpush.bf16.msra.mxu0 %v4966
        %5459 = vmatpush.bf16.msra.mxu0 %v4962
        %5460 = vmatpush.bf16.msra.mxu0 %v4958
        %5461 = vmatpush.bf16.msra.mxu0 %v4954
        %5462 = vmatpush.bf16.msra.mxu0 %v4950
        %5463 = vmatpush.bf16.msra.mxu0 %v4946
        %5464 = vmatpush.bf16.msra.mxu0 %v4942
        %5465 = vmatpush.bf16.msra.mxu0 %v4938
        %5466 = vmatmul.bf16.gmra.mxu0 %v2475
        %v5467 = vpop.f32.mrf.mxu0
        %v5468 = vadd.f32 %v5455, %v5467
        %v5469 = vpop.f32.mrf.mxu0
        %5470 = vdwg.mxu0
        %v5471 = vld [vmem:[#allocation2] sm:$0xfc]
        %v5472 = vld [vmem:[#allocation2 + $0x8] sm:$0xfc]
        %v5473 = vld [vmem:[#allocation2 + $0x10] sm:$0xfc]
        %v5474 = vld [vmem:[#allocation2 + $0x18] sm:$0xfc]
        %v5475 = vld [vmem:[#allocation2 + $0x20] sm:$0xfc]
        %v5476 = vld [vmem:[#allocation2 + $0x28] sm:$0xfc]
        %v5477 = vld [vmem:[#allocation2 + $0x30] sm:$0x3]
        %v5478 = vld [vmem:[#allocation2 + $0x38] sm:$0x3]
        %v5479 = vld [vmem:[#allocation2 + $0x40] sm:$0x3]
        %v5480 = vld [vmem:[#allocation2 + $0x48] sm:$0x3]
        %v5481 = vld [vmem:[#allocation2 + $0x50] sm:$0x3]
        %v5482 = vld [vmem:[#allocation2 + $0x58] sm:$0x3]
        %v5483 = vpack.c.bf16 %v5477, %v5471
        %v5484 = vpack.c.bf16 %v5478, %v5472
        %v5485 = vpack.c.bf16 %v5479, %v5473
        %v5486 = vpack.c.bf16 %v5480, %v5474
        %v5487 = vpack.c.bf16 %v5481, %v5475
        %v5488 = vpack.c.bf16 %v5482, %v5476
        %s5489 = scalar_lea.vmem [#allocation9], 3072
        %v5490 = vld [vmem:[%s5489] sm:$0xff]
        %v5491 = vld [vmem:[%s5489 + $0x8] sm:$0xff]
        %v5492 = vld [vmem:[%s5489 + $0x10] sm:$0xff]
        %v5493 = vld [vmem:[%s5489 + $0x18] sm:$0xff]
        %v5494 = vld [vmem:[%s5489 + $0x20] sm:$0xff]
        %v5495 = vld [vmem:[%s5489 + $0x28] sm:$0xff]
        %v5496 = vld [vmem:[%s5489 + $0x30] sm:$0xff]
        %v5497 = vld [vmem:[%s5489 + $0x38] sm:$0xff]
        %v5498 = vld [vmem:[%s5489 + $0x40] sm:$0xff]
        %v5499 = vld [vmem:[%s5489 + $0x48] sm:$0xff]
        %v5500 = vld [vmem:[%s5489 + $0x50] sm:$0xff]
        %v5501 = vld [vmem:[%s5489 + $0x58] sm:$0xff]
        %v5502 = vld [vmem:[%s5489 + $0x60] sm:$0xff]
        %v5503 = vld [vmem:[%s5489 + $0x68] sm:$0xff]
        %v5504 = vld [vmem:[%s5489 + $0x70] sm:$0xff]
        %v5505 = vld [vmem:[%s5489 + $0x78] sm:$0xff]
        %v5506 = vld [vmem:[%s5489 + $0x80] sm:$0xff]
        %v5507 = vld [vmem:[%s5489 + $0x88] sm:$0xff]
        %v5508 = vld [vmem:[%s5489 + $0x90] sm:$0xff]
        %v5509 = vld [vmem:[%s5489 + $0x98] sm:$0xff]
        %v5510 = vld [vmem:[%s5489 + $0xa0] sm:$0xff]
        %v5511 = vld [vmem:[%s5489 + $0xa8] sm:$0xff]
        %v5512 = vld [vmem:[%s5489 + $0xb0] sm:$0xff]
        %v5513 = vld [vmem:[%s5489 + $0xb8] sm:$0xff]
        %v5514 = vld [vmem:[%s5489 + $0xc0] sm:$0xff]
        %v5515 = vld [vmem:[%s5489 + $0xc8] sm:$0xff]
        %v5516 = vld [vmem:[%s5489 + $0xd0] sm:$0xff]
        %v5517 = vld [vmem:[%s5489 + $0xd8] sm:$0xff]
        %v5518 = vld [vmem:[%s5489 + $0xe0] sm:$0xff]
        %v5519 = vld [vmem:[%s5489 + $0xe8] sm:$0xff]
        %v5520 = vld [vmem:[%s5489 + $0xf0] sm:$0xff]
        %v5521 = vld [vmem:[%s5489 + $0xf8] sm:$0xff]
        %v5522 = vld [vmem:[%s5489 + $0x100] sm:$0xff]
        %v5523 = vld [vmem:[%s5489 + $0x108] sm:$0xff]
        %v5524 = vld [vmem:[%s5489 + $0x110] sm:$0xff]
        %v5525 = vld [vmem:[%s5489 + $0x118] sm:$0xff]
        %v5526 = vld [vmem:[%s5489 + $0x120] sm:$0xff]
        %v5527 = vld [vmem:[%s5489 + $0x128] sm:$0xff]
        %v5528 = vld [vmem:[%s5489 + $0x130] sm:$0xff]
        %v5529 = vld [vmem:[%s5489 + $0x138] sm:$0xff]
        %v5530 = vld [vmem:[%s5489 + $0x140] sm:$0xff]
        %v5531 = vld [vmem:[%s5489 + $0x148] sm:$0xff]
        %v5532 = vld [vmem:[%s5489 + $0x150] sm:$0xff]
        %v5533 = vld [vmem:[%s5489 + $0x158] sm:$0xff]
        %v5534 = vld [vmem:[%s5489 + $0x160] sm:$0xff]
        %v5535 = vld [vmem:[%s5489 + $0x168] sm:$0xff]
        %v5536 = vld [vmem:[%s5489 + $0x170] sm:$0xff]
        %v5537 = vld [vmem:[%s5489 + $0x178] sm:$0xff]
        %v5538 = vld [vmem:[%s5489 + $0x180] sm:$0xff]
        %v5539 = vld [vmem:[%s5489 + $0x188] sm:$0xff]
        %v5540 = vld [vmem:[%s5489 + $0x190] sm:$0xff]
        %v5541 = vld [vmem:[%s5489 + $0x198] sm:$0xff]
        %v5542 = vld [vmem:[%s5489 + $0x1a0] sm:$0xff]
        %v5543 = vld [vmem:[%s5489 + $0x1a8] sm:$0xff]
        %v5544 = vld [vmem:[%s5489 + $0x1b0] sm:$0xff]
        %v5545 = vld [vmem:[%s5489 + $0x1b8] sm:$0xff]
        %v5546 = vld [vmem:[%s5489 + $0x1c0] sm:$0xff]
        %v5547 = vld [vmem:[%s5489 + $0x1c8] sm:$0xff]
        %v5548 = vld [vmem:[%s5489 + $0x1d0] sm:$0xff]
        %v5549 = vld [vmem:[%s5489 + $0x1d8] sm:$0xff]
        %v5550 = vld [vmem:[%s5489 + $0x1e0] sm:$0xff]
        %v5551 = vld [vmem:[%s5489 + $0x1e8] sm:$0xff]
        %v5552 = vld [vmem:[%s5489 + $0x1f0] sm:$0xff]
        %v5553 = vld [vmem:[%s5489 + $0x1f8] sm:$0xff]
        %v5554 = vld [vmem:[%s5489 + $0x200] sm:$0xff]
        %v5555 = vld [vmem:[%s5489 + $0x208] sm:$0xff]
        %v5556 = vld [vmem:[%s5489 + $0x210] sm:$0xff]
        %v5557 = vld [vmem:[%s5489 + $0x218] sm:$0xff]
        %v5558 = vld [vmem:[%s5489 + $0x220] sm:$0xff]
        %v5559 = vld [vmem:[%s5489 + $0x228] sm:$0xff]
        %v5560 = vld [vmem:[%s5489 + $0x230] sm:$0xff]
        %v5561 = vld [vmem:[%s5489 + $0x238] sm:$0xff]
        %v5562 = vld [vmem:[%s5489 + $0x240] sm:$0xff]
        %v5563 = vld [vmem:[%s5489 + $0x248] sm:$0xff]
        %v5564 = vld [vmem:[%s5489 + $0x250] sm:$0xff]
        %v5565 = vld [vmem:[%s5489 + $0x258] sm:$0xff]
        %v5566 = vld [vmem:[%s5489 + $0x260] sm:$0xff]
        %v5567 = vld [vmem:[%s5489 + $0x268] sm:$0xff]
        %v5568 = vld [vmem:[%s5489 + $0x270] sm:$0xff]
        %v5569 = vld [vmem:[%s5489 + $0x278] sm:$0xff]
        %v5570 = vld [vmem:[%s5489 + $0x280] sm:$0xff]
        %v5571 = vld [vmem:[%s5489 + $0x288] sm:$0xff]
        %v5572 = vld [vmem:[%s5489 + $0x290] sm:$0xff]
        %v5573 = vld [vmem:[%s5489 + $0x298] sm:$0xff]
        %v5574 = vld [vmem:[%s5489 + $0x2a0] sm:$0xff]
        %v5575 = vld [vmem:[%s5489 + $0x2a8] sm:$0xff]
        %v5576 = vld [vmem:[%s5489 + $0x2b0] sm:$0xff]
        %v5577 = vld [vmem:[%s5489 + $0x2b8] sm:$0xff]
        %v5578 = vld [vmem:[%s5489 + $0x2c0] sm:$0xff]
        %v5579 = vld [vmem:[%s5489 + $0x2c8] sm:$0xff]
        %v5580 = vld [vmem:[%s5489 + $0x2d0] sm:$0xff]
        %v5581 = vld [vmem:[%s5489 + $0x2d8] sm:$0xff]
        %v5582 = vld [vmem:[%s5489 + $0x2e0] sm:$0xff]
        %v5583 = vld [vmem:[%s5489 + $0x2e8] sm:$0xff]
        %v5584 = vld [vmem:[%s5489 + $0x2f0] sm:$0xff]
        %v5585 = vld [vmem:[%s5489 + $0x2f8] sm:$0xff]
        %v5586 = vld [vmem:[%s5489 + $0x300] sm:$0xff]
        %v5587 = vld [vmem:[%s5489 + $0x308] sm:$0xff]
        %v5588 = vld [vmem:[%s5489 + $0x310] sm:$0xff]
        %v5589 = vld [vmem:[%s5489 + $0x318] sm:$0xff]
        %v5590 = vld [vmem:[%s5489 + $0x320] sm:$0xff]
        %v5591 = vld [vmem:[%s5489 + $0x328] sm:$0xff]
        %v5592 = vld [vmem:[%s5489 + $0x330] sm:$0xff]
        %v5593 = vld [vmem:[%s5489 + $0x338] sm:$0xff]
        %v5594 = vld [vmem:[%s5489 + $0x340] sm:$0xff]
        %v5595 = vld [vmem:[%s5489 + $0x348] sm:$0xff]
        %v5596 = vld [vmem:[%s5489 + $0x350] sm:$0xff]
        %v5597 = vld [vmem:[%s5489 + $0x358] sm:$0xff]
        %v5598 = vld [vmem:[%s5489 + $0x360] sm:$0xff]
        %v5599 = vld [vmem:[%s5489 + $0x368] sm:$0xff]
        %v5600 = vld [vmem:[%s5489 + $0x370] sm:$0xff]
        %v5601 = vld [vmem:[%s5489 + $0x378] sm:$0xff]
        %v5602 = vld [vmem:[%s5489 + $0x380] sm:$0xff]
        %v5603 = vld [vmem:[%s5489 + $0x388] sm:$0xff]
        %v5604 = vld [vmem:[%s5489 + $0x390] sm:$0xff]
        %v5605 = vld [vmem:[%s5489 + $0x398] sm:$0xff]
        %v5606 = vld [vmem:[%s5489 + $0x3a0] sm:$0xff]
        %v5607 = vld [vmem:[%s5489 + $0x3a8] sm:$0xff]
        %v5608 = vld [vmem:[%s5489 + $0x3b0] sm:$0xff]
        %v5609 = vld [vmem:[%s5489 + $0x3b8] sm:$0xff]
        %v5610 = vld [vmem:[%s5489 + $0x3c0] sm:$0xff]
        %v5611 = vld [vmem:[%s5489 + $0x3c8] sm:$0xff]
        %v5612 = vld [vmem:[%s5489 + $0x3d0] sm:$0xff]
        %v5613 = vld [vmem:[%s5489 + $0x3d8] sm:$0xff]
        %v5614 = vld [vmem:[%s5489 + $0x3e0] sm:$0xff]
        %v5615 = vld [vmem:[%s5489 + $0x3e8] sm:$0xff]
        %v5616 = vld [vmem:[%s5489 + $0x3f0] sm:$0xff]
        %v5617 = vld [vmem:[%s5489 + $0x3f8] sm:$0xff]
        %v5618 = vld [vmem:[%s5489 + $0x400] sm:$0xff]
        %v5619 = vld [vmem:[%s5489 + $0x408] sm:$0xff]
        %v5620 = vld [vmem:[%s5489 + $0x410] sm:$0xff]
        %v5621 = vld [vmem:[%s5489 + $0x418] sm:$0xff]
        %v5622 = vld [vmem:[%s5489 + $0x420] sm:$0xff]
        %v5623 = vld [vmem:[%s5489 + $0x428] sm:$0xff]
        %v5624 = vld [vmem:[%s5489 + $0x430] sm:$0xff]
        %v5625 = vld [vmem:[%s5489 + $0x438] sm:$0xff]
        %v5626 = vld [vmem:[%s5489 + $0x440] sm:$0xff]
        %v5627 = vld [vmem:[%s5489 + $0x448] sm:$0xff]
        %v5628 = vld [vmem:[%s5489 + $0x450] sm:$0xff]
        %v5629 = vld [vmem:[%s5489 + $0x458] sm:$0xff]
        %v5630 = vld [vmem:[%s5489 + $0x460] sm:$0xff]
        %v5631 = vld [vmem:[%s5489 + $0x468] sm:$0xff]
        %v5632 = vld [vmem:[%s5489 + $0x470] sm:$0xff]
        %v5633 = vld [vmem:[%s5489 + $0x478] sm:$0xff]
        %v5634 = vld [vmem:[%s5489 + $0x480] sm:$0xff]
        %v5635 = vld [vmem:[%s5489 + $0x488] sm:$0xff]
        %v5636 = vld [vmem:[%s5489 + $0x490] sm:$0xff]
        %v5637 = vld [vmem:[%s5489 + $0x498] sm:$0xff]
        %v5638 = vld [vmem:[%s5489 + $0x4a0] sm:$0xff]
        %v5639 = vld [vmem:[%s5489 + $0x4a8] sm:$0xff]
        %v5640 = vld [vmem:[%s5489 + $0x4b0] sm:$0xff]
        %v5641 = vld [vmem:[%s5489 + $0x4b8] sm:$0xff]
        %v5642 = vld [vmem:[%s5489 + $0x4c0] sm:$0xff]
        %v5643 = vld [vmem:[%s5489 + $0x4c8] sm:$0xff]
        %v5644 = vld [vmem:[%s5489 + $0x4d0] sm:$0xff]
        %v5645 = vld [vmem:[%s5489 + $0x4d8] sm:$0xff]
        %v5646 = vld [vmem:[%s5489 + $0x4e0] sm:$0xff]
        %v5647 = vld [vmem:[%s5489 + $0x4e8] sm:$0xff]
        %v5648 = vld [vmem:[%s5489 + $0x4f0] sm:$0xff]
        %v5649 = vld [vmem:[%s5489 + $0x4f8] sm:$0xff]
        %v5650 = vld [vmem:[%s5489 + $0x500] sm:$0xff]
        %v5651 = vld [vmem:[%s5489 + $0x508] sm:$0xff]
        %v5652 = vld [vmem:[%s5489 + $0x510] sm:$0xff]
        %v5653 = vld [vmem:[%s5489 + $0x518] sm:$0xff]
        %v5654 = vld [vmem:[%s5489 + $0x520] sm:$0xff]
        %v5655 = vld [vmem:[%s5489 + $0x528] sm:$0xff]
        %v5656 = vld [vmem:[%s5489 + $0x530] sm:$0xff]
        %v5657 = vld [vmem:[%s5489 + $0x538] sm:$0xff]
        %v5658 = vld [vmem:[%s5489 + $0x540] sm:$0xff]
        %v5659 = vld [vmem:[%s5489 + $0x548] sm:$0xff]
        %v5660 = vld [vmem:[%s5489 + $0x550] sm:$0xff]
        %v5661 = vld [vmem:[%s5489 + $0x558] sm:$0xff]
        %v5662 = vld [vmem:[%s5489 + $0x560] sm:$0xff]
        %v5663 = vld [vmem:[%s5489 + $0x568] sm:$0xff]
        %v5664 = vld [vmem:[%s5489 + $0x570] sm:$0xff]
        %v5665 = vld [vmem:[%s5489 + $0x578] sm:$0xff]
        %v5666 = vld [vmem:[%s5489 + $0x580] sm:$0xff]
        %v5667 = vld [vmem:[%s5489 + $0x588] sm:$0xff]
        %v5668 = vld [vmem:[%s5489 + $0x590] sm:$0xff]
        %v5669 = vld [vmem:[%s5489 + $0x598] sm:$0xff]
        %v5670 = vld [vmem:[%s5489 + $0x5a0] sm:$0xff]
        %v5671 = vld [vmem:[%s5489 + $0x5a8] sm:$0xff]
        %v5672 = vld [vmem:[%s5489 + $0x5b0] sm:$0xff]
        %v5673 = vld [vmem:[%s5489 + $0x5b8] sm:$0xff]
        %v5674 = vld [vmem:[%s5489 + $0x5c0] sm:$0xff]
        %v5675 = vld [vmem:[%s5489 + $0x5c8] sm:$0xff]
        %v5676 = vld [vmem:[%s5489 + $0x5d0] sm:$0xff]
        %v5677 = vld [vmem:[%s5489 + $0x5d8] sm:$0xff]
        %v5678 = vld [vmem:[%s5489 + $0x5e0] sm:$0xff]
        %v5679 = vld [vmem:[%s5489 + $0x5e8] sm:$0xff]
        %v5680 = vld [vmem:[%s5489 + $0x5f0] sm:$0xff]
        %v5681 = vld [vmem:[%s5489 + $0x5f8] sm:$0xff]
        %v5688 = vrot.slane %v5483, 1
        %v5689 = vrot.slane %v5484, 1
        %v5690 = vrot.slane %v5485, 1
        %v5691 = vrot.slane %v5486, 1
        %v5692 = vrot.slane %v5487, 1
        %v5693 = vrot.slane %v5488, 1
        %v5892 = vunpack.c.l.b16 %v5490
        %v5893 = vunpack.c.h.b16 %v5490
        %v5894 = vunpack.c.l.b16 %v5491
        %v5895 = vunpack.c.h.b16 %v5491
        %v5896 = vunpack.c.l.b16 %v5492
        %v5897 = vunpack.c.h.b16 %v5492
        %v5898 = vunpack.c.l.b16 %v5493
        %v5899 = vunpack.c.h.b16 %v5493
        %v5900 = vunpack.c.l.b16 %v5494
        %v5901 = vunpack.c.h.b16 %v5494
        %v5902 = vunpack.c.l.b16 %v5495
        %v5903 = vunpack.c.h.b16 %v5495
        %v5904 = vunpack.c.l.b16 %v5496
        %v5905 = vunpack.c.h.b16 %v5496
        %v5906 = vunpack.c.l.b16 %v5497
        %v5907 = vunpack.c.h.b16 %v5497
        %v5908 = vunpack.c.l.b16 %v5498
        %v5909 = vunpack.c.h.b16 %v5498
        %v5910 = vunpack.c.l.b16 %v5499
        %v5911 = vunpack.c.h.b16 %v5499
        %v5912 = vunpack.c.l.b16 %v5500
        %v5913 = vunpack.c.h.b16 %v5500
        %v5914 = vunpack.c.l.b16 %v5501
        %v5915 = vunpack.c.h.b16 %v5501
        %v5916 = vunpack.c.l.b16 %v5502
        %v5917 = vunpack.c.h.b16 %v5502
        %v5918 = vunpack.c.l.b16 %v5503
        %v5919 = vunpack.c.h.b16 %v5503
        %v5920 = vunpack.c.l.b16 %v5504
        %v5921 = vunpack.c.h.b16 %v5504
        %v5922 = vunpack.c.l.b16 %v5505
        %v5923 = vunpack.c.h.b16 %v5505
        %v5924 = vunpack.c.l.b16 %v5506
        %v5925 = vunpack.c.h.b16 %v5506
        %v5926 = vunpack.c.l.b16 %v5507
        %v5927 = vunpack.c.h.b16 %v5507
        %v5928 = vunpack.c.l.b16 %v5508
        %v5929 = vunpack.c.h.b16 %v5508
        %v5930 = vunpack.c.l.b16 %v5509
        %v5931 = vunpack.c.h.b16 %v5509
        %v5932 = vunpack.c.l.b16 %v5510
        %v5933 = vunpack.c.h.b16 %v5510
        %v5934 = vunpack.c.l.b16 %v5511
        %v5935 = vunpack.c.h.b16 %v5511
        %v5936 = vunpack.c.l.b16 %v5512
        %v5937 = vunpack.c.h.b16 %v5512
        %v5938 = vunpack.c.l.b16 %v5513
        %v5939 = vunpack.c.h.b16 %v5513
        %v5940 = vunpack.c.l.b16 %v5514
        %v5941 = vunpack.c.h.b16 %v5514
        %v5942 = vunpack.c.l.b16 %v5515
        %v5943 = vunpack.c.h.b16 %v5515
        %v5944 = vunpack.c.l.b16 %v5516
        %v5945 = vunpack.c.h.b16 %v5516
        %v5946 = vunpack.c.l.b16 %v5517
        %v5947 = vunpack.c.h.b16 %v5517
        %v5948 = vunpack.c.l.b16 %v5518
        %v5949 = vunpack.c.h.b16 %v5518
        %v5950 = vunpack.c.l.b16 %v5519
        %v5951 = vunpack.c.h.b16 %v5519
        %v5952 = vunpack.c.l.b16 %v5520
        %v5953 = vunpack.c.h.b16 %v5520
        %v5954 = vunpack.c.l.b16 %v5521
        %v5955 = vunpack.c.h.b16 %v5521
        %v5956 = vunpack.c.l.b16 %v5522
        %v5957 = vunpack.c.h.b16 %v5522
        %v5958 = vunpack.c.l.b16 %v5523
        %v5959 = vunpack.c.h.b16 %v5523
        %v5960 = vunpack.c.l.b16 %v5524
        %v5961 = vunpack.c.h.b16 %v5524
        %v5962 = vunpack.c.l.b16 %v5525
        %v5963 = vunpack.c.h.b16 %v5525
        %v5964 = vunpack.c.l.b16 %v5526
        %v5965 = vunpack.c.h.b16 %v5526
        %v5966 = vunpack.c.l.b16 %v5527
        %v5967 = vunpack.c.h.b16 %v5527
        %v5968 = vunpack.c.l.b16 %v5528
        %v5969 = vunpack.c.h.b16 %v5528
        %v5970 = vunpack.c.l.b16 %v5529
        %v5971 = vunpack.c.h.b16 %v5529
        %v5972 = vunpack.c.l.b16 %v5530
        %v5973 = vunpack.c.h.b16 %v5530
        %v5974 = vunpack.c.l.b16 %v5531
        %v5975 = vunpack.c.h.b16 %v5531
        %v5976 = vunpack.c.l.b16 %v5532
        %v5977 = vunpack.c.h.b16 %v5532
        %v5978 = vunpack.c.l.b16 %v5533
        %v5979 = vunpack.c.h.b16 %v5533
        %v5980 = vunpack.c.l.b16 %v5534
        %v5981 = vunpack.c.h.b16 %v5534
        %v5982 = vunpack.c.l.b16 %v5535
        %v5983 = vunpack.c.h.b16 %v5535
        %v5984 = vunpack.c.l.b16 %v5536
        %v5985 = vunpack.c.h.b16 %v5536
        %v5986 = vunpack.c.l.b16 %v5537
        %v5987 = vunpack.c.h.b16 %v5537
        %v5988 = vunpack.c.l.b16 %v5538
        %v5989 = vunpack.c.h.b16 %v5538
        %v5990 = vunpack.c.l.b16 %v5539
        %v5991 = vunpack.c.h.b16 %v5539
        %v5992 = vunpack.c.l.b16 %v5540
        %v5993 = vunpack.c.h.b16 %v5540
        %v5994 = vunpack.c.l.b16 %v5541
        %v5995 = vunpack.c.h.b16 %v5541
        %v5996 = vunpack.c.l.b16 %v5542
        %v5997 = vunpack.c.h.b16 %v5542
        %v5998 = vunpack.c.l.b16 %v5543
        %v5999 = vunpack.c.h.b16 %v5543
        %v6000 = vunpack.c.l.b16 %v5544
        %v6001 = vunpack.c.h.b16 %v5544
        %v6002 = vunpack.c.l.b16 %v5545
        %v6003 = vunpack.c.h.b16 %v5545
        %v6004 = vunpack.c.l.b16 %v5546
        %v6005 = vunpack.c.h.b16 %v5546
        %v6006 = vunpack.c.l.b16 %v5547
        %v6007 = vunpack.c.h.b16 %v5547
        %v6008 = vunpack.c.l.b16 %v5548
        %v6009 = vunpack.c.h.b16 %v5548
        %v6010 = vunpack.c.l.b16 %v5549
        %v6011 = vunpack.c.h.b16 %v5549
        %v6012 = vunpack.c.l.b16 %v5550
        %v6013 = vunpack.c.h.b16 %v5550
        %v6014 = vunpack.c.l.b16 %v5551
        %v6015 = vunpack.c.h.b16 %v5551
        %v6016 = vunpack.c.l.b16 %v5552
        %v6017 = vunpack.c.h.b16 %v5552
        %v6018 = vunpack.c.l.b16 %v5553
        %v6019 = vunpack.c.h.b16 %v5553
        %v6020 = vunpack.c.l.b16 %v5554
        %v6021 = vunpack.c.h.b16 %v5554
        %v6022 = vunpack.c.l.b16 %v5555
        %v6023 = vunpack.c.h.b16 %v5555
        %v6024 = vunpack.c.l.b16 %v5556
        %v6025 = vunpack.c.h.b16 %v5556
        %v6026 = vunpack.c.l.b16 %v5557
        %v6027 = vunpack.c.h.b16 %v5557
        %v6028 = vunpack.c.l.b16 %v5558
        %v6029 = vunpack.c.h.b16 %v5558
        %v6030 = vunpack.c.l.b16 %v5559
        %v6031 = vunpack.c.h.b16 %v5559
        %v6032 = vunpack.c.l.b16 %v5560
        %v6033 = vunpack.c.h.b16 %v5560
        %v6034 = vunpack.c.l.b16 %v5561
        %v6035 = vunpack.c.h.b16 %v5561
        %v6036 = vunpack.c.l.b16 %v5562
        %v6037 = vunpack.c.h.b16 %v5562
        %v6038 = vunpack.c.l.b16 %v5563
        %v6039 = vunpack.c.h.b16 %v5563
        %v6040 = vunpack.c.l.b16 %v5564
        %v6041 = vunpack.c.h.b16 %v5564
        %v6042 = vunpack.c.l.b16 %v5565
        %v6043 = vunpack.c.h.b16 %v5565
        %v6044 = vunpack.c.l.b16 %v5566
        %v6045 = vunpack.c.h.b16 %v5566
        %v6046 = vunpack.c.l.b16 %v5567
        %v6047 = vunpack.c.h.b16 %v5567
        %v6048 = vunpack.c.l.b16 %v5568
        %v6049 = vunpack.c.h.b16 %v5568
        %v6050 = vunpack.c.l.b16 %v5569
        %v6051 = vunpack.c.h.b16 %v5569
        %v6052 = vunpack.c.l.b16 %v5570
        %v6053 = vunpack.c.h.b16 %v5570
        %v6054 = vunpack.c.l.b16 %v5571
        %v6055 = vunpack.c.h.b16 %v5571
        %v6056 = vunpack.c.l.b16 %v5572
        %v6057 = vunpack.c.h.b16 %v5572
        %v6058 = vunpack.c.l.b16 %v5573
        %v6059 = vunpack.c.h.b16 %v5573
        %v6060 = vunpack.c.l.b16 %v5574
        %v6061 = vunpack.c.h.b16 %v5574
        %v6062 = vunpack.c.l.b16 %v5575
        %v6063 = vunpack.c.h.b16 %v5575
        %v6064 = vunpack.c.l.b16 %v5576
        %v6065 = vunpack.c.h.b16 %v5576
        %v6066 = vunpack.c.l.b16 %v5577
        %v6067 = vunpack.c.h.b16 %v5577
        %v6068 = vunpack.c.l.b16 %v5578
        %v6069 = vunpack.c.h.b16 %v5578
        %v6070 = vunpack.c.l.b16 %v5579
        %v6071 = vunpack.c.h.b16 %v5579
        %v6072 = vunpack.c.l.b16 %v5580
        %v6073 = vunpack.c.h.b16 %v5580
        %v6074 = vunpack.c.l.b16 %v5581
        %v6075 = vunpack.c.h.b16 %v5581
        %v6076 = vunpack.c.l.b16 %v5582
        %v6077 = vunpack.c.h.b16 %v5582
        %v6078 = vunpack.c.l.b16 %v5583
        %v6079 = vunpack.c.h.b16 %v5583
        %v6080 = vunpack.c.l.b16 %v5584
        %v6081 = vunpack.c.h.b16 %v5584
        %v6082 = vunpack.c.l.b16 %v5585
        %v6083 = vunpack.c.h.b16 %v5585
        %v6084 = vunpack.c.l.b16 %v5586
        %v6085 = vunpack.c.h.b16 %v5586
        %v6086 = vunpack.c.l.b16 %v5587
        %v6087 = vunpack.c.h.b16 %v5587
        %v6088 = vunpack.c.l.b16 %v5588
        %v6089 = vunpack.c.h.b16 %v5588
        %v6090 = vunpack.c.l.b16 %v5589
        %v6091 = vunpack.c.h.b16 %v5589
        %v6092 = vunpack.c.l.b16 %v5590
        %v6093 = vunpack.c.h.b16 %v5590
        %v6094 = vunpack.c.l.b16 %v5591
        %v6095 = vunpack.c.h.b16 %v5591
        %v6096 = vunpack.c.l.b16 %v5592
        %v6097 = vunpack.c.h.b16 %v5592
        %v6098 = vunpack.c.l.b16 %v5593
        %v6099 = vunpack.c.h.b16 %v5593
        %v6100 = vunpack.c.l.b16 %v5594
        %v6101 = vunpack.c.h.b16 %v5594
        %v6102 = vunpack.c.l.b16 %v5595
        %v6103 = vunpack.c.h.b16 %v5595
        %v6104 = vunpack.c.l.b16 %v5596
        %v6105 = vunpack.c.h.b16 %v5596
        %v6106 = vunpack.c.l.b16 %v5597
        %v6107 = vunpack.c.h.b16 %v5597
        %v6108 = vunpack.c.l.b16 %v5598
        %v6109 = vunpack.c.h.b16 %v5598
        %v6110 = vunpack.c.l.b16 %v5599
        %v6111 = vunpack.c.h.b16 %v5599
        %v6112 = vunpack.c.l.b16 %v5600
        %v6113 = vunpack.c.h.b16 %v5600
        %v6114 = vunpack.c.l.b16 %v5601
        %v6115 = vunpack.c.h.b16 %v5601
        %v6116 = vunpack.c.l.b16 %v5602
        %v6117 = vunpack.c.h.b16 %v5602
        %v6118 = vunpack.c.l.b16 %v5603
        %v6119 = vunpack.c.h.b16 %v5603
        %v6120 = vunpack.c.l.b16 %v5604
        %v6121 = vunpack.c.h.b16 %v5604
        %v6122 = vunpack.c.l.b16 %v5605
        %v6123 = vunpack.c.h.b16 %v5605
        %v6124 = vunpack.c.l.b16 %v5606
        %v6125 = vunpack.c.h.b16 %v5606
        %v6126 = vunpack.c.l.b16 %v5607
        %v6127 = vunpack.c.h.b16 %v5607
        %v6128 = vunpack.c.l.b16 %v5608
        %v6129 = vunpack.c.h.b16 %v5608
        %v6130 = vunpack.c.l.b16 %v5609
        %v6131 = vunpack.c.h.b16 %v5609
        %v6132 = vunpack.c.l.b16 %v5610
        %v6133 = vunpack.c.h.b16 %v5610
        %v6134 = vunpack.c.l.b16 %v5611
        %v6135 = vunpack.c.h.b16 %v5611
        %v6136 = vunpack.c.l.b16 %v5612
        %v6137 = vunpack.c.h.b16 %v5612
        %v6138 = vunpack.c.l.b16 %v5613
        %v6139 = vunpack.c.h.b16 %v5613
        %v6140 = vunpack.c.l.b16 %v5614
        %v6141 = vunpack.c.h.b16 %v5614
        %v6142 = vunpack.c.l.b16 %v5615
        %v6143 = vunpack.c.h.b16 %v5615
        %v6144 = vunpack.c.l.b16 %v5616
        %v6145 = vunpack.c.h.b16 %v5616
        %v6146 = vunpack.c.l.b16 %v5617
        %v6147 = vunpack.c.h.b16 %v5617
        %v6148 = vunpack.c.l.b16 %v5618
        %v6149 = vunpack.c.h.b16 %v5618
        %v6150 = vunpack.c.l.b16 %v5619
        %v6151 = vunpack.c.h.b16 %v5619
        %v6152 = vunpack.c.l.b16 %v5620
        %v6153 = vunpack.c.h.b16 %v5620
        %v6154 = vunpack.c.l.b16 %v5621
        %v6155 = vunpack.c.h.b16 %v5621
        %v6156 = vunpack.c.l.b16 %v5622
        %v6157 = vunpack.c.h.b16 %v5622
        %v6158 = vunpack.c.l.b16 %v5623
        %v6159 = vunpack.c.h.b16 %v5623
        %v6160 = vunpack.c.l.b16 %v5624
        %v6161 = vunpack.c.h.b16 %v5624
        %v6162 = vunpack.c.l.b16 %v5625
        %v6163 = vunpack.c.h.b16 %v5625
        %v6164 = vunpack.c.l.b16 %v5626
        %v6165 = vunpack.c.h.b16 %v5626
        %v6166 = vunpack.c.l.b16 %v5627
        %v6167 = vunpack.c.h.b16 %v5627
        %v6168 = vunpack.c.l.b16 %v5628
        %v6169 = vunpack.c.h.b16 %v5628
        %v6170 = vunpack.c.l.b16 %v5629
        %v6171 = vunpack.c.h.b16 %v5629
        %v6172 = vunpack.c.l.b16 %v5630
        %v6173 = vunpack.c.h.b16 %v5630
        %v6174 = vunpack.c.l.b16 %v5631
        %v6175 = vunpack.c.h.b16 %v5631
        %v6176 = vunpack.c.l.b16 %v5632
        %v6177 = vunpack.c.h.b16 %v5632
        %v6178 = vunpack.c.l.b16 %v5633
        %v6179 = vunpack.c.h.b16 %v5633
        %v6180 = vunpack.c.l.b16 %v5634
        %v6181 = vunpack.c.h.b16 %v5634
        %v6182 = vunpack.c.l.b16 %v5635
        %v6183 = vunpack.c.h.b16 %v5635
        %v6184 = vunpack.c.l.b16 %v5636
        %v6185 = vunpack.c.h.b16 %v5636
        %v6186 = vunpack.c.l.b16 %v5637
        %v6187 = vunpack.c.h.b16 %v5637
        %v6188 = vunpack.c.l.b16 %v5638
        %v6189 = vunpack.c.h.b16 %v5638
        %v6190 = vunpack.c.l.b16 %v5639
        %v6191 = vunpack.c.h.b16 %v5639
        %v6192 = vunpack.c.l.b16 %v5640
        %v6193 = vunpack.c.h.b16 %v5640
        %v6194 = vunpack.c.l.b16 %v5641
        %v6195 = vunpack.c.h.b16 %v5641
        %v6196 = vunpack.c.l.b16 %v5642
        %v6197 = vunpack.c.h.b16 %v5642
        %v6198 = vunpack.c.l.b16 %v5643
        %v6199 = vunpack.c.h.b16 %v5643
        %v6200 = vunpack.c.l.b16 %v5644
        %v6201 = vunpack.c.h.b16 %v5644
        %v6202 = vunpack.c.l.b16 %v5645
        %v6203 = vunpack.c.h.b16 %v5645
        %v6204 = vunpack.c.l.b16 %v5646
        %v6205 = vunpack.c.h.b16 %v5646
        %v6206 = vunpack.c.l.b16 %v5647
        %v6207 = vunpack.c.h.b16 %v5647
        %v6208 = vunpack.c.l.b16 %v5648
        %v6209 = vunpack.c.h.b16 %v5648
        %v6210 = vunpack.c.l.b16 %v5649
        %v6211 = vunpack.c.h.b16 %v5649
        %v6212 = vunpack.c.l.b16 %v5650
        %v6213 = vunpack.c.h.b16 %v5650
        %v6214 = vunpack.c.l.b16 %v5651
        %v6215 = vunpack.c.h.b16 %v5651
        %v6216 = vunpack.c.l.b16 %v5652
        %v6217 = vunpack.c.h.b16 %v5652
        %v6218 = vunpack.c.l.b16 %v5653
        %v6219 = vunpack.c.h.b16 %v5653
        %v6220 = vunpack.c.l.b16 %v5654
        %v6221 = vunpack.c.h.b16 %v5654
        %v6222 = vunpack.c.l.b16 %v5655
        %v6223 = vunpack.c.h.b16 %v5655
        %v6224 = vunpack.c.l.b16 %v5656
        %v6225 = vunpack.c.h.b16 %v5656
        %v6226 = vunpack.c.l.b16 %v5657
        %v6227 = vunpack.c.h.b16 %v5657
        %v6228 = vunpack.c.l.b16 %v5658
        %v6229 = vunpack.c.h.b16 %v5658
        %v6230 = vunpack.c.l.b16 %v5659
        %v6231 = vunpack.c.h.b16 %v5659
        %v6232 = vunpack.c.l.b16 %v5660
        %v6233 = vunpack.c.h.b16 %v5660
        %v6234 = vunpack.c.l.b16 %v5661
        %v6235 = vunpack.c.h.b16 %v5661
        %v6236 = vunpack.c.l.b16 %v5662
        %v6237 = vunpack.c.h.b16 %v5662
        %v6238 = vunpack.c.l.b16 %v5663
        %v6239 = vunpack.c.h.b16 %v5663
        %v6240 = vunpack.c.l.b16 %v5664
        %v6241 = vunpack.c.h.b16 %v5664
        %v6242 = vunpack.c.l.b16 %v5665
        %v6243 = vunpack.c.h.b16 %v5665
        %v6244 = vunpack.c.l.b16 %v5666
        %v6245 = vunpack.c.h.b16 %v5666
        %v6246 = vunpack.c.l.b16 %v5667
        %v6247 = vunpack.c.h.b16 %v5667
        %v6248 = vunpack.c.l.b16 %v5668
        %v6249 = vunpack.c.h.b16 %v5668
        %v6250 = vunpack.c.l.b16 %v5669
        %v6251 = vunpack.c.h.b16 %v5669
        %v6252 = vunpack.c.l.b16 %v5670
        %v6253 = vunpack.c.h.b16 %v5670
        %v6254 = vunpack.c.l.b16 %v5671
        %v6255 = vunpack.c.h.b16 %v5671
        %v6256 = vunpack.c.l.b16 %v5672
        %v6257 = vunpack.c.h.b16 %v5672
        %v6258 = vunpack.c.l.b16 %v5673
        %v6259 = vunpack.c.h.b16 %v5673
        %v6260 = vunpack.c.l.b16 %v5674
        %v6261 = vunpack.c.h.b16 %v5674
        %v6262 = vunpack.c.l.b16 %v5675
        %v6263 = vunpack.c.h.b16 %v5675
        %v6264 = vunpack.c.l.b16 %v5676
        %v6265 = vunpack.c.h.b16 %v5676
        %v6266 = vunpack.c.l.b16 %v5677
        %v6267 = vunpack.c.h.b16 %v5677
        %v6268 = vunpack.c.l.b16 %v5678
        %v6269 = vunpack.c.h.b16 %v5678
        %v6270 = vunpack.c.l.b16 %v5679
        %v6271 = vunpack.c.h.b16 %v5679
        %v6272 = vunpack.c.l.b16 %v5680
        %v6273 = vunpack.c.h.b16 %v5680
        %v6274 = vunpack.c.l.b16 %v5681
        %v6275 = vunpack.c.h.b16 %v5681
        %v6276 = vpack.c.b16 %v5896, %v5892
        %v6277 = vpack.c.b16 %v5897, %v5893
        %v6278 = vpack.c.b16 %v5898, %v5894
        %v6279 = vpack.c.b16 %v5899, %v5895
        %v6280 = vpack.c.b16 %v5904, %v5900
        %v6281 = vpack.c.b16 %v5905, %v5901
        %v6282 = vpack.c.b16 %v5906, %v5902
        %v6283 = vpack.c.b16 %v5907, %v5903
        %v6284 = vpack.c.b16 %v5912, %v5908
        %v6285 = vpack.c.b16 %v5913, %v5909
        %v6286 = vpack.c.b16 %v5914, %v5910
        %v6287 = vpack.c.b16 %v5915, %v5911
        %v6288 = vpack.c.b16 %v5920, %v5916
        %v6289 = vpack.c.b16 %v5921, %v5917
        %v6290 = vpack.c.b16 %v5922, %v5918
        %v6291 = vpack.c.b16 %v5923, %v5919
        %v6292 = vpack.c.b16 %v5928, %v5924
        %v6293 = vpack.c.b16 %v5929, %v5925
        %v6294 = vpack.c.b16 %v5930, %v5926
        %v6295 = vpack.c.b16 %v5931, %v5927
        %v6296 = vpack.c.b16 %v5936, %v5932
        %v6297 = vpack.c.b16 %v5937, %v5933
        %v6298 = vpack.c.b16 %v5938, %v5934
        %v6299 = vpack.c.b16 %v5939, %v5935
        %v6300 = vpack.c.b16 %v5944, %v5940
        %v6301 = vpack.c.b16 %v5945, %v5941
        %v6302 = vpack.c.b16 %v5946, %v5942
        %v6303 = vpack.c.b16 %v5947, %v5943
        %v6304 = vpack.c.b16 %v5952, %v5948
        %v6305 = vpack.c.b16 %v5953, %v5949
        %v6306 = vpack.c.b16 %v5954, %v5950
        %v6307 = vpack.c.b16 %v5955, %v5951
        %v6308 = vpack.c.b16 %v5960, %v5956
        %v6309 = vpack.c.b16 %v5961, %v5957
        %v6310 = vpack.c.b16 %v5962, %v5958
        %v6311 = vpack.c.b16 %v5963, %v5959
        %v6312 = vpack.c.b16 %v5968, %v5964
        %v6313 = vpack.c.b16 %v5969, %v5965
        %v6314 = vpack.c.b16 %v5970, %v5966
        %v6315 = vpack.c.b16 %v5971, %v5967
        %v6316 = vpack.c.b16 %v5976, %v5972
        %v6317 = vpack.c.b16 %v5977, %v5973
        %v6318 = vpack.c.b16 %v5978, %v5974
        %v6319 = vpack.c.b16 %v5979, %v5975
        %v6320 = vpack.c.b16 %v5984, %v5980
        %v6321 = vpack.c.b16 %v5985, %v5981
        %v6322 = vpack.c.b16 %v5986, %v5982
        %v6323 = vpack.c.b16 %v5987, %v5983
        %v6324 = vpack.c.b16 %v5992, %v5988
        %v6325 = vpack.c.b16 %v5993, %v5989
        %v6326 = vpack.c.b16 %v5994, %v5990
        %v6327 = vpack.c.b16 %v5995, %v5991
        %v6328 = vpack.c.b16 %v6000, %v5996
        %v6329 = vpack.c.b16 %v6001, %v5997
        %v6330 = vpack.c.b16 %v6002, %v5998
        %v6331 = vpack.c.b16 %v6003, %v5999
        %v6332 = vpack.c.b16 %v6008, %v6004
        %v6333 = vpack.c.b16 %v6009, %v6005
        %v6334 = vpack.c.b16 %v6010, %v6006
        %v6335 = vpack.c.b16 %v6011, %v6007
        %v6336 = vpack.c.b16 %v6016, %v6012
        %v6337 = vpack.c.b16 %v6017, %v6013
        %v6338 = vpack.c.b16 %v6018, %v6014
        %v6339 = vpack.c.b16 %v6019, %v6015
        %v6340 = vpack.c.b16 %v6024, %v6020
        %v6341 = vpack.c.b16 %v6025, %v6021
        %v6342 = vpack.c.b16 %v6026, %v6022
        %v6343 = vpack.c.b16 %v6027, %v6023
        %v6344 = vpack.c.b16 %v6032, %v6028
        %v6345 = vpack.c.b16 %v6033, %v6029
        %v6346 = vpack.c.b16 %v6034, %v6030
        %v6347 = vpack.c.b16 %v6035, %v6031
        %v6348 = vpack.c.b16 %v6040, %v6036
        %v6349 = vpack.c.b16 %v6041, %v6037
        %v6350 = vpack.c.b16 %v6042, %v6038
        %v6351 = vpack.c.b16 %v6043, %v6039
        %v6352 = vpack.c.b16 %v6048, %v6044
        %v6353 = vpack.c.b16 %v6049, %v6045
        %v6354 = vpack.c.b16 %v6050, %v6046
        %v6355 = vpack.c.b16 %v6051, %v6047
        %v6356 = vpack.c.b16 %v6056, %v6052
        %v6357 = vpack.c.b16 %v6057, %v6053
        %v6358 = vpack.c.b16 %v6058, %v6054
        %v6359 = vpack.c.b16 %v6059, %v6055
        %v6360 = vpack.c.b16 %v6064, %v6060
        %v6361 = vpack.c.b16 %v6065, %v6061
        %v6362 = vpack.c.b16 %v6066, %v6062
        %v6363 = vpack.c.b16 %v6067, %v6063
        %v6364 = vpack.c.b16 %v6072, %v6068
        %v6365 = vpack.c.b16 %v6073, %v6069
        %v6366 = vpack.c.b16 %v6074, %v6070
        %v6367 = vpack.c.b16 %v6075, %v6071
        %v6368 = vpack.c.b16 %v6080, %v6076
        %v6369 = vpack.c.b16 %v6081, %v6077
        %v6370 = vpack.c.b16 %v6082, %v6078
        %v6371 = vpack.c.b16 %v6083, %v6079
        %v6372 = vpack.c.b16 %v6088, %v6084
        %v6373 = vpack.c.b16 %v6089, %v6085
        %v6374 = vpack.c.b16 %v6090, %v6086
        %v6375 = vpack.c.b16 %v6091, %v6087
        %v6376 = vpack.c.b16 %v6096, %v6092
        %v6377 = vpack.c.b16 %v6097, %v6093
        %v6378 = vpack.c.b16 %v6098, %v6094
        %v6379 = vpack.c.b16 %v6099, %v6095
        %v6380 = vpack.c.b16 %v6104, %v6100
        %v6381 = vpack.c.b16 %v6105, %v6101
        %v6382 = vpack.c.b16 %v6106, %v6102
        %v6383 = vpack.c.b16 %v6107, %v6103
        %v6384 = vpack.c.b16 %v6112, %v6108
        %v6385 = vpack.c.b16 %v6113, %v6109
        %v6386 = vpack.c.b16 %v6114, %v6110
        %v6387 = vpack.c.b16 %v6115, %v6111
        %v6388 = vpack.c.b16 %v6120, %v6116
        %v6389 = vpack.c.b16 %v6121, %v6117
        %v6390 = vpack.c.b16 %v6122, %v6118
        %v6391 = vpack.c.b16 %v6123, %v6119
        %v6392 = vpack.c.b16 %v6128, %v6124
        %v6393 = vpack.c.b16 %v6129, %v6125
        %v6394 = vpack.c.b16 %v6130, %v6126
        %v6395 = vpack.c.b16 %v6131, %v6127
        %v6396 = vpack.c.b16 %v6136, %v6132
        %v6397 = vpack.c.b16 %v6137, %v6133
        %v6398 = vpack.c.b16 %v6138, %v6134
        %v6399 = vpack.c.b16 %v6139, %v6135
        %v6400 = vpack.c.b16 %v6144, %v6140
        %v6401 = vpack.c.b16 %v6145, %v6141
        %v6402 = vpack.c.b16 %v6146, %v6142
        %v6403 = vpack.c.b16 %v6147, %v6143
        %v6404 = vpack.c.b16 %v6152, %v6148
        %v6405 = vpack.c.b16 %v6153, %v6149
        %v6406 = vpack.c.b16 %v6154, %v6150
        %v6407 = vpack.c.b16 %v6155, %v6151
        %v6408 = vpack.c.b16 %v6160, %v6156
        %v6409 = vpack.c.b16 %v6161, %v6157
        %v6410 = vpack.c.b16 %v6162, %v6158
        %v6411 = vpack.c.b16 %v6163, %v6159
        %v6412 = vpack.c.b16 %v6168, %v6164
        %v6413 = vpack.c.b16 %v6169, %v6165
        %v6414 = vpack.c.b16 %v6170, %v6166
        %v6415 = vpack.c.b16 %v6171, %v6167
        %v6416 = vpack.c.b16 %v6176, %v6172
        %v6417 = vpack.c.b16 %v6177, %v6173
        %v6418 = vpack.c.b16 %v6178, %v6174
        %v6419 = vpack.c.b16 %v6179, %v6175
        %v6420 = vpack.c.b16 %v6184, %v6180
        %v6421 = vpack.c.b16 %v6185, %v6181
        %v6422 = vpack.c.b16 %v6186, %v6182
        %v6423 = vpack.c.b16 %v6187, %v6183
        %v6424 = vpack.c.b16 %v6192, %v6188
        %v6425 = vpack.c.b16 %v6193, %v6189
        %v6426 = vpack.c.b16 %v6194, %v6190
        %v6427 = vpack.c.b16 %v6195, %v6191
        %v6428 = vpack.c.b16 %v6200, %v6196
        %v6429 = vpack.c.b16 %v6201, %v6197
        %v6430 = vpack.c.b16 %v6202, %v6198
        %v6431 = vpack.c.b16 %v6203, %v6199
        %v6432 = vpack.c.b16 %v6208, %v6204
        %v6433 = vpack.c.b16 %v6209, %v6205
        %v6434 = vpack.c.b16 %v6210, %v6206
        %v6435 = vpack.c.b16 %v6211, %v6207
        %v6436 = vpack.c.b16 %v6216, %v6212
        %v6437 = vpack.c.b16 %v6217, %v6213
        %v6438 = vpack.c.b16 %v6218, %v6214
        %v6439 = vpack.c.b16 %v6219, %v6215
        %v6440 = vpack.c.b16 %v6224, %v6220
        %v6441 = vpack.c.b16 %v6225, %v6221
        %v6442 = vpack.c.b16 %v6226, %v6222
        %v6443 = vpack.c.b16 %v6227, %v6223
        %v6444 = vpack.c.b16 %v6232, %v6228
        %v6445 = vpack.c.b16 %v6233, %v6229
        %v6446 = vpack.c.b16 %v6234, %v6230
        %v6447 = vpack.c.b16 %v6235, %v6231
        %v6448 = vpack.c.b16 %v6240, %v6236
        %v6449 = vpack.c.b16 %v6241, %v6237
        %v6450 = vpack.c.b16 %v6242, %v6238
        %v6451 = vpack.c.b16 %v6243, %v6239
        %v6452 = vpack.c.b16 %v6248, %v6244
        %v6453 = vpack.c.b16 %v6249, %v6245
        %v6454 = vpack.c.b16 %v6250, %v6246
        %v6455 = vpack.c.b16 %v6251, %v6247
        %v6456 = vpack.c.b16 %v6256, %v6252
        %v6457 = vpack.c.b16 %v6257, %v6253
        %v6458 = vpack.c.b16 %v6258, %v6254
        %v6459 = vpack.c.b16 %v6259, %v6255
        %v6460 = vpack.c.b16 %v6264, %v6260
        %v6461 = vpack.c.b16 %v6265, %v6261
        %v6462 = vpack.c.b16 %v6266, %v6262
        %v6463 = vpack.c.b16 %v6267, %v6263
        %v6464 = vpack.c.b16 %v6272, %v6268
        %v6465 = vpack.c.b16 %v6273, %v6269
        %v6466 = vpack.c.b16 %v6274, %v6270
        %v6467 = vpack.c.b16 %v6275, %v6271
        %6660 = vmatpush.bf16.msra.mxu0 %v6304
        %6661 = vmatpush.bf16.msra.mxu0 %v6300
        %6662 = vmatpush.bf16.msra.mxu0 %v6296
        %6663 = vmatpush.bf16.msra.mxu0 %v6292
        %6664 = vmatpush.bf16.msra.mxu0 %v6288
        %6665 = vmatpush.bf16.msra.mxu0 %v6284
        %6666 = vmatpush.bf16.msra.mxu0 %v6280
        %6667 = vmatpush.bf16.msra.mxu0 %v6276
        %6668 = vmatmul.bf16.gmra.mxu0 %v5688
        %v6669 = vpop.f32.mrf.mxu0
        %v6670 = vadd.f32 0.0, %v6669
        %v6671 = vpop.f32.mrf.mxu0
        %6672 = vdwg.mxu0
        %6673 = vmatpush.bf16.msra.mxu0 %v6336
        %6674 = vmatpush.bf16.msra.mxu0 %v6332
        %6675 = vmatpush.bf16.msra.mxu0 %v6328
        %6676 = vmatpush.bf16.msra.mxu0 %v6324
        %6677 = vmatpush.bf16.msra.mxu0 %v6320
        %6678 = vmatpush.bf16.msra.mxu0 %v6316
        %6679 = vmatpush.bf16.msra.mxu0 %v6312
        %6680 = vmatpush.bf16.msra.mxu0 %v6308
        %6681 = vmatmul.bf16.gmra.mxu0 %v5689
        %v6682 = vpop.f32.mrf.mxu0
        %v6683 = vadd.f32 %v6670, %v6682
        %v6684 = vpop.f32.mrf.mxu0
        %6685 = vdwg.mxu0
        %6686 = vmatpush.bf16.msra.mxu0 %v6368
        %6687 = vmatpush.bf16.msra.mxu0 %v6364
        %6688 = vmatpush.bf16.msra.mxu0 %v6360
        %6689 = vmatpush.bf16.msra.mxu0 %v6356
        %6690 = vmatpush.bf16.msra.mxu0 %v6352
        %6691 = vmatpush.bf16.msra.mxu0 %v6348
        %6692 = vmatpush.bf16.msra.mxu0 %v6344
        %6693 = vmatpush.bf16.msra.mxu0 %v6340
        %6694 = vmatmul.bf16.gmra.mxu0 %v5690
        %v6695 = vpop.f32.mrf.mxu0
        %v6696 = vadd.f32 %v6683, %v6695
        %v6697 = vpop.f32.mrf.mxu0
        %6698 = vdwg.mxu0
        %6699 = vmatpush.bf16.msra.mxu0 %v6400
        %6700 = vmatpush.bf16.msra.mxu0 %v6396
        %6701 = vmatpush.bf16.msra.mxu0 %v6392
        %6702 = vmatpush.bf16.msra.mxu0 %v6388
        %6703 = vmatpush.bf16.msra.mxu0 %v6384
        %6704 = vmatpush.bf16.msra.mxu0 %v6380
        %6705 = vmatpush.bf16.msra.mxu0 %v6376
        %6706 = vmatpush.bf16.msra.mxu0 %v6372
        %6707 = vmatmul.bf16.gmra.mxu0 %v5691
        %v6708 = vpop.f32.mrf.mxu0
        %v6709 = vadd.f32 %v6696, %v6708
        %v6710 = vpop.f32.mrf.mxu0
        %6711 = vdwg.mxu0
        %6712 = vmatpush.bf16.msra.mxu0 %v6432
        %6713 = vmatpush.bf16.msra.mxu0 %v6428
        %6714 = vmatpush.bf16.msra.mxu0 %v6424
        %6715 = vmatpush.bf16.msra.mxu0 %v6420
        %6716 = vmatpush.bf16.msra.mxu0 %v6416
        %6717 = vmatpush.bf16.msra.mxu0 %v6412
        %6718 = vmatpush.bf16.msra.mxu0 %v6408
        %6719 = vmatpush.bf16.msra.mxu0 %v6404
        %6720 = vmatmul.bf16.gmra.mxu0 %v5692
        %v6721 = vpop.f32.mrf.mxu0
        %v6722 = vadd.f32 %v6709, %v6721
        %v6723 = vpop.f32.mrf.mxu0
        %6724 = vdwg.mxu0
        %6725 = vmatpush.bf16.msra.mxu0 %v6464
        %6726 = vmatpush.bf16.msra.mxu0 %v6460
        %6727 = vmatpush.bf16.msra.mxu0 %v6456
        %6728 = vmatpush.bf16.msra.mxu0 %v6452
        %6729 = vmatpush.bf16.msra.mxu0 %v6448
        %6730 = vmatpush.bf16.msra.mxu0 %v6444
        %6731 = vmatpush.bf16.msra.mxu0 %v6440
        %6732 = vmatpush.bf16.msra.mxu0 %v6436
        %6733 = vmatmul.bf16.gmra.mxu0 %v5693
        %v6734 = vpop.f32.mrf.mxu0
        %v6735 = vadd.f32 %v6722, %v6734
        %v6736 = vpop.f32.mrf.mxu0
        %6737 = vdwg.mxu0
        %6738 = vmatpush.bf16.msra.mxu0 %v6305
        %6739 = vmatpush.bf16.msra.mxu0 %v6301
        %6740 = vmatpush.bf16.msra.mxu0 %v6297
        %6741 = vmatpush.bf16.msra.mxu0 %v6293
        %6742 = vmatpush.bf16.msra.mxu0 %v6289
        %6743 = vmatpush.bf16.msra.mxu0 %v6285
        %6744 = vmatpush.bf16.msra.mxu0 %v6281
        %6745 = vmatpush.bf16.msra.mxu0 %v6277
        %6746 = vmatmul.bf16.gmra.mxu0 %v5688
        %v6747 = vpop.f32.mrf.mxu0
        %v6748 = vadd.f32 0.0, %v6747
        %v6749 = vpop.f32.mrf.mxu0
        %6750 = vdwg.mxu0
        %6751 = vmatpush.bf16.msra.mxu0 %v6337
        %6752 = vmatpush.bf16.msra.mxu0 %v6333
        %6753 = vmatpush.bf16.msra.mxu0 %v6329
        %6754 = vmatpush.bf16.msra.mxu0 %v6325
        %6755 = vmatpush.bf16.msra.mxu0 %v6321
        %6756 = vmatpush.bf16.msra.mxu0 %v6317
        %6757 = vmatpush.bf16.msra.mxu0 %v6313
        %6758 = vmatpush.bf16.msra.mxu0 %v6309
        %6759 = vmatmul.bf16.gmra.mxu0 %v5689
        %v6760 = vpop.f32.mrf.mxu0
        %v6761 = vadd.f32 %v6748, %v6760
        %v6762 = vpop.f32.mrf.mxu0
        %6763 = vdwg.mxu0
        %6764 = vmatpush.bf16.msra.mxu0 %v6369
        %6765 = vmatpush.bf16.msra.mxu0 %v6365
        %6766 = vmatpush.bf16.msra.mxu0 %v6361
        %6767 = vmatpush.bf16.msra.mxu0 %v6357
        %6768 = vmatpush.bf16.msra.mxu0 %v6353
        %6769 = vmatpush.bf16.msra.mxu0 %v6349
        %6770 = vmatpush.bf16.msra.mxu0 %v6345
        %6771 = vmatpush.bf16.msra.mxu0 %v6341
        %6772 = vmatmul.bf16.gmra.mxu0 %v5690
        %v6773 = vpop.f32.mrf.mxu0
        %v6774 = vadd.f32 %v6761, %v6773
        %v6775 = vpop.f32.mrf.mxu0
        %6776 = vdwg.mxu0
        %6777 = vmatpush.bf16.msra.mxu0 %v6401
        %6778 = vmatpush.bf16.msra.mxu0 %v6397
        %6779 = vmatpush.bf16.msra.mxu0 %v6393
        %6780 = vmatpush.bf16.msra.mxu0 %v6389
        %6781 = vmatpush.bf16.msra.mxu0 %v6385
        %6782 = vmatpush.bf16.msra.mxu0 %v6381
        %6783 = vmatpush.bf16.msra.mxu0 %v6377
        %6784 = vmatpush.bf16.msra.mxu0 %v6373
        %6785 = vmatmul.bf16.gmra.mxu0 %v5691
        %v6786 = vpop.f32.mrf.mxu0
        %v6787 = vadd.f32 %v6774, %v6786
        %v6788 = vpop.f32.mrf.mxu0
        %6789 = vdwg.mxu0
        %6790 = vmatpush.bf16.msra.mxu0 %v6433
        %6791 = vmatpush.bf16.msra.mxu0 %v6429
        %6792 = vmatpush.bf16.msra.mxu0 %v6425
        %6793 = vmatpush.bf16.msra.mxu0 %v6421
        %6794 = vmatpush.bf16.msra.mxu0 %v6417
        %6795 = vmatpush.bf16.msra.mxu0 %v6413
        %6796 = vmatpush.bf16.msra.mxu0 %v6409
        %6797 = vmatpush.bf16.msra.mxu0 %v6405
        %6798 = vmatmul.bf16.gmra.mxu0 %v5692
        %v6799 = vpop.f32.mrf.mxu0
        %v6800 = vadd.f32 %v6787, %v6799
        %v6801 = vpop.f32.mrf.mxu0
        %6802 = vdwg.mxu0
        %6803 = vmatpush.bf16.msra.mxu0 %v6465
        %6804 = vmatpush.bf16.msra.mxu0 %v6461
        %6805 = vmatpush.bf16.msra.mxu0 %v6457
        %6806 = vmatpush.bf16.msra.mxu0 %v6453
        %6807 = vmatpush.bf16.msra.mxu0 %v6449
        %6808 = vmatpush.bf16.msra.mxu0 %v6445
        %6809 = vmatpush.bf16.msra.mxu0 %v6441
        %6810 = vmatpush.bf16.msra.mxu0 %v6437
        %6811 = vmatmul.bf16.gmra.mxu0 %v5693
        %v6812 = vpop.f32.mrf.mxu0
        %v6813 = vadd.f32 %v6800, %v6812
        %v6814 = vpop.f32.mrf.mxu0
        %6815 = vdwg.mxu0
        %6816 = vmatpush.bf16.msra.mxu0 %v6306
        %6817 = vmatpush.bf16.msra.mxu0 %v6302
        %6818 = vmatpush.bf16.msra.mxu0 %v6298
        %6819 = vmatpush.bf16.msra.mxu0 %v6294
        %6820 = vmatpush.bf16.msra.mxu0 %v6290
        %6821 = vmatpush.bf16.msra.mxu0 %v6286
        %6822 = vmatpush.bf16.msra.mxu0 %v6282
        %6823 = vmatpush.bf16.msra.mxu0 %v6278
        %6824 = vmatmul.bf16.gmra.mxu0 %v5688
        %v6825 = vpop.f32.mrf.mxu0
        %v6826 = vadd.f32 0.0, %v6825
        %v6827 = vpop.f32.mrf.mxu0
        %6828 = vdwg.mxu0
        %6829 = vmatpush.bf16.msra.mxu0 %v6338
        %6830 = vmatpush.bf16.msra.mxu0 %v6334
        %6831 = vmatpush.bf16.msra.mxu0 %v6330
        %6832 = vmatpush.bf16.msra.mxu0 %v6326
        %6833 = vmatpush.bf16.msra.mxu0 %v6322
        %6834 = vmatpush.bf16.msra.mxu0 %v6318
        %6835 = vmatpush.bf16.msra.mxu0 %v6314
        %6836 = vmatpush.bf16.msra.mxu0 %v6310
        %6837 = vmatmul.bf16.gmra.mxu0 %v5689
        %v6838 = vpop.f32.mrf.mxu0
        %v6839 = vadd.f32 %v6826, %v6838
        %v6840 = vpop.f32.mrf.mxu0
        %6841 = vdwg.mxu0
        %6842 = vmatpush.bf16.msra.mxu0 %v6370
        %6843 = vmatpush.bf16.msra.mxu0 %v6366
        %6844 = vmatpush.bf16.msra.mxu0 %v6362
        %6845 = vmatpush.bf16.msra.mxu0 %v6358
        %6846 = vmatpush.bf16.msra.mxu0 %v6354
        %6847 = vmatpush.bf16.msra.mxu0 %v6350
        %6848 = vmatpush.bf16.msra.mxu0 %v6346
        %6849 = vmatpush.bf16.msra.mxu0 %v6342
        %6850 = vmatmul.bf16.gmra.mxu0 %v5690
        %v6851 = vpop.f32.mrf.mxu0
        %v6852 = vadd.f32 %v6839, %v6851
        %v6853 = vpop.f32.mrf.mxu0
        %6854 = vdwg.mxu0
        %6855 = vmatpush.bf16.msra.mxu0 %v6402
        %6856 = vmatpush.bf16.msra.mxu0 %v6398
        %6857 = vmatpush.bf16.msra.mxu0 %v6394
        %6858 = vmatpush.bf16.msra.mxu0 %v6390
        %6859 = vmatpush.bf16.msra.mxu0 %v6386
        %6860 = vmatpush.bf16.msra.mxu0 %v6382
        %6861 = vmatpush.bf16.msra.mxu0 %v6378
        %6862 = vmatpush.bf16.msra.mxu0 %v6374
        %6863 = vmatmul.bf16.gmra.mxu0 %v5691
        %v6864 = vpop.f32.mrf.mxu0
        %v6865 = vadd.f32 %v6852, %v6864
        %v6866 = vpop.f32.mrf.mxu0
        %6867 = vdwg.mxu0
        %6868 = vmatpush.bf16.msra.mxu0 %v6434
        %6869 = vmatpush.bf16.msra.mxu0 %v6430
        %6870 = vmatpush.bf16.msra.mxu0 %v6426
        %6871 = vmatpush.bf16.msra.mxu0 %v6422
        %6872 = vmatpush.bf16.msra.mxu0 %v6418
        %6873 = vmatpush.bf16.msra.mxu0 %v6414
        %6874 = vmatpush.bf16.msra.mxu0 %v6410
        %6875 = vmatpush.bf16.msra.mxu0 %v6406
        %6876 = vmatmul.bf16.gmra.mxu0 %v5692
        %v6877 = vpop.f32.mrf.mxu0
        %v6878 = vadd.f32 %v6865, %v6877
        %v6879 = vpop.f32.mrf.mxu0
        %6880 = vdwg.mxu0
        %6881 = vmatpush.bf16.msra.mxu0 %v6466
        %6882 = vmatpush.bf16.msra.mxu0 %v6462
        %6883 = vmatpush.bf16.msra.mxu0 %v6458
        %6884 = vmatpush.bf16.msra.mxu0 %v6454
        %6885 = vmatpush.bf16.msra.mxu0 %v6450
        %6886 = vmatpush.bf16.msra.mxu0 %v6446
        %6887 = vmatpush.bf16.msra.mxu0 %v6442
        %6888 = vmatpush.bf16.msra.mxu0 %v6438
        %6889 = vmatmul.bf16.gmra.mxu0 %v5693
        %v6890 = vpop.f32.mrf.mxu0
        %v6891 = vadd.f32 %v6878, %v6890
        %v6892 = vpop.f32.mrf.mxu0
        %6893 = vdwg.mxu0
        %6894 = vmatpush.bf16.msra.mxu0 %v6307
        %6895 = vmatpush.bf16.msra.mxu0 %v6303
        %6896 = vmatpush.bf16.msra.mxu0 %v6299
        %6897 = vmatpush.bf16.msra.mxu0 %v6295
        %6898 = vmatpush.bf16.msra.mxu0 %v6291
        %6899 = vmatpush.bf16.msra.mxu0 %v6287
        %6900 = vmatpush.bf16.msra.mxu0 %v6283
        %6901 = vmatpush.bf16.msra.mxu0 %v6279
        %6902 = vmatmul.bf16.gmra.mxu0 %v5688
        %v6903 = vpop.f32.mrf.mxu0
        %v6904 = vadd.f32 0.0, %v6903
        %v6905 = vpop.f32.mrf.mxu0
        %6906 = vdwg.mxu0
        %6907 = vmatpush.bf16.msra.mxu0 %v6339
        %6908 = vmatpush.bf16.msra.mxu0 %v6335
        %6909 = vmatpush.bf16.msra.mxu0 %v6331
        %6910 = vmatpush.bf16.msra.mxu0 %v6327
        %6911 = vmatpush.bf16.msra.mxu0 %v6323
        %6912 = vmatpush.bf16.msra.mxu0 %v6319
        %6913 = vmatpush.bf16.msra.mxu0 %v6315
        %6914 = vmatpush.bf16.msra.mxu0 %v6311
        %6915 = vmatmul.bf16.gmra.mxu0 %v5689
        %v6916 = vpop.f32.mrf.mxu0
        %v6917 = vadd.f32 %v6904, %v6916
        %v6918 = vpop.f32.mrf.mxu0
        %6919 = vdwg.mxu0
        %6920 = vmatpush.bf16.msra.mxu0 %v6371
        %6921 = vmatpush.bf16.msra.mxu0 %v6367
        %6922 = vmatpush.bf16.msra.mxu0 %v6363
        %6923 = vmatpush.bf16.msra.mxu0 %v6359
        %6924 = vmatpush.bf16.msra.mxu0 %v6355
        %6925 = vmatpush.bf16.msra.mxu0 %v6351
        %6926 = vmatpush.bf16.msra.mxu0 %v6347
        %6927 = vmatpush.bf16.msra.mxu0 %v6343
        %6928 = vmatmul.bf16.gmra.mxu0 %v5690
        %v6929 = vpop.f32.mrf.mxu0
        %v6930 = vadd.f32 %v6917, %v6929
        %v6931 = vpop.f32.mrf.mxu0
        %6932 = vdwg.mxu0
        %6933 = vmatpush.bf16.msra.mxu0 %v6403
        %6934 = vmatpush.bf16.msra.mxu0 %v6399
        %6935 = vmatpush.bf16.msra.mxu0 %v6395
        %6936 = vmatpush.bf16.msra.mxu0 %v6391
        %6937 = vmatpush.bf16.msra.mxu0 %v6387
        %6938 = vmatpush.bf16.msra.mxu0 %v6383
        %6939 = vmatpush.bf16.msra.mxu0 %v6379
        %6940 = vmatpush.bf16.msra.mxu0 %v6375
        %6941 = vmatmul.bf16.gmra.mxu0 %v5691
        %v6942 = vpop.f32.mrf.mxu0
        %v6943 = vadd.f32 %v6930, %v6942
        %v6944 = vpop.f32.mrf.mxu0
        %6945 = vdwg.mxu0
        %6946 = vmatpush.bf16.msra.mxu0 %v6435
        %6947 = vmatpush.bf16.msra.mxu0 %v6431
        %6948 = vmatpush.bf16.msra.mxu0 %v6427
        %6949 = vmatpush.bf16.msra.mxu0 %v6423
        %6950 = vmatpush.bf16.msra.mxu0 %v6419
        %6951 = vmatpush.bf16.msra.mxu0 %v6415
        %6952 = vmatpush.bf16.msra.mxu0 %v6411
        %6953 = vmatpush.bf16.msra.mxu0 %v6407
        %6954 = vmatmul.bf16.gmra.mxu0 %v5692
        %v6955 = vpop.f32.mrf.mxu0
        %v6956 = vadd.f32 %v6943, %v6955
        %v6957 = vpop.f32.mrf.mxu0
        %6958 = vdwg.mxu0
        %6959 = vmatpush.bf16.msra.mxu0 %v6467
        %6960 = vmatpush.bf16.msra.mxu0 %v6463
        %6961 = vmatpush.bf16.msra.mxu0 %v6459
        %6962 = vmatpush.bf16.msra.mxu0 %v6455
        %6963 = vmatpush.bf16.msra.mxu0 %v6451
        %6964 = vmatpush.bf16.msra.mxu0 %v6447
        %6965 = vmatpush.bf16.msra.mxu0 %v6443
        %6966 = vmatpush.bf16.msra.mxu0 %v6439
        %6967 = vmatmul.bf16.gmra.mxu0 %v5693
        %v6968 = vpop.f32.mrf.mxu0
        %v6969 = vadd.f32 %v6956, %v6968
        %v6970 = vpop.f32.mrf.mxu0
        %6971 = vdwg.mxu0
        %v6972 = vadd.f32 %v5234, %v6735
        %v6973 = vadd.f32 %v5312, %v6813
        %v6974 = vadd.f32 %v5390, %v6891
        %v6975 = vadd.f32 %v5468, %v6969
        %v6976 = vld [vmem:[#allocation2] sm:$0xf8]
        %v6977 = vld [vmem:[#allocation2 + $0x8] sm:$0xf8]
        %v6978 = vld [vmem:[#allocation2 + $0x10] sm:$0xf8]
        %v6979 = vld [vmem:[#allocation2 + $0x18] sm:$0xf8]
        %v6980 = vld [vmem:[#allocation2 + $0x20] sm:$0xf8]
        %v6981 = vld [vmem:[#allocation2 + $0x28] sm:$0xf8]
        %v6982 = vld [vmem:[#allocation2 + $0x30] sm:$0x7]
        %v6983 = vld [vmem:[#allocation2 + $0x38] sm:$0x7]
        %v6984 = vld [vmem:[#allocation2 + $0x40] sm:$0x7]
        %v6985 = vld [vmem:[#allocation2 + $0x48] sm:$0x7]
        %v6986 = vld [vmem:[#allocation2 + $0x50] sm:$0x7]
        %v6987 = vld [vmem:[#allocation2 + $0x58] sm:$0x7]
        %v6988 = vpack.c.bf16 %v6982, %v6976
        %v6989 = vpack.c.bf16 %v6983, %v6977
        %v6990 = vpack.c.bf16 %v6984, %v6978
        %v6991 = vpack.c.bf16 %v6985, %v6979
        %v6992 = vpack.c.bf16 %v6986, %v6980
        %v6993 = vpack.c.bf16 %v6987, %v6981
        %s6994 = scalar_lea.vmem [#allocation9], 4608
        %v6995 = vld [vmem:[%s6994] sm:$0xff]
        %v6996 = vld [vmem:[%s6994 + $0x8] sm:$0xff]
        %v6997 = vld [vmem:[%s6994 + $0x10] sm:$0xff]
        %v6998 = vld [vmem:[%s6994 + $0x18] sm:$0xff]
        %v6999 = vld [vmem:[%s6994 + $0x20] sm:$0xff]
        %v7000 = vld [vmem:[%s6994 + $0x28] sm:$0xff]
        %v7001 = vld [vmem:[%s6994 + $0x30] sm:$0xff]
        %v7002 = vld [vmem:[%s6994 + $0x38] sm:$0xff]
        %v7003 = vld [vmem:[%s6994 + $0x40] sm:$0xff]
        %v7004 = vld [vmem:[%s6994 + $0x48] sm:$0xff]
        %v7005 = vld [vmem:[%s6994 + $0x50] sm:$0xff]
        %v7006 = vld [vmem:[%s6994 + $0x58] sm:$0xff]
        %v7007 = vld [vmem:[%s6994 + $0x60] sm:$0xff]
        %v7008 = vld [vmem:[%s6994 + $0x68] sm:$0xff]
        %v7009 = vld [vmem:[%s6994 + $0x70] sm:$0xff]
        %v7010 = vld [vmem:[%s6994 + $0x78] sm:$0xff]
        %v7011 = vld [vmem:[%s6994 + $0x80] sm:$0xff]
        %v7012 = vld [vmem:[%s6994 + $0x88] sm:$0xff]
        %v7013 = vld [vmem:[%s6994 + $0x90] sm:$0xff]
        %v7014 = vld [vmem:[%s6994 + $0x98] sm:$0xff]
        %v7015 = vld [vmem:[%s6994 + $0xa0] sm:$0xff]
        %v7016 = vld [vmem:[%s6994 + $0xa8] sm:$0xff]
        %v7017 = vld [vmem:[%s6994 + $0xb0] sm:$0xff]
        %v7018 = vld [vmem:[%s6994 + $0xb8] sm:$0xff]
        %v7019 = vld [vmem:[%s6994 + $0xc0] sm:$0xff]
        %v7020 = vld [vmem:[%s6994 + $0xc8] sm:$0xff]
        %v7021 = vld [vmem:[%s6994 + $0xd0] sm:$0xff]
        %v7022 = vld [vmem:[%s6994 + $0xd8] sm:$0xff]
        %v7023 = vld [vmem:[%s6994 + $0xe0] sm:$0xff]
        %v7024 = vld [vmem:[%s6994 + $0xe8] sm:$0xff]
        %v7025 = vld [vmem:[%s6994 + $0xf0] sm:$0xff]
        %v7026 = vld [vmem:[%s6994 + $0xf8] sm:$0xff]
        %v7027 = vld [vmem:[%s6994 + $0x100] sm:$0xff]
        %v7028 = vld [vmem:[%s6994 + $0x108] sm:$0xff]
        %v7029 = vld [vmem:[%s6994 + $0x110] sm:$0xff]
        %v7030 = vld [vmem:[%s6994 + $0x118] sm:$0xff]
        %v7031 = vld [vmem:[%s6994 + $0x120] sm:$0xff]
        %v7032 = vld [vmem:[%s6994 + $0x128] sm:$0xff]
        %v7033 = vld [vmem:[%s6994 + $0x130] sm:$0xff]
        %v7034 = vld [vmem:[%s6994 + $0x138] sm:$0xff]
        %v7035 = vld [vmem:[%s6994 + $0x140] sm:$0xff]
        %v7036 = vld [vmem:[%s6994 + $0x148] sm:$0xff]
        %v7037 = vld [vmem:[%s6994 + $0x150] sm:$0xff]
        %v7038 = vld [vmem:[%s6994 + $0x158] sm:$0xff]
        %v7039 = vld [vmem:[%s6994 + $0x160] sm:$0xff]
        %v7040 = vld [vmem:[%s6994 + $0x168] sm:$0xff]
        %v7041 = vld [vmem:[%s6994 + $0x170] sm:$0xff]
        %v7042 = vld [vmem:[%s6994 + $0x178] sm:$0xff]
        %v7043 = vld [vmem:[%s6994 + $0x180] sm:$0xff]
        %v7044 = vld [vmem:[%s6994 + $0x188] sm:$0xff]
        %v7045 = vld [vmem:[%s6994 + $0x190] sm:$0xff]
        %v7046 = vld [vmem:[%s6994 + $0x198] sm:$0xff]
        %v7047 = vld [vmem:[%s6994 + $0x1a0] sm:$0xff]
        %v7048 = vld [vmem:[%s6994 + $0x1a8] sm:$0xff]
        %v7049 = vld [vmem:[%s6994 + $0x1b0] sm:$0xff]
        %v7050 = vld [vmem:[%s6994 + $0x1b8] sm:$0xff]
        %v7051 = vld [vmem:[%s6994 + $0x1c0] sm:$0xff]
        %v7052 = vld [vmem:[%s6994 + $0x1c8] sm:$0xff]
        %v7053 = vld [vmem:[%s6994 + $0x1d0] sm:$0xff]
        %v7054 = vld [vmem:[%s6994 + $0x1d8] sm:$0xff]
        %v7055 = vld [vmem:[%s6994 + $0x1e0] sm:$0xff]
        %v7056 = vld [vmem:[%s6994 + $0x1e8] sm:$0xff]
        %v7057 = vld [vmem:[%s6994 + $0x1f0] sm:$0xff]
        %v7058 = vld [vmem:[%s6994 + $0x1f8] sm:$0xff]
        %v7059 = vld [vmem:[%s6994 + $0x200] sm:$0xff]
        %v7060 = vld [vmem:[%s6994 + $0x208] sm:$0xff]
        %v7061 = vld [vmem:[%s6994 + $0x210] sm:$0xff]
        %v7062 = vld [vmem:[%s6994 + $0x218] sm:$0xff]
        %v7063 = vld [vmem:[%s6994 + $0x220] sm:$0xff]
        %v7064 = vld [vmem:[%s6994 + $0x228] sm:$0xff]
        %v7065 = vld [vmem:[%s6994 + $0x230] sm:$0xff]
        %v7066 = vld [vmem:[%s6994 + $0x238] sm:$0xff]
        %v7067 = vld [vmem:[%s6994 + $0x240] sm:$0xff]
        %v7068 = vld [vmem:[%s6994 + $0x248] sm:$0xff]
        %v7069 = vld [vmem:[%s6994 + $0x250] sm:$0xff]
        %v7070 = vld [vmem:[%s6994 + $0x258] sm:$0xff]
        %v7071 = vld [vmem:[%s6994 + $0x260] sm:$0xff]
        %v7072 = vld [vmem:[%s6994 + $0x268] sm:$0xff]
        %v7073 = vld [vmem:[%s6994 + $0x270] sm:$0xff]
        %v7074 = vld [vmem:[%s6994 + $0x278] sm:$0xff]
        %v7075 = vld [vmem:[%s6994 + $0x280] sm:$0xff]
        %v7076 = vld [vmem:[%s6994 + $0x288] sm:$0xff]
        %v7077 = vld [vmem:[%s6994 + $0x290] sm:$0xff]
        %v7078 = vld [vmem:[%s6994 + $0x298] sm:$0xff]
        %v7079 = vld [vmem:[%s6994 + $0x2a0] sm:$0xff]
        %v7080 = vld [vmem:[%s6994 + $0x2a8] sm:$0xff]
        %v7081 = vld [vmem:[%s6994 + $0x2b0] sm:$0xff]
        %v7082 = vld [vmem:[%s6994 + $0x2b8] sm:$0xff]
        %v7083 = vld [vmem:[%s6994 + $0x2c0] sm:$0xff]
        %v7084 = vld [vmem:[%s6994 + $0x2c8] sm:$0xff]
        %v7085 = vld [vmem:[%s6994 + $0x2d0] sm:$0xff]
        %v7086 = vld [vmem:[%s6994 + $0x2d8] sm:$0xff]
        %v7087 = vld [vmem:[%s6994 + $0x2e0] sm:$0xff]
        %v7088 = vld [vmem:[%s6994 + $0x2e8] sm:$0xff]
        %v7089 = vld [vmem:[%s6994 + $0x2f0] sm:$0xff]
        %v7090 = vld [vmem:[%s6994 + $0x2f8] sm:$0xff]
        %v7091 = vld [vmem:[%s6994 + $0x300] sm:$0xff]
        %v7092 = vld [vmem:[%s6994 + $0x308] sm:$0xff]
        %v7093 = vld [vmem:[%s6994 + $0x310] sm:$0xff]
        %v7094 = vld [vmem:[%s6994 + $0x318] sm:$0xff]
        %v7095 = vld [vmem:[%s6994 + $0x320] sm:$0xff]
        %v7096 = vld [vmem:[%s6994 + $0x328] sm:$0xff]
        %v7097 = vld [vmem:[%s6994 + $0x330] sm:$0xff]
        %v7098 = vld [vmem:[%s6994 + $0x338] sm:$0xff]
        %v7099 = vld [vmem:[%s6994 + $0x340] sm:$0xff]
        %v7100 = vld [vmem:[%s6994 + $0x348] sm:$0xff]
        %v7101 = vld [vmem:[%s6994 + $0x350] sm:$0xff]
        %v7102 = vld [vmem:[%s6994 + $0x358] sm:$0xff]
        %v7103 = vld [vmem:[%s6994 + $0x360] sm:$0xff]
        %v7104 = vld [vmem:[%s6994 + $0x368] sm:$0xff]
        %v7105 = vld [vmem:[%s6994 + $0x370] sm:$0xff]
        %v7106 = vld [vmem:[%s6994 + $0x378] sm:$0xff]
        %v7107 = vld [vmem:[%s6994 + $0x380] sm:$0xff]
        %v7108 = vld [vmem:[%s6994 + $0x388] sm:$0xff]
        %v7109 = vld [vmem:[%s6994 + $0x390] sm:$0xff]
        %v7110 = vld [vmem:[%s6994 + $0x398] sm:$0xff]
        %v7111 = vld [vmem:[%s6994 + $0x3a0] sm:$0xff]
        %v7112 = vld [vmem:[%s6994 + $0x3a8] sm:$0xff]
        %v7113 = vld [vmem:[%s6994 + $0x3b0] sm:$0xff]
        %v7114 = vld [vmem:[%s6994 + $0x3b8] sm:$0xff]
        %v7115 = vld [vmem:[%s6994 + $0x3c0] sm:$0xff]
        %v7116 = vld [vmem:[%s6994 + $0x3c8] sm:$0xff]
        %v7117 = vld [vmem:[%s6994 + $0x3d0] sm:$0xff]
        %v7118 = vld [vmem:[%s6994 + $0x3d8] sm:$0xff]
        %v7119 = vld [vmem:[%s6994 + $0x3e0] sm:$0xff]
        %v7120 = vld [vmem:[%s6994 + $0x3e8] sm:$0xff]
        %v7121 = vld [vmem:[%s6994 + $0x3f0] sm:$0xff]
        %v7122 = vld [vmem:[%s6994 + $0x3f8] sm:$0xff]
        %v7123 = vld [vmem:[%s6994 + $0x400] sm:$0xff]
        %v7124 = vld [vmem:[%s6994 + $0x408] sm:$0xff]
        %v7125 = vld [vmem:[%s6994 + $0x410] sm:$0xff]
        %v7126 = vld [vmem:[%s6994 + $0x418] sm:$0xff]
        %v7127 = vld [vmem:[%s6994 + $0x420] sm:$0xff]
        %v7128 = vld [vmem:[%s6994 + $0x428] sm:$0xff]
        %v7129 = vld [vmem:[%s6994 + $0x430] sm:$0xff]
        %v7130 = vld [vmem:[%s6994 + $0x438] sm:$0xff]
        %v7131 = vld [vmem:[%s6994 + $0x440] sm:$0xff]
        %v7132 = vld [vmem:[%s6994 + $0x448] sm:$0xff]
        %v7133 = vld [vmem:[%s6994 + $0x450] sm:$0xff]
        %v7134 = vld [vmem:[%s6994 + $0x458] sm:$0xff]
        %v7135 = vld [vmem:[%s6994 + $0x460] sm:$0xff]
        %v7136 = vld [vmem:[%s6994 + $0x468] sm:$0xff]
        %v7137 = vld [vmem:[%s6994 + $0x470] sm:$0xff]
        %v7138 = vld [vmem:[%s6994 + $0x478] sm:$0xff]
        %v7139 = vld [vmem:[%s6994 + $0x480] sm:$0xff]
        %v7140 = vld [vmem:[%s6994 + $0x488] sm:$0xff]
        %v7141 = vld [vmem:[%s6994 + $0x490] sm:$0xff]
        %v7142 = vld [vmem:[%s6994 + $0x498] sm:$0xff]
        %v7143 = vld [vmem:[%s6994 + $0x4a0] sm:$0xff]
        %v7144 = vld [vmem:[%s6994 + $0x4a8] sm:$0xff]
        %v7145 = vld [vmem:[%s6994 + $0x4b0] sm:$0xff]
        %v7146 = vld [vmem:[%s6994 + $0x4b8] sm:$0xff]
        %v7147 = vld [vmem:[%s6994 + $0x4c0] sm:$0xff]
        %v7148 = vld [vmem:[%s6994 + $0x4c8] sm:$0xff]
        %v7149 = vld [vmem:[%s6994 + $0x4d0] sm:$0xff]
        %v7150 = vld [vmem:[%s6994 + $0x4d8] sm:$0xff]
        %v7151 = vld [vmem:[%s6994 + $0x4e0] sm:$0xff]
        %v7152 = vld [vmem:[%s6994 + $0x4e8] sm:$0xff]
        %v7153 = vld [vmem:[%s6994 + $0x4f0] sm:$0xff]
        %v7154 = vld [vmem:[%s6994 + $0x4f8] sm:$0xff]
        %v7155 = vld [vmem:[%s6994 + $0x500] sm:$0xff]
        %v7156 = vld [vmem:[%s6994 + $0x508] sm:$0xff]
        %v7157 = vld [vmem:[%s6994 + $0x510] sm:$0xff]
        %v7158 = vld [vmem:[%s6994 + $0x518] sm:$0xff]
        %v7159 = vld [vmem:[%s6994 + $0x520] sm:$0xff]
        %v7160 = vld [vmem:[%s6994 + $0x528] sm:$0xff]
        %v7161 = vld [vmem:[%s6994 + $0x530] sm:$0xff]
        %v7162 = vld [vmem:[%s6994 + $0x538] sm:$0xff]
        %v7163 = vld [vmem:[%s6994 + $0x540] sm:$0xff]
        %v7164 = vld [vmem:[%s6994 + $0x548] sm:$0xff]
        %v7165 = vld [vmem:[%s6994 + $0x550] sm:$0xff]
        %v7166 = vld [vmem:[%s6994 + $0x558] sm:$0xff]
        %v7167 = vld [vmem:[%s6994 + $0x560] sm:$0xff]
        %v7168 = vld [vmem:[%s6994 + $0x568] sm:$0xff]
        %v7169 = vld [vmem:[%s6994 + $0x570] sm:$0xff]
        %v7170 = vld [vmem:[%s6994 + $0x578] sm:$0xff]
        %v7171 = vld [vmem:[%s6994 + $0x580] sm:$0xff]
        %v7172 = vld [vmem:[%s6994 + $0x588] sm:$0xff]
        %v7173 = vld [vmem:[%s6994 + $0x590] sm:$0xff]
        %v7174 = vld [vmem:[%s6994 + $0x598] sm:$0xff]
        %v7175 = vld [vmem:[%s6994 + $0x5a0] sm:$0xff]
        %v7176 = vld [vmem:[%s6994 + $0x5a8] sm:$0xff]
        %v7177 = vld [vmem:[%s6994 + $0x5b0] sm:$0xff]
        %v7178 = vld [vmem:[%s6994 + $0x5b8] sm:$0xff]
        %v7179 = vld [vmem:[%s6994 + $0x5c0] sm:$0xff]
        %v7180 = vld [vmem:[%s6994 + $0x5c8] sm:$0xff]
        %v7181 = vld [vmem:[%s6994 + $0x5d0] sm:$0xff]
        %v7182 = vld [vmem:[%s6994 + $0x5d8] sm:$0xff]
        %v7183 = vld [vmem:[%s6994 + $0x5e0] sm:$0xff]
        %v7184 = vld [vmem:[%s6994 + $0x5e8] sm:$0xff]
        %v7185 = vld [vmem:[%s6994 + $0x5f0] sm:$0xff]
        %v7186 = vld [vmem:[%s6994 + $0x5f8] sm:$0xff]
        %v7188 = vshrl.u32 %v6988, 16
        %v7190 = vrot.slane %v7188, 1
        %v7191 = vshll.u32 %v6988, 16
        %v7193 = vrot.slane %v7191, 2
        %v7194 = vor.u32 %v7190, %v7193
        %v7196 = vshrl.u32 %v6989, 16
        %v7198 = vrot.slane %v7196, 1
        %v7199 = vshll.u32 %v6989, 16
        %v7201 = vrot.slane %v7199, 2
        %v7202 = vor.u32 %v7198, %v7201
        %v7204 = vshrl.u32 %v6990, 16
        %v7206 = vrot.slane %v7204, 1
        %v7207 = vshll.u32 %v6990, 16
        %v7209 = vrot.slane %v7207, 2
        %v7210 = vor.u32 %v7206, %v7209
        %v7212 = vshrl.u32 %v6991, 16
        %v7214 = vrot.slane %v7212, 1
        %v7215 = vshll.u32 %v6991, 16
        %v7217 = vrot.slane %v7215, 2
        %v7218 = vor.u32 %v7214, %v7217
        %v7220 = vshrl.u32 %v6992, 16
        %v7222 = vrot.slane %v7220, 1
        %v7223 = vshll.u32 %v6992, 16
        %v7225 = vrot.slane %v7223, 2
        %v7226 = vor.u32 %v7222, %v7225
        %v7228 = vshrl.u32 %v6993, 16
        %v7230 = vrot.slane %v7228, 1
        %v7231 = vshll.u32 %v6993, 16
        %v7233 = vrot.slane %v7231, 2
        %v7234 = vor.u32 %v7230, %v7233
        %v7433 = vunpack.c.l.b16 %v6995
        %v7434 = vunpack.c.h.b16 %v6995
        %v7435 = vunpack.c.l.b16 %v6996
        %v7436 = vunpack.c.h.b16 %v6996
        %v7437 = vunpack.c.l.b16 %v6997
        %v7438 = vunpack.c.h.b16 %v6997
        %v7439 = vunpack.c.l.b16 %v6998
        %v7440 = vunpack.c.h.b16 %v6998
        %v7441 = vunpack.c.l.b16 %v6999
        %v7442 = vunpack.c.h.b16 %v6999
        %v7443 = vunpack.c.l.b16 %v7000
        %v7444 = vunpack.c.h.b16 %v7000
        %v7445 = vunpack.c.l.b16 %v7001
        %v7446 = vunpack.c.h.b16 %v7001
        %v7447 = vunpack.c.l.b16 %v7002
        %v7448 = vunpack.c.h.b16 %v7002
        %v7449 = vunpack.c.l.b16 %v7003
        %v7450 = vunpack.c.h.b16 %v7003
        %v7451 = vunpack.c.l.b16 %v7004
        %v7452 = vunpack.c.h.b16 %v7004
        %v7453 = vunpack.c.l.b16 %v7005
        %v7454 = vunpack.c.h.b16 %v7005
        %v7455 = vunpack.c.l.b16 %v7006
        %v7456 = vunpack.c.h.b16 %v7006
        %v7457 = vunpack.c.l.b16 %v7007
        %v7458 = vunpack.c.h.b16 %v7007
        %v7459 = vunpack.c.l.b16 %v7008
        %v7460 = vunpack.c.h.b16 %v7008
        %v7461 = vunpack.c.l.b16 %v7009
        %v7462 = vunpack.c.h.b16 %v7009
        %v7463 = vunpack.c.l.b16 %v7010
        %v7464 = vunpack.c.h.b16 %v7010
        %v7465 = vunpack.c.l.b16 %v7011
        %v7466 = vunpack.c.h.b16 %v7011
        %v7467 = vunpack.c.l.b16 %v7012
        %v7468 = vunpack.c.h.b16 %v7012
        %v7469 = vunpack.c.l.b16 %v7013
        %v7470 = vunpack.c.h.b16 %v7013
        %v7471 = vunpack.c.l.b16 %v7014
        %v7472 = vunpack.c.h.b16 %v7014
        %v7473 = vunpack.c.l.b16 %v7015
        %v7474 = vunpack.c.h.b16 %v7015
        %v7475 = vunpack.c.l.b16 %v7016
        %v7476 = vunpack.c.h.b16 %v7016
        %v7477 = vunpack.c.l.b16 %v7017
        %v7478 = vunpack.c.h.b16 %v7017
        %v7479 = vunpack.c.l.b16 %v7018
        %v7480 = vunpack.c.h.b16 %v7018
        %v7481 = vunpack.c.l.b16 %v7019
        %v7482 = vunpack.c.h.b16 %v7019
        %v7483 = vunpack.c.l.b16 %v7020
        %v7484 = vunpack.c.h.b16 %v7020
        %v7485 = vunpack.c.l.b16 %v7021
        %v7486 = vunpack.c.h.b16 %v7021
        %v7487 = vunpack.c.l.b16 %v7022
        %v7488 = vunpack.c.h.b16 %v7022
        %v7489 = vunpack.c.l.b16 %v7023
        %v7490 = vunpack.c.h.b16 %v7023
        %v7491 = vunpack.c.l.b16 %v7024
        %v7492 = vunpack.c.h.b16 %v7024
        %v7493 = vunpack.c.l.b16 %v7025
        %v7494 = vunpack.c.h.b16 %v7025
        %v7495 = vunpack.c.l.b16 %v7026
        %v7496 = vunpack.c.h.b16 %v7026
        %v7497 = vunpack.c.l.b16 %v7027
        %v7498 = vunpack.c.h.b16 %v7027
        %v7499 = vunpack.c.l.b16 %v7028
        %v7500 = vunpack.c.h.b16 %v7028
        %v7501 = vunpack.c.l.b16 %v7029
        %v7502 = vunpack.c.h.b16 %v7029
        %v7503 = vunpack.c.l.b16 %v7030
        %v7504 = vunpack.c.h.b16 %v7030
        %v7505 = vunpack.c.l.b16 %v7031
        %v7506 = vunpack.c.h.b16 %v7031
        %v7507 = vunpack.c.l.b16 %v7032
        %v7508 = vunpack.c.h.b16 %v7032
        %v7509 = vunpack.c.l.b16 %v7033
        %v7510 = vunpack.c.h.b16 %v7033
        %v7511 = vunpack.c.l.b16 %v7034
        %v7512 = vunpack.c.h.b16 %v7034
        %v7513 = vunpack.c.l.b16 %v7035
        %v7514 = vunpack.c.h.b16 %v7035
        %v7515 = vunpack.c.l.b16 %v7036
        %v7516 = vunpack.c.h.b16 %v7036
        %v7517 = vunpack.c.l.b16 %v7037
        %v7518 = vunpack.c.h.b16 %v7037
        %v7519 = vunpack.c.l.b16 %v7038
        %v7520 = vunpack.c.h.b16 %v7038
        %v7521 = vunpack.c.l.b16 %v7039
        %v7522 = vunpack.c.h.b16 %v7039
        %v7523 = vunpack.c.l.b16 %v7040
        %v7524 = vunpack.c.h.b16 %v7040
        %v7525 = vunpack.c.l.b16 %v7041
        %v7526 = vunpack.c.h.b16 %v7041
        %v7527 = vunpack.c.l.b16 %v7042
        %v7528 = vunpack.c.h.b16 %v7042
        %v7529 = vunpack.c.l.b16 %v7043
        %v7530 = vunpack.c.h.b16 %v7043
        %v7531 = vunpack.c.l.b16 %v7044
        %v7532 = vunpack.c.h.b16 %v7044
        %v7533 = vunpack.c.l.b16 %v7045
        %v7534 = vunpack.c.h.b16 %v7045
        %v7535 = vunpack.c.l.b16 %v7046
        %v7536 = vunpack.c.h.b16 %v7046
        %v7537 = vunpack.c.l.b16 %v7047
        %v7538 = vunpack.c.h.b16 %v7047
        %v7539 = vunpack.c.l.b16 %v7048
        %v7540 = vunpack.c.h.b16 %v7048
        %v7541 = vunpack.c.l.b16 %v7049
        %v7542 = vunpack.c.h.b16 %v7049
        %v7543 = vunpack.c.l.b16 %v7050
        %v7544 = vunpack.c.h.b16 %v7050
        %v7545 = vunpack.c.l.b16 %v7051
        %v7546 = vunpack.c.h.b16 %v7051
        %v7547 = vunpack.c.l.b16 %v7052
        %v7548 = vunpack.c.h.b16 %v7052
        %v7549 = vunpack.c.l.b16 %v7053
        %v7550 = vunpack.c.h.b16 %v7053
        %v7551 = vunpack.c.l.b16 %v7054
        %v7552 = vunpack.c.h.b16 %v7054
        %v7553 = vunpack.c.l.b16 %v7055
        %v7554 = vunpack.c.h.b16 %v7055
        %v7555 = vunpack.c.l.b16 %v7056
        %v7556 = vunpack.c.h.b16 %v7056
        %v7557 = vunpack.c.l.b16 %v7057
        %v7558 = vunpack.c.h.b16 %v7057
        %v7559 = vunpack.c.l.b16 %v7058
        %v7560 = vunpack.c.h.b16 %v7058
        %v7561 = vunpack.c.l.b16 %v7059
        %v7562 = vunpack.c.h.b16 %v7059
        %v7563 = vunpack.c.l.b16 %v7060
        %v7564 = vunpack.c.h.b16 %v7060
        %v7565 = vunpack.c.l.b16 %v7061
        %v7566 = vunpack.c.h.b16 %v7061
        %v7567 = vunpack.c.l.b16 %v7062
        %v7568 = vunpack.c.h.b16 %v7062
        %v7569 = vunpack.c.l.b16 %v7063
        %v7570 = vunpack.c.h.b16 %v7063
        %v7571 = vunpack.c.l.b16 %v7064
        %v7572 = vunpack.c.h.b16 %v7064
        %v7573 = vunpack.c.l.b16 %v7065
        %v7574 = vunpack.c.h.b16 %v7065
        %v7575 = vunpack.c.l.b16 %v7066
        %v7576 = vunpack.c.h.b16 %v7066
        %v7577 = vunpack.c.l.b16 %v7067
        %v7578 = vunpack.c.h.b16 %v7067
        %v7579 = vunpack.c.l.b16 %v7068
        %v7580 = vunpack.c.h.b16 %v7068
        %v7581 = vunpack.c.l.b16 %v7069
        %v7582 = vunpack.c.h.b16 %v7069
        %v7583 = vunpack.c.l.b16 %v7070
        %v7584 = vunpack.c.h.b16 %v7070
        %v7585 = vunpack.c.l.b16 %v7071
        %v7586 = vunpack.c.h.b16 %v7071
        %v7587 = vunpack.c.l.b16 %v7072
        %v7588 = vunpack.c.h.b16 %v7072
        %v7589 = vunpack.c.l.b16 %v7073
        %v7590 = vunpack.c.h.b16 %v7073
        %v7591 = vunpack.c.l.b16 %v7074
        %v7592 = vunpack.c.h.b16 %v7074
        %v7593 = vunpack.c.l.b16 %v7075
        %v7594 = vunpack.c.h.b16 %v7075
        %v7595 = vunpack.c.l.b16 %v7076
        %v7596 = vunpack.c.h.b16 %v7076
        %v7597 = vunpack.c.l.b16 %v7077
        %v7598 = vunpack.c.h.b16 %v7077
        %v7599 = vunpack.c.l.b16 %v7078
        %v7600 = vunpack.c.h.b16 %v7078
        %v7601 = vunpack.c.l.b16 %v7079
        %v7602 = vunpack.c.h.b16 %v7079
        %v7603 = vunpack.c.l.b16 %v7080
        %v7604 = vunpack.c.h.b16 %v7080
        %v7605 = vunpack.c.l.b16 %v7081
        %v7606 = vunpack.c.h.b16 %v7081
        %v7607 = vunpack.c.l.b16 %v7082
        %v7608 = vunpack.c.h.b16 %v7082
        %v7609 = vunpack.c.l.b16 %v7083
        %v7610 = vunpack.c.h.b16 %v7083
        %v7611 = vunpack.c.l.b16 %v7084
        %v7612 = vunpack.c.h.b16 %v7084
        %v7613 = vunpack.c.l.b16 %v7085
        %v7614 = vunpack.c.h.b16 %v7085
        %v7615 = vunpack.c.l.b16 %v7086
        %v7616 = vunpack.c.h.b16 %v7086
        %v7617 = vunpack.c.l.b16 %v7087
        %v7618 = vunpack.c.h.b16 %v7087
        %v7619 = vunpack.c.l.b16 %v7088
        %v7620 = vunpack.c.h.b16 %v7088
        %v7621 = vunpack.c.l.b16 %v7089
        %v7622 = vunpack.c.h.b16 %v7089
        %v7623 = vunpack.c.l.b16 %v7090
        %v7624 = vunpack.c.h.b16 %v7090
        %v7625 = vunpack.c.l.b16 %v7091
        %v7626 = vunpack.c.h.b16 %v7091
        %v7627 = vunpack.c.l.b16 %v7092
        %v7628 = vunpack.c.h.b16 %v7092
        %v7629 = vunpack.c.l.b16 %v7093
        %v7630 = vunpack.c.h.b16 %v7093
        %v7631 = vunpack.c.l.b16 %v7094
        %v7632 = vunpack.c.h.b16 %v7094
        %v7633 = vunpack.c.l.b16 %v7095
        %v7634 = vunpack.c.h.b16 %v7095
        %v7635 = vunpack.c.l.b16 %v7096
        %v7636 = vunpack.c.h.b16 %v7096
        %v7637 = vunpack.c.l.b16 %v7097
        %v7638 = vunpack.c.h.b16 %v7097
        %v7639 = vunpack.c.l.b16 %v7098
        %v7640 = vunpack.c.h.b16 %v7098
        %v7641 = vunpack.c.l.b16 %v7099
        %v7642 = vunpack.c.h.b16 %v7099
        %v7643 = vunpack.c.l.b16 %v7100
        %v7644 = vunpack.c.h.b16 %v7100
        %v7645 = vunpack.c.l.b16 %v7101
        %v7646 = vunpack.c.h.b16 %v7101
        %v7647 = vunpack.c.l.b16 %v7102
        %v7648 = vunpack.c.h.b16 %v7102
        %v7649 = vunpack.c.l.b16 %v7103
        %v7650 = vunpack.c.h.b16 %v7103
        %v7651 = vunpack.c.l.b16 %v7104
        %v7652 = vunpack.c.h.b16 %v7104
        %v7653 = vunpack.c.l.b16 %v7105
        %v7654 = vunpack.c.h.b16 %v7105
        %v7655 = vunpack.c.l.b16 %v7106
        %v7656 = vunpack.c.h.b16 %v7106
        %v7657 = vunpack.c.l.b16 %v7107
        %v7658 = vunpack.c.h.b16 %v7107
        %v7659 = vunpack.c.l.b16 %v7108
        %v7660 = vunpack.c.h.b16 %v7108
        %v7661 = vunpack.c.l.b16 %v7109
        %v7662 = vunpack.c.h.b16 %v7109
        %v7663 = vunpack.c.l.b16 %v7110
        %v7664 = vunpack.c.h.b16 %v7110
        %v7665 = vunpack.c.l.b16 %v7111
        %v7666 = vunpack.c.h.b16 %v7111
        %v7667 = vunpack.c.l.b16 %v7112
        %v7668 = vunpack.c.h.b16 %v7112
        %v7669 = vunpack.c.l.b16 %v7113
        %v7670 = vunpack.c.h.b16 %v7113
        %v7671 = vunpack.c.l.b16 %v7114
        %v7672 = vunpack.c.h.b16 %v7114
        %v7673 = vunpack.c.l.b16 %v7115
        %v7674 = vunpack.c.h.b16 %v7115
        %v7675 = vunpack.c.l.b16 %v7116
        %v7676 = vunpack.c.h.b16 %v7116
        %v7677 = vunpack.c.l.b16 %v7117
        %v7678 = vunpack.c.h.b16 %v7117
        %v7679 = vunpack.c.l.b16 %v7118
        %v7680 = vunpack.c.h.b16 %v7118
        %v7681 = vunpack.c.l.b16 %v7119
        %v7682 = vunpack.c.h.b16 %v7119
        %v7683 = vunpack.c.l.b16 %v7120
        %v7684 = vunpack.c.h.b16 %v7120
        %v7685 = vunpack.c.l.b16 %v7121
        %v7686 = vunpack.c.h.b16 %v7121
        %v7687 = vunpack.c.l.b16 %v7122
        %v7688 = vunpack.c.h.b16 %v7122
        %v7689 = vunpack.c.l.b16 %v7123
        %v7690 = vunpack.c.h.b16 %v7123
        %v7691 = vunpack.c.l.b16 %v7124
        %v7692 = vunpack.c.h.b16 %v7124
        %v7693 = vunpack.c.l.b16 %v7125
        %v7694 = vunpack.c.h.b16 %v7125
        %v7695 = vunpack.c.l.b16 %v7126
        %v7696 = vunpack.c.h.b16 %v7126
        %v7697 = vunpack.c.l.b16 %v7127
        %v7698 = vunpack.c.h.b16 %v7127
        %v7699 = vunpack.c.l.b16 %v7128
        %v7700 = vunpack.c.h.b16 %v7128
        %v7701 = vunpack.c.l.b16 %v7129
        %v7702 = vunpack.c.h.b16 %v7129
        %v7703 = vunpack.c.l.b16 %v7130
        %v7704 = vunpack.c.h.b16 %v7130
        %v7705 = vunpack.c.l.b16 %v7131
        %v7706 = vunpack.c.h.b16 %v7131
        %v7707 = vunpack.c.l.b16 %v7132
        %v7708 = vunpack.c.h.b16 %v7132
        %v7709 = vunpack.c.l.b16 %v7133
        %v7710 = vunpack.c.h.b16 %v7133
        %v7711 = vunpack.c.l.b16 %v7134
        %v7712 = vunpack.c.h.b16 %v7134
        %v7713 = vunpack.c.l.b16 %v7135
        %v7714 = vunpack.c.h.b16 %v7135
        %v7715 = vunpack.c.l.b16 %v7136
        %v7716 = vunpack.c.h.b16 %v7136
        %v7717 = vunpack.c.l.b16 %v7137
        %v7718 = vunpack.c.h.b16 %v7137
        %v7719 = vunpack.c.l.b16 %v7138
        %v7720 = vunpack.c.h.b16 %v7138
        %v7721 = vunpack.c.l.b16 %v7139
        %v7722 = vunpack.c.h.b16 %v7139
        %v7723 = vunpack.c.l.b16 %v7140
        %v7724 = vunpack.c.h.b16 %v7140
        %v7725 = vunpack.c.l.b16 %v7141
        %v7726 = vunpack.c.h.b16 %v7141
        %v7727 = vunpack.c.l.b16 %v7142
        %v7728 = vunpack.c.h.b16 %v7142
        %v7729 = vunpack.c.l.b16 %v7143
        %v7730 = vunpack.c.h.b16 %v7143
        %v7731 = vunpack.c.l.b16 %v7144
        %v7732 = vunpack.c.h.b16 %v7144
        %v7733 = vunpack.c.l.b16 %v7145
        %v7734 = vunpack.c.h.b16 %v7145
        %v7735 = vunpack.c.l.b16 %v7146
        %v7736 = vunpack.c.h.b16 %v7146
        %v7737 = vunpack.c.l.b16 %v7147
        %v7738 = vunpack.c.h.b16 %v7147
        %v7739 = vunpack.c.l.b16 %v7148
        %v7740 = vunpack.c.h.b16 %v7148
        %v7741 = vunpack.c.l.b16 %v7149
        %v7742 = vunpack.c.h.b16 %v7149
        %v7743 = vunpack.c.l.b16 %v7150
        %v7744 = vunpack.c.h.b16 %v7150
        %v7745 = vunpack.c.l.b16 %v7151
        %v7746 = vunpack.c.h.b16 %v7151
        %v7747 = vunpack.c.l.b16 %v7152
        %v7748 = vunpack.c.h.b16 %v7152
        %v7749 = vunpack.c.l.b16 %v7153
        %v7750 = vunpack.c.h.b16 %v7153
        %v7751 = vunpack.c.l.b16 %v7154
        %v7752 = vunpack.c.h.b16 %v7154
        %v7753 = vunpack.c.l.b16 %v7155
        %v7754 = vunpack.c.h.b16 %v7155
        %v7755 = vunpack.c.l.b16 %v7156
        %v7756 = vunpack.c.h.b16 %v7156
        %v7757 = vunpack.c.l.b16 %v7157
        %v7758 = vunpack.c.h.b16 %v7157
        %v7759 = vunpack.c.l.b16 %v7158
        %v7760 = vunpack.c.h.b16 %v7158
        %v7761 = vunpack.c.l.b16 %v7159
        %v7762 = vunpack.c.h.b16 %v7159
        %v7763 = vunpack.c.l.b16 %v7160
        %v7764 = vunpack.c.h.b16 %v7160
        %v7765 = vunpack.c.l.b16 %v7161
        %v7766 = vunpack.c.h.b16 %v7161
        %v7767 = vunpack.c.l.b16 %v7162
        %v7768 = vunpack.c.h.b16 %v7162
        %v7769 = vunpack.c.l.b16 %v7163
        %v7770 = vunpack.c.h.b16 %v7163
        %v7771 = vunpack.c.l.b16 %v7164
        %v7772 = vunpack.c.h.b16 %v7164
        %v7773 = vunpack.c.l.b16 %v7165
        %v7774 = vunpack.c.h.b16 %v7165
        %v7775 = vunpack.c.l.b16 %v7166
        %v7776 = vunpack.c.h.b16 %v7166
        %v7777 = vunpack.c.l.b16 %v7167
        %v7778 = vunpack.c.h.b16 %v7167
        %v7779 = vunpack.c.l.b16 %v7168
        %v7780 = vunpack.c.h.b16 %v7168
        %v7781 = vunpack.c.l.b16 %v7169
        %v7782 = vunpack.c.h.b16 %v7169
        %v7783 = vunpack.c.l.b16 %v7170
        %v7784 = vunpack.c.h.b16 %v7170
        %v7785 = vunpack.c.l.b16 %v7171
        %v7786 = vunpack.c.h.b16 %v7171
        %v7787 = vunpack.c.l.b16 %v7172
        %v7788 = vunpack.c.h.b16 %v7172
        %v7789 = vunpack.c.l.b16 %v7173
        %v7790 = vunpack.c.h.b16 %v7173
        %v7791 = vunpack.c.l.b16 %v7174
        %v7792 = vunpack.c.h.b16 %v7174
        %v7793 = vunpack.c.l.b16 %v7175
        %v7794 = vunpack.c.h.b16 %v7175
        %v7795 = vunpack.c.l.b16 %v7176
        %v7796 = vunpack.c.h.b16 %v7176
        %v7797 = vunpack.c.l.b16 %v7177
        %v7798 = vunpack.c.h.b16 %v7177
        %v7799 = vunpack.c.l.b16 %v7178
        %v7800 = vunpack.c.h.b16 %v7178
        %v7801 = vunpack.c.l.b16 %v7179
        %v7802 = vunpack.c.h.b16 %v7179
        %v7803 = vunpack.c.l.b16 %v7180
        %v7804 = vunpack.c.h.b16 %v7180
        %v7805 = vunpack.c.l.b16 %v7181
        %v7806 = vunpack.c.h.b16 %v7181
        %v7807 = vunpack.c.l.b16 %v7182
        %v7808 = vunpack.c.h.b16 %v7182
        %v7809 = vunpack.c.l.b16 %v7183
        %v7810 = vunpack.c.h.b16 %v7183
        %v7811 = vunpack.c.l.b16 %v7184
        %v7812 = vunpack.c.h.b16 %v7184
        %v7813 = vunpack.c.l.b16 %v7185
        %v7814 = vunpack.c.h.b16 %v7185
        %v7815 = vunpack.c.l.b16 %v7186
        %v7816 = vunpack.c.h.b16 %v7186
        %v7817 = vpack.c.b16 %v7437, %v7433
        %v7818 = vpack.c.b16 %v7438, %v7434
        %v7819 = vpack.c.b16 %v7439, %v7435
        %v7820 = vpack.c.b16 %v7440, %v7436
        %v7821 = vpack.c.b16 %v7445, %v7441
        %v7822 = vpack.c.b16 %v7446, %v7442
        %v7823 = vpack.c.b16 %v7447, %v7443
        %v7824 = vpack.c.b16 %v7448, %v7444
        %v7825 = vpack.c.b16 %v7453, %v7449
        %v7826 = vpack.c.b16 %v7454, %v7450
        %v7827 = vpack.c.b16 %v7455, %v7451
        %v7828 = vpack.c.b16 %v7456, %v7452
        %v7829 = vpack.c.b16 %v7461, %v7457
        %v7830 = vpack.c.b16 %v7462, %v7458
        %v7831 = vpack.c.b16 %v7463, %v7459
        %v7832 = vpack.c.b16 %v7464, %v7460
        %v7833 = vpack.c.b16 %v7469, %v7465
        %v7834 = vpack.c.b16 %v7470, %v7466
        %v7835 = vpack.c.b16 %v7471, %v7467
        %v7836 = vpack.c.b16 %v7472, %v7468
        %v7837 = vpack.c.b16 %v7477, %v7473
        %v7838 = vpack.c.b16 %v7478, %v7474
        %v7839 = vpack.c.b16 %v7479, %v7475
        %v7840 = vpack.c.b16 %v7480, %v7476
        %v7841 = vpack.c.b16 %v7485, %v7481
        %v7842 = vpack.c.b16 %v7486, %v7482
        %v7843 = vpack.c.b16 %v7487, %v7483
        %v7844 = vpack.c.b16 %v7488, %v7484
        %v7845 = vpack.c.b16 %v7493, %v7489
        %v7846 = vpack.c.b16 %v7494, %v7490
        %v7847 = vpack.c.b16 %v7495, %v7491
        %v7848 = vpack.c.b16 %v7496, %v7492
        %v7849 = vpack.c.b16 %v7501, %v7497
        %v7850 = vpack.c.b16 %v7502, %v7498
        %v7851 = vpack.c.b16 %v7503, %v7499
        %v7852 = vpack.c.b16 %v7504, %v7500
        %v7853 = vpack.c.b16 %v7509, %v7505
        %v7854 = vpack.c.b16 %v7510, %v7506
        %v7855 = vpack.c.b16 %v7511, %v7507
        %v7856 = vpack.c.b16 %v7512, %v7508
        %v7857 = vpack.c.b16 %v7517, %v7513
        %v7858 = vpack.c.b16 %v7518, %v7514
        %v7859 = vpack.c.b16 %v7519, %v7515
        %v7860 = vpack.c.b16 %v7520, %v7516
        %v7861 = vpack.c.b16 %v7525, %v7521
        %v7862 = vpack.c.b16 %v7526, %v7522
        %v7863 = vpack.c.b16 %v7527, %v7523
        %v7864 = vpack.c.b16 %v7528, %v7524
        %v7865 = vpack.c.b16 %v7533, %v7529
        %v7866 = vpack.c.b16 %v7534, %v7530
        %v7867 = vpack.c.b16 %v7535, %v7531
        %v7868 = vpack.c.b16 %v7536, %v7532
        %v7869 = vpack.c.b16 %v7541, %v7537
        %v7870 = vpack.c.b16 %v7542, %v7538
        %v7871 = vpack.c.b16 %v7543, %v7539
        %v7872 = vpack.c.b16 %v7544, %v7540
        %v7873 = vpack.c.b16 %v7549, %v7545
        %v7874 = vpack.c.b16 %v7550, %v7546
        %v7875 = vpack.c.b16 %v7551, %v7547
        %v7876 = vpack.c.b16 %v7552, %v7548
        %v7877 = vpack.c.b16 %v7557, %v7553
        %v7878 = vpack.c.b16 %v7558, %v7554
        %v7879 = vpack.c.b16 %v7559, %v7555
        %v7880 = vpack.c.b16 %v7560, %v7556
        %v7881 = vpack.c.b16 %v7565, %v7561
        %v7882 = vpack.c.b16 %v7566, %v7562
        %v7883 = vpack.c.b16 %v7567, %v7563
        %v7884 = vpack.c.b16 %v7568, %v7564
        %v7885 = vpack.c.b16 %v7573, %v7569
        %v7886 = vpack.c.b16 %v7574, %v7570
        %v7887 = vpack.c.b16 %v7575, %v7571
        %v7888 = vpack.c.b16 %v7576, %v7572
        %v7889 = vpack.c.b16 %v7581, %v7577
        %v7890 = vpack.c.b16 %v7582, %v7578
        %v7891 = vpack.c.b16 %v7583, %v7579
        %v7892 = vpack.c.b16 %v7584, %v7580
        %v7893 = vpack.c.b16 %v7589, %v7585
        %v7894 = vpack.c.b16 %v7590, %v7586
        %v7895 = vpack.c.b16 %v7591, %v7587
        %v7896 = vpack.c.b16 %v7592, %v7588
        %v7897 = vpack.c.b16 %v7597, %v7593
        %v7898 = vpack.c.b16 %v7598, %v7594
        %v7899 = vpack.c.b16 %v7599, %v7595
        %v7900 = vpack.c.b16 %v7600, %v7596
        %v7901 = vpack.c.b16 %v7605, %v7601
        %v7902 = vpack.c.b16 %v7606, %v7602
        %v7903 = vpack.c.b16 %v7607, %v7603
        %v7904 = vpack.c.b16 %v7608, %v7604
        %v7905 = vpack.c.b16 %v7613, %v7609
        %v7906 = vpack.c.b16 %v7614, %v7610
        %v7907 = vpack.c.b16 %v7615, %v7611
        %v7908 = vpack.c.b16 %v7616, %v7612
        %v7909 = vpack.c.b16 %v7621, %v7617
        %v7910 = vpack.c.b16 %v7622, %v7618
        %v7911 = vpack.c.b16 %v7623, %v7619
        %v7912 = vpack.c.b16 %v7624, %v7620
        %v7913 = vpack.c.b16 %v7629, %v7625
        %v7914 = vpack.c.b16 %v7630, %v7626
        %v7915 = vpack.c.b16 %v7631, %v7627
        %v7916 = vpack.c.b16 %v7632, %v7628
        %v7917 = vpack.c.b16 %v7637, %v7633
        %v7918 = vpack.c.b16 %v7638, %v7634
        %v7919 = vpack.c.b16 %v7639, %v7635
        %v7920 = vpack.c.b16 %v7640, %v7636
        %v7921 = vpack.c.b16 %v7645, %v7641
        %v7922 = vpack.c.b16 %v7646, %v7642
        %v7923 = vpack.c.b16 %v7647, %v7643
        %v7924 = vpack.c.b16 %v7648, %v7644
        %v7925 = vpack.c.b16 %v7653, %v7649
        %v7926 = vpack.c.b16 %v7654, %v7650
        %v7927 = vpack.c.b16 %v7655, %v7651
        %v7928 = vpack.c.b16 %v7656, %v7652
        %v7929 = vpack.c.b16 %v7661, %v7657
        %v7930 = vpack.c.b16 %v7662, %v7658
        %v7931 = vpack.c.b16 %v7663, %v7659
        %v7932 = vpack.c.b16 %v7664, %v7660
        %v7933 = vpack.c.b16 %v7669, %v7665
        %v7934 = vpack.c.b16 %v7670, %v7666
        %v7935 = vpack.c.b16 %v7671, %v7667
        %v7936 = vpack.c.b16 %v7672, %v7668
        %v7937 = vpack.c.b16 %v7677, %v7673
        %v7938 = vpack.c.b16 %v7678, %v7674
        %v7939 = vpack.c.b16 %v7679, %v7675
        %v7940 = vpack.c.b16 %v7680, %v7676
        %v7941 = vpack.c.b16 %v7685, %v7681
        %v7942 = vpack.c.b16 %v7686, %v7682
        %v7943 = vpack.c.b16 %v7687, %v7683
        %v7944 = vpack.c.b16 %v7688, %v7684
        %v7945 = vpack.c.b16 %v7693, %v7689
        %v7946 = vpack.c.b16 %v7694, %v7690
        %v7947 = vpack.c.b16 %v7695, %v7691
        %v7948 = vpack.c.b16 %v7696, %v7692
        %v7949 = vpack.c.b16 %v7701, %v7697
        %v7950 = vpack.c.b16 %v7702, %v7698
        %v7951 = vpack.c.b16 %v7703, %v7699
        %v7952 = vpack.c.b16 %v7704, %v7700
        %v7953 = vpack.c.b16 %v7709, %v7705
        %v7954 = vpack.c.b16 %v7710, %v7706
        %v7955 = vpack.c.b16 %v7711, %v7707
        %v7956 = vpack.c.b16 %v7712, %v7708
        %v7957 = vpack.c.b16 %v7717, %v7713
        %v7958 = vpack.c.b16 %v7718, %v7714
        %v7959 = vpack.c.b16 %v7719, %v7715
        %v7960 = vpack.c.b16 %v7720, %v7716
        %v7961 = vpack.c.b16 %v7725, %v7721
        %v7962 = vpack.c.b16 %v7726, %v7722
        %v7963 = vpack.c.b16 %v7727, %v7723
        %v7964 = vpack.c.b16 %v7728, %v7724
        %v7965 = vpack.c.b16 %v7733, %v7729
        %v7966 = vpack.c.b16 %v7734, %v7730
        %v7967 = vpack.c.b16 %v7735, %v7731
        %v7968 = vpack.c.b16 %v7736, %v7732
        %v7969 = vpack.c.b16 %v7741, %v7737
        %v7970 = vpack.c.b16 %v7742, %v7738
        %v7971 = vpack.c.b16 %v7743, %v7739
        %v7972 = vpack.c.b16 %v7744, %v7740
        %v7973 = vpack.c.b16 %v7749, %v7745
        %v7974 = vpack.c.b16 %v7750, %v7746
        %v7975 = vpack.c.b16 %v7751, %v7747
        %v7976 = vpack.c.b16 %v7752, %v7748
        %v7977 = vpack.c.b16 %v7757, %v7753
        %v7978 = vpack.c.b16 %v7758, %v7754
        %v7979 = vpack.c.b16 %v7759, %v7755
        %v7980 = vpack.c.b16 %v7760, %v7756
        %v7981 = vpack.c.b16 %v7765, %v7761
        %v7982 = vpack.c.b16 %v7766, %v7762
        %v7983 = vpack.c.b16 %v7767, %v7763
        %v7984 = vpack.c.b16 %v7768, %v7764
        %v7985 = vpack.c.b16 %v7773, %v7769
        %v7986 = vpack.c.b16 %v7774, %v7770
        %v7987 = vpack.c.b16 %v7775, %v7771
        %v7988 = vpack.c.b16 %v7776, %v7772
        %v7989 = vpack.c.b16 %v7781, %v7777
        %v7990 = vpack.c.b16 %v7782, %v7778
        %v7991 = vpack.c.b16 %v7783, %v7779
        %v7992 = vpack.c.b16 %v7784, %v7780
        %v7993 = vpack.c.b16 %v7789, %v7785
        %v7994 = vpack.c.b16 %v7790, %v7786
        %v7995 = vpack.c.b16 %v7791, %v7787
        %v7996 = vpack.c.b16 %v7792, %v7788
        %v7997 = vpack.c.b16 %v7797, %v7793
        %v7998 = vpack.c.b16 %v7798, %v7794
        %v7999 = vpack.c.b16 %v7799, %v7795
        %v8000 = vpack.c.b16 %v7800, %v7796
        %v8001 = vpack.c.b16 %v7805, %v7801
        %v8002 = vpack.c.b16 %v7806, %v7802
        %v8003 = vpack.c.b16 %v7807, %v7803
        %v8004 = vpack.c.b16 %v7808, %v7804
        %v8005 = vpack.c.b16 %v7813, %v7809
        %v8006 = vpack.c.b16 %v7814, %v7810
        %v8007 = vpack.c.b16 %v7815, %v7811
        %v8008 = vpack.c.b16 %v7816, %v7812
        %8201 = vmatpush.bf16.msra.mxu0 %v7845
        %8202 = vmatpush.bf16.msra.mxu0 %v7841
        %8203 = vmatpush.bf16.msra.mxu0 %v7837
        %8204 = vmatpush.bf16.msra.mxu0 %v7833
        %8205 = vmatpush.bf16.msra.mxu0 %v7829
        %8206 = vmatpush.bf16.msra.mxu0 %v7825
        %8207 = vmatpush.bf16.msra.mxu0 %v7821
        %8208 = vmatpush.bf16.msra.mxu0 %v7817
        %8209 = vmatmul.bf16.gmra.mxu0 %v7194
        %v8210 = vpop.f32.mrf.mxu0
        %v8211 = vadd.f32 0.0, %v8210
        %v8212 = vpop.f32.mrf.mxu0
        %8213 = vdwg.mxu0
        %8214 = vmatpush.bf16.msra.mxu0 %v7877
        %8215 = vmatpush.bf16.msra.mxu0 %v7873
        %8216 = vmatpush.bf16.msra.mxu0 %v7869
        %8217 = vmatpush.bf16.msra.mxu0 %v7865
        %8218 = vmatpush.bf16.msra.mxu0 %v7861
        %8219 = vmatpush.bf16.msra.mxu0 %v7857
        %8220 = vmatpush.bf16.msra.mxu0 %v7853
        %8221 = vmatpush.bf16.msra.mxu0 %v7849
        %8222 = vmatmul.bf16.gmra.mxu0 %v7202
        %v8223 = vpop.f32.mrf.mxu0
        %v8224 = vadd.f32 %v8211, %v8223
        %v8225 = vpop.f32.mrf.mxu0
        %8226 = vdwg.mxu0
        %8227 = vmatpush.bf16.msra.mxu0 %v7909
        %8228 = vmatpush.bf16.msra.mxu0 %v7905
        %8229 = vmatpush.bf16.msra.mxu0 %v7901
        %8230 = vmatpush.bf16.msra.mxu0 %v7897
        %8231 = vmatpush.bf16.msra.mxu0 %v7893
        %8232 = vmatpush.bf16.msra.mxu0 %v7889
        %8233 = vmatpush.bf16.msra.mxu0 %v7885
        %8234 = vmatpush.bf16.msra.mxu0 %v7881
        %8235 = vmatmul.bf16.gmra.mxu0 %v7210
        %v8236 = vpop.f32.mrf.mxu0
        %v8237 = vadd.f32 %v8224, %v8236
        %v8238 = vpop.f32.mrf.mxu0
        %8239 = vdwg.mxu0
        %8240 = vmatpush.bf16.msra.mxu0 %v7941
        %8241 = vmatpush.bf16.msra.mxu0 %v7937
        %8242 = vmatpush.bf16.msra.mxu0 %v7933
        %8243 = vmatpush.bf16.msra.mxu0 %v7929
        %8244 = vmatpush.bf16.msra.mxu0 %v7925
        %8245 = vmatpush.bf16.msra.mxu0 %v7921
        %8246 = vmatpush.bf16.msra.mxu0 %v7917
        %8247 = vmatpush.bf16.msra.mxu0 %v7913
        %8248 = vmatmul.bf16.gmra.mxu0 %v7218
        %v8249 = vpop.f32.mrf.mxu0
        %v8250 = vadd.f32 %v8237, %v8249
        %v8251 = vpop.f32.mrf.mxu0
        %8252 = vdwg.mxu0
        %8253 = vmatpush.bf16.msra.mxu0 %v7973
        %8254 = vmatpush.bf16.msra.mxu0 %v7969
        %8255 = vmatpush.bf16.msra.mxu0 %v7965
        %8256 = vmatpush.bf16.msra.mxu0 %v7961
        %8257 = vmatpush.bf16.msra.mxu0 %v7957
        %8258 = vmatpush.bf16.msra.mxu0 %v7953
        %8259 = vmatpush.bf16.msra.mxu0 %v7949
        %8260 = vmatpush.bf16.msra.mxu0 %v7945
        %8261 = vmatmul.bf16.gmra.mxu0 %v7226
        %v8262 = vpop.f32.mrf.mxu0
        %v8263 = vadd.f32 %v8250, %v8262
        %v8264 = vpop.f32.mrf.mxu0
        %8265 = vdwg.mxu0
        %8266 = vmatpush.bf16.msra.mxu0 %v8005
        %8267 = vmatpush.bf16.msra.mxu0 %v8001
        %8268 = vmatpush.bf16.msra.mxu0 %v7997
        %8269 = vmatpush.bf16.msra.mxu0 %v7993
        %8270 = vmatpush.bf16.msra.mxu0 %v7989
        %8271 = vmatpush.bf16.msra.mxu0 %v7985
        %8272 = vmatpush.bf16.msra.mxu0 %v7981
        %8273 = vmatpush.bf16.msra.mxu0 %v7977
        %8274 = vmatmul.bf16.gmra.mxu0 %v7234
        %v8275 = vpop.f32.mrf.mxu0
        %v8276 = vadd.f32 %v8263, %v8275
        %v8277 = vpop.f32.mrf.mxu0
        %8278 = vdwg.mxu0
        %8279 = vmatpush.bf16.msra.mxu0 %v7846
        %8280 = vmatpush.bf16.msra.mxu0 %v7842
        %8281 = vmatpush.bf16.msra.mxu0 %v7838
        %8282 = vmatpush.bf16.msra.mxu0 %v7834
        %8283 = vmatpush.bf16.msra.mxu0 %v7830
        %8284 = vmatpush.bf16.msra.mxu0 %v7826
        %8285 = vmatpush.bf16.msra.mxu0 %v7822
        %8286 = vmatpush.bf16.msra.mxu0 %v7818
        %8287 = vmatmul.bf16.gmra.mxu0 %v7194
        %v8288 = vpop.f32.mrf.mxu0
        %v8289 = vadd.f32 0.0, %v8288
        %v8290 = vpop.f32.mrf.mxu0
        %8291 = vdwg.mxu0
        %8292 = vmatpush.bf16.msra.mxu0 %v7878
        %8293 = vmatpush.bf16.msra.mxu0 %v7874
        %8294 = vmatpush.bf16.msra.mxu0 %v7870
        %8295 = vmatpush.bf16.msra.mxu0 %v7866
        %8296 = vmatpush.bf16.msra.mxu0 %v7862
        %8297 = vmatpush.bf16.msra.mxu0 %v7858
        %8298 = vmatpush.bf16.msra.mxu0 %v7854
        %8299 = vmatpush.bf16.msra.mxu0 %v7850
        %8300 = vmatmul.bf16.gmra.mxu0 %v7202
        %v8301 = vpop.f32.mrf.mxu0
        %v8302 = vadd.f32 %v8289, %v8301
        %v8303 = vpop.f32.mrf.mxu0
        %8304 = vdwg.mxu0
        %8305 = vmatpush.bf16.msra.mxu0 %v7910
        %8306 = vmatpush.bf16.msra.mxu0 %v7906
        %8307 = vmatpush.bf16.msra.mxu0 %v7902
        %8308 = vmatpush.bf16.msra.mxu0 %v7898
        %8309 = vmatpush.bf16.msra.mxu0 %v7894
        %8310 = vmatpush.bf16.msra.mxu0 %v7890
        %8311 = vmatpush.bf16.msra.mxu0 %v7886
        %8312 = vmatpush.bf16.msra.mxu0 %v7882
        %8313 = vmatmul.bf16.gmra.mxu0 %v7210
        %v8314 = vpop.f32.mrf.mxu0
        %v8315 = vadd.f32 %v8302, %v8314
        %v8316 = vpop.f32.mrf.mxu0
        %8317 = vdwg.mxu0
        %8318 = vmatpush.bf16.msra.mxu0 %v7942
        %8319 = vmatpush.bf16.msra.mxu0 %v7938
        %8320 = vmatpush.bf16.msra.mxu0 %v7934
        %8321 = vmatpush.bf16.msra.mxu0 %v7930
        %8322 = vmatpush.bf16.msra.mxu0 %v7926
        %8323 = vmatpush.bf16.msra.mxu0 %v7922
        %8324 = vmatpush.bf16.msra.mxu0 %v7918
        %8325 = vmatpush.bf16.msra.mxu0 %v7914
        %8326 = vmatmul.bf16.gmra.mxu0 %v7218
        %v8327 = vpop.f32.mrf.mxu0
        %v8328 = vadd.f32 %v8315, %v8327
        %v8329 = vpop.f32.mrf.mxu0
        %8330 = vdwg.mxu0
        %8331 = vmatpush.bf16.msra.mxu0 %v7974
        %8332 = vmatpush.bf16.msra.mxu0 %v7970
        %8333 = vmatpush.bf16.msra.mxu0 %v7966
        %8334 = vmatpush.bf16.msra.mxu0 %v7962
        %8335 = vmatpush.bf16.msra.mxu0 %v7958
        %8336 = vmatpush.bf16.msra.mxu0 %v7954
        %8337 = vmatpush.bf16.msra.mxu0 %v7950
        %8338 = vmatpush.bf16.msra.mxu0 %v7946
        %8339 = vmatmul.bf16.gmra.mxu0 %v7226
        %v8340 = vpop.f32.mrf.mxu0
        %v8341 = vadd.f32 %v8328, %v8340
        %v8342 = vpop.f32.mrf.mxu0
        %8343 = vdwg.mxu0
        %8344 = vmatpush.bf16.msra.mxu0 %v8006
        %8345 = vmatpush.bf16.msra.mxu0 %v8002
        %8346 = vmatpush.bf16.msra.mxu0 %v7998
        %8347 = vmatpush.bf16.msra.mxu0 %v7994
        %8348 = vmatpush.bf16.msra.mxu0 %v7990
        %8349 = vmatpush.bf16.msra.mxu0 %v7986
        %8350 = vmatpush.bf16.msra.mxu0 %v7982
        %8351 = vmatpush.bf16.msra.mxu0 %v7978
        %8352 = vmatmul.bf16.gmra.mxu0 %v7234
        %v8353 = vpop.f32.mrf.mxu0
        %v8354 = vadd.f32 %v8341, %v8353
        %v8355 = vpop.f32.mrf.mxu0
        %8356 = vdwg.mxu0
        %8357 = vmatpush.bf16.msra.mxu0 %v7847
        %8358 = vmatpush.bf16.msra.mxu0 %v7843
        %8359 = vmatpush.bf16.msra.mxu0 %v7839
        %8360 = vmatpush.bf16.msra.mxu0 %v7835
        %8361 = vmatpush.bf16.msra.mxu0 %v7831
        %8362 = vmatpush.bf16.msra.mxu0 %v7827
        %8363 = vmatpush.bf16.msra.mxu0 %v7823
        %8364 = vmatpush.bf16.msra.mxu0 %v7819
        %8365 = vmatmul.bf16.gmra.mxu0 %v7194
        %v8366 = vpop.f32.mrf.mxu0
        %v8367 = vadd.f32 0.0, %v8366
        %v8368 = vpop.f32.mrf.mxu0
        %8369 = vdwg.mxu0
        %8370 = vmatpush.bf16.msra.mxu0 %v7879
        %8371 = vmatpush.bf16.msra.mxu0 %v7875
        %8372 = vmatpush.bf16.msra.mxu0 %v7871
        %8373 = vmatpush.bf16.msra.mxu0 %v7867
        %8374 = vmatpush.bf16.msra.mxu0 %v7863
        %8375 = vmatpush.bf16.msra.mxu0 %v7859
        %8376 = vmatpush.bf16.msra.mxu0 %v7855
        %8377 = vmatpush.bf16.msra.mxu0 %v7851
        %8378 = vmatmul.bf16.gmra.mxu0 %v7202
        %v8379 = vpop.f32.mrf.mxu0
        %v8380 = vadd.f32 %v8367, %v8379
        %v8381 = vpop.f32.mrf.mxu0
        %8382 = vdwg.mxu0
        %8383 = vmatpush.bf16.msra.mxu0 %v7911
        %8384 = vmatpush.bf16.msra.mxu0 %v7907
        %8385 = vmatpush.bf16.msra.mxu0 %v7903
        %8386 = vmatpush.bf16.msra.mxu0 %v7899
        %8387 = vmatpush.bf16.msra.mxu0 %v7895
        %8388 = vmatpush.bf16.msra.mxu0 %v7891
        %8389 = vmatpush.bf16.msra.mxu0 %v7887
        %8390 = vmatpush.bf16.msra.mxu0 %v7883
        %8391 = vmatmul.bf16.gmra.mxu0 %v7210
        %v8392 = vpop.f32.mrf.mxu0
        %v8393 = vadd.f32 %v8380, %v8392
        %v8394 = vpop.f32.mrf.mxu0
        %8395 = vdwg.mxu0
        %8396 = vmatpush.bf16.msra.mxu0 %v7943
        %8397 = vmatpush.bf16.msra.mxu0 %v7939
        %8398 = vmatpush.bf16.msra.mxu0 %v7935
        %8399 = vmatpush.bf16.msra.mxu0 %v7931
        %8400 = vmatpush.bf16.msra.mxu0 %v7927
        %8401 = vmatpush.bf16.msra.mxu0 %v7923
        %8402 = vmatpush.bf16.msra.mxu0 %v7919
        %8403 = vmatpush.bf16.msra.mxu0 %v7915
        %8404 = vmatmul.bf16.gmra.mxu0 %v7218
        %v8405 = vpop.f32.mrf.mxu0
        %v8406 = vadd.f32 %v8393, %v8405
        %v8407 = vpop.f32.mrf.mxu0
        %8408 = vdwg.mxu0
        %8409 = vmatpush.bf16.msra.mxu0 %v7975
        %8410 = vmatpush.bf16.msra.mxu0 %v7971
        %8411 = vmatpush.bf16.msra.mxu0 %v7967
        %8412 = vmatpush.bf16.msra.mxu0 %v7963
        %8413 = vmatpush.bf16.msra.mxu0 %v7959
        %8414 = vmatpush.bf16.msra.mxu0 %v7955
        %8415 = vmatpush.bf16.msra.mxu0 %v7951
        %8416 = vmatpush.bf16.msra.mxu0 %v7947
        %8417 = vmatmul.bf16.gmra.mxu0 %v7226
        %v8418 = vpop.f32.mrf.mxu0
        %v8419 = vadd.f32 %v8406, %v8418
        %v8420 = vpop.f32.mrf.mxu0
        %8421 = vdwg.mxu0
        %8422 = vmatpush.bf16.msra.mxu0 %v8007
        %8423 = vmatpush.bf16.msra.mxu0 %v8003
        %8424 = vmatpush.bf16.msra.mxu0 %v7999
        %8425 = vmatpush.bf16.msra.mxu0 %v7995
        %8426 = vmatpush.bf16.msra.mxu0 %v7991
        %8427 = vmatpush.bf16.msra.mxu0 %v7987
        %8428 = vmatpush.bf16.msra.mxu0 %v7983
        %8429 = vmatpush.bf16.msra.mxu0 %v7979
        %8430 = vmatmul.bf16.gmra.mxu0 %v7234
        %v8431 = vpop.f32.mrf.mxu0
        %v8432 = vadd.f32 %v8419, %v8431
        %v8433 = vpop.f32.mrf.mxu0
        %8434 = vdwg.mxu0
        %8435 = vmatpush.bf16.msra.mxu0 %v7848
        %8436 = vmatpush.bf16.msra.mxu0 %v7844
        %8437 = vmatpush.bf16.msra.mxu0 %v7840
        %8438 = vmatpush.bf16.msra.mxu0 %v7836
        %8439 = vmatpush.bf16.msra.mxu0 %v7832
        %8440 = vmatpush.bf16.msra.mxu0 %v7828
        %8441 = vmatpush.bf16.msra.mxu0 %v7824
        %8442 = vmatpush.bf16.msra.mxu0 %v7820
        %8443 = vmatmul.bf16.gmra.mxu0 %v7194
        %v8444 = vpop.f32.mrf.mxu0
        %v8445 = vadd.f32 0.0, %v8444
        %v8446 = vpop.f32.mrf.mxu0
        %8447 = vdwg.mxu0
        %8448 = vmatpush.bf16.msra.mxu0 %v7880
        %8449 = vmatpush.bf16.msra.mxu0 %v7876
        %8450 = vmatpush.bf16.msra.mxu0 %v7872
        %8451 = vmatpush.bf16.msra.mxu0 %v7868
        %8452 = vmatpush.bf16.msra.mxu0 %v7864
        %8453 = vmatpush.bf16.msra.mxu0 %v7860
        %8454 = vmatpush.bf16.msra.mxu0 %v7856
        %8455 = vmatpush.bf16.msra.mxu0 %v7852
        %8456 = vmatmul.bf16.gmra.mxu0 %v7202
        %v8457 = vpop.f32.mrf.mxu0
        %v8458 = vadd.f32 %v8445, %v8457
        %v8459 = vpop.f32.mrf.mxu0
        %8460 = vdwg.mxu0
        %8461 = vmatpush.bf16.msra.mxu0 %v7912
        %8462 = vmatpush.bf16.msra.mxu0 %v7908
        %8463 = vmatpush.bf16.msra.mxu0 %v7904
        %8464 = vmatpush.bf16.msra.mxu0 %v7900
        %8465 = vmatpush.bf16.msra.mxu0 %v7896
        %8466 = vmatpush.bf16.msra.mxu0 %v7892
        %8467 = vmatpush.bf16.msra.mxu0 %v7888
        %8468 = vmatpush.bf16.msra.mxu0 %v7884
        %8469 = vmatmul.bf16.gmra.mxu0 %v7210
        %v8470 = vpop.f32.mrf.mxu0
        %v8471 = vadd.f32 %v8458, %v8470
        %v8472 = vpop.f32.mrf.mxu0
        %8473 = vdwg.mxu0
        %8474 = vmatpush.bf16.msra.mxu0 %v7944
        %8475 = vmatpush.bf16.msra.mxu0 %v7940
        %8476 = vmatpush.bf16.msra.mxu0 %v7936
        %8477 = vmatpush.bf16.msra.mxu0 %v7932
        %8478 = vmatpush.bf16.msra.mxu0 %v7928
        %8479 = vmatpush.bf16.msra.mxu0 %v7924
        %8480 = vmatpush.bf16.msra.mxu0 %v7920
        %8481 = vmatpush.bf16.msra.mxu0 %v7916
        %8482 = vmatmul.bf16.gmra.mxu0 %v7218
        %v8483 = vpop.f32.mrf.mxu0
        %v8484 = vadd.f32 %v8471, %v8483
        %v8485 = vpop.f32.mrf.mxu0
        %8486 = vdwg.mxu0
        %8487 = vmatpush.bf16.msra.mxu0 %v7976
        %8488 = vmatpush.bf16.msra.mxu0 %v7972
        %8489 = vmatpush.bf16.msra.mxu0 %v7968
        %8490 = vmatpush.bf16.msra.mxu0 %v7964
        %8491 = vmatpush.bf16.msra.mxu0 %v7960
        %8492 = vmatpush.bf16.msra.mxu0 %v7956
        %8493 = vmatpush.bf16.msra.mxu0 %v7952
        %8494 = vmatpush.bf16.msra.mxu0 %v7948
        %8495 = vmatmul.bf16.gmra.mxu0 %v7226
        %v8496 = vpop.f32.mrf.mxu0
        %v8497 = vadd.f32 %v8484, %v8496
        %v8498 = vpop.f32.mrf.mxu0
        %8499 = vdwg.mxu0
        %8500 = vmatpush.bf16.msra.mxu0 %v8008
        %8501 = vmatpush.bf16.msra.mxu0 %v8004
        %8502 = vmatpush.bf16.msra.mxu0 %v8000
        %8503 = vmatpush.bf16.msra.mxu0 %v7996
        %8504 = vmatpush.bf16.msra.mxu0 %v7992
        %8505 = vmatpush.bf16.msra.mxu0 %v7988
        %8506 = vmatpush.bf16.msra.mxu0 %v7984
        %8507 = vmatpush.bf16.msra.mxu0 %v7980
        %8508 = vmatmul.bf16.gmra.mxu0 %v7234
        %v8509 = vpop.f32.mrf.mxu0
        %v8510 = vadd.f32 %v8497, %v8509
        %v8511 = vpop.f32.mrf.mxu0
        %8512 = vdwg.mxu0
        %v8513 = vadd.f32 %v6972, %v8276
        %v8514 = vadd.f32 %v6973, %v8354
        %v8515 = vadd.f32 %v6974, %v8432
        %v8516 = vadd.f32 %v6975, %v8510
        %v8517 = vld [vmem:[#allocation2] sm:$0xf0]
        %v8518 = vld [vmem:[#allocation2 + $0x8] sm:$0xf0]
        %v8519 = vld [vmem:[#allocation2 + $0x10] sm:$0xf0]
        %v8520 = vld [vmem:[#allocation2 + $0x18] sm:$0xf0]
        %v8521 = vld [vmem:[#allocation2 + $0x20] sm:$0xf0]
        %v8522 = vld [vmem:[#allocation2 + $0x28] sm:$0xf0]
        %v8523 = vld [vmem:[#allocation2 + $0x30] sm:$0xf]
        %v8524 = vld [vmem:[#allocation2 + $0x38] sm:$0xf]
        %v8525 = vld [vmem:[#allocation2 + $0x40] sm:$0xf]
        %v8526 = vld [vmem:[#allocation2 + $0x48] sm:$0xf]
        %v8527 = vld [vmem:[#allocation2 + $0x50] sm:$0xf]
        %v8528 = vld [vmem:[#allocation2 + $0x58] sm:$0xf]
        %v8529 = vpack.c.bf16 %v8523, %v8517
        %v8530 = vpack.c.bf16 %v8524, %v8518
        %v8531 = vpack.c.bf16 %v8525, %v8519
        %v8532 = vpack.c.bf16 %v8526, %v8520
        %v8533 = vpack.c.bf16 %v8527, %v8521
        %v8534 = vpack.c.bf16 %v8528, %v8522
        %s8535 = scalar_lea.vmem [#allocation9], 6144
        %v8536 = vld [vmem:[%s8535] sm:$0xff]
        %v8537 = vld [vmem:[%s8535 + $0x8] sm:$0xff]
        %v8538 = vld [vmem:[%s8535 + $0x10] sm:$0xff]
        %v8539 = vld [vmem:[%s8535 + $0x18] sm:$0xff]
        %v8540 = vld [vmem:[%s8535 + $0x20] sm:$0xff]
        %v8541 = vld [vmem:[%s8535 + $0x28] sm:$0xff]
        %v8542 = vld [vmem:[%s8535 + $0x30] sm:$0xff]
        %v8543 = vld [vmem:[%s8535 + $0x38] sm:$0xff]
        %v8544 = vld [vmem:[%s8535 + $0x40] sm:$0xff]
        %v8545 = vld [vmem:[%s8535 + $0x48] sm:$0xff]
        %v8546 = vld [vmem:[%s8535 + $0x50] sm:$0xff]
        %v8547 = vld [vmem:[%s8535 + $0x58] sm:$0xff]
        %v8548 = vld [vmem:[%s8535 + $0x60] sm:$0xff]
        %v8549 = vld [vmem:[%s8535 + $0x68] sm:$0xff]
        %v8550 = vld [vmem:[%s8535 + $0x70] sm:$0xff]
        %v8551 = vld [vmem:[%s8535 + $0x78] sm:$0xff]
        %v8552 = vld [vmem:[%s8535 + $0x80] sm:$0xff]
        %v8553 = vld [vmem:[%s8535 + $0x88] sm:$0xff]
        %v8554 = vld [vmem:[%s8535 + $0x90] sm:$0xff]
        %v8555 = vld [vmem:[%s8535 + $0x98] sm:$0xff]
        %v8556 = vld [vmem:[%s8535 + $0xa0] sm:$0xff]
        %v8557 = vld [vmem:[%s8535 + $0xa8] sm:$0xff]
        %v8558 = vld [vmem:[%s8535 + $0xb0] sm:$0xff]
        %v8559 = vld [vmem:[%s8535 + $0xb8] sm:$0xff]
        %v8560 = vld [vmem:[%s8535 + $0xc0] sm:$0xff]
        %v8561 = vld [vmem:[%s8535 + $0xc8] sm:$0xff]
        %v8562 = vld [vmem:[%s8535 + $0xd0] sm:$0xff]
        %v8563 = vld [vmem:[%s8535 + $0xd8] sm:$0xff]
        %v8564 = vld [vmem:[%s8535 + $0xe0] sm:$0xff]
        %v8565 = vld [vmem:[%s8535 + $0xe8] sm:$0xff]
        %v8566 = vld [vmem:[%s8535 + $0xf0] sm:$0xff]
        %v8567 = vld [vmem:[%s8535 + $0xf8] sm:$0xff]
        %v8568 = vld [vmem:[%s8535 + $0x100] sm:$0xff]
        %v8569 = vld [vmem:[%s8535 + $0x108] sm:$0xff]
        %v8570 = vld [vmem:[%s8535 + $0x110] sm:$0xff]
        %v8571 = vld [vmem:[%s8535 + $0x118] sm:$0xff]
        %v8572 = vld [vmem:[%s8535 + $0x120] sm:$0xff]
        %v8573 = vld [vmem:[%s8535 + $0x128] sm:$0xff]
        %v8574 = vld [vmem:[%s8535 + $0x130] sm:$0xff]
        %v8575 = vld [vmem:[%s8535 + $0x138] sm:$0xff]
        %v8576 = vld [vmem:[%s8535 + $0x140] sm:$0xff]
        %v8577 = vld [vmem:[%s8535 + $0x148] sm:$0xff]
        %v8578 = vld [vmem:[%s8535 + $0x150] sm:$0xff]
        %v8579 = vld [vmem:[%s8535 + $0x158] sm:$0xff]
        %v8580 = vld [vmem:[%s8535 + $0x160] sm:$0xff]
        %v8581 = vld [vmem:[%s8535 + $0x168] sm:$0xff]
        %v8582 = vld [vmem:[%s8535 + $0x170] sm:$0xff]
        %v8583 = vld [vmem:[%s8535 + $0x178] sm:$0xff]
        %v8584 = vld [vmem:[%s8535 + $0x180] sm:$0xff]
        %v8585 = vld [vmem:[%s8535 + $0x188] sm:$0xff]
        %v8586 = vld [vmem:[%s8535 + $0x190] sm:$0xff]
        %v8587 = vld [vmem:[%s8535 + $0x198] sm:$0xff]
        %v8588 = vld [vmem:[%s8535 + $0x1a0] sm:$0xff]
        %v8589 = vld [vmem:[%s8535 + $0x1a8] sm:$0xff]
        %v8590 = vld [vmem:[%s8535 + $0x1b0] sm:$0xff]
        %v8591 = vld [vmem:[%s8535 + $0x1b8] sm:$0xff]
        %v8592 = vld [vmem:[%s8535 + $0x1c0] sm:$0xff]
        %v8593 = vld [vmem:[%s8535 + $0x1c8] sm:$0xff]
        %v8594 = vld [vmem:[%s8535 + $0x1d0] sm:$0xff]
        %v8595 = vld [vmem:[%s8535 + $0x1d8] sm:$0xff]
        %v8596 = vld [vmem:[%s8535 + $0x1e0] sm:$0xff]
        %v8597 = vld [vmem:[%s8535 + $0x1e8] sm:$0xff]
        %v8598 = vld [vmem:[%s8535 + $0x1f0] sm:$0xff]
        %v8599 = vld [vmem:[%s8535 + $0x1f8] sm:$0xff]
        %v8600 = vld [vmem:[%s8535 + $0x200] sm:$0xff]
        %v8601 = vld [vmem:[%s8535 + $0x208] sm:$0xff]
        %v8602 = vld [vmem:[%s8535 + $0x210] sm:$0xff]
        %v8603 = vld [vmem:[%s8535 + $0x218] sm:$0xff]
        %v8604 = vld [vmem:[%s8535 + $0x220] sm:$0xff]
        %v8605 = vld [vmem:[%s8535 + $0x228] sm:$0xff]
        %v8606 = vld [vmem:[%s8535 + $0x230] sm:$0xff]
        %v8607 = vld [vmem:[%s8535 + $0x238] sm:$0xff]
        %v8608 = vld [vmem:[%s8535 + $0x240] sm:$0xff]
        %v8609 = vld [vmem:[%s8535 + $0x248] sm:$0xff]
        %v8610 = vld [vmem:[%s8535 + $0x250] sm:$0xff]
        %v8611 = vld [vmem:[%s8535 + $0x258] sm:$0xff]
        %v8612 = vld [vmem:[%s8535 + $0x260] sm:$0xff]
        %v8613 = vld [vmem:[%s8535 + $0x268] sm:$0xff]
        %v8614 = vld [vmem:[%s8535 + $0x270] sm:$0xff]
        %v8615 = vld [vmem:[%s8535 + $0x278] sm:$0xff]
        %v8616 = vld [vmem:[%s8535 + $0x280] sm:$0xff]
        %v8617 = vld [vmem:[%s8535 + $0x288] sm:$0xff]
        %v8618 = vld [vmem:[%s8535 + $0x290] sm:$0xff]
        %v8619 = vld [vmem:[%s8535 + $0x298] sm:$0xff]
        %v8620 = vld [vmem:[%s8535 + $0x2a0] sm:$0xff]
        %v8621 = vld [vmem:[%s8535 + $0x2a8] sm:$0xff]
        %v8622 = vld [vmem:[%s8535 + $0x2b0] sm:$0xff]
        %v8623 = vld [vmem:[%s8535 + $0x2b8] sm:$0xff]
        %v8624 = vld [vmem:[%s8535 + $0x2c0] sm:$0xff]
        %v8625 = vld [vmem:[%s8535 + $0x2c8] sm:$0xff]
        %v8626 = vld [vmem:[%s8535 + $0x2d0] sm:$0xff]
        %v8627 = vld [vmem:[%s8535 + $0x2d8] sm:$0xff]
        %v8628 = vld [vmem:[%s8535 + $0x2e0] sm:$0xff]
        %v8629 = vld [vmem:[%s8535 + $0x2e8] sm:$0xff]
        %v8630 = vld [vmem:[%s8535 + $0x2f0] sm:$0xff]
        %v8631 = vld [vmem:[%s8535 + $0x2f8] sm:$0xff]
        %v8632 = vld [vmem:[%s8535 + $0x300] sm:$0xff]
        %v8633 = vld [vmem:[%s8535 + $0x308] sm:$0xff]
        %v8634 = vld [vmem:[%s8535 + $0x310] sm:$0xff]
        %v8635 = vld [vmem:[%s8535 + $0x318] sm:$0xff]
        %v8636 = vld [vmem:[%s8535 + $0x320] sm:$0xff]
        %v8637 = vld [vmem:[%s8535 + $0x328] sm:$0xff]
        %v8638 = vld [vmem:[%s8535 + $0x330] sm:$0xff]
        %v8639 = vld [vmem:[%s8535 + $0x338] sm:$0xff]
        %v8640 = vld [vmem:[%s8535 + $0x340] sm:$0xff]
        %v8641 = vld [vmem:[%s8535 + $0x348] sm:$0xff]
        %v8642 = vld [vmem:[%s8535 + $0x350] sm:$0xff]
        %v8643 = vld [vmem:[%s8535 + $0x358] sm:$0xff]
        %v8644 = vld [vmem:[%s8535 + $0x360] sm:$0xff]
        %v8645 = vld [vmem:[%s8535 + $0x368] sm:$0xff]
        %v8646 = vld [vmem:[%s8535 + $0x370] sm:$0xff]
        %v8647 = vld [vmem:[%s8535 + $0x378] sm:$0xff]
        %v8648 = vld [vmem:[%s8535 + $0x380] sm:$0xff]
        %v8649 = vld [vmem:[%s8535 + $0x388] sm:$0xff]
        %v8650 = vld [vmem:[%s8535 + $0x390] sm:$0xff]
        %v8651 = vld [vmem:[%s8535 + $0x398] sm:$0xff]
        %v8652 = vld [vmem:[%s8535 + $0x3a0] sm:$0xff]
        %v8653 = vld [vmem:[%s8535 + $0x3a8] sm:$0xff]
        %v8654 = vld [vmem:[%s8535 + $0x3b0] sm:$0xff]
        %v8655 = vld [vmem:[%s8535 + $0x3b8] sm:$0xff]
        %v8656 = vld [vmem:[%s8535 + $0x3c0] sm:$0xff]
        %v8657 = vld [vmem:[%s8535 + $0x3c8] sm:$0xff]
        %v8658 = vld [vmem:[%s8535 + $0x3d0] sm:$0xff]
        %v8659 = vld [vmem:[%s8535 + $0x3d8] sm:$0xff]
        %v8660 = vld [vmem:[%s8535 + $0x3e0] sm:$0xff]
        %v8661 = vld [vmem:[%s8535 + $0x3e8] sm:$0xff]
        %v8662 = vld [vmem:[%s8535 + $0x3f0] sm:$0xff]
        %v8663 = vld [vmem:[%s8535 + $0x3f8] sm:$0xff]
        %v8664 = vld [vmem:[%s8535 + $0x400] sm:$0xff]
        %v8665 = vld [vmem:[%s8535 + $0x408] sm:$0xff]
        %v8666 = vld [vmem:[%s8535 + $0x410] sm:$0xff]
        %v8667 = vld [vmem:[%s8535 + $0x418] sm:$0xff]
        %v8668 = vld [vmem:[%s8535 + $0x420] sm:$0xff]
        %v8669 = vld [vmem:[%s8535 + $0x428] sm:$0xff]
        %v8670 = vld [vmem:[%s8535 + $0x430] sm:$0xff]
        %v8671 = vld [vmem:[%s8535 + $0x438] sm:$0xff]
        %v8672 = vld [vmem:[%s8535 + $0x440] sm:$0xff]
        %v8673 = vld [vmem:[%s8535 + $0x448] sm:$0xff]
        %v8674 = vld [vmem:[%s8535 + $0x450] sm:$0xff]
        %v8675 = vld [vmem:[%s8535 + $0x458] sm:$0xff]
        %v8676 = vld [vmem:[%s8535 + $0x460] sm:$0xff]
        %v8677 = vld [vmem:[%s8535 + $0x468] sm:$0xff]
        %v8678 = vld [vmem:[%s8535 + $0x470] sm:$0xff]
        %v8679 = vld [vmem:[%s8535 + $0x478] sm:$0xff]
        %v8680 = vld [vmem:[%s8535 + $0x480] sm:$0xff]
        %v8681 = vld [vmem:[%s8535 + $0x488] sm:$0xff]
        %v8682 = vld [vmem:[%s8535 + $0x490] sm:$0xff]
        %v8683 = vld [vmem:[%s8535 + $0x498] sm:$0xff]
        %v8684 = vld [vmem:[%s8535 + $0x4a0] sm:$0xff]
        %v8685 = vld [vmem:[%s8535 + $0x4a8] sm:$0xff]
        %v8686 = vld [vmem:[%s8535 + $0x4b0] sm:$0xff]
        %v8687 = vld [vmem:[%s8535 + $0x4b8] sm:$0xff]
        %v8688 = vld [vmem:[%s8535 + $0x4c0] sm:$0xff]
        %v8689 = vld [vmem:[%s8535 + $0x4c8] sm:$0xff]
        %v8690 = vld [vmem:[%s8535 + $0x4d0] sm:$0xff]
        %v8691 = vld [vmem:[%s8535 + $0x4d8] sm:$0xff]
        %v8692 = vld [vmem:[%s8535 + $0x4e0] sm:$0xff]
        %v8693 = vld [vmem:[%s8535 + $0x4e8] sm:$0xff]
        %v8694 = vld [vmem:[%s8535 + $0x4f0] sm:$0xff]
        %v8695 = vld [vmem:[%s8535 + $0x4f8] sm:$0xff]
        %v8696 = vld [vmem:[%s8535 + $0x500] sm:$0xff]
        %v8697 = vld [vmem:[%s8535 + $0x508] sm:$0xff]
        %v8698 = vld [vmem:[%s8535 + $0x510] sm:$0xff]
        %v8699 = vld [vmem:[%s8535 + $0x518] sm:$0xff]
        %v8700 = vld [vmem:[%s8535 + $0x520] sm:$0xff]
        %v8701 = vld [vmem:[%s8535 + $0x528] sm:$0xff]
        %v8702 = vld [vmem:[%s8535 + $0x530] sm:$0xff]
        %v8703 = vld [vmem:[%s8535 + $0x538] sm:$0xff]
        %v8704 = vld [vmem:[%s8535 + $0x540] sm:$0xff]
        %v8705 = vld [vmem:[%s8535 + $0x548] sm:$0xff]
        %v8706 = vld [vmem:[%s8535 + $0x550] sm:$0xff]
        %v8707 = vld [vmem:[%s8535 + $0x558] sm:$0xff]
        %v8708 = vld [vmem:[%s8535 + $0x560] sm:$0xff]
        %v8709 = vld [vmem:[%s8535 + $0x568] sm:$0xff]
        %v8710 = vld [vmem:[%s8535 + $0x570] sm:$0xff]
        %v8711 = vld [vmem:[%s8535 + $0x578] sm:$0xff]
        %v8712 = vld [vmem:[%s8535 + $0x580] sm:$0xff]
        %v8713 = vld [vmem:[%s8535 + $0x588] sm:$0xff]
        %v8714 = vld [vmem:[%s8535 + $0x590] sm:$0xff]
        %v8715 = vld [vmem:[%s8535 + $0x598] sm:$0xff]
        %v8716 = vld [vmem:[%s8535 + $0x5a0] sm:$0xff]
        %v8717 = vld [vmem:[%s8535 + $0x5a8] sm:$0xff]
        %v8718 = vld [vmem:[%s8535 + $0x5b0] sm:$0xff]
        %v8719 = vld [vmem:[%s8535 + $0x5b8] sm:$0xff]
        %v8720 = vld [vmem:[%s8535 + $0x5c0] sm:$0xff]
        %v8721 = vld [vmem:[%s8535 + $0x5c8] sm:$0xff]
        %v8722 = vld [vmem:[%s8535 + $0x5d0] sm:$0xff]
        %v8723 = vld [vmem:[%s8535 + $0x5d8] sm:$0xff]
        %v8724 = vld [vmem:[%s8535 + $0x5e0] sm:$0xff]
        %v8725 = vld [vmem:[%s8535 + $0x5e8] sm:$0xff]
        %v8726 = vld [vmem:[%s8535 + $0x5f0] sm:$0xff]
        %v8727 = vld [vmem:[%s8535 + $0x5f8] sm:$0xff]
        %v8734 = vrot.slane %v8529, 2
        %v8735 = vrot.slane %v8530, 2
        %v8736 = vrot.slane %v8531, 2
        %v8737 = vrot.slane %v8532, 2
        %v8738 = vrot.slane %v8533, 2
        %v8739 = vrot.slane %v8534, 2
        %v8938 = vunpack.c.l.b16 %v8536
        %v8939 = vunpack.c.h.b16 %v8536
        %v8940 = vunpack.c.l.b16 %v8537
        %v8941 = vunpack.c.h.b16 %v8537
        %v8942 = vunpack.c.l.b16 %v8538
        %v8943 = vunpack.c.h.b16 %v8538
        %v8944 = vunpack.c.l.b16 %v8539
        %v8945 = vunpack.c.h.b16 %v8539
        %v8946 = vunpack.c.l.b16 %v8540
        %v8947 = vunpack.c.h.b16 %v8540
        %v8948 = vunpack.c.l.b16 %v8541
        %v8949 = vunpack.c.h.b16 %v8541
        %v8950 = vunpack.c.l.b16 %v8542
        %v8951 = vunpack.c.h.b16 %v8542
        %v8952 = vunpack.c.l.b16 %v8543
        %v8953 = vunpack.c.h.b16 %v8543
        %v8954 = vunpack.c.l.b16 %v8544
        %v8955 = vunpack.c.h.b16 %v8544
        %v8956 = vunpack.c.l.b16 %v8545
        %v8957 = vunpack.c.h.b16 %v8545
        %v8958 = vunpack.c.l.b16 %v8546
        %v8959 = vunpack.c.h.b16 %v8546
        %v8960 = vunpack.c.l.b16 %v8547
        %v8961 = vunpack.c.h.b16 %v8547
        %v8962 = vunpack.c.l.b16 %v8548
        %v8963 = vunpack.c.h.b16 %v8548
        %v8964 = vunpack.c.l.b16 %v8549
        %v8965 = vunpack.c.h.b16 %v8549
        %v8966 = vunpack.c.l.b16 %v8550
        %v8967 = vunpack.c.h.b16 %v8550
        %v8968 = vunpack.c.l.b16 %v8551
        %v8969 = vunpack.c.h.b16 %v8551
        %v8970 = vunpack.c.l.b16 %v8552
        %v8971 = vunpack.c.h.b16 %v8552
        %v8972 = vunpack.c.l.b16 %v8553
        %v8973 = vunpack.c.h.b16 %v8553
        %v8974 = vunpack.c.l.b16 %v8554
        %v8975 = vunpack.c.h.b16 %v8554
        %v8976 = vunpack.c.l.b16 %v8555
        %v8977 = vunpack.c.h.b16 %v8555
        %v8978 = vunpack.c.l.b16 %v8556
        %v8979 = vunpack.c.h.b16 %v8556
        %v8980 = vunpack.c.l.b16 %v8557
        %v8981 = vunpack.c.h.b16 %v8557
        %v8982 = vunpack.c.l.b16 %v8558
        %v8983 = vunpack.c.h.b16 %v8558
        %v8984 = vunpack.c.l.b16 %v8559
        %v8985 = vunpack.c.h.b16 %v8559
        %v8986 = vunpack.c.l.b16 %v8560
        %v8987 = vunpack.c.h.b16 %v8560
        %v8988 = vunpack.c.l.b16 %v8561
        %v8989 = vunpack.c.h.b16 %v8561
        %v8990 = vunpack.c.l.b16 %v8562
        %v8991 = vunpack.c.h.b16 %v8562
        %v8992 = vunpack.c.l.b16 %v8563
        %v8993 = vunpack.c.h.b16 %v8563
        %v8994 = vunpack.c.l.b16 %v8564
        %v8995 = vunpack.c.h.b16 %v8564
        %v8996 = vunpack.c.l.b16 %v8565
        %v8997 = vunpack.c.h.b16 %v8565
        %v8998 = vunpack.c.l.b16 %v8566
        %v8999 = vunpack.c.h.b16 %v8566
        %v9000 = vunpack.c.l.b16 %v8567
        %v9001 = vunpack.c.h.b16 %v8567
        %v9002 = vunpack.c.l.b16 %v8568
        %v9003 = vunpack.c.h.b16 %v8568
        %v9004 = vunpack.c.l.b16 %v8569
        %v9005 = vunpack.c.h.b16 %v8569
        %v9006 = vunpack.c.l.b16 %v8570
        %v9007 = vunpack.c.h.b16 %v8570
        %v9008 = vunpack.c.l.b16 %v8571
        %v9009 = vunpack.c.h.b16 %v8571
        %v9010 = vunpack.c.l.b16 %v8572
        %v9011 = vunpack.c.h.b16 %v8572
        %v9012 = vunpack.c.l.b16 %v8573
        %v9013 = vunpack.c.h.b16 %v8573
        %v9014 = vunpack.c.l.b16 %v8574
        %v9015 = vunpack.c.h.b16 %v8574
        %v9016 = vunpack.c.l.b16 %v8575
        %v9017 = vunpack.c.h.b16 %v8575
        %v9018 = vunpack.c.l.b16 %v8576
        %v9019 = vunpack.c.h.b16 %v8576
        %v9020 = vunpack.c.l.b16 %v8577
        %v9021 = vunpack.c.h.b16 %v8577
        %v9022 = vunpack.c.l.b16 %v8578
        %v9023 = vunpack.c.h.b16 %v8578
        %v9024 = vunpack.c.l.b16 %v8579
        %v9025 = vunpack.c.h.b16 %v8579
        %v9026 = vunpack.c.l.b16 %v8580
        %v9027 = vunpack.c.h.b16 %v8580
        %v9028 = vunpack.c.l.b16 %v8581
        %v9029 = vunpack.c.h.b16 %v8581
        %v9030 = vunpack.c.l.b16 %v8582
        %v9031 = vunpack.c.h.b16 %v8582
        %v9032 = vunpack.c.l.b16 %v8583
        %v9033 = vunpack.c.h.b16 %v8583
        %v9034 = vunpack.c.l.b16 %v8584
        %v9035 = vunpack.c.h.b16 %v8584
        %v9036 = vunpack.c.l.b16 %v8585
        %v9037 = vunpack.c.h.b16 %v8585
        %v9038 = vunpack.c.l.b16 %v8586
        %v9039 = vunpack.c.h.b16 %v8586
        %v9040 = vunpack.c.l.b16 %v8587
        %v9041 = vunpack.c.h.b16 %v8587
        %v9042 = vunpack.c.l.b16 %v8588
        %v9043 = vunpack.c.h.b16 %v8588
        %v9044 = vunpack.c.l.b16 %v8589
        %v9045 = vunpack.c.h.b16 %v8589
        %v9046 = vunpack.c.l.b16 %v8590
        %v9047 = vunpack.c.h.b16 %v8590
        %v9048 = vunpack.c.l.b16 %v8591
        %v9049 = vunpack.c.h.b16 %v8591
        %v9050 = vunpack.c.l.b16 %v8592
        %v9051 = vunpack.c.h.b16 %v8592
        %v9052 = vunpack.c.l.b16 %v8593
        %v9053 = vunpack.c.h.b16 %v8593
        %v9054 = vunpack.c.l.b16 %v8594
        %v9055 = vunpack.c.h.b16 %v8594
        %v9056 = vunpack.c.l.b16 %v8595
        %v9057 = vunpack.c.h.b16 %v8595
        %v9058 = vunpack.c.l.b16 %v8596
        %v9059 = vunpack.c.h.b16 %v8596
        %v9060 = vunpack.c.l.b16 %v8597
        %v9061 = vunpack.c.h.b16 %v8597
        %v9062 = vunpack.c.l.b16 %v8598
        %v9063 = vunpack.c.h.b16 %v8598
        %v9064 = vunpack.c.l.b16 %v8599
        %v9065 = vunpack.c.h.b16 %v8599
        %v9066 = vunpack.c.l.b16 %v8600
        %v9067 = vunpack.c.h.b16 %v8600
        %v9068 = vunpack.c.l.b16 %v8601
        %v9069 = vunpack.c.h.b16 %v8601
        %v9070 = vunpack.c.l.b16 %v8602
        %v9071 = vunpack.c.h.b16 %v8602
        %v9072 = vunpack.c.l.b16 %v8603
        %v9073 = vunpack.c.h.b16 %v8603
        %v9074 = vunpack.c.l.b16 %v8604
        %v9075 = vunpack.c.h.b16 %v8604
        %v9076 = vunpack.c.l.b16 %v8605
        %v9077 = vunpack.c.h.b16 %v8605
        %v9078 = vunpack.c.l.b16 %v8606
        %v9079 = vunpack.c.h.b16 %v8606
        %v9080 = vunpack.c.l.b16 %v8607
        %v9081 = vunpack.c.h.b16 %v8607
        %v9082 = vunpack.c.l.b16 %v8608
        %v9083 = vunpack.c.h.b16 %v8608
        %v9084 = vunpack.c.l.b16 %v8609
        %v9085 = vunpack.c.h.b16 %v8609
        %v9086 = vunpack.c.l.b16 %v8610
        %v9087 = vunpack.c.h.b16 %v8610
        %v9088 = vunpack.c.l.b16 %v8611
        %v9089 = vunpack.c.h.b16 %v8611
        %v9090 = vunpack.c.l.b16 %v8612
        %v9091 = vunpack.c.h.b16 %v8612
        %v9092 = vunpack.c.l.b16 %v8613
        %v9093 = vunpack.c.h.b16 %v8613
        %v9094 = vunpack.c.l.b16 %v8614
        %v9095 = vunpack.c.h.b16 %v8614
        %v9096 = vunpack.c.l.b16 %v8615
        %v9097 = vunpack.c.h.b16 %v8615
        %v9098 = vunpack.c.l.b16 %v8616
        %v9099 = vunpack.c.h.b16 %v8616
        %v9100 = vunpack.c.l.b16 %v8617
        %v9101 = vunpack.c.h.b16 %v8617
        %v9102 = vunpack.c.l.b16 %v8618
        %v9103 = vunpack.c.h.b16 %v8618
        %v9104 = vunpack.c.l.b16 %v8619
        %v9105 = vunpack.c.h.b16 %v8619
        %v9106 = vunpack.c.l.b16 %v8620
        %v9107 = vunpack.c.h.b16 %v8620
        %v9108 = vunpack.c.l.b16 %v8621
        %v9109 = vunpack.c.h.b16 %v8621
        %v9110 = vunpack.c.l.b16 %v8622
        %v9111 = vunpack.c.h.b16 %v8622
        %v9112 = vunpack.c.l.b16 %v8623
        %v9113 = vunpack.c.h.b16 %v8623
        %v9114 = vunpack.c.l.b16 %v8624
        %v9115 = vunpack.c.h.b16 %v8624
        %v9116 = vunpack.c.l.b16 %v8625
        %v9117 = vunpack.c.h.b16 %v8625
        %v9118 = vunpack.c.l.b16 %v8626
        %v9119 = vunpack.c.h.b16 %v8626
        %v9120 = vunpack.c.l.b16 %v8627
        %v9121 = vunpack.c.h.b16 %v8627
        %v9122 = vunpack.c.l.b16 %v8628
        %v9123 = vunpack.c.h.b16 %v8628
        %v9124 = vunpack.c.l.b16 %v8629
        %v9125 = vunpack.c.h.b16 %v8629
        %v9126 = vunpack.c.l.b16 %v8630
        %v9127 = vunpack.c.h.b16 %v8630
        %v9128 = vunpack.c.l.b16 %v8631
        %v9129 = vunpack.c.h.b16 %v8631
        %v9130 = vunpack.c.l.b16 %v8632
        %v9131 = vunpack.c.h.b16 %v8632
        %v9132 = vunpack.c.l.b16 %v8633
        %v9133 = vunpack.c.h.b16 %v8633
        %v9134 = vunpack.c.l.b16 %v8634
        %v9135 = vunpack.c.h.b16 %v8634
        %v9136 = vunpack.c.l.b16 %v8635
        %v9137 = vunpack.c.h.b16 %v8635
        %v9138 = vunpack.c.l.b16 %v8636
        %v9139 = vunpack.c.h.b16 %v8636
        %v9140 = vunpack.c.l.b16 %v8637
        %v9141 = vunpack.c.h.b16 %v8637
        %v9142 = vunpack.c.l.b16 %v8638
        %v9143 = vunpack.c.h.b16 %v8638
        %v9144 = vunpack.c.l.b16 %v8639
        %v9145 = vunpack.c.h.b16 %v8639
        %v9146 = vunpack.c.l.b16 %v8640
        %v9147 = vunpack.c.h.b16 %v8640
        %v9148 = vunpack.c.l.b16 %v8641
        %v9149 = vunpack.c.h.b16 %v8641
        %v9150 = vunpack.c.l.b16 %v8642
        %v9151 = vunpack.c.h.b16 %v8642
        %v9152 = vunpack.c.l.b16 %v8643
        %v9153 = vunpack.c.h.b16 %v8643
        %v9154 = vunpack.c.l.b16 %v8644
        %v9155 = vunpack.c.h.b16 %v8644
        %v9156 = vunpack.c.l.b16 %v8645
        %v9157 = vunpack.c.h.b16 %v8645
        %v9158 = vunpack.c.l.b16 %v8646
        %v9159 = vunpack.c.h.b16 %v8646
        %v9160 = vunpack.c.l.b16 %v8647
        %v9161 = vunpack.c.h.b16 %v8647
        %v9162 = vunpack.c.l.b16 %v8648
        %v9163 = vunpack.c.h.b16 %v8648
        %v9164 = vunpack.c.l.b16 %v8649
        %v9165 = vunpack.c.h.b16 %v8649
        %v9166 = vunpack.c.l.b16 %v8650
        %v9167 = vunpack.c.h.b16 %v8650
        %v9168 = vunpack.c.l.b16 %v8651
        %v9169 = vunpack.c.h.b16 %v8651
        %v9170 = vunpack.c.l.b16 %v8652
        %v9171 = vunpack.c.h.b16 %v8652
        %v9172 = vunpack.c.l.b16 %v8653
        %v9173 = vunpack.c.h.b16 %v8653
        %v9174 = vunpack.c.l.b16 %v8654
        %v9175 = vunpack.c.h.b16 %v8654
        %v9176 = vunpack.c.l.b16 %v8655
        %v9177 = vunpack.c.h.b16 %v8655
        %v9178 = vunpack.c.l.b16 %v8656
        %v9179 = vunpack.c.h.b16 %v8656
        %v9180 = vunpack.c.l.b16 %v8657
        %v9181 = vunpack.c.h.b16 %v8657
        %v9182 = vunpack.c.l.b16 %v8658
        %v9183 = vunpack.c.h.b16 %v8658
        %v9184 = vunpack.c.l.b16 %v8659
        %v9185 = vunpack.c.h.b16 %v8659
        %v9186 = vunpack.c.l.b16 %v8660
        %v9187 = vunpack.c.h.b16 %v8660
        %v9188 = vunpack.c.l.b16 %v8661
        %v9189 = vunpack.c.h.b16 %v8661
        %v9190 = vunpack.c.l.b16 %v8662
        %v9191 = vunpack.c.h.b16 %v8662
        %v9192 = vunpack.c.l.b16 %v8663
        %v9193 = vunpack.c.h.b16 %v8663
        %v9194 = vunpack.c.l.b16 %v8664
        %v9195 = vunpack.c.h.b16 %v8664
        %v9196 = vunpack.c.l.b16 %v8665
        %v9197 = vunpack.c.h.b16 %v8665
        %v9198 = vunpack.c.l.b16 %v8666
        %v9199 = vunpack.c.h.b16 %v8666
        %v9200 = vunpack.c.l.b16 %v8667
        %v9201 = vunpack.c.h.b16 %v8667
        %v9202 = vunpack.c.l.b16 %v8668
        %v9203 = vunpack.c.h.b16 %v8668
        %v9204 = vunpack.c.l.b16 %v8669
        %v9205 = vunpack.c.h.b16 %v8669
        %v9206 = vunpack.c.l.b16 %v8670
        %v9207 = vunpack.c.h.b16 %v8670
        %v9208 = vunpack.c.l.b16 %v8671
        %v9209 = vunpack.c.h.b16 %v8671
        %v9210 = vunpack.c.l.b16 %v8672
        %v9211 = vunpack.c.h.b16 %v8672
        %v9212 = vunpack.c.l.b16 %v8673
        %v9213 = vunpack.c.h.b16 %v8673
        %v9214 = vunpack.c.l.b16 %v8674
        %v9215 = vunpack.c.h.b16 %v8674
        %v9216 = vunpack.c.l.b16 %v8675
        %v9217 = vunpack.c.h.b16 %v8675
        %v9218 = vunpack.c.l.b16 %v8676
        %v9219 = vunpack.c.h.b16 %v8676
        %v9220 = vunpack.c.l.b16 %v8677
        %v9221 = vunpack.c.h.b16 %v8677
        %v9222 = vunpack.c.l.b16 %v8678
        %v9223 = vunpack.c.h.b16 %v8678
        %v9224 = vunpack.c.l.b16 %v8679
        %v9225 = vunpack.c.h.b16 %v8679
        %v9226 = vunpack.c.l.b16 %v8680
        %v9227 = vunpack.c.h.b16 %v8680
        %v9228 = vunpack.c.l.b16 %v8681
        %v9229 = vunpack.c.h.b16 %v8681
        %v9230 = vunpack.c.l.b16 %v8682
        %v9231 = vunpack.c.h.b16 %v8682
        %v9232 = vunpack.c.l.b16 %v8683
        %v9233 = vunpack.c.h.b16 %v8683
        %v9234 = vunpack.c.l.b16 %v8684
        %v9235 = vunpack.c.h.b16 %v8684
        %v9236 = vunpack.c.l.b16 %v8685
        %v9237 = vunpack.c.h.b16 %v8685
        %v9238 = vunpack.c.l.b16 %v8686
        %v9239 = vunpack.c.h.b16 %v8686
        %v9240 = vunpack.c.l.b16 %v8687
        %v9241 = vunpack.c.h.b16 %v8687
        %v9242 = vunpack.c.l.b16 %v8688
        %v9243 = vunpack.c.h.b16 %v8688
        %v9244 = vunpack.c.l.b16 %v8689
        %v9245 = vunpack.c.h.b16 %v8689
        %v9246 = vunpack.c.l.b16 %v8690
        %v9247 = vunpack.c.h.b16 %v8690
        %v9248 = vunpack.c.l.b16 %v8691
        %v9249 = vunpack.c.h.b16 %v8691
        %v9250 = vunpack.c.l.b16 %v8692
        %v9251 = vunpack.c.h.b16 %v8692
        %v9252 = vunpack.c.l.b16 %v8693
        %v9253 = vunpack.c.h.b16 %v8693
        %v9254 = vunpack.c.l.b16 %v8694
        %v9255 = vunpack.c.h.b16 %v8694
        %v9256 = vunpack.c.l.b16 %v8695
        %v9257 = vunpack.c.h.b16 %v8695
        %v9258 = vunpack.c.l.b16 %v8696
        %v9259 = vunpack.c.h.b16 %v8696
        %v9260 = vunpack.c.l.b16 %v8697
        %v9261 = vunpack.c.h.b16 %v8697
        %v9262 = vunpack.c.l.b16 %v8698
        %v9263 = vunpack.c.h.b16 %v8698
        %v9264 = vunpack.c.l.b16 %v8699
        %v9265 = vunpack.c.h.b16 %v8699
        %v9266 = vunpack.c.l.b16 %v8700
        %v9267 = vunpack.c.h.b16 %v8700
        %v9268 = vunpack.c.l.b16 %v8701
        %v9269 = vunpack.c.h.b16 %v8701
        %v9270 = vunpack.c.l.b16 %v8702
        %v9271 = vunpack.c.h.b16 %v8702
        %v9272 = vunpack.c.l.b16 %v8703
        %v9273 = vunpack.c.h.b16 %v8703
        %v9274 = vunpack.c.l.b16 %v8704
        %v9275 = vunpack.c.h.b16 %v8704
        %v9276 = vunpack.c.l.b16 %v8705
        %v9277 = vunpack.c.h.b16 %v8705
        %v9278 = vunpack.c.l.b16 %v8706
        %v9279 = vunpack.c.h.b16 %v8706
        %v9280 = vunpack.c.l.b16 %v8707
        %v9281 = vunpack.c.h.b16 %v8707
        %v9282 = vunpack.c.l.b16 %v8708
        %v9283 = vunpack.c.h.b16 %v8708
        %v9284 = vunpack.c.l.b16 %v8709
        %v9285 = vunpack.c.h.b16 %v8709
        %v9286 = vunpack.c.l.b16 %v8710
        %v9287 = vunpack.c.h.b16 %v8710
        %v9288 = vunpack.c.l.b16 %v8711
        %v9289 = vunpack.c.h.b16 %v8711
        %v9290 = vunpack.c.l.b16 %v8712
        %v9291 = vunpack.c.h.b16 %v8712
        %v9292 = vunpack.c.l.b16 %v8713
        %v9293 = vunpack.c.h.b16 %v8713
        %v9294 = vunpack.c.l.b16 %v8714
        %v9295 = vunpack.c.h.b16 %v8714
        %v9296 = vunpack.c.l.b16 %v8715
        %v9297 = vunpack.c.h.b16 %v8715
        %v9298 = vunpack.c.l.b16 %v8716
        %v9299 = vunpack.c.h.b16 %v8716
        %v9300 = vunpack.c.l.b16 %v8717
        %v9301 = vunpack.c.h.b16 %v8717
        %v9302 = vunpack.c.l.b16 %v8718
        %v9303 = vunpack.c.h.b16 %v8718
        %v9304 = vunpack.c.l.b16 %v8719
        %v9305 = vunpack.c.h.b16 %v8719
        %v9306 = vunpack.c.l.b16 %v8720
        %v9307 = vunpack.c.h.b16 %v8720
        %v9308 = vunpack.c.l.b16 %v8721
        %v9309 = vunpack.c.h.b16 %v8721
        %v9310 = vunpack.c.l.b16 %v8722
        %v9311 = vunpack.c.h.b16 %v8722
        %v9312 = vunpack.c.l.b16 %v8723
        %v9313 = vunpack.c.h.b16 %v8723
        %v9314 = vunpack.c.l.b16 %v8724
        %v9315 = vunpack.c.h.b16 %v8724
        %v9316 = vunpack.c.l.b16 %v8725
        %v9317 = vunpack.c.h.b16 %v8725
        %v9318 = vunpack.c.l.b16 %v8726
        %v9319 = vunpack.c.h.b16 %v8726
        %v9320 = vunpack.c.l.b16 %v8727
        %v9321 = vunpack.c.h.b16 %v8727
        %v9322 = vpack.c.b16 %v8942, %v8938
        %v9323 = vpack.c.b16 %v8943, %v8939
        %v9324 = vpack.c.b16 %v8944, %v8940
        %v9325 = vpack.c.b16 %v8945, %v8941
        %v9326 = vpack.c.b16 %v8950, %v8946
        %v9327 = vpack.c.b16 %v8951, %v8947
        %v9328 = vpack.c.b16 %v8952, %v8948
        %v9329 = vpack.c.b16 %v8953, %v8949
        %v9330 = vpack.c.b16 %v8958, %v8954
        %v9331 = vpack.c.b16 %v8959, %v8955
        %v9332 = vpack.c.b16 %v8960, %v8956
        %v9333 = vpack.c.b16 %v8961, %v8957
        %v9334 = vpack.c.b16 %v8966, %v8962
        %v9335 = vpack.c.b16 %v8967, %v8963
        %v9336 = vpack.c.b16 %v8968, %v8964
        %v9337 = vpack.c.b16 %v8969, %v8965
        %v9338 = vpack.c.b16 %v8974, %v8970
        %v9339 = vpack.c.b16 %v8975, %v8971
        %v9340 = vpack.c.b16 %v8976, %v8972
        %v9341 = vpack.c.b16 %v8977, %v8973
        %v9342 = vpack.c.b16 %v8982, %v8978
        %v9343 = vpack.c.b16 %v8983, %v8979
        %v9344 = vpack.c.b16 %v8984, %v8980
        %v9345 = vpack.c.b16 %v8985, %v8981
        %v9346 = vpack.c.b16 %v8990, %v8986
        %v9347 = vpack.c.b16 %v8991, %v8987
        %v9348 = vpack.c.b16 %v8992, %v8988
        %v9349 = vpack.c.b16 %v8993, %v8989
        %v9350 = vpack.c.b16 %v8998, %v8994
        %v9351 = vpack.c.b16 %v8999, %v8995
        %v9352 = vpack.c.b16 %v9000, %v8996
        %v9353 = vpack.c.b16 %v9001, %v8997
        %v9354 = vpack.c.b16 %v9006, %v9002
        %v9355 = vpack.c.b16 %v9007, %v9003
        %v9356 = vpack.c.b16 %v9008, %v9004
        %v9357 = vpack.c.b16 %v9009, %v9005
        %v9358 = vpack.c.b16 %v9014, %v9010
        %v9359 = vpack.c.b16 %v9015, %v9011
        %v9360 = vpack.c.b16 %v9016, %v9012
        %v9361 = vpack.c.b16 %v9017, %v9013
        %v9362 = vpack.c.b16 %v9022, %v9018
        %v9363 = vpack.c.b16 %v9023, %v9019
        %v9364 = vpack.c.b16 %v9024, %v9020
        %v9365 = vpack.c.b16 %v9025, %v9021
        %v9366 = vpack.c.b16 %v9030, %v9026
        %v9367 = vpack.c.b16 %v9031, %v9027
        %v9368 = vpack.c.b16 %v9032, %v9028
        %v9369 = vpack.c.b16 %v9033, %v9029
        %v9370 = vpack.c.b16 %v9038, %v9034
        %v9371 = vpack.c.b16 %v9039, %v9035
        %v9372 = vpack.c.b16 %v9040, %v9036
        %v9373 = vpack.c.b16 %v9041, %v9037
        %v9374 = vpack.c.b16 %v9046, %v9042
        %v9375 = vpack.c.b16 %v9047, %v9043
        %v9376 = vpack.c.b16 %v9048, %v9044
        %v9377 = vpack.c.b16 %v9049, %v9045
        %v9378 = vpack.c.b16 %v9054, %v9050
        %v9379 = vpack.c.b16 %v9055, %v9051
        %v9380 = vpack.c.b16 %v9056, %v9052
        %v9381 = vpack.c.b16 %v9057, %v9053
        %v9382 = vpack.c.b16 %v9062, %v9058
        %v9383 = vpack.c.b16 %v9063, %v9059
        %v9384 = vpack.c.b16 %v9064, %v9060
        %v9385 = vpack.c.b16 %v9065, %v9061
        %v9386 = vpack.c.b16 %v9070, %v9066
        %v9387 = vpack.c.b16 %v9071, %v9067
        %v9388 = vpack.c.b16 %v9072, %v9068
        %v9389 = vpack.c.b16 %v9073, %v9069
        %v9390 = vpack.c.b16 %v9078, %v9074
        %v9391 = vpack.c.b16 %v9079, %v9075
        %v9392 = vpack.c.b16 %v9080, %v9076
        %v9393 = vpack.c.b16 %v9081, %v9077
        %v9394 = vpack.c.b16 %v9086, %v9082
        %v9395 = vpack.c.b16 %v9087, %v9083
        %v9396 = vpack.c.b16 %v9088, %v9084
        %v9397 = vpack.c.b16 %v9089, %v9085
        %v9398 = vpack.c.b16 %v9094, %v9090
        %v9399 = vpack.c.b16 %v9095, %v9091
        %v9400 = vpack.c.b16 %v9096, %v9092
        %v9401 = vpack.c.b16 %v9097, %v9093
        %v9402 = vpack.c.b16 %v9102, %v9098
        %v9403 = vpack.c.b16 %v9103, %v9099
        %v9404 = vpack.c.b16 %v9104, %v9100
        %v9405 = vpack.c.b16 %v9105, %v9101
        %v9406 = vpack.c.b16 %v9110, %v9106
        %v9407 = vpack.c.b16 %v9111, %v9107
        %v9408 = vpack.c.b16 %v9112, %v9108
        %v9409 = vpack.c.b16 %v9113, %v9109
        %v9410 = vpack.c.b16 %v9118, %v9114
        %v9411 = vpack.c.b16 %v9119, %v9115
        %v9412 = vpack.c.b16 %v9120, %v9116
        %v9413 = vpack.c.b16 %v9121, %v9117
        %v9414 = vpack.c.b16 %v9126, %v9122
        %v9415 = vpack.c.b16 %v9127, %v9123
        %v9416 = vpack.c.b16 %v9128, %v9124
        %v9417 = vpack.c.b16 %v9129, %v9125
        %v9418 = vpack.c.b16 %v9134, %v9130
        %v9419 = vpack.c.b16 %v9135, %v9131
        %v9420 = vpack.c.b16 %v9136, %v9132
        %v9421 = vpack.c.b16 %v9137, %v9133
        %v9422 = vpack.c.b16 %v9142, %v9138
        %v9423 = vpack.c.b16 %v9143, %v9139
        %v9424 = vpack.c.b16 %v9144, %v9140
        %v9425 = vpack.c.b16 %v9145, %v9141
        %v9426 = vpack.c.b16 %v9150, %v9146
        %v9427 = vpack.c.b16 %v9151, %v9147
        %v9428 = vpack.c.b16 %v9152, %v9148
        %v9429 = vpack.c.b16 %v9153, %v9149
        %v9430 = vpack.c.b16 %v9158, %v9154
        %v9431 = vpack.c.b16 %v9159, %v9155
        %v9432 = vpack.c.b16 %v9160, %v9156
        %v9433 = vpack.c.b16 %v9161, %v9157
        %v9434 = vpack.c.b16 %v9166, %v9162
        %v9435 = vpack.c.b16 %v9167, %v9163
        %v9436 = vpack.c.b16 %v9168, %v9164
        %v9437 = vpack.c.b16 %v9169, %v9165
        %v9438 = vpack.c.b16 %v9174, %v9170
        %v9439 = vpack.c.b16 %v9175, %v9171
        %v9440 = vpack.c.b16 %v9176, %v9172
        %v9441 = vpack.c.b16 %v9177, %v9173
        %v9442 = vpack.c.b16 %v9182, %v9178
        %v9443 = vpack.c.b16 %v9183, %v9179
        %v9444 = vpack.c.b16 %v9184, %v9180
        %v9445 = vpack.c.b16 %v9185, %v9181
        %v9446 = vpack.c.b16 %v9190, %v9186
        %v9447 = vpack.c.b16 %v9191, %v9187
        %v9448 = vpack.c.b16 %v9192, %v9188
        %v9449 = vpack.c.b16 %v9193, %v9189
        %v9450 = vpack.c.b16 %v9198, %v9194
        %v9451 = vpack.c.b16 %v9199, %v9195
        %v9452 = vpack.c.b16 %v9200, %v9196
        %v9453 = vpack.c.b16 %v9201, %v9197
        %v9454 = vpack.c.b16 %v9206, %v9202
        %v9455 = vpack.c.b16 %v9207, %v9203
        %v9456 = vpack.c.b16 %v9208, %v9204
        %v9457 = vpack.c.b16 %v9209, %v9205
        %v9458 = vpack.c.b16 %v9214, %v9210
        %v9459 = vpack.c.b16 %v9215, %v9211
        %v9460 = vpack.c.b16 %v9216, %v9212
        %v9461 = vpack.c.b16 %v9217, %v9213
        %v9462 = vpack.c.b16 %v9222, %v9218
        %v9463 = vpack.c.b16 %v9223, %v9219
        %v9464 = vpack.c.b16 %v9224, %v9220
        %v9465 = vpack.c.b16 %v9225, %v9221
        %v9466 = vpack.c.b16 %v9230, %v9226
        %v9467 = vpack.c.b16 %v9231, %v9227
        %v9468 = vpack.c.b16 %v9232, %v9228
        %v9469 = vpack.c.b16 %v9233, %v9229
        %v9470 = vpack.c.b16 %v9238, %v9234
        %v9471 = vpack.c.b16 %v9239, %v9235
        %v9472 = vpack.c.b16 %v9240, %v9236
        %v9473 = vpack.c.b16 %v9241, %v9237
        %v9474 = vpack.c.b16 %v9246, %v9242
        %v9475 = vpack.c.b16 %v9247, %v9243
        %v9476 = vpack.c.b16 %v9248, %v9244
        %v9477 = vpack.c.b16 %v9249, %v9245
        %v9478 = vpack.c.b16 %v9254, %v9250
        %v9479 = vpack.c.b16 %v9255, %v9251
        %v9480 = vpack.c.b16 %v9256, %v9252
        %v9481 = vpack.c.b16 %v9257, %v9253
        %v9482 = vpack.c.b16 %v9262, %v9258
        %v9483 = vpack.c.b16 %v9263, %v9259
        %v9484 = vpack.c.b16 %v9264, %v9260
        %v9485 = vpack.c.b16 %v9265, %v9261
        %v9486 = vpack.c.b16 %v9270, %v9266
        %v9487 = vpack.c.b16 %v9271, %v9267
        %v9488 = vpack.c.b16 %v9272, %v9268
        %v9489 = vpack.c.b16 %v9273, %v9269
        %v9490 = vpack.c.b16 %v9278, %v9274
        %v9491 = vpack.c.b16 %v9279, %v9275
        %v9492 = vpack.c.b16 %v9280, %v9276
        %v9493 = vpack.c.b16 %v9281, %v9277
        %v9494 = vpack.c.b16 %v9286, %v9282
        %v9495 = vpack.c.b16 %v9287, %v9283
        %v9496 = vpack.c.b16 %v9288, %v9284
        %v9497 = vpack.c.b16 %v9289, %v9285
        %v9498 = vpack.c.b16 %v9294, %v9290
        %v9499 = vpack.c.b16 %v9295, %v9291
        %v9500 = vpack.c.b16 %v9296, %v9292
        %v9501 = vpack.c.b16 %v9297, %v9293
        %v9502 = vpack.c.b16 %v9302, %v9298
        %v9503 = vpack.c.b16 %v9303, %v9299
        %v9504 = vpack.c.b16 %v9304, %v9300
        %v9505 = vpack.c.b16 %v9305, %v9301
        %v9506 = vpack.c.b16 %v9310, %v9306
        %v9507 = vpack.c.b16 %v9311, %v9307
        %v9508 = vpack.c.b16 %v9312, %v9308
        %v9509 = vpack.c.b16 %v9313, %v9309
        %v9510 = vpack.c.b16 %v9318, %v9314
        %v9511 = vpack.c.b16 %v9319, %v9315
        %v9512 = vpack.c.b16 %v9320, %v9316
        %v9513 = vpack.c.b16 %v9321, %v9317
        %9706 = vmatpush.bf16.msra.mxu0 %v9350
        %9707 = vmatpush.bf16.msra.mxu0 %v9346
        %9708 = vmatpush.bf16.msra.mxu0 %v9342
        %9709 = vmatpush.bf16.msra.mxu0 %v9338
        %9710 = vmatpush.bf16.msra.mxu0 %v9334
        %9711 = vmatpush.bf16.msra.mxu0 %v9330
        %9712 = vmatpush.bf16.msra.mxu0 %v9326
        %9713 = vmatpush.bf16.msra.mxu0 %v9322
        %9714 = vmatmul.bf16.gmra.mxu0 %v8734
        %v9715 = vpop.f32.mrf.mxu0
        %v9716 = vadd.f32 0.0, %v9715
        %v9717 = vpop.f32.mrf.mxu0
        %9718 = vdwg.mxu0
        %9719 = vmatpush.bf16.msra.mxu0 %v9382
        %9720 = vmatpush.bf16.msra.mxu0 %v9378
        %9721 = vmatpush.bf16.msra.mxu0 %v9374
        %9722 = vmatpush.bf16.msra.mxu0 %v9370
        %9723 = vmatpush.bf16.msra.mxu0 %v9366
        %9724 = vmatpush.bf16.msra.mxu0 %v9362
        %9725 = vmatpush.bf16.msra.mxu0 %v9358
        %9726 = vmatpush.bf16.msra.mxu0 %v9354
        %9727 = vmatmul.bf16.gmra.mxu0 %v8735
        %v9728 = vpop.f32.mrf.mxu0
        %v9729 = vadd.f32 %v9716, %v9728
        %v9730 = vpop.f32.mrf.mxu0
        %9731 = vdwg.mxu0
        %9732 = vmatpush.bf16.msra.mxu0 %v9414
        %9733 = vmatpush.bf16.msra.mxu0 %v9410
        %9734 = vmatpush.bf16.msra.mxu0 %v9406
        %9735 = vmatpush.bf16.msra.mxu0 %v9402
        %9736 = vmatpush.bf16.msra.mxu0 %v9398
        %9737 = vmatpush.bf16.msra.mxu0 %v9394
        %9738 = vmatpush.bf16.msra.mxu0 %v9390
        %9739 = vmatpush.bf16.msra.mxu0 %v9386
        %9740 = vmatmul.bf16.gmra.mxu0 %v8736
        %v9741 = vpop.f32.mrf.mxu0
        %v9742 = vadd.f32 %v9729, %v9741
        %v9743 = vpop.f32.mrf.mxu0
        %9744 = vdwg.mxu0
        %9745 = vmatpush.bf16.msra.mxu0 %v9446
        %9746 = vmatpush.bf16.msra.mxu0 %v9442
        %9747 = vmatpush.bf16.msra.mxu0 %v9438
        %9748 = vmatpush.bf16.msra.mxu0 %v9434
        %9749 = vmatpush.bf16.msra.mxu0 %v9430
        %9750 = vmatpush.bf16.msra.mxu0 %v9426
        %9751 = vmatpush.bf16.msra.mxu0 %v9422
        %9752 = vmatpush.bf16.msra.mxu0 %v9418
        %9753 = vmatmul.bf16.gmra.mxu0 %v8737
        %v9754 = vpop.f32.mrf.mxu0
        %v9755 = vadd.f32 %v9742, %v9754
        %v9756 = vpop.f32.mrf.mxu0
        %9757 = vdwg.mxu0
        %9758 = vmatpush.bf16.msra.mxu0 %v9478
        %9759 = vmatpush.bf16.msra.mxu0 %v9474
        %9760 = vmatpush.bf16.msra.mxu0 %v9470
        %9761 = vmatpush.bf16.msra.mxu0 %v9466
        %9762 = vmatpush.bf16.msra.mxu0 %v9462
        %9763 = vmatpush.bf16.msra.mxu0 %v9458
        %9764 = vmatpush.bf16.msra.mxu0 %v9454
        %9765 = vmatpush.bf16.msra.mxu0 %v9450
        %9766 = vmatmul.bf16.gmra.mxu0 %v8738
        %v9767 = vpop.f32.mrf.mxu0
        %v9768 = vadd.f32 %v9755, %v9767
        %v9769 = vpop.f32.mrf.mxu0
        %9770 = vdwg.mxu0
        %9771 = vmatpush.bf16.msra.mxu0 %v9510
        %9772 = vmatpush.bf16.msra.mxu0 %v9506
        %9773 = vmatpush.bf16.msra.mxu0 %v9502
        %9774 = vmatpush.bf16.msra.mxu0 %v9498
        %9775 = vmatpush.bf16.msra.mxu0 %v9494
        %9776 = vmatpush.bf16.msra.mxu0 %v9490
        %9777 = vmatpush.bf16.msra.mxu0 %v9486
        %9778 = vmatpush.bf16.msra.mxu0 %v9482
        %9779 = vmatmul.bf16.gmra.mxu0 %v8739
        %v9780 = vpop.f32.mrf.mxu0
        %v9781 = vadd.f32 %v9768, %v9780
        %v9782 = vpop.f32.mrf.mxu0
        %9783 = vdwg.mxu0
        %9784 = vmatpush.bf16.msra.mxu0 %v9351
        %9785 = vmatpush.bf16.msra.mxu0 %v9347
        %9786 = vmatpush.bf16.msra.mxu0 %v9343
        %9787 = vmatpush.bf16.msra.mxu0 %v9339
        %9788 = vmatpush.bf16.msra.mxu0 %v9335
        %9789 = vmatpush.bf16.msra.mxu0 %v9331
        %9790 = vmatpush.bf16.msra.mxu0 %v9327
        %9791 = vmatpush.bf16.msra.mxu0 %v9323
        %9792 = vmatmul.bf16.gmra.mxu0 %v8734
        %v9793 = vpop.f32.mrf.mxu0
        %v9794 = vadd.f32 0.0, %v9793
        %v9795 = vpop.f32.mrf.mxu0
        %9796 = vdwg.mxu0
        %9797 = vmatpush.bf16.msra.mxu0 %v9383
        %9798 = vmatpush.bf16.msra.mxu0 %v9379
        %9799 = vmatpush.bf16.msra.mxu0 %v9375
        %9800 = vmatpush.bf16.msra.mxu0 %v9371
        %9801 = vmatpush.bf16.msra.mxu0 %v9367
        %9802 = vmatpush.bf16.msra.mxu0 %v9363
        %9803 = vmatpush.bf16.msra.mxu0 %v9359
        %9804 = vmatpush.bf16.msra.mxu0 %v9355
        %9805 = vmatmul.bf16.gmra.mxu0 %v8735
        %v9806 = vpop.f32.mrf.mxu0
        %v9807 = vadd.f32 %v9794, %v9806
        %v9808 = vpop.f32.mrf.mxu0
        %9809 = vdwg.mxu0
        %9810 = vmatpush.bf16.msra.mxu0 %v9415
        %9811 = vmatpush.bf16.msra.mxu0 %v9411
        %9812 = vmatpush.bf16.msra.mxu0 %v9407
        %9813 = vmatpush.bf16.msra.mxu0 %v9403
        %9814 = vmatpush.bf16.msra.mxu0 %v9399
        %9815 = vmatpush.bf16.msra.mxu0 %v9395
        %9816 = vmatpush.bf16.msra.mxu0 %v9391
        %9817 = vmatpush.bf16.msra.mxu0 %v9387
        %9818 = vmatmul.bf16.gmra.mxu0 %v8736
        %v9819 = vpop.f32.mrf.mxu0
        %v9820 = vadd.f32 %v9807, %v9819
        %v9821 = vpop.f32.mrf.mxu0
        %9822 = vdwg.mxu0
        %9823 = vmatpush.bf16.msra.mxu0 %v9447
        %9824 = vmatpush.bf16.msra.mxu0 %v9443
        %9825 = vmatpush.bf16.msra.mxu0 %v9439
        %9826 = vmatpush.bf16.msra.mxu0 %v9435
        %9827 = vmatpush.bf16.msra.mxu0 %v9431
        %9828 = vmatpush.bf16.msra.mxu0 %v9427
        %9829 = vmatpush.bf16.msra.mxu0 %v9423
        %9830 = vmatpush.bf16.msra.mxu0 %v9419
        %9831 = vmatmul.bf16.gmra.mxu0 %v8737
        %v9832 = vpop.f32.mrf.mxu0
        %v9833 = vadd.f32 %v9820, %v9832
        %v9834 = vpop.f32.mrf.mxu0
        %9835 = vdwg.mxu0
        %9836 = vmatpush.bf16.msra.mxu0 %v9479
        %9837 = vmatpush.bf16.msra.mxu0 %v9475
        %9838 = vmatpush.bf16.msra.mxu0 %v9471
        %9839 = vmatpush.bf16.msra.mxu0 %v9467
        %9840 = vmatpush.bf16.msra.mxu0 %v9463
        %9841 = vmatpush.bf16.msra.mxu0 %v9459
        %9842 = vmatpush.bf16.msra.mxu0 %v9455
        %9843 = vmatpush.bf16.msra.mxu0 %v9451
        %9844 = vmatmul.bf16.gmra.mxu0 %v8738
        %v9845 = vpop.f32.mrf.mxu0
        %v9846 = vadd.f32 %v9833, %v9845
        %v9847 = vpop.f32.mrf.mxu0
        %9848 = vdwg.mxu0
        %9849 = vmatpush.bf16.msra.mxu0 %v9511
        %9850 = vmatpush.bf16.msra.mxu0 %v9507
        %9851 = vmatpush.bf16.msra.mxu0 %v9503
        %9852 = vmatpush.bf16.msra.mxu0 %v9499
        %9853 = vmatpush.bf16.msra.mxu0 %v9495
        %9854 = vmatpush.bf16.msra.mxu0 %v9491
        %9855 = vmatpush.bf16.msra.mxu0 %v9487
        %9856 = vmatpush.bf16.msra.mxu0 %v9483
        %9857 = vmatmul.bf16.gmra.mxu0 %v8739
        %v9858 = vpop.f32.mrf.mxu0
        %v9859 = vadd.f32 %v9846, %v9858
        %v9860 = vpop.f32.mrf.mxu0
        %9861 = vdwg.mxu0
        %9862 = vmatpush.bf16.msra.mxu0 %v9352
        %9863 = vmatpush.bf16.msra.mxu0 %v9348
        %9864 = vmatpush.bf16.msra.mxu0 %v9344
        %9865 = vmatpush.bf16.msra.mxu0 %v9340
        %9866 = vmatpush.bf16.msra.mxu0 %v9336
        %9867 = vmatpush.bf16.msra.mxu0 %v9332
        %9868 = vmatpush.bf16.msra.mxu0 %v9328
        %9869 = vmatpush.bf16.msra.mxu0 %v9324
        %9870 = vmatmul.bf16.gmra.mxu0 %v8734
        %v9871 = vpop.f32.mrf.mxu0
        %v9872 = vadd.f32 0.0, %v9871
        %v9873 = vpop.f32.mrf.mxu0
        %9874 = vdwg.mxu0
        %9875 = vmatpush.bf16.msra.mxu0 %v9384
        %9876 = vmatpush.bf16.msra.mxu0 %v9380
        %9877 = vmatpush.bf16.msra.mxu0 %v9376
        %9878 = vmatpush.bf16.msra.mxu0 %v9372
        %9879 = vmatpush.bf16.msra.mxu0 %v9368
        %9880 = vmatpush.bf16.msra.mxu0 %v9364
        %9881 = vmatpush.bf16.msra.mxu0 %v9360
        %9882 = vmatpush.bf16.msra.mxu0 %v9356
        %9883 = vmatmul.bf16.gmra.mxu0 %v8735
        %v9884 = vpop.f32.mrf.mxu0
        %v9885 = vadd.f32 %v9872, %v9884
        %v9886 = vpop.f32.mrf.mxu0
        %9887 = vdwg.mxu0
        %9888 = vmatpush.bf16.msra.mxu0 %v9416
        %9889 = vmatpush.bf16.msra.mxu0 %v9412
        %9890 = vmatpush.bf16.msra.mxu0 %v9408
        %9891 = vmatpush.bf16.msra.mxu0 %v9404
        %9892 = vmatpush.bf16.msra.mxu0 %v9400
        %9893 = vmatpush.bf16.msra.mxu0 %v9396
        %9894 = vmatpush.bf16.msra.mxu0 %v9392
        %9895 = vmatpush.bf16.msra.mxu0 %v9388
        %9896 = vmatmul.bf16.gmra.mxu0 %v8736
        %v9897 = vpop.f32.mrf.mxu0
        %v9898 = vadd.f32 %v9885, %v9897
        %v9899 = vpop.f32.mrf.mxu0
        %9900 = vdwg.mxu0
        %9901 = vmatpush.bf16.msra.mxu0 %v9448
        %9902 = vmatpush.bf16.msra.mxu0 %v9444
        %9903 = vmatpush.bf16.msra.mxu0 %v9440
        %9904 = vmatpush.bf16.msra.mxu0 %v9436
        %9905 = vmatpush.bf16.msra.mxu0 %v9432
        %9906 = vmatpush.bf16.msra.mxu0 %v9428
        %9907 = vmatpush.bf16.msra.mxu0 %v9424
        %9908 = vmatpush.bf16.msra.mxu0 %v9420
        %9909 = vmatmul.bf16.gmra.mxu0 %v8737
        %v9910 = vpop.f32.mrf.mxu0
        %v9911 = vadd.f32 %v9898, %v9910
        %v9912 = vpop.f32.mrf.mxu0
        %9913 = vdwg.mxu0
        %9914 = vmatpush.bf16.msra.mxu0 %v9480
        %9915 = vmatpush.bf16.msra.mxu0 %v9476
        %9916 = vmatpush.bf16.msra.mxu0 %v9472
        %9917 = vmatpush.bf16.msra.mxu0 %v9468
        %9918 = vmatpush.bf16.msra.mxu0 %v9464
        %9919 = vmatpush.bf16.msra.mxu0 %v9460
        %9920 = vmatpush.bf16.msra.mxu0 %v9456
        %9921 = vmatpush.bf16.msra.mxu0 %v9452
        %9922 = vmatmul.bf16.gmra.mxu0 %v8738
        %v9923 = vpop.f32.mrf.mxu0
        %v9924 = vadd.f32 %v9911, %v9923
        %v9925 = vpop.f32.mrf.mxu0
        %9926 = vdwg.mxu0
        %9927 = vmatpush.bf16.msra.mxu0 %v9512
        %9928 = vmatpush.bf16.msra.mxu0 %v9508
        %9929 = vmatpush.bf16.msra.mxu0 %v9504
        %9930 = vmatpush.bf16.msra.mxu0 %v9500
        %9931 = vmatpush.bf16.msra.mxu0 %v9496
        %9932 = vmatpush.bf16.msra.mxu0 %v9492
        %9933 = vmatpush.bf16.msra.mxu0 %v9488
        %9934 = vmatpush.bf16.msra.mxu0 %v9484
        %9935 = vmatmul.bf16.gmra.mxu0 %v8739
        %v9936 = vpop.f32.mrf.mxu0
        %v9937 = vadd.f32 %v9924, %v9936
        %v9938 = vpop.f32.mrf.mxu0
        %9939 = vdwg.mxu0
        %9940 = vmatpush.bf16.msra.mxu0 %v9353
        %9941 = vmatpush.bf16.msra.mxu0 %v9349
        %9942 = vmatpush.bf16.msra.mxu0 %v9345
        %9943 = vmatpush.bf16.msra.mxu0 %v9341
        %9944 = vmatpush.bf16.msra.mxu0 %v9337
        %9945 = vmatpush.bf16.msra.mxu0 %v9333
        %9946 = vmatpush.bf16.msra.mxu0 %v9329
        %9947 = vmatpush.bf16.msra.mxu0 %v9325
        %9948 = vmatmul.bf16.gmra.mxu0 %v8734
        %v9949 = vpop.f32.mrf.mxu0
        %v9950 = vadd.f32 0.0, %v9949
        %v9951 = vpop.f32.mrf.mxu0
        %9952 = vdwg.mxu0
        %9953 = vmatpush.bf16.msra.mxu0 %v9385
        %9954 = vmatpush.bf16.msra.mxu0 %v9381
        %9955 = vmatpush.bf16.msra.mxu0 %v9377
        %9956 = vmatpush.bf16.msra.mxu0 %v9373
        %9957 = vmatpush.bf16.msra.mxu0 %v9369
        %9958 = vmatpush.bf16.msra.mxu0 %v9365
        %9959 = vmatpush.bf16.msra.mxu0 %v9361
        %9960 = vmatpush.bf16.msra.mxu0 %v9357
        %9961 = vmatmul.bf16.gmra.mxu0 %v8735
        %v9962 = vpop.f32.mrf.mxu0
        %v9963 = vadd.f32 %v9950, %v9962
        %v9964 = vpop.f32.mrf.mxu0
        %9965 = vdwg.mxu0
        %9966 = vmatpush.bf16.msra.mxu0 %v9417
        %9967 = vmatpush.bf16.msra.mxu0 %v9413
        %9968 = vmatpush.bf16.msra.mxu0 %v9409
        %9969 = vmatpush.bf16.msra.mxu0 %v9405
        %9970 = vmatpush.bf16.msra.mxu0 %v9401
        %9971 = vmatpush.bf16.msra.mxu0 %v9397
        %9972 = vmatpush.bf16.msra.mxu0 %v9393
        %9973 = vmatpush.bf16.msra.mxu0 %v9389
        %9974 = vmatmul.bf16.gmra.mxu0 %v8736
        %v9975 = vpop.f32.mrf.mxu0
        %v9976 = vadd.f32 %v9963, %v9975
        %v9977 = vpop.f32.mrf.mxu0
        %9978 = vdwg.mxu0
        %9979 = vmatpush.bf16.msra.mxu0 %v9449
        %9980 = vmatpush.bf16.msra.mxu0 %v9445
        %9981 = vmatpush.bf16.msra.mxu0 %v9441
        %9982 = vmatpush.bf16.msra.mxu0 %v9437
        %9983 = vmatpush.bf16.msra.mxu0 %v9433
        %9984 = vmatpush.bf16.msra.mxu0 %v9429
        %9985 = vmatpush.bf16.msra.mxu0 %v9425
        %9986 = vmatpush.bf16.msra.mxu0 %v9421
        %9987 = vmatmul.bf16.gmra.mxu0 %v8737
        %v9988 = vpop.f32.mrf.mxu0
        %v9989 = vadd.f32 %v9976, %v9988
        %v9990 = vpop.f32.mrf.mxu0
        %9991 = vdwg.mxu0
        %9992 = vmatpush.bf16.msra.mxu0 %v9481
        %9993 = vmatpush.bf16.msra.mxu0 %v9477
        %9994 = vmatpush.bf16.msra.mxu0 %v9473
        %9995 = vmatpush.bf16.msra.mxu0 %v9469
        %9996 = vmatpush.bf16.msra.mxu0 %v9465
        %9997 = vmatpush.bf16.msra.mxu0 %v9461
        %9998 = vmatpush.bf16.msra.mxu0 %v9457
        %9999 = vmatpush.bf16.msra.mxu0 %v9453
        %10000 = vmatmul.bf16.gmra.mxu0 %v8738
        %v10001 = vpop.f32.mrf.mxu0
        %v10002 = vadd.f32 %v9989, %v10001
        %v10003 = vpop.f32.mrf.mxu0
        %10004 = vdwg.mxu0
        %10005 = vmatpush.bf16.msra.mxu0 %v9513
        %10006 = vmatpush.bf16.msra.mxu0 %v9509
        %10007 = vmatpush.bf16.msra.mxu0 %v9505
        %10008 = vmatpush.bf16.msra.mxu0 %v9501
        %10009 = vmatpush.bf16.msra.mxu0 %v9497
        %10010 = vmatpush.bf16.msra.mxu0 %v9493
        %10011 = vmatpush.bf16.msra.mxu0 %v9489
        %10012 = vmatpush.bf16.msra.mxu0 %v9485
        %10013 = vmatmul.bf16.gmra.mxu0 %v8739
        %v10014 = vpop.f32.mrf.mxu0
        %v10015 = vadd.f32 %v10002, %v10014
        %v10016 = vpop.f32.mrf.mxu0
        %10017 = vdwg.mxu0
        %v10018 = vadd.f32 %v8513, %v9781
        %v10019 = vadd.f32 %v8514, %v9859
        %v10020 = vadd.f32 %v8515, %v9937
        %v10021 = vadd.f32 %v8516, %v10015
        %v10022 = vld [vmem:[#allocation10] sm:$0xf]
        %v10024 = vperm.slane %v10022, 0
        %v10025 = vperm.slane %v10022, 1
        %v10026 = vperm.slane %v10022, 2
        %v10027 = vperm.slane %v10022, 3
        %v10032 = vadd.f32 %v10018, %v10024
        %v10033 = vadd.f32 %v10019, %v10025
        %v10034 = vadd.f32 %v10020, %v10026
        %v10035 = vadd.f32 %v10021, %v10027
        %v10036 = vmax.f32 %v10032, 0.0
        %v10037 = vmax.f32 %v10033, 0.0
        %v10038 = vmax.f32 %v10034, 0.0
        %v10039 = vmax.f32 %v10035, 0.0
        %10044 = vrot.lane.b32.xlu0 %v10036, 64
        %v10045 = vpop.permute.xlu0 %10044
        %10046 = vrot.lane.b32.xlu0 %v10037, 64
        %v10047 = vpop.permute.xlu0 %10046
        %10048 = vrot.lane.b32.xlu0 %v10038, 64
        %v10049 = vpop.permute.xlu0 %10048
        %10050 = vrot.lane.b32.xlu0 %v10039, 64
        %v10051 = vpop.permute.xlu0 %10050
        %vm10052 = vcmask 523264
        %v10053 = vsel %vm10052, %v10045, %v10047
        %v10054 = vsel %vm10052, %v10047, %v10049
        %v10055 = vsel %vm10052, %v10049, %v10051
        %v10061 = vsel %vm10052, %v10051, %v10045
        %v10062 = vmax.f32 %v10036, %v10053
        %v10063 = vmax.f32 %v10037, %v10054
        %v10064 = vmax.f32 %v10038, %v10055
        %v10065 = vmax.f32 %v10039, %v10061
        %10066 = vst [vmem:[#allocation3] sm:$0xff] %v10062
        %10067 = vst [vmem:[#allocation3 + $0x8] sm:$0xff] %v10063
        %10068 = vst [vmem:[#allocation3 + $0x10] sm:$0xff] %v10064
        %10069 = vst [vmem:[#allocation3 + $0x18] sm:$0xff] %v10065
        %v10070 = vld [vmem:[#allocation3] ss:$8 sm:$0xf]
        %s10071 = scalar_lea.vmem [#allocation3], 1
        %v10072 = vld [vmem:[%s10071] ss:$8 sm:$0xf]
        %v10073 = vmax.f32 %v10070, %v10072
        %v10075 = vperm.slane %v10073, 0
        %v10076 = vperm.slane %v10073, 1
        %v10077 = vperm.slane %v10073, 2
        %v10078 = vperm.slane %v10073, 3
        %v10083 = vpack.c.bf16 %v10075, %v10075
        %v10084 = vpack.c.bf16 %v10076, %v10076
        %v10085 = vpack.c.bf16 %v10077, %v10077
        %v10086 = vpack.c.bf16 %v10078, %v10078
        %v10087 = vld [vmem:[#allocation12] sm:$0xff]
        %v10088 = vld [vmem:[#allocation12 + $0x8] sm:$0xff]
        %v10089 = vld [vmem:[#allocation12 + $0x10] sm:$0xff]
        %v10090 = vld [vmem:[#allocation12 + $0x18] sm:$0xff]
        %v10091 = vld [vmem:[#allocation12 + $0x20] sm:$0xff]
        %v10092 = vld [vmem:[#allocation12 + $0x28] sm:$0xff]
        %v10093 = vld [vmem:[#allocation12 + $0x30] sm:$0xff]
        %v10094 = vld [vmem:[#allocation12 + $0x38] sm:$0xff]
        %v10095 = vld [vmem:[#allocation12 + $0x40] sm:$0xff]
        %v10096 = vld [vmem:[#allocation12 + $0x48] sm:$0xff]
        %v10097 = vld [vmem:[#allocation12 + $0x50] sm:$0xff]
        %v10098 = vld [vmem:[#allocation12 + $0x58] sm:$0xff]
        %v10099 = vld [vmem:[#allocation12 + $0x60] sm:$0xff]
        %v10100 = vld [vmem:[#allocation12 + $0x68] sm:$0xff]
        %v10101 = vld [vmem:[#allocation12 + $0x70] sm:$0xff]
        %v10102 = vld [vmem:[#allocation12 + $0x78] sm:$0xff]
        %v10103 = vld [vmem:[#allocation12 + $0x80] sm:$0xff]
        %v10104 = vld [vmem:[#allocation12 + $0x88] sm:$0xff]
        %v10105 = vld [vmem:[#allocation12 + $0x90] sm:$0xff]
        %v10106 = vld [vmem:[#allocation12 + $0x98] sm:$0xff]
        %v10107 = vld [vmem:[#allocation12 + $0xa0] sm:$0xff]
        %v10108 = vld [vmem:[#allocation12 + $0xa8] sm:$0xff]
        %v10109 = vld [vmem:[#allocation12 + $0xb0] sm:$0xff]
        %v10110 = vld [vmem:[#allocation12 + $0xb8] sm:$0xff]
        %v10111 = vld [vmem:[#allocation12 + $0xc0] sm:$0xff]
        %v10112 = vld [vmem:[#allocation12 + $0xc8] sm:$0xff]
        %v10113 = vld [vmem:[#allocation12 + $0xd0] sm:$0xff]
        %v10114 = vld [vmem:[#allocation12 + $0xd8] sm:$0xff]
        %v10115 = vld [vmem:[#allocation12 + $0xe0] sm:$0xff]
        %v10116 = vld [vmem:[#allocation12 + $0xe8] sm:$0xff]
        %v10117 = vld [vmem:[#allocation12 + $0xf0] sm:$0xff]
        %v10118 = vld [vmem:[#allocation12 + $0xf8] sm:$0xff]
        %v10119 = vld [vmem:[#allocation12 + $0x100] sm:$0xff]
        %v10120 = vld [vmem:[#allocation12 + $0x108] sm:$0xff]
        %v10121 = vld [vmem:[#allocation12 + $0x110] sm:$0xff]
        %v10122 = vld [vmem:[#allocation12 + $0x118] sm:$0xff]
        %v10123 = vld [vmem:[#allocation12 + $0x120] sm:$0xff]
        %v10124 = vld [vmem:[#allocation12 + $0x128] sm:$0xff]
        %v10125 = vld [vmem:[#allocation12 + $0x130] sm:$0xff]
        %v10126 = vld [vmem:[#allocation12 + $0x138] sm:$0xff]
        %v10127 = vld [vmem:[#allocation12 + $0x140] sm:$0xff]
        %v10128 = vld [vmem:[#allocation12 + $0x148] sm:$0xff]
        %v10129 = vld [vmem:[#allocation12 + $0x150] sm:$0xff]
        %v10130 = vld [vmem:[#allocation12 + $0x158] sm:$0xff]
        %v10131 = vld [vmem:[#allocation12 + $0x160] sm:$0xff]
        %v10132 = vld [vmem:[#allocation12 + $0x168] sm:$0xff]
        %v10133 = vld [vmem:[#allocation12 + $0x170] sm:$0xff]
        %v10134 = vld [vmem:[#allocation12 + $0x178] sm:$0xff]
        %v10135 = vld [vmem:[#allocation12 + $0x180] sm:$0xff]
        %v10136 = vld [vmem:[#allocation12 + $0x188] sm:$0xff]
        %v10137 = vld [vmem:[#allocation12 + $0x190] sm:$0xff]
        %v10138 = vld [vmem:[#allocation12 + $0x198] sm:$0xff]
        %v10139 = vld [vmem:[#allocation12 + $0x1a0] sm:$0xff]
        %v10140 = vld [vmem:[#allocation12 + $0x1a8] sm:$0xff]
        %v10141 = vld [vmem:[#allocation12 + $0x1b0] sm:$0xff]
        %v10142 = vld [vmem:[#allocation12 + $0x1b8] sm:$0xff]
        %v10143 = vld [vmem:[#allocation12 + $0x1c0] sm:$0xff]
        %v10144 = vld [vmem:[#allocation12 + $0x1c8] sm:$0xff]
        %v10145 = vld [vmem:[#allocation12 + $0x1d0] sm:$0xff]
        %v10146 = vld [vmem:[#allocation12 + $0x1d8] sm:$0xff]
        %v10147 = vld [vmem:[#allocation12 + $0x1e0] sm:$0xff]
        %v10148 = vld [vmem:[#allocation12 + $0x1e8] sm:$0xff]
        %v10149 = vld [vmem:[#allocation12 + $0x1f0] sm:$0xff]
        %v10150 = vld [vmem:[#allocation12 + $0x1f8] sm:$0xff]
        %s10151 = scalar_lea.vmem [#allocation3], 2
        %v10152 = vld [vmem:[%s10151] ss:$8 sm:$0xf]
        %s10153 = scalar_lea.vmem [#allocation3], 3
        %v10154 = vld [vmem:[%s10153] ss:$8 sm:$0xf]
        %v10155 = vmax.f32 %v10152, %v10154
        %v10157 = vperm.slane %v10155, 0
        %v10158 = vperm.slane %v10155, 1
        %v10159 = vperm.slane %v10155, 2
        %v10160 = vperm.slane %v10155, 3
        %v10165 = vpack.c.bf16 %v10157, %v10157
        %v10166 = vpack.c.bf16 %v10158, %v10158
        %v10167 = vpack.c.bf16 %v10159, %v10159
        %v10168 = vpack.c.bf16 %v10160, %v10160
        %s10169 = scalar_lea.vmem [#allocation12], 512
        %v10170 = vld [vmem:[%s10169] sm:$0xff]
        %v10171 = vld [vmem:[%s10169 + $0x8] sm:$0xff]
        %v10172 = vld [vmem:[%s10169 + $0x10] sm:$0xff]
        %v10173 = vld [vmem:[%s10169 + $0x18] sm:$0xff]
        %v10174 = vld [vmem:[%s10169 + $0x20] sm:$0xff]
        %v10175 = vld [vmem:[%s10169 + $0x28] sm:$0xff]
        %v10176 = vld [vmem:[%s10169 + $0x30] sm:$0xff]
        %v10177 = vld [vmem:[%s10169 + $0x38] sm:$0xff]
        %v10178 = vld [vmem:[%s10169 + $0x40] sm:$0xff]
        %v10179 = vld [vmem:[%s10169 + $0x48] sm:$0xff]
        %v10180 = vld [vmem:[%s10169 + $0x50] sm:$0xff]
        %v10181 = vld [vmem:[%s10169 + $0x58] sm:$0xff]
        %v10182 = vld [vmem:[%s10169 + $0x60] sm:$0xff]
        %v10183 = vld [vmem:[%s10169 + $0x68] sm:$0xff]
        %v10184 = vld [vmem:[%s10169 + $0x70] sm:$0xff]
        %v10185 = vld [vmem:[%s10169 + $0x78] sm:$0xff]
        %v10186 = vld [vmem:[%s10169 + $0x80] sm:$0xff]
        %v10187 = vld [vmem:[%s10169 + $0x88] sm:$0xff]
        %v10188 = vld [vmem:[%s10169 + $0x90] sm:$0xff]
        %v10189 = vld [vmem:[%s10169 + $0x98] sm:$0xff]
        %v10190 = vld [vmem:[%s10169 + $0xa0] sm:$0xff]
        %v10191 = vld [vmem:[%s10169 + $0xa8] sm:$0xff]
        %v10192 = vld [vmem:[%s10169 + $0xb0] sm:$0xff]
        %v10193 = vld [vmem:[%s10169 + $0xb8] sm:$0xff]
        %v10194 = vld [vmem:[%s10169 + $0xc0] sm:$0xff]
        %v10195 = vld [vmem:[%s10169 + $0xc8] sm:$0xff]
        %v10196 = vld [vmem:[%s10169 + $0xd0] sm:$0xff]
        %v10197 = vld [vmem:[%s10169 + $0xd8] sm:$0xff]
        %v10198 = vld [vmem:[%s10169 + $0xe0] sm:$0xff]
        %v10199 = vld [vmem:[%s10169 + $0xe8] sm:$0xff]
        %v10200 = vld [vmem:[%s10169 + $0xf0] sm:$0xff]
        %v10201 = vld [vmem:[%s10169 + $0xf8] sm:$0xff]
        %v10202 = vld [vmem:[%s10169 + $0x100] sm:$0xff]
        %v10203 = vld [vmem:[%s10169 + $0x108] sm:$0xff]
        %v10204 = vld [vmem:[%s10169 + $0x110] sm:$0xff]
        %v10205 = vld [vmem:[%s10169 + $0x118] sm:$0xff]
        %v10206 = vld [vmem:[%s10169 + $0x120] sm:$0xff]
        %v10207 = vld [vmem:[%s10169 + $0x128] sm:$0xff]
        %v10208 = vld [vmem:[%s10169 + $0x130] sm:$0xff]
        %v10209 = vld [vmem:[%s10169 + $0x138] sm:$0xff]
        %v10210 = vld [vmem:[%s10169 + $0x140] sm:$0xff]
        %v10211 = vld [vmem:[%s10169 + $0x148] sm:$0xff]
        %v10212 = vld [vmem:[%s10169 + $0x150] sm:$0xff]
        %v10213 = vld [vmem:[%s10169 + $0x158] sm:$0xff]
        %v10214 = vld [vmem:[%s10169 + $0x160] sm:$0xff]
        %v10215 = vld [vmem:[%s10169 + $0x168] sm:$0xff]
        %v10216 = vld [vmem:[%s10169 + $0x170] sm:$0xff]
        %v10217 = vld [vmem:[%s10169 + $0x178] sm:$0xff]
        %v10218 = vld [vmem:[%s10169 + $0x180] sm:$0xff]
        %v10219 = vld [vmem:[%s10169 + $0x188] sm:$0xff]
        %v10220 = vld [vmem:[%s10169 + $0x190] sm:$0xff]
        %v10221 = vld [vmem:[%s10169 + $0x198] sm:$0xff]
        %v10222 = vld [vmem:[%s10169 + $0x1a0] sm:$0xff]
        %v10223 = vld [vmem:[%s10169 + $0x1a8] sm:$0xff]
        %v10224 = vld [vmem:[%s10169 + $0x1b0] sm:$0xff]
        %v10225 = vld [vmem:[%s10169 + $0x1b8] sm:$0xff]
        %v10226 = vld [vmem:[%s10169 + $0x1c0] sm:$0xff]
        %v10227 = vld [vmem:[%s10169 + $0x1c8] sm:$0xff]
        %v10228 = vld [vmem:[%s10169 + $0x1d0] sm:$0xff]
        %v10229 = vld [vmem:[%s10169 + $0x1d8] sm:$0xff]
        %v10230 = vld [vmem:[%s10169 + $0x1e0] sm:$0xff]
        %v10231 = vld [vmem:[%s10169 + $0x1e8] sm:$0xff]
        %v10232 = vld [vmem:[%s10169 + $0x1f0] sm:$0xff]
        %v10233 = vld [vmem:[%s10169 + $0x1f8] sm:$0xff]
        %v10298 = vunpack.c.l.b16 %v10170
        %v10299 = vunpack.c.h.b16 %v10170
        %v10300 = vunpack.c.l.b16 %v10171
        %v10301 = vunpack.c.h.b16 %v10171
        %v10302 = vunpack.c.l.b16 %v10172
        %v10303 = vunpack.c.h.b16 %v10172
        %v10304 = vunpack.c.l.b16 %v10173
        %v10305 = vunpack.c.h.b16 %v10173
        %v10306 = vunpack.c.l.b16 %v10174
        %v10307 = vunpack.c.h.b16 %v10174
        %v10308 = vunpack.c.l.b16 %v10175
        %v10309 = vunpack.c.h.b16 %v10175
        %v10310 = vunpack.c.l.b16 %v10176
        %v10311 = vunpack.c.h.b16 %v10176
        %v10312 = vunpack.c.l.b16 %v10177
        %v10313 = vunpack.c.h.b16 %v10177
        %v10314 = vunpack.c.l.b16 %v10178
        %v10315 = vunpack.c.h.b16 %v10178
        %v10316 = vunpack.c.l.b16 %v10179
        %v10317 = vunpack.c.h.b16 %v10179
        %v10318 = vunpack.c.l.b16 %v10180
        %v10319 = vunpack.c.h.b16 %v10180
        %v10320 = vunpack.c.l.b16 %v10181
        %v10321 = vunpack.c.h.b16 %v10181
        %v10322 = vunpack.c.l.b16 %v10182
        %v10323 = vunpack.c.h.b16 %v10182
        %v10324 = vunpack.c.l.b16 %v10183
        %v10325 = vunpack.c.h.b16 %v10183
        %v10326 = vunpack.c.l.b16 %v10184
        %v10327 = vunpack.c.h.b16 %v10184
        %v10328 = vunpack.c.l.b16 %v10185
        %v10329 = vunpack.c.h.b16 %v10185
        %v10330 = vunpack.c.l.b16 %v10186
        %v10331 = vunpack.c.h.b16 %v10186
        %v10332 = vunpack.c.l.b16 %v10187
        %v10333 = vunpack.c.h.b16 %v10187
        %v10334 = vunpack.c.l.b16 %v10188
        %v10335 = vunpack.c.h.b16 %v10188
        %v10336 = vunpack.c.l.b16 %v10189
        %v10337 = vunpack.c.h.b16 %v10189
        %v10338 = vunpack.c.l.b16 %v10190
        %v10339 = vunpack.c.h.b16 %v10190
        %v10340 = vunpack.c.l.b16 %v10191
        %v10341 = vunpack.c.h.b16 %v10191
        %v10342 = vunpack.c.l.b16 %v10192
        %v10343 = vunpack.c.h.b16 %v10192
        %v10344 = vunpack.c.l.b16 %v10193
        %v10345 = vunpack.c.h.b16 %v10193
        %v10346 = vunpack.c.l.b16 %v10194
        %v10347 = vunpack.c.h.b16 %v10194
        %v10348 = vunpack.c.l.b16 %v10195
        %v10349 = vunpack.c.h.b16 %v10195
        %v10350 = vunpack.c.l.b16 %v10196
        %v10351 = vunpack.c.h.b16 %v10196
        %v10352 = vunpack.c.l.b16 %v10197
        %v10353 = vunpack.c.h.b16 %v10197
        %v10354 = vunpack.c.l.b16 %v10198
        %v10355 = vunpack.c.h.b16 %v10198
        %v10356 = vunpack.c.l.b16 %v10199
        %v10357 = vunpack.c.h.b16 %v10199
        %v10358 = vunpack.c.l.b16 %v10200
        %v10359 = vunpack.c.h.b16 %v10200
        %v10360 = vunpack.c.l.b16 %v10201
        %v10361 = vunpack.c.h.b16 %v10201
        %v10362 = vunpack.c.l.b16 %v10202
        %v10363 = vunpack.c.h.b16 %v10202
        %v10364 = vunpack.c.l.b16 %v10203
        %v10365 = vunpack.c.h.b16 %v10203
        %v10366 = vunpack.c.l.b16 %v10204
        %v10367 = vunpack.c.h.b16 %v10204
        %v10368 = vunpack.c.l.b16 %v10205
        %v10369 = vunpack.c.h.b16 %v10205
        %v10370 = vunpack.c.l.b16 %v10206
        %v10371 = vunpack.c.h.b16 %v10206
        %v10372 = vunpack.c.l.b16 %v10207
        %v10373 = vunpack.c.h.b16 %v10207
        %v10374 = vunpack.c.l.b16 %v10208
        %v10375 = vunpack.c.h.b16 %v10208
        %v10376 = vunpack.c.l.b16 %v10209
        %v10377 = vunpack.c.h.b16 %v10209
        %v10378 = vunpack.c.l.b16 %v10210
        %v10379 = vunpack.c.h.b16 %v10210
        %v10380 = vunpack.c.l.b16 %v10211
        %v10381 = vunpack.c.h.b16 %v10211
        %v10382 = vunpack.c.l.b16 %v10212
        %v10383 = vunpack.c.h.b16 %v10212
        %v10384 = vunpack.c.l.b16 %v10213
        %v10385 = vunpack.c.h.b16 %v10213
        %v10386 = vunpack.c.l.b16 %v10214
        %v10387 = vunpack.c.h.b16 %v10214
        %v10388 = vunpack.c.l.b16 %v10215
        %v10389 = vunpack.c.h.b16 %v10215
        %v10390 = vunpack.c.l.b16 %v10216
        %v10391 = vunpack.c.h.b16 %v10216
        %v10392 = vunpack.c.l.b16 %v10217
        %v10393 = vunpack.c.h.b16 %v10217
        %v10394 = vunpack.c.l.b16 %v10218
        %v10395 = vunpack.c.h.b16 %v10218
        %v10396 = vunpack.c.l.b16 %v10219
        %v10397 = vunpack.c.h.b16 %v10219
        %v10398 = vunpack.c.l.b16 %v10220
        %v10399 = vunpack.c.h.b16 %v10220
        %v10400 = vunpack.c.l.b16 %v10221
        %v10401 = vunpack.c.h.b16 %v10221
        %v10402 = vunpack.c.l.b16 %v10222
        %v10403 = vunpack.c.h.b16 %v10222
        %v10404 = vunpack.c.l.b16 %v10223
        %v10405 = vunpack.c.h.b16 %v10223
        %v10406 = vunpack.c.l.b16 %v10224
        %v10407 = vunpack.c.h.b16 %v10224
        %v10408 = vunpack.c.l.b16 %v10225
        %v10409 = vunpack.c.h.b16 %v10225
        %v10410 = vunpack.c.l.b16 %v10226
        %v10411 = vunpack.c.h.b16 %v10226
        %v10412 = vunpack.c.l.b16 %v10227
        %v10413 = vunpack.c.h.b16 %v10227
        %v10414 = vunpack.c.l.b16 %v10228
        %v10415 = vunpack.c.h.b16 %v10228
        %v10416 = vunpack.c.l.b16 %v10229
        %v10417 = vunpack.c.h.b16 %v10229
        %v10418 = vunpack.c.l.b16 %v10230
        %v10419 = vunpack.c.h.b16 %v10230
        %v10420 = vunpack.c.l.b16 %v10231
        %v10421 = vunpack.c.h.b16 %v10231
        %v10422 = vunpack.c.l.b16 %v10232
        %v10423 = vunpack.c.h.b16 %v10232
        %v10424 = vunpack.c.l.b16 %v10233
        %v10425 = vunpack.c.h.b16 %v10233
        %v10426 = vpack.c.b16 %v10300, %v10298
        %v10427 = vpack.c.b16 %v10301, %v10299
        %v10428 = vpack.c.b16 %v10304, %v10302
        %v10429 = vpack.c.b16 %v10305, %v10303
        %v10430 = vpack.c.b16 %v10308, %v10306
        %v10431 = vpack.c.b16 %v10309, %v10307
        %v10432 = vpack.c.b16 %v10312, %v10310
        %v10433 = vpack.c.b16 %v10313, %v10311
        %v10434 = vpack.c.b16 %v10316, %v10314
        %v10435 = vpack.c.b16 %v10317, %v10315
        %v10436 = vpack.c.b16 %v10320, %v10318
        %v10437 = vpack.c.b16 %v10321, %v10319
        %v10438 = vpack.c.b16 %v10324, %v10322
        %v10439 = vpack.c.b16 %v10325, %v10323
        %v10440 = vpack.c.b16 %v10328, %v10326
        %v10441 = vpack.c.b16 %v10329, %v10327
        %v10442 = vpack.c.b16 %v10332, %v10330
        %v10443 = vpack.c.b16 %v10333, %v10331
        %v10444 = vpack.c.b16 %v10336, %v10334
        %v10445 = vpack.c.b16 %v10337, %v10335
        %v10446 = vpack.c.b16 %v10340, %v10338
        %v10447 = vpack.c.b16 %v10341, %v10339
        %v10448 = vpack.c.b16 %v10344, %v10342
        %v10449 = vpack.c.b16 %v10345, %v10343
        %v10450 = vpack.c.b16 %v10348, %v10346
        %v10451 = vpack.c.b16 %v10349, %v10347
        %v10452 = vpack.c.b16 %v10352, %v10350
        %v10453 = vpack.c.b16 %v10353, %v10351
        %v10454 = vpack.c.b16 %v10356, %v10354
        %v10455 = vpack.c.b16 %v10357, %v10355
        %v10456 = vpack.c.b16 %v10360, %v10358
        %v10457 = vpack.c.b16 %v10361, %v10359
        %v10458 = vpack.c.b16 %v10364, %v10362
        %v10459 = vpack.c.b16 %v10365, %v10363
        %v10460 = vpack.c.b16 %v10368, %v10366
        %v10461 = vpack.c.b16 %v10369, %v10367
        %v10462 = vpack.c.b16 %v10372, %v10370
        %v10463 = vpack.c.b16 %v10373, %v10371
        %v10464 = vpack.c.b16 %v10376, %v10374
        %v10465 = vpack.c.b16 %v10377, %v10375
        %v10466 = vpack.c.b16 %v10380, %v10378
        %v10467 = vpack.c.b16 %v10381, %v10379
        %v10468 = vpack.c.b16 %v10384, %v10382
        %v10469 = vpack.c.b16 %v10385, %v10383
        %v10470 = vpack.c.b16 %v10388, %v10386
        %v10471 = vpack.c.b16 %v10389, %v10387
        %v10472 = vpack.c.b16 %v10392, %v10390
        %v10473 = vpack.c.b16 %v10393, %v10391
        %v10474 = vpack.c.b16 %v10396, %v10394
        %v10475 = vpack.c.b16 %v10397, %v10395
        %v10476 = vpack.c.b16 %v10400, %v10398
        %v10477 = vpack.c.b16 %v10401, %v10399
        %v10478 = vpack.c.b16 %v10404, %v10402
        %v10479 = vpack.c.b16 %v10405, %v10403
        %v10480 = vpack.c.b16 %v10408, %v10406
        %v10481 = vpack.c.b16 %v10409, %v10407
        %v10482 = vpack.c.b16 %v10412, %v10410
        %v10483 = vpack.c.b16 %v10413, %v10411
        %v10484 = vpack.c.b16 %v10416, %v10414
        %v10485 = vpack.c.b16 %v10417, %v10415
        %v10486 = vpack.c.b16 %v10420, %v10418
        %v10487 = vpack.c.b16 %v10421, %v10419
        %v10488 = vpack.c.b16 %v10424, %v10422
        %v10489 = vpack.c.b16 %v10425, %v10423
        %10554 = vmatpush.bf16.msra.mxu0 %v10440
        %10555 = vmatpush.bf16.msra.mxu0 %v10438
        %10556 = vmatpush.bf16.msra.mxu0 %v10436
        %10557 = vmatpush.bf16.msra.mxu0 %v10434
        %10558 = vmatpush.bf16.msra.mxu0 %v10432
        %10559 = vmatpush.bf16.msra.mxu0 %v10430
        %10560 = vmatpush.bf16.msra.mxu0 %v10428
        %10561 = vmatpush.bf16.msra.mxu0 %v10426
        %10562 = vmatmul.bf16.gmra.mxu0 %v10165
        %v10563 = vpop.f32.mrf.mxu0
        %v10564 = vadd.f32 0.0, %v10563
        %v10565 = vpop.f32.mrf.mxu0
        %10566 = vdwg.mxu0
        %10567 = vmatpush.bf16.msra.mxu0 %v10456
        %10568 = vmatpush.bf16.msra.mxu0 %v10454
        %10569 = vmatpush.bf16.msra.mxu0 %v10452
        %10570 = vmatpush.bf16.msra.mxu0 %v10450
        %10571 = vmatpush.bf16.msra.mxu0 %v10448
        %10572 = vmatpush.bf16.msra.mxu0 %v10446
        %10573 = vmatpush.bf16.msra.mxu0 %v10444
        %10574 = vmatpush.bf16.msra.mxu0 %v10442
        %10575 = vmatmul.bf16.gmra.mxu0 %v10166
        %v10576 = vpop.f32.mrf.mxu0
        %v10577 = vadd.f32 %v10564, %v10576
        %v10578 = vpop.f32.mrf.mxu0
        %10579 = vdwg.mxu0
        %10580 = vmatpush.bf16.msra.mxu0 %v10472
        %10581 = vmatpush.bf16.msra.mxu0 %v10470
        %10582 = vmatpush.bf16.msra.mxu0 %v10468
        %10583 = vmatpush.bf16.msra.mxu0 %v10466
        %10584 = vmatpush.bf16.msra.mxu0 %v10464
        %10585 = vmatpush.bf16.msra.mxu0 %v10462
        %10586 = vmatpush.bf16.msra.mxu0 %v10460
        %10587 = vmatpush.bf16.msra.mxu0 %v10458
        %10588 = vmatmul.bf16.gmra.mxu0 %v10167
        %v10589 = vpop.f32.mrf.mxu0
        %v10590 = vadd.f32 %v10577, %v10589
        %v10591 = vpop.f32.mrf.mxu0
        %10592 = vdwg.mxu0
        %10593 = vmatpush.bf16.msra.mxu0 %v10488
        %10594 = vmatpush.bf16.msra.mxu0 %v10486
        %10595 = vmatpush.bf16.msra.mxu0 %v10484
        %10596 = vmatpush.bf16.msra.mxu0 %v10482
        %10597 = vmatpush.bf16.msra.mxu0 %v10480
        %10598 = vmatpush.bf16.msra.mxu0 %v10478
        %10599 = vmatpush.bf16.msra.mxu0 %v10476
        %10600 = vmatpush.bf16.msra.mxu0 %v10474
        %10601 = vmatmul.bf16.gmra.mxu0 %v10168
        %v10602 = vpop.f32.mrf.mxu0
        %v10603 = vadd.f32 %v10590, %v10602
        %v10604 = vpop.f32.mrf.mxu0
        %10605 = vdwg.mxu0
        %10606 = vmatpush.bf16.msra.mxu0 %v10441
        %10607 = vmatpush.bf16.msra.mxu0 %v10439
        %10608 = vmatpush.bf16.msra.mxu0 %v10437
        %10609 = vmatpush.bf16.msra.mxu0 %v10435
        %10610 = vmatpush.bf16.msra.mxu0 %v10433
        %10611 = vmatpush.bf16.msra.mxu0 %v10431
        %10612 = vmatpush.bf16.msra.mxu0 %v10429
        %10613 = vmatpush.bf16.msra.mxu0 %v10427
        %10614 = vmatmul.bf16.gmra.mxu0 %v10165
        %v10615 = vpop.f32.mrf.mxu0
        %v10616 = vadd.f32 0.0, %v10615
        %v10617 = vpop.f32.mrf.mxu0
        %10618 = vdwg.mxu0
        %10619 = vmatpush.bf16.msra.mxu0 %v10457
        %10620 = vmatpush.bf16.msra.mxu0 %v10455
        %10621 = vmatpush.bf16.msra.mxu0 %v10453
        %10622 = vmatpush.bf16.msra.mxu0 %v10451
        %10623 = vmatpush.bf16.msra.mxu0 %v10449
        %10624 = vmatpush.bf16.msra.mxu0 %v10447
        %10625 = vmatpush.bf16.msra.mxu0 %v10445
        %10626 = vmatpush.bf16.msra.mxu0 %v10443
        %10627 = vmatmul.bf16.gmra.mxu0 %v10166
        %v10628 = vpop.f32.mrf.mxu0
        %v10629 = vadd.f32 %v10616, %v10628
        %v10630 = vpop.f32.mrf.mxu0
        %10631 = vdwg.mxu0
        %10632 = vmatpush.bf16.msra.mxu0 %v10473
        %10633 = vmatpush.bf16.msra.mxu0 %v10471
        %10634 = vmatpush.bf16.msra.mxu0 %v10469
        %10635 = vmatpush.bf16.msra.mxu0 %v10467
        %10636 = vmatpush.bf16.msra.mxu0 %v10465
        %10637 = vmatpush.bf16.msra.mxu0 %v10463
        %10638 = vmatpush.bf16.msra.mxu0 %v10461
        %10639 = vmatpush.bf16.msra.mxu0 %v10459
        %10640 = vmatmul.bf16.gmra.mxu0 %v10167
        %v10641 = vpop.f32.mrf.mxu0
        %v10642 = vadd.f32 %v10629, %v10641
        %v10643 = vpop.f32.mrf.mxu0
        %10644 = vdwg.mxu0
        %10645 = vmatpush.bf16.msra.mxu0 %v10489
        %10646 = vmatpush.bf16.msra.mxu0 %v10487
        %10647 = vmatpush.bf16.msra.mxu0 %v10485
        %10648 = vmatpush.bf16.msra.mxu0 %v10483
        %10649 = vmatpush.bf16.msra.mxu0 %v10481
        %10650 = vmatpush.bf16.msra.mxu0 %v10479
        %10651 = vmatpush.bf16.msra.mxu0 %v10477
        %10652 = vmatpush.bf16.msra.mxu0 %v10475
        %10653 = vmatmul.bf16.gmra.mxu0 %v10168
        %v10654 = vpop.f32.mrf.mxu0
        %v10655 = vadd.f32 %v10642, %v10654
        %v10656 = vpop.f32.mrf.mxu0
        %10657 = vdwg.mxu0
        %v10722 = vunpack.c.l.b16 %v10087
        %v10723 = vunpack.c.h.b16 %v10087
        %v10724 = vunpack.c.l.b16 %v10088
        %v10725 = vunpack.c.h.b16 %v10088
        %v10726 = vunpack.c.l.b16 %v10089
        %v10727 = vunpack.c.h.b16 %v10089
        %v10728 = vunpack.c.l.b16 %v10090
        %v10729 = vunpack.c.h.b16 %v10090
        %v10730 = vunpack.c.l.b16 %v10091
        %v10731 = vunpack.c.h.b16 %v10091
        %v10732 = vunpack.c.l.b16 %v10092
        %v10733 = vunpack.c.h.b16 %v10092
        %v10734 = vunpack.c.l.b16 %v10093
        %v10735 = vunpack.c.h.b16 %v10093
        %v10736 = vunpack.c.l.b16 %v10094
        %v10737 = vunpack.c.h.b16 %v10094
        %v10738 = vunpack.c.l.b16 %v10095
        %v10739 = vunpack.c.h.b16 %v10095
        %v10740 = vunpack.c.l.b16 %v10096
        %v10741 = vunpack.c.h.b16 %v10096
        %v10742 = vunpack.c.l.b16 %v10097
        %v10743 = vunpack.c.h.b16 %v10097
        %v10744 = vunpack.c.l.b16 %v10098
        %v10745 = vunpack.c.h.b16 %v10098
        %v10746 = vunpack.c.l.b16 %v10099
        %v10747 = vunpack.c.h.b16 %v10099
        %v10748 = vunpack.c.l.b16 %v10100
        %v10749 = vunpack.c.h.b16 %v10100
        %v10750 = vunpack.c.l.b16 %v10101
        %v10751 = vunpack.c.h.b16 %v10101
        %v10752 = vunpack.c.l.b16 %v10102
        %v10753 = vunpack.c.h.b16 %v10102
        %v10754 = vunpack.c.l.b16 %v10103
        %v10755 = vunpack.c.h.b16 %v10103
        %v10756 = vunpack.c.l.b16 %v10104
        %v10757 = vunpack.c.h.b16 %v10104
        %v10758 = vunpack.c.l.b16 %v10105
        %v10759 = vunpack.c.h.b16 %v10105
        %v10760 = vunpack.c.l.b16 %v10106
        %v10761 = vunpack.c.h.b16 %v10106
        %v10762 = vunpack.c.l.b16 %v10107
        %v10763 = vunpack.c.h.b16 %v10107
        %v10764 = vunpack.c.l.b16 %v10108
        %v10765 = vunpack.c.h.b16 %v10108
        %v10766 = vunpack.c.l.b16 %v10109
        %v10767 = vunpack.c.h.b16 %v10109
        %v10768 = vunpack.c.l.b16 %v10110
        %v10769 = vunpack.c.h.b16 %v10110
        %v10770 = vunpack.c.l.b16 %v10111
        %v10771 = vunpack.c.h.b16 %v10111
        %v10772 = vunpack.c.l.b16 %v10112
        %v10773 = vunpack.c.h.b16 %v10112
        %v10774 = vunpack.c.l.b16 %v10113
        %v10775 = vunpack.c.h.b16 %v10113
        %v10776 = vunpack.c.l.b16 %v10114
        %v10777 = vunpack.c.h.b16 %v10114
        %v10778 = vunpack.c.l.b16 %v10115
        %v10779 = vunpack.c.h.b16 %v10115
        %v10780 = vunpack.c.l.b16 %v10116
        %v10781 = vunpack.c.h.b16 %v10116
        %v10782 = vunpack.c.l.b16 %v10117
        %v10783 = vunpack.c.h.b16 %v10117
        %v10784 = vunpack.c.l.b16 %v10118
        %v10785 = vunpack.c.h.b16 %v10118
        %v10786 = vunpack.c.l.b16 %v10119
        %v10787 = vunpack.c.h.b16 %v10119
        %v10788 = vunpack.c.l.b16 %v10120
        %v10789 = vunpack.c.h.b16 %v10120
        %v10790 = vunpack.c.l.b16 %v10121
        %v10791 = vunpack.c.h.b16 %v10121
        %v10792 = vunpack.c.l.b16 %v10122
        %v10793 = vunpack.c.h.b16 %v10122
        %v10794 = vunpack.c.l.b16 %v10123
        %v10795 = vunpack.c.h.b16 %v10123
        %v10796 = vunpack.c.l.b16 %v10124
        %v10797 = vunpack.c.h.b16 %v10124
        %v10798 = vunpack.c.l.b16 %v10125
        %v10799 = vunpack.c.h.b16 %v10125
        %v10800 = vunpack.c.l.b16 %v10126
        %v10801 = vunpack.c.h.b16 %v10126
        %v10802 = vunpack.c.l.b16 %v10127
        %v10803 = vunpack.c.h.b16 %v10127
        %v10804 = vunpack.c.l.b16 %v10128
        %v10805 = vunpack.c.h.b16 %v10128
        %v10806 = vunpack.c.l.b16 %v10129
        %v10807 = vunpack.c.h.b16 %v10129
        %v10808 = vunpack.c.l.b16 %v10130
        %v10809 = vunpack.c.h.b16 %v10130
        %v10810 = vunpack.c.l.b16 %v10131
        %v10811 = vunpack.c.h.b16 %v10131
        %v10812 = vunpack.c.l.b16 %v10132
        %v10813 = vunpack.c.h.b16 %v10132
        %v10814 = vunpack.c.l.b16 %v10133
        %v10815 = vunpack.c.h.b16 %v10133
        %v10816 = vunpack.c.l.b16 %v10134
        %v10817 = vunpack.c.h.b16 %v10134
        %v10818 = vunpack.c.l.b16 %v10135
        %v10819 = vunpack.c.h.b16 %v10135
        %v10820 = vunpack.c.l.b16 %v10136
        %v10821 = vunpack.c.h.b16 %v10136
        %v10822 = vunpack.c.l.b16 %v10137
        %v10823 = vunpack.c.h.b16 %v10137
        %v10824 = vunpack.c.l.b16 %v10138
        %v10825 = vunpack.c.h.b16 %v10138
        %v10826 = vunpack.c.l.b16 %v10139
        %v10827 = vunpack.c.h.b16 %v10139
        %v10828 = vunpack.c.l.b16 %v10140
        %v10829 = vunpack.c.h.b16 %v10140
        %v10830 = vunpack.c.l.b16 %v10141
        %v10831 = vunpack.c.h.b16 %v10141
        %v10832 = vunpack.c.l.b16 %v10142
        %v10833 = vunpack.c.h.b16 %v10142
        %v10834 = vunpack.c.l.b16 %v10143
        %v10835 = vunpack.c.h.b16 %v10143
        %v10836 = vunpack.c.l.b16 %v10144
        %v10837 = vunpack.c.h.b16 %v10144
        %v10838 = vunpack.c.l.b16 %v10145
        %v10839 = vunpack.c.h.b16 %v10145
        %v10840 = vunpack.c.l.b16 %v10146
        %v10841 = vunpack.c.h.b16 %v10146
        %v10842 = vunpack.c.l.b16 %v10147
        %v10843 = vunpack.c.h.b16 %v10147
        %v10844 = vunpack.c.l.b16 %v10148
        %v10845 = vunpack.c.h.b16 %v10148
        %v10846 = vunpack.c.l.b16 %v10149
        %v10847 = vunpack.c.h.b16 %v10149
        %v10848 = vunpack.c.l.b16 %v10150
        %v10849 = vunpack.c.h.b16 %v10150
        %v10850 = vpack.c.b16 %v10724, %v10722
        %v10851 = vpack.c.b16 %v10725, %v10723
        %v10852 = vpack.c.b16 %v10728, %v10726
        %v10853 = vpack.c.b16 %v10729, %v10727
        %v10854 = vpack.c.b16 %v10732, %v10730
        %v10855 = vpack.c.b16 %v10733, %v10731
        %v10856 = vpack.c.b16 %v10736, %v10734
        %v10857 = vpack.c.b16 %v10737, %v10735
        %v10858 = vpack.c.b16 %v10740, %v10738
        %v10859 = vpack.c.b16 %v10741, %v10739
        %v10860 = vpack.c.b16 %v10744, %v10742
        %v10861 = vpack.c.b16 %v10745, %v10743
        %v10862 = vpack.c.b16 %v10748, %v10746
        %v10863 = vpack.c.b16 %v10749, %v10747
        %v10864 = vpack.c.b16 %v10752, %v10750
        %v10865 = vpack.c.b16 %v10753, %v10751
        %v10866 = vpack.c.b16 %v10756, %v10754
        %v10867 = vpack.c.b16 %v10757, %v10755
        %v10868 = vpack.c.b16 %v10760, %v10758
        %v10869 = vpack.c.b16 %v10761, %v10759
        %v10870 = vpack.c.b16 %v10764, %v10762
        %v10871 = vpack.c.b16 %v10765, %v10763
        %v10872 = vpack.c.b16 %v10768, %v10766
        %v10873 = vpack.c.b16 %v10769, %v10767
        %v10874 = vpack.c.b16 %v10772, %v10770
        %v10875 = vpack.c.b16 %v10773, %v10771
        %v10876 = vpack.c.b16 %v10776, %v10774
        %v10877 = vpack.c.b16 %v10777, %v10775
        %v10878 = vpack.c.b16 %v10780, %v10778
        %v10879 = vpack.c.b16 %v10781, %v10779
        %v10880 = vpack.c.b16 %v10784, %v10782
        %v10881 = vpack.c.b16 %v10785, %v10783
        %v10882 = vpack.c.b16 %v10788, %v10786
        %v10883 = vpack.c.b16 %v10789, %v10787
        %v10884 = vpack.c.b16 %v10792, %v10790
        %v10885 = vpack.c.b16 %v10793, %v10791
        %v10886 = vpack.c.b16 %v10796, %v10794
        %v10887 = vpack.c.b16 %v10797, %v10795
        %v10888 = vpack.c.b16 %v10800, %v10798
        %v10889 = vpack.c.b16 %v10801, %v10799
        %v10890 = vpack.c.b16 %v10804, %v10802
        %v10891 = vpack.c.b16 %v10805, %v10803
        %v10892 = vpack.c.b16 %v10808, %v10806
        %v10893 = vpack.c.b16 %v10809, %v10807
        %v10894 = vpack.c.b16 %v10812, %v10810
        %v10895 = vpack.c.b16 %v10813, %v10811
        %v10896 = vpack.c.b16 %v10816, %v10814
        %v10897 = vpack.c.b16 %v10817, %v10815
        %v10898 = vpack.c.b16 %v10820, %v10818
        %v10899 = vpack.c.b16 %v10821, %v10819
        %v10900 = vpack.c.b16 %v10824, %v10822
        %v10901 = vpack.c.b16 %v10825, %v10823
        %v10902 = vpack.c.b16 %v10828, %v10826
        %v10903 = vpack.c.b16 %v10829, %v10827
        %v10904 = vpack.c.b16 %v10832, %v10830
        %v10905 = vpack.c.b16 %v10833, %v10831
        %v10906 = vpack.c.b16 %v10836, %v10834
        %v10907 = vpack.c.b16 %v10837, %v10835
        %v10908 = vpack.c.b16 %v10840, %v10838
        %v10909 = vpack.c.b16 %v10841, %v10839
        %v10910 = vpack.c.b16 %v10844, %v10842
        %v10911 = vpack.c.b16 %v10845, %v10843
        %v10912 = vpack.c.b16 %v10848, %v10846
        %v10913 = vpack.c.b16 %v10849, %v10847
        %10978 = vmatpush.bf16.msra.mxu0 %v10864
        %10979 = vmatpush.bf16.msra.mxu0 %v10862
        %10980 = vmatpush.bf16.msra.mxu0 %v10860
        %10981 = vmatpush.bf16.msra.mxu0 %v10858
        %10982 = vmatpush.bf16.msra.mxu0 %v10856
        %10983 = vmatpush.bf16.msra.mxu0 %v10854
        %10984 = vmatpush.bf16.msra.mxu0 %v10852
        %10985 = vmatpush.bf16.msra.mxu0 %v10850
        %10986 = vmatmul.bf16.gmra.mxu0 %v10083
        %v10987 = vpop.f32.mrf.mxu0
        %v10988 = vadd.f32 %v10603, %v10987
        %v10989 = vpop.f32.mrf.mxu0
        %10990 = vdwg.mxu0
        %10991 = vmatpush.bf16.msra.mxu0 %v10880
        %10992 = vmatpush.bf16.msra.mxu0 %v10878
        %10993 = vmatpush.bf16.msra.mxu0 %v10876
        %10994 = vmatpush.bf16.msra.mxu0 %v10874
        %10995 = vmatpush.bf16.msra.mxu0 %v10872
        %10996 = vmatpush.bf16.msra.mxu0 %v10870
        %10997 = vmatpush.bf16.msra.mxu0 %v10868
        %10998 = vmatpush.bf16.msra.mxu0 %v10866
        %10999 = vmatmul.bf16.gmra.mxu0 %v10084
        %v11000 = vpop.f32.mrf.mxu0
        %v11001 = vadd.f32 %v10988, %v11000
        %v11002 = vpop.f32.mrf.mxu0
        %11003 = vdwg.mxu0
        %11004 = vmatpush.bf16.msra.mxu0 %v10896
        %11005 = vmatpush.bf16.msra.mxu0 %v10894
        %11006 = vmatpush.bf16.msra.mxu0 %v10892
        %11007 = vmatpush.bf16.msra.mxu0 %v10890
        %11008 = vmatpush.bf16.msra.mxu0 %v10888
        %11009 = vmatpush.bf16.msra.mxu0 %v10886
        %11010 = vmatpush.bf16.msra.mxu0 %v10884
        %11011 = vmatpush.bf16.msra.mxu0 %v10882
        %11012 = vmatmul.bf16.gmra.mxu0 %v10085
        %v11013 = vpop.f32.mrf.mxu0
        %v11014 = vadd.f32 %v11001, %v11013
        %v11015 = vpop.f32.mrf.mxu0
        %11016 = vdwg.mxu0
        %11017 = vmatpush.bf16.msra.mxu0 %v10912
        %11018 = vmatpush.bf16.msra.mxu0 %v10910
        %11019 = vmatpush.bf16.msra.mxu0 %v10908
        %11020 = vmatpush.bf16.msra.mxu0 %v10906
        %11021 = vmatpush.bf16.msra.mxu0 %v10904
        %11022 = vmatpush.bf16.msra.mxu0 %v10902
        %11023 = vmatpush.bf16.msra.mxu0 %v10900
        %11024 = vmatpush.bf16.msra.mxu0 %v10898
        %11025 = vmatmul.bf16.gmra.mxu0 %v10086
        %v11026 = vpop.f32.mrf.mxu0
        %v11027 = vadd.f32 %v11014, %v11026
        %v11028 = vpop.f32.mrf.mxu0
        %11029 = vdwg.mxu0
        %11030 = vmatpush.bf16.msra.mxu0 %v10865
        %11031 = vmatpush.bf16.msra.mxu0 %v10863
        %11032 = vmatpush.bf16.msra.mxu0 %v10861
        %11033 = vmatpush.bf16.msra.mxu0 %v10859
        %11034 = vmatpush.bf16.msra.mxu0 %v10857
        %11035 = vmatpush.bf16.msra.mxu0 %v10855
        %11036 = vmatpush.bf16.msra.mxu0 %v10853
        %11037 = vmatpush.bf16.msra.mxu0 %v10851
        %11038 = vmatmul.bf16.gmra.mxu0 %v10083
        %v11039 = vpop.f32.mrf.mxu0
        %v11040 = vadd.f32 %v10655, %v11039
        %v11041 = vpop.f32.mrf.mxu0
        %11042 = vdwg.mxu0
        %11043 = vmatpush.bf16.msra.mxu0 %v10881
        %11044 = vmatpush.bf16.msra.mxu0 %v10879
        %11045 = vmatpush.bf16.msra.mxu0 %v10877
        %11046 = vmatpush.bf16.msra.mxu0 %v10875
        %11047 = vmatpush.bf16.msra.mxu0 %v10873
        %11048 = vmatpush.bf16.msra.mxu0 %v10871
        %11049 = vmatpush.bf16.msra.mxu0 %v10869
        %11050 = vmatpush.bf16.msra.mxu0 %v10867
        %11051 = vmatmul.bf16.gmra.mxu0 %v10084
        %v11052 = vpop.f32.mrf.mxu0
        %v11053 = vadd.f32 %v11040, %v11052
        %v11054 = vpop.f32.mrf.mxu0
        %11055 = vdwg.mxu0
        %11056 = vmatpush.bf16.msra.mxu0 %v10897
        %11057 = vmatpush.bf16.msra.mxu0 %v10895
        %11058 = vmatpush.bf16.msra.mxu0 %v10893
        %11059 = vmatpush.bf16.msra.mxu0 %v10891
        %11060 = vmatpush.bf16.msra.mxu0 %v10889
        %11061 = vmatpush.bf16.msra.mxu0 %v10887
        %11062 = vmatpush.bf16.msra.mxu0 %v10885
        %11063 = vmatpush.bf16.msra.mxu0 %v10883
        %11064 = vmatmul.bf16.gmra.mxu0 %v10085
        %v11065 = vpop.f32.mrf.mxu0
        %v11066 = vadd.f32 %v11053, %v11065
        %v11067 = vpop.f32.mrf.mxu0
        %11068 = vdwg.mxu0
        %11069 = vmatpush.bf16.msra.mxu0 %v10913
        %11070 = vmatpush.bf16.msra.mxu0 %v10911
        %11071 = vmatpush.bf16.msra.mxu0 %v10909
        %11072 = vmatpush.bf16.msra.mxu0 %v10907
        %11073 = vmatpush.bf16.msra.mxu0 %v10905
        %11074 = vmatpush.bf16.msra.mxu0 %v10903
        %11075 = vmatpush.bf16.msra.mxu0 %v10901
        %11076 = vmatpush.bf16.msra.mxu0 %v10899
        %11077 = vmatmul.bf16.gmra.mxu0 %v10086
        %v11078 = vpop.f32.mrf.mxu0
        %v11079 = vadd.f32 %v11066, %v11078
        %v11080 = vpop.f32.mrf.mxu0
        %11081 = vdwg.mxu0
        %s11082 = scalar_lea.vmem [#allocation3], 4
        %v11083 = vld [vmem:[%s11082] ss:$8 sm:$0xf]
        %s11084 = scalar_lea.vmem [#allocation3], 5
        %v11085 = vld [vmem:[%s11084] ss:$8 sm:$0xf]
        %v11086 = vmax.f32 %v11083, %v11085
        %v11088 = vperm.slane %v11086, 0
        %v11089 = vperm.slane %v11086, 1
        %v11090 = vperm.slane %v11086, 2
        %v11091 = vperm.slane %v11086, 3
        %v11096 = vpack.c.bf16 %v11088, %v11088
        %v11097 = vpack.c.bf16 %v11089, %v11089
        %v11098 = vpack.c.bf16 %v11090, %v11090
        %v11099 = vpack.c.bf16 %v11091, %v11091
        %s11100 = scalar_lea.vmem [#allocation12], 1024
        %v11101 = vld [vmem:[%s11100] sm:$0xff]
        %v11102 = vld [vmem:[%s11100 + $0x8] sm:$0xff]
        %v11103 = vld [vmem:[%s11100 + $0x10] sm:$0xff]
        %v11104 = vld [vmem:[%s11100 + $0x18] sm:$0xff]
        %v11105 = vld [vmem:[%s11100 + $0x20] sm:$0xff]
        %v11106 = vld [vmem:[%s11100 + $0x28] sm:$0xff]
        %v11107 = vld [vmem:[%s11100 + $0x30] sm:$0xff]
        %v11108 = vld [vmem:[%s11100 + $0x38] sm:$0xff]
        %v11109 = vld [vmem:[%s11100 + $0x40] sm:$0xff]
        %v11110 = vld [vmem:[%s11100 + $0x48] sm:$0xff]
        %v11111 = vld [vmem:[%s11100 + $0x50] sm:$0xff]
        %v11112 = vld [vmem:[%s11100 + $0x58] sm:$0xff]
        %v11113 = vld [vmem:[%s11100 + $0x60] sm:$0xff]
        %v11114 = vld [vmem:[%s11100 + $0x68] sm:$0xff]
        %v11115 = vld [vmem:[%s11100 + $0x70] sm:$0xff]
        %v11116 = vld [vmem:[%s11100 + $0x78] sm:$0xff]
        %v11117 = vld [vmem:[%s11100 + $0x80] sm:$0xff]
        %v11118 = vld [vmem:[%s11100 + $0x88] sm:$0xff]
        %v11119 = vld [vmem:[%s11100 + $0x90] sm:$0xff]
        %v11120 = vld [vmem:[%s11100 + $0x98] sm:$0xff]
        %v11121 = vld [vmem:[%s11100 + $0xa0] sm:$0xff]
        %v11122 = vld [vmem:[%s11100 + $0xa8] sm:$0xff]
        %v11123 = vld [vmem:[%s11100 + $0xb0] sm:$0xff]
        %v11124 = vld [vmem:[%s11100 + $0xb8] sm:$0xff]
        %v11125 = vld [vmem:[%s11100 + $0xc0] sm:$0xff]
        %v11126 = vld [vmem:[%s11100 + $0xc8] sm:$0xff]
        %v11127 = vld [vmem:[%s11100 + $0xd0] sm:$0xff]
        %v11128 = vld [vmem:[%s11100 + $0xd8] sm:$0xff]
        %v11129 = vld [vmem:[%s11100 + $0xe0] sm:$0xff]
        %v11130 = vld [vmem:[%s11100 + $0xe8] sm:$0xff]
        %v11131 = vld [vmem:[%s11100 + $0xf0] sm:$0xff]
        %v11132 = vld [vmem:[%s11100 + $0xf8] sm:$0xff]
        %v11133 = vld [vmem:[%s11100 + $0x100] sm:$0xff]
        %v11134 = vld [vmem:[%s11100 + $0x108] sm:$0xff]
        %v11135 = vld [vmem:[%s11100 + $0x110] sm:$0xff]
        %v11136 = vld [vmem:[%s11100 + $0x118] sm:$0xff]
        %v11137 = vld [vmem:[%s11100 + $0x120] sm:$0xff]
        %v11138 = vld [vmem:[%s11100 + $0x128] sm:$0xff]
        %v11139 = vld [vmem:[%s11100 + $0x130] sm:$0xff]
        %v11140 = vld [vmem:[%s11100 + $0x138] sm:$0xff]
        %v11141 = vld [vmem:[%s11100 + $0x140] sm:$0xff]
        %v11142 = vld [vmem:[%s11100 + $0x148] sm:$0xff]
        %v11143 = vld [vmem:[%s11100 + $0x150] sm:$0xff]
        %v11144 = vld [vmem:[%s11100 + $0x158] sm:$0xff]
        %v11145 = vld [vmem:[%s11100 + $0x160] sm:$0xff]
        %v11146 = vld [vmem:[%s11100 + $0x168] sm:$0xff]
        %v11147 = vld [vmem:[%s11100 + $0x170] sm:$0xff]
        %v11148 = vld [vmem:[%s11100 + $0x178] sm:$0xff]
        %v11149 = vld [vmem:[%s11100 + $0x180] sm:$0xff]
        %v11150 = vld [vmem:[%s11100 + $0x188] sm:$0xff]
        %v11151 = vld [vmem:[%s11100 + $0x190] sm:$0xff]
        %v11152 = vld [vmem:[%s11100 + $0x198] sm:$0xff]
        %v11153 = vld [vmem:[%s11100 + $0x1a0] sm:$0xff]
        %v11154 = vld [vmem:[%s11100 + $0x1a8] sm:$0xff]
        %v11155 = vld [vmem:[%s11100 + $0x1b0] sm:$0xff]
        %v11156 = vld [vmem:[%s11100 + $0x1b8] sm:$0xff]
        %v11157 = vld [vmem:[%s11100 + $0x1c0] sm:$0xff]
        %v11158 = vld [vmem:[%s11100 + $0x1c8] sm:$0xff]
        %v11159 = vld [vmem:[%s11100 + $0x1d0] sm:$0xff]
        %v11160 = vld [vmem:[%s11100 + $0x1d8] sm:$0xff]
        %v11161 = vld [vmem:[%s11100 + $0x1e0] sm:$0xff]
        %v11162 = vld [vmem:[%s11100 + $0x1e8] sm:$0xff]
        %v11163 = vld [vmem:[%s11100 + $0x1f0] sm:$0xff]
        %v11164 = vld [vmem:[%s11100 + $0x1f8] sm:$0xff]
        %v11229 = vunpack.c.l.b16 %v11101
        %v11230 = vunpack.c.h.b16 %v11101
        %v11231 = vunpack.c.l.b16 %v11102
        %v11232 = vunpack.c.h.b16 %v11102
        %v11233 = vunpack.c.l.b16 %v11103
        %v11234 = vunpack.c.h.b16 %v11103
        %v11235 = vunpack.c.l.b16 %v11104
        %v11236 = vunpack.c.h.b16 %v11104
        %v11237 = vunpack.c.l.b16 %v11105
        %v11238 = vunpack.c.h.b16 %v11105
        %v11239 = vunpack.c.l.b16 %v11106
        %v11240 = vunpack.c.h.b16 %v11106
        %v11241 = vunpack.c.l.b16 %v11107
        %v11242 = vunpack.c.h.b16 %v11107
        %v11243 = vunpack.c.l.b16 %v11108
        %v11244 = vunpack.c.h.b16 %v11108
        %v11245 = vunpack.c.l.b16 %v11109
        %v11246 = vunpack.c.h.b16 %v11109
        %v11247 = vunpack.c.l.b16 %v11110
        %v11248 = vunpack.c.h.b16 %v11110
        %v11249 = vunpack.c.l.b16 %v11111
        %v11250 = vunpack.c.h.b16 %v11111
        %v11251 = vunpack.c.l.b16 %v11112
        %v11252 = vunpack.c.h.b16 %v11112
        %v11253 = vunpack.c.l.b16 %v11113
        %v11254 = vunpack.c.h.b16 %v11113
        %v11255 = vunpack.c.l.b16 %v11114
        %v11256 = vunpack.c.h.b16 %v11114
        %v11257 = vunpack.c.l.b16 %v11115
        %v11258 = vunpack.c.h.b16 %v11115
        %v11259 = vunpack.c.l.b16 %v11116
        %v11260 = vunpack.c.h.b16 %v11116
        %v11261 = vunpack.c.l.b16 %v11117
        %v11262 = vunpack.c.h.b16 %v11117
        %v11263 = vunpack.c.l.b16 %v11118
        %v11264 = vunpack.c.h.b16 %v11118
        %v11265 = vunpack.c.l.b16 %v11119
        %v11266 = vunpack.c.h.b16 %v11119
        %v11267 = vunpack.c.l.b16 %v11120
        %v11268 = vunpack.c.h.b16 %v11120
        %v11269 = vunpack.c.l.b16 %v11121
        %v11270 = vunpack.c.h.b16 %v11121
        %v11271 = vunpack.c.l.b16 %v11122
        %v11272 = vunpack.c.h.b16 %v11122
        %v11273 = vunpack.c.l.b16 %v11123
        %v11274 = vunpack.c.h.b16 %v11123
        %v11275 = vunpack.c.l.b16 %v11124
        %v11276 = vunpack.c.h.b16 %v11124
        %v11277 = vunpack.c.l.b16 %v11125
        %v11278 = vunpack.c.h.b16 %v11125
        %v11279 = vunpack.c.l.b16 %v11126
        %v11280 = vunpack.c.h.b16 %v11126
        %v11281 = vunpack.c.l.b16 %v11127
        %v11282 = vunpack.c.h.b16 %v11127
        %v11283 = vunpack.c.l.b16 %v11128
        %v11284 = vunpack.c.h.b16 %v11128
        %v11285 = vunpack.c.l.b16 %v11129
        %v11286 = vunpack.c.h.b16 %v11129
        %v11287 = vunpack.c.l.b16 %v11130
        %v11288 = vunpack.c.h.b16 %v11130
        %v11289 = vunpack.c.l.b16 %v11131
        %v11290 = vunpack.c.h.b16 %v11131
        %v11291 = vunpack.c.l.b16 %v11132
        %v11292 = vunpack.c.h.b16 %v11132
        %v11293 = vunpack.c.l.b16 %v11133
        %v11294 = vunpack.c.h.b16 %v11133
        %v11295 = vunpack.c.l.b16 %v11134
        %v11296 = vunpack.c.h.b16 %v11134
        %v11297 = vunpack.c.l.b16 %v11135
        %v11298 = vunpack.c.h.b16 %v11135
        %v11299 = vunpack.c.l.b16 %v11136
        %v11300 = vunpack.c.h.b16 %v11136
        %v11301 = vunpack.c.l.b16 %v11137
        %v11302 = vunpack.c.h.b16 %v11137
        %v11303 = vunpack.c.l.b16 %v11138
        %v11304 = vunpack.c.h.b16 %v11138
        %v11305 = vunpack.c.l.b16 %v11139
        %v11306 = vunpack.c.h.b16 %v11139
        %v11307 = vunpack.c.l.b16 %v11140
        %v11308 = vunpack.c.h.b16 %v11140
        %v11309 = vunpack.c.l.b16 %v11141
        %v11310 = vunpack.c.h.b16 %v11141
        %v11311 = vunpack.c.l.b16 %v11142
        %v11312 = vunpack.c.h.b16 %v11142
        %v11313 = vunpack.c.l.b16 %v11143
        %v11314 = vunpack.c.h.b16 %v11143
        %v11315 = vunpack.c.l.b16 %v11144
        %v11316 = vunpack.c.h.b16 %v11144
        %v11317 = vunpack.c.l.b16 %v11145
        %v11318 = vunpack.c.h.b16 %v11145
        %v11319 = vunpack.c.l.b16 %v11146
        %v11320 = vunpack.c.h.b16 %v11146
        %v11321 = vunpack.c.l.b16 %v11147
        %v11322 = vunpack.c.h.b16 %v11147
        %v11323 = vunpack.c.l.b16 %v11148
        %v11324 = vunpack.c.h.b16 %v11148
        %v11325 = vunpack.c.l.b16 %v11149
        %v11326 = vunpack.c.h.b16 %v11149
        %v11327 = vunpack.c.l.b16 %v11150
        %v11328 = vunpack.c.h.b16 %v11150
        %v11329 = vunpack.c.l.b16 %v11151
        %v11330 = vunpack.c.h.b16 %v11151
        %v11331 = vunpack.c.l.b16 %v11152
        %v11332 = vunpack.c.h.b16 %v11152
        %v11333 = vunpack.c.l.b16 %v11153
        %v11334 = vunpack.c.h.b16 %v11153
        %v11335 = vunpack.c.l.b16 %v11154
        %v11336 = vunpack.c.h.b16 %v11154
        %v11337 = vunpack.c.l.b16 %v11155
        %v11338 = vunpack.c.h.b16 %v11155
        %v11339 = vunpack.c.l.b16 %v11156
        %v11340 = vunpack.c.h.b16 %v11156
        %v11341 = vunpack.c.l.b16 %v11157
        %v11342 = vunpack.c.h.b16 %v11157
        %v11343 = vunpack.c.l.b16 %v11158
        %v11344 = vunpack.c.h.b16 %v11158
        %v11345 = vunpack.c.l.b16 %v11159
        %v11346 = vunpack.c.h.b16 %v11159
        %v11347 = vunpack.c.l.b16 %v11160
        %v11348 = vunpack.c.h.b16 %v11160
        %v11349 = vunpack.c.l.b16 %v11161
        %v11350 = vunpack.c.h.b16 %v11161
        %v11351 = vunpack.c.l.b16 %v11162
        %v11352 = vunpack.c.h.b16 %v11162
        %v11353 = vunpack.c.l.b16 %v11163
        %v11354 = vunpack.c.h.b16 %v11163
        %v11355 = vunpack.c.l.b16 %v11164
        %v11356 = vunpack.c.h.b16 %v11164
        %v11357 = vpack.c.b16 %v11231, %v11229
        %v11358 = vpack.c.b16 %v11232, %v11230
        %v11359 = vpack.c.b16 %v11235, %v11233
        %v11360 = vpack.c.b16 %v11236, %v11234
        %v11361 = vpack.c.b16 %v11239, %v11237
        %v11362 = vpack.c.b16 %v11240, %v11238
        %v11363 = vpack.c.b16 %v11243, %v11241
        %v11364 = vpack.c.b16 %v11244, %v11242
        %v11365 = vpack.c.b16 %v11247, %v11245
        %v11366 = vpack.c.b16 %v11248, %v11246
        %v11367 = vpack.c.b16 %v11251, %v11249
        %v11368 = vpack.c.b16 %v11252, %v11250
        %v11369 = vpack.c.b16 %v11255, %v11253
        %v11370 = vpack.c.b16 %v11256, %v11254
        %v11371 = vpack.c.b16 %v11259, %v11257
        %v11372 = vpack.c.b16 %v11260, %v11258
        %v11373 = vpack.c.b16 %v11263, %v11261
        %v11374 = vpack.c.b16 %v11264, %v11262
        %v11375 = vpack.c.b16 %v11267, %v11265
        %v11376 = vpack.c.b16 %v11268, %v11266
        %v11377 = vpack.c.b16 %v11271, %v11269
        %v11378 = vpack.c.b16 %v11272, %v11270
        %v11379 = vpack.c.b16 %v11275, %v11273
        %v11380 = vpack.c.b16 %v11276, %v11274
        %v11381 = vpack.c.b16 %v11279, %v11277
        %v11382 = vpack.c.b16 %v11280, %v11278
        %v11383 = vpack.c.b16 %v11283, %v11281
        %v11384 = vpack.c.b16 %v11284, %v11282
        %v11385 = vpack.c.b16 %v11287, %v11285
        %v11386 = vpack.c.b16 %v11288, %v11286
        %v11387 = vpack.c.b16 %v11291, %v11289
        %v11388 = vpack.c.b16 %v11292, %v11290
        %v11389 = vpack.c.b16 %v11295, %v11293
        %v11390 = vpack.c.b16 %v11296, %v11294
        %v11391 = vpack.c.b16 %v11299, %v11297
        %v11392 = vpack.c.b16 %v11300, %v11298
        %v11393 = vpack.c.b16 %v11303, %v11301
        %v11394 = vpack.c.b16 %v11304, %v11302
        %v11395 = vpack.c.b16 %v11307, %v11305
        %v11396 = vpack.c.b16 %v11308, %v11306
        %v11397 = vpack.c.b16 %v11311, %v11309
        %v11398 = vpack.c.b16 %v11312, %v11310
        %v11399 = vpack.c.b16 %v11315, %v11313
        %v11400 = vpack.c.b16 %v11316, %v11314
        %v11401 = vpack.c.b16 %v11319, %v11317
        %v11402 = vpack.c.b16 %v11320, %v11318
        %v11403 = vpack.c.b16 %v11323, %v11321
        %v11404 = vpack.c.b16 %v11324, %v11322
        %v11405 = vpack.c.b16 %v11327, %v11325
        %v11406 = vpack.c.b16 %v11328, %v11326
        %v11407 = vpack.c.b16 %v11331, %v11329
        %v11408 = vpack.c.b16 %v11332, %v11330
        %v11409 = vpack.c.b16 %v11335, %v11333
        %v11410 = vpack.c.b16 %v11336, %v11334
        %v11411 = vpack.c.b16 %v11339, %v11337
        %v11412 = vpack.c.b16 %v11340, %v11338
        %v11413 = vpack.c.b16 %v11343, %v11341
        %v11414 = vpack.c.b16 %v11344, %v11342
        %v11415 = vpack.c.b16 %v11347, %v11345
        %v11416 = vpack.c.b16 %v11348, %v11346
        %v11417 = vpack.c.b16 %v11351, %v11349
        %v11418 = vpack.c.b16 %v11352, %v11350
        %v11419 = vpack.c.b16 %v11355, %v11353
        %v11420 = vpack.c.b16 %v11356, %v11354
        %11485 = vmatpush.bf16.msra.mxu0 %v11371
        %11486 = vmatpush.bf16.msra.mxu0 %v11369
        %11487 = vmatpush.bf16.msra.mxu0 %v11367
        %11488 = vmatpush.bf16.msra.mxu0 %v11365
        %11489 = vmatpush.bf16.msra.mxu0 %v11363
        %11490 = vmatpush.bf16.msra.mxu0 %v11361
        %11491 = vmatpush.bf16.msra.mxu0 %v11359
        %11492 = vmatpush.bf16.msra.mxu0 %v11357
        %11493 = vmatmul.bf16.gmra.mxu0 %v11096
        %v11494 = vpop.f32.mrf.mxu0
        %v11495 = vadd.f32 0.0, %v11494
        %v11496 = vpop.f32.mrf.mxu0
        %11497 = vdwg.mxu0
        %11498 = vmatpush.bf16.msra.mxu0 %v11387
        %11499 = vmatpush.bf16.msra.mxu0 %v11385
        %11500 = vmatpush.bf16.msra.mxu0 %v11383
        %11501 = vmatpush.bf16.msra.mxu0 %v11381
        %11502 = vmatpush.bf16.msra.mxu0 %v11379
        %11503 = vmatpush.bf16.msra.mxu0 %v11377
        %11504 = vmatpush.bf16.msra.mxu0 %v11375
        %11505 = vmatpush.bf16.msra.mxu0 %v11373
        %11506 = vmatmul.bf16.gmra.mxu0 %v11097
        %v11507 = vpop.f32.mrf.mxu0
        %v11508 = vadd.f32 %v11495, %v11507
        %v11509 = vpop.f32.mrf.mxu0
        %11510 = vdwg.mxu0
        %11511 = vmatpush.bf16.msra.mxu0 %v11403
        %11512 = vmatpush.bf16.msra.mxu0 %v11401
        %11513 = vmatpush.bf16.msra.mxu0 %v11399
        %11514 = vmatpush.bf16.msra.mxu0 %v11397
        %11515 = vmatpush.bf16.msra.mxu0 %v11395
        %11516 = vmatpush.bf16.msra.mxu0 %v11393
        %11517 = vmatpush.bf16.msra.mxu0 %v11391
        %11518 = vmatpush.bf16.msra.mxu0 %v11389
        %11519 = vmatmul.bf16.gmra.mxu0 %v11098
        %v11520 = vpop.f32.mrf.mxu0
        %v11521 = vadd.f32 %v11508, %v11520
        %v11522 = vpop.f32.mrf.mxu0
        %11523 = vdwg.mxu0
        %11524 = vmatpush.bf16.msra.mxu0 %v11419
        %11525 = vmatpush.bf16.msra.mxu0 %v11417
        %11526 = vmatpush.bf16.msra.mxu0 %v11415
        %11527 = vmatpush.bf16.msra.mxu0 %v11413
        %11528 = vmatpush.bf16.msra.mxu0 %v11411
        %11529 = vmatpush.bf16.msra.mxu0 %v11409
        %11530 = vmatpush.bf16.msra.mxu0 %v11407
        %11531 = vmatpush.bf16.msra.mxu0 %v11405
        %11532 = vmatmul.bf16.gmra.mxu0 %v11099
        %v11533 = vpop.f32.mrf.mxu0
        %v11534 = vadd.f32 %v11521, %v11533
        %v11535 = vpop.f32.mrf.mxu0
        %11536 = vdwg.mxu0
        %11537 = vmatpush.bf16.msra.mxu0 %v11372
        %11538 = vmatpush.bf16.msra.mxu0 %v11370
        %11539 = vmatpush.bf16.msra.mxu0 %v11368
        %11540 = vmatpush.bf16.msra.mxu0 %v11366
        %11541 = vmatpush.bf16.msra.mxu0 %v11364
        %11542 = vmatpush.bf16.msra.mxu0 %v11362
        %11543 = vmatpush.bf16.msra.mxu0 %v11360
        %11544 = vmatpush.bf16.msra.mxu0 %v11358
        %11545 = vmatmul.bf16.gmra.mxu0 %v11096
        %v11546 = vpop.f32.mrf.mxu0
        %v11547 = vadd.f32 0.0, %v11546
        %v11548 = vpop.f32.mrf.mxu0
        %11549 = vdwg.mxu0
        %11550 = vmatpush.bf16.msra.mxu0 %v11388
        %11551 = vmatpush.bf16.msra.mxu0 %v11386
        %11552 = vmatpush.bf16.msra.mxu0 %v11384
        %11553 = vmatpush.bf16.msra.mxu0 %v11382
        %11554 = vmatpush.bf16.msra.mxu0 %v11380
        %11555 = vmatpush.bf16.msra.mxu0 %v11378
        %11556 = vmatpush.bf16.msra.mxu0 %v11376
        %11557 = vmatpush.bf16.msra.mxu0 %v11374
        %11558 = vmatmul.bf16.gmra.mxu0 %v11097
        %v11559 = vpop.f32.mrf.mxu0
        %v11560 = vadd.f32 %v11547, %v11559
        %v11561 = vpop.f32.mrf.mxu0
        %11562 = vdwg.mxu0
        %11563 = vmatpush.bf16.msra.mxu0 %v11404
        %11564 = vmatpush.bf16.msra.mxu0 %v11402
        %11565 = vmatpush.bf16.msra.mxu0 %v11400
        %11566 = vmatpush.bf16.msra.mxu0 %v11398
        %11567 = vmatpush.bf16.msra.mxu0 %v11396
        %11568 = vmatpush.bf16.msra.mxu0 %v11394
        %11569 = vmatpush.bf16.msra.mxu0 %v11392
        %11570 = vmatpush.bf16.msra.mxu0 %v11390
        %11571 = vmatmul.bf16.gmra.mxu0 %v11098
        %v11572 = vpop.f32.mrf.mxu0
        %v11573 = vadd.f32 %v11560, %v11572
        %v11574 = vpop.f32.mrf.mxu0
        %11575 = vdwg.mxu0
        %11576 = vmatpush.bf16.msra.mxu0 %v11420
        %11577 = vmatpush.bf16.msra.mxu0 %v11418
        %11578 = vmatpush.bf16.msra.mxu0 %v11416
        %11579 = vmatpush.bf16.msra.mxu0 %v11414
        %11580 = vmatpush.bf16.msra.mxu0 %v11412
        %11581 = vmatpush.bf16.msra.mxu0 %v11410
        %11582 = vmatpush.bf16.msra.mxu0 %v11408
        %11583 = vmatpush.bf16.msra.mxu0 %v11406
        %11584 = vmatmul.bf16.gmra.mxu0 %v11099
        %v11585 = vpop.f32.mrf.mxu0
        %v11586 = vadd.f32 %v11573, %v11585
        %v11587 = vpop.f32.mrf.mxu0
        %11588 = vdwg.mxu0
        %v11589 = vadd.f32 %v11027, %v11534
        %v11590 = vadd.f32 %v11079, %v11586
        %s11591 = scalar_lea.vmem [#allocation3], 6
        %v11592 = vld [vmem:[%s11591] ss:$8 sm:$0xf]
        %s11593 = scalar_lea.vmem [#allocation3], 7
        %v11594 = vld [vmem:[%s11593] ss:$8 sm:$0xf]
        %v11595 = vmax.f32 %v11592, %v11594
        %v11597 = vperm.slane %v11595, 0
        %v11598 = vperm.slane %v11595, 1
        %v11599 = vperm.slane %v11595, 2
        %v11600 = vperm.slane %v11595, 3
        %v11605 = vpack.c.bf16 %v11597, %v11597
        %v11606 = vpack.c.bf16 %v11598, %v11598
        %v11607 = vpack.c.bf16 %v11599, %v11599
        %v11608 = vpack.c.bf16 %v11600, %v11600
        %s11609 = scalar_lea.vmem [#allocation12], 1536
        %v11610 = vld [vmem:[%s11609] sm:$0xff]
        %v11611 = vld [vmem:[%s11609 + $0x8] sm:$0xff]
        %v11612 = vld [vmem:[%s11609 + $0x10] sm:$0xff]
        %v11613 = vld [vmem:[%s11609 + $0x18] sm:$0xff]
        %v11614 = vld [vmem:[%s11609 + $0x20] sm:$0xff]
        %v11615 = vld [vmem:[%s11609 + $0x28] sm:$0xff]
        %v11616 = vld [vmem:[%s11609 + $0x30] sm:$0xff]
        %v11617 = vld [vmem:[%s11609 + $0x38] sm:$0xff]
        %v11618 = vld [vmem:[%s11609 + $0x40] sm:$0xff]
        %v11619 = vld [vmem:[%s11609 + $0x48] sm:$0xff]
        %v11620 = vld [vmem:[%s11609 + $0x50] sm:$0xff]
        %v11621 = vld [vmem:[%s11609 + $0x58] sm:$0xff]
        %v11622 = vld [vmem:[%s11609 + $0x60] sm:$0xff]
        %v11623 = vld [vmem:[%s11609 + $0x68] sm:$0xff]
        %v11624 = vld [vmem:[%s11609 + $0x70] sm:$0xff]
        %v11625 = vld [vmem:[%s11609 + $0x78] sm:$0xff]
        %v11626 = vld [vmem:[%s11609 + $0x80] sm:$0xff]
        %v11627 = vld [vmem:[%s11609 + $0x88] sm:$0xff]
        %v11628 = vld [vmem:[%s11609 + $0x90] sm:$0xff]
        %v11629 = vld [vmem:[%s11609 + $0x98] sm:$0xff]
        %v11630 = vld [vmem:[%s11609 + $0xa0] sm:$0xff]
        %v11631 = vld [vmem:[%s11609 + $0xa8] sm:$0xff]
        %v11632 = vld [vmem:[%s11609 + $0xb0] sm:$0xff]
        %v11633 = vld [vmem:[%s11609 + $0xb8] sm:$0xff]
        %v11634 = vld [vmem:[%s11609 + $0xc0] sm:$0xff]
        %v11635 = vld [vmem:[%s11609 + $0xc8] sm:$0xff]
        %v11636 = vld [vmem:[%s11609 + $0xd0] sm:$0xff]
        %v11637 = vld [vmem:[%s11609 + $0xd8] sm:$0xff]
        %v11638 = vld [vmem:[%s11609 + $0xe0] sm:$0xff]
        %v11639 = vld [vmem:[%s11609 + $0xe8] sm:$0xff]
        %v11640 = vld [vmem:[%s11609 + $0xf0] sm:$0xff]
        %v11641 = vld [vmem:[%s11609 + $0xf8] sm:$0xff]
        %v11642 = vld [vmem:[%s11609 + $0x100] sm:$0xff]
        %v11643 = vld [vmem:[%s11609 + $0x108] sm:$0xff]
        %v11644 = vld [vmem:[%s11609 + $0x110] sm:$0xff]
        %v11645 = vld [vmem:[%s11609 + $0x118] sm:$0xff]
        %v11646 = vld [vmem:[%s11609 + $0x120] sm:$0xff]
        %v11647 = vld [vmem:[%s11609 + $0x128] sm:$0xff]
        %v11648 = vld [vmem:[%s11609 + $0x130] sm:$0xff]
        %v11649 = vld [vmem:[%s11609 + $0x138] sm:$0xff]
        %v11650 = vld [vmem:[%s11609 + $0x140] sm:$0xff]
        %v11651 = vld [vmem:[%s11609 + $0x148] sm:$0xff]
        %v11652 = vld [vmem:[%s11609 + $0x150] sm:$0xff]
        %v11653 = vld [vmem:[%s11609 + $0x158] sm:$0xff]
        %v11654 = vld [vmem:[%s11609 + $0x160] sm:$0xff]
        %v11655 = vld [vmem:[%s11609 + $0x168] sm:$0xff]
        %v11656 = vld [vmem:[%s11609 + $0x170] sm:$0xff]
        %v11657 = vld [vmem:[%s11609 + $0x178] sm:$0xff]
        %v11658 = vld [vmem:[%s11609 + $0x180] sm:$0xff]
        %v11659 = vld [vmem:[%s11609 + $0x188] sm:$0xff]
        %v11660 = vld [vmem:[%s11609 + $0x190] sm:$0xff]
        %v11661 = vld [vmem:[%s11609 + $0x198] sm:$0xff]
        %v11662 = vld [vmem:[%s11609 + $0x1a0] sm:$0xff]
        %v11663 = vld [vmem:[%s11609 + $0x1a8] sm:$0xff]
        %v11664 = vld [vmem:[%s11609 + $0x1b0] sm:$0xff]
        %v11665 = vld [vmem:[%s11609 + $0x1b8] sm:$0xff]
        %v11666 = vld [vmem:[%s11609 + $0x1c0] sm:$0xff]
        %v11667 = vld [vmem:[%s11609 + $0x1c8] sm:$0xff]
        %v11668 = vld [vmem:[%s11609 + $0x1d0] sm:$0xff]
        %v11669 = vld [vmem:[%s11609 + $0x1d8] sm:$0xff]
        %v11670 = vld [vmem:[%s11609 + $0x1e0] sm:$0xff]
        %v11671 = vld [vmem:[%s11609 + $0x1e8] sm:$0xff]
        %v11672 = vld [vmem:[%s11609 + $0x1f0] sm:$0xff]
        %v11673 = vld [vmem:[%s11609 + $0x1f8] sm:$0xff]
        %v11738 = vunpack.c.l.b16 %v11610
        %v11739 = vunpack.c.h.b16 %v11610
        %v11740 = vunpack.c.l.b16 %v11611
        %v11741 = vunpack.c.h.b16 %v11611
        %v11742 = vunpack.c.l.b16 %v11612
        %v11743 = vunpack.c.h.b16 %v11612
        %v11744 = vunpack.c.l.b16 %v11613
        %v11745 = vunpack.c.h.b16 %v11613
        %v11746 = vunpack.c.l.b16 %v11614
        %v11747 = vunpack.c.h.b16 %v11614
        %v11748 = vunpack.c.l.b16 %v11615
        %v11749 = vunpack.c.h.b16 %v11615
        %v11750 = vunpack.c.l.b16 %v11616
        %v11751 = vunpack.c.h.b16 %v11616
        %v11752 = vunpack.c.l.b16 %v11617
        %v11753 = vunpack.c.h.b16 %v11617
        %v11754 = vunpack.c.l.b16 %v11618
        %v11755 = vunpack.c.h.b16 %v11618
        %v11756 = vunpack.c.l.b16 %v11619
        %v11757 = vunpack.c.h.b16 %v11619
        %v11758 = vunpack.c.l.b16 %v11620
        %v11759 = vunpack.c.h.b16 %v11620
        %v11760 = vunpack.c.l.b16 %v11621
        %v11761 = vunpack.c.h.b16 %v11621
        %v11762 = vunpack.c.l.b16 %v11622
        %v11763 = vunpack.c.h.b16 %v11622
        %v11764 = vunpack.c.l.b16 %v11623
        %v11765 = vunpack.c.h.b16 %v11623
        %v11766 = vunpack.c.l.b16 %v11624
        %v11767 = vunpack.c.h.b16 %v11624
        %v11768 = vunpack.c.l.b16 %v11625
        %v11769 = vunpack.c.h.b16 %v11625
        %v11770 = vunpack.c.l.b16 %v11626
        %v11771 = vunpack.c.h.b16 %v11626
        %v11772 = vunpack.c.l.b16 %v11627
        %v11773 = vunpack.c.h.b16 %v11627
        %v11774 = vunpack.c.l.b16 %v11628
        %v11775 = vunpack.c.h.b16 %v11628
        %v11776 = vunpack.c.l.b16 %v11629
        %v11777 = vunpack.c.h.b16 %v11629
        %v11778 = vunpack.c.l.b16 %v11630
        %v11779 = vunpack.c.h.b16 %v11630
        %v11780 = vunpack.c.l.b16 %v11631
        %v11781 = vunpack.c.h.b16 %v11631
        %v11782 = vunpack.c.l.b16 %v11632
        %v11783 = vunpack.c.h.b16 %v11632
        %v11784 = vunpack.c.l.b16 %v11633
        %v11785 = vunpack.c.h.b16 %v11633
        %v11786 = vunpack.c.l.b16 %v11634
        %v11787 = vunpack.c.h.b16 %v11634
        %v11788 = vunpack.c.l.b16 %v11635
        %v11789 = vunpack.c.h.b16 %v11635
        %v11790 = vunpack.c.l.b16 %v11636
        %v11791 = vunpack.c.h.b16 %v11636
        %v11792 = vunpack.c.l.b16 %v11637
        %v11793 = vunpack.c.h.b16 %v11637
        %v11794 = vunpack.c.l.b16 %v11638
        %v11795 = vunpack.c.h.b16 %v11638
        %v11796 = vunpack.c.l.b16 %v11639
        %v11797 = vunpack.c.h.b16 %v11639
        %v11798 = vunpack.c.l.b16 %v11640
        %v11799 = vunpack.c.h.b16 %v11640
        %v11800 = vunpack.c.l.b16 %v11641
        %v11801 = vunpack.c.h.b16 %v11641
        %v11802 = vunpack.c.l.b16 %v11642
        %v11803 = vunpack.c.h.b16 %v11642
        %v11804 = vunpack.c.l.b16 %v11643
        %v11805 = vunpack.c.h.b16 %v11643
        %v11806 = vunpack.c.l.b16 %v11644
        %v11807 = vunpack.c.h.b16 %v11644
        %v11808 = vunpack.c.l.b16 %v11645
        %v11809 = vunpack.c.h.b16 %v11645
        %v11810 = vunpack.c.l.b16 %v11646
        %v11811 = vunpack.c.h.b16 %v11646
        %v11812 = vunpack.c.l.b16 %v11647
        %v11813 = vunpack.c.h.b16 %v11647
        %v11814 = vunpack.c.l.b16 %v11648
        %v11815 = vunpack.c.h.b16 %v11648
        %v11816 = vunpack.c.l.b16 %v11649
        %v11817 = vunpack.c.h.b16 %v11649
        %v11818 = vunpack.c.l.b16 %v11650
        %v11819 = vunpack.c.h.b16 %v11650
        %v11820 = vunpack.c.l.b16 %v11651
        %v11821 = vunpack.c.h.b16 %v11651
        %v11822 = vunpack.c.l.b16 %v11652
        %v11823 = vunpack.c.h.b16 %v11652
        %v11824 = vunpack.c.l.b16 %v11653
        %v11825 = vunpack.c.h.b16 %v11653
        %v11826 = vunpack.c.l.b16 %v11654
        %v11827 = vunpack.c.h.b16 %v11654
        %v11828 = vunpack.c.l.b16 %v11655
        %v11829 = vunpack.c.h.b16 %v11655
        %v11830 = vunpack.c.l.b16 %v11656
        %v11831 = vunpack.c.h.b16 %v11656
        %v11832 = vunpack.c.l.b16 %v11657
        %v11833 = vunpack.c.h.b16 %v11657
        %v11834 = vunpack.c.l.b16 %v11658
        %v11835 = vunpack.c.h.b16 %v11658
        %v11836 = vunpack.c.l.b16 %v11659
        %v11837 = vunpack.c.h.b16 %v11659
        %v11838 = vunpack.c.l.b16 %v11660
        %v11839 = vunpack.c.h.b16 %v11660
        %v11840 = vunpack.c.l.b16 %v11661
        %v11841 = vunpack.c.h.b16 %v11661
        %v11842 = vunpack.c.l.b16 %v11662
        %v11843 = vunpack.c.h.b16 %v11662
        %v11844 = vunpack.c.l.b16 %v11663
        %v11845 = vunpack.c.h.b16 %v11663
        %v11846 = vunpack.c.l.b16 %v11664
        %v11847 = vunpack.c.h.b16 %v11664
        %v11848 = vunpack.c.l.b16 %v11665
        %v11849 = vunpack.c.h.b16 %v11665
        %v11850 = vunpack.c.l.b16 %v11666
        %v11851 = vunpack.c.h.b16 %v11666
        %v11852 = vunpack.c.l.b16 %v11667
        %v11853 = vunpack.c.h.b16 %v11667
        %v11854 = vunpack.c.l.b16 %v11668
        %v11855 = vunpack.c.h.b16 %v11668
        %v11856 = vunpack.c.l.b16 %v11669
        %v11857 = vunpack.c.h.b16 %v11669
        %v11858 = vunpack.c.l.b16 %v11670
        %v11859 = vunpack.c.h.b16 %v11670
        %v11860 = vunpack.c.l.b16 %v11671
        %v11861 = vunpack.c.h.b16 %v11671
        %v11862 = vunpack.c.l.b16 %v11672
        %v11863 = vunpack.c.h.b16 %v11672
        %v11864 = vunpack.c.l.b16 %v11673
        %v11865 = vunpack.c.h.b16 %v11673
        %v11866 = vpack.c.b16 %v11740, %v11738
        %v11867 = vpack.c.b16 %v11741, %v11739
        %v11868 = vpack.c.b16 %v11744, %v11742
        %v11869 = vpack.c.b16 %v11745, %v11743
        %v11870 = vpack.c.b16 %v11748, %v11746
        %v11871 = vpack.c.b16 %v11749, %v11747
        %v11872 = vpack.c.b16 %v11752, %v11750
        %v11873 = vpack.c.b16 %v11753, %v11751
        %v11874 = vpack.c.b16 %v11756, %v11754
        %v11875 = vpack.c.b16 %v11757, %v11755
        %v11876 = vpack.c.b16 %v11760, %v11758
        %v11877 = vpack.c.b16 %v11761, %v11759
        %v11878 = vpack.c.b16 %v11764, %v11762
        %v11879 = vpack.c.b16 %v11765, %v11763
        %v11880 = vpack.c.b16 %v11768, %v11766
        %v11881 = vpack.c.b16 %v11769, %v11767
        %v11882 = vpack.c.b16 %v11772, %v11770
        %v11883 = vpack.c.b16 %v11773, %v11771
        %v11884 = vpack.c.b16 %v11776, %v11774
        %v11885 = vpack.c.b16 %v11777, %v11775
        %v11886 = vpack.c.b16 %v11780, %v11778
        %v11887 = vpack.c.b16 %v11781, %v11779
        %v11888 = vpack.c.b16 %v11784, %v11782
        %v11889 = vpack.c.b16 %v11785, %v11783
        %v11890 = vpack.c.b16 %v11788, %v11786
        %v11891 = vpack.c.b16 %v11789, %v11787
        %v11892 = vpack.c.b16 %v11792, %v11790
        %v11893 = vpack.c.b16 %v11793, %v11791
        %v11894 = vpack.c.b16 %v11796, %v11794
        %v11895 = vpack.c.b16 %v11797, %v11795
        %v11896 = vpack.c.b16 %v11800, %v11798
        %v11897 = vpack.c.b16 %v11801, %v11799
        %v11898 = vpack.c.b16 %v11804, %v11802
        %v11899 = vpack.c.b16 %v11805, %v11803
        %v11900 = vpack.c.b16 %v11808, %v11806
        %v11901 = vpack.c.b16 %v11809, %v11807
        %v11902 = vpack.c.b16 %v11812, %v11810
        %v11903 = vpack.c.b16 %v11813, %v11811
        %v11904 = vpack.c.b16 %v11816, %v11814
        %v11905 = vpack.c.b16 %v11817, %v11815
        %v11906 = vpack.c.b16 %v11820, %v11818
        %v11907 = vpack.c.b16 %v11821, %v11819
        %v11908 = vpack.c.b16 %v11824, %v11822
        %v11909 = vpack.c.b16 %v11825, %v11823
        %v11910 = vpack.c.b16 %v11828, %v11826
        %v11911 = vpack.c.b16 %v11829, %v11827
        %v11912 = vpack.c.b16 %v11832, %v11830
        %v11913 = vpack.c.b16 %v11833, %v11831
        %v11914 = vpack.c.b16 %v11836, %v11834
        %v11915 = vpack.c.b16 %v11837, %v11835
        %v11916 = vpack.c.b16 %v11840, %v11838
        %v11917 = vpack.c.b16 %v11841, %v11839
        %v11918 = vpack.c.b16 %v11844, %v11842
        %v11919 = vpack.c.b16 %v11845, %v11843
        %v11920 = vpack.c.b16 %v11848, %v11846
        %v11921 = vpack.c.b16 %v11849, %v11847
        %v11922 = vpack.c.b16 %v11852, %v11850
        %v11923 = vpack.c.b16 %v11853, %v11851
        %v11924 = vpack.c.b16 %v11856, %v11854
        %v11925 = vpack.c.b16 %v11857, %v11855
        %v11926 = vpack.c.b16 %v11860, %v11858
        %v11927 = vpack.c.b16 %v11861, %v11859
        %v11928 = vpack.c.b16 %v11864, %v11862
        %v11929 = vpack.c.b16 %v11865, %v11863
        %11994 = vmatpush.bf16.msra.mxu0 %v11880
        %11995 = vmatpush.bf16.msra.mxu0 %v11878
        %11996 = vmatpush.bf16.msra.mxu0 %v11876
        %11997 = vmatpush.bf16.msra.mxu0 %v11874
        %11998 = vmatpush.bf16.msra.mxu0 %v11872
        %11999 = vmatpush.bf16.msra.mxu0 %v11870
        %12000 = vmatpush.bf16.msra.mxu0 %v11868
        %12001 = vmatpush.bf16.msra.mxu0 %v11866
        %12002 = vmatmul.bf16.gmra.mxu0 %v11605
        %v12003 = vpop.f32.mrf.mxu0
        %v12004 = vadd.f32 0.0, %v12003
        %v12005 = vpop.f32.mrf.mxu0
        %12006 = vdwg.mxu0
        %12007 = vmatpush.bf16.msra.mxu0 %v11896
        %12008 = vmatpush.bf16.msra.mxu0 %v11894
        %12009 = vmatpush.bf16.msra.mxu0 %v11892
        %12010 = vmatpush.bf16.msra.mxu0 %v11890
        %12011 = vmatpush.bf16.msra.mxu0 %v11888
        %12012 = vmatpush.bf16.msra.mxu0 %v11886
        %12013 = vmatpush.bf16.msra.mxu0 %v11884
        %12014 = vmatpush.bf16.msra.mxu0 %v11882
        %12015 = vmatmul.bf16.gmra.mxu0 %v11606
        %v12016 = vpop.f32.mrf.mxu0
        %v12017 = vadd.f32 %v12004, %v12016
        %v12018 = vpop.f32.mrf.mxu0
        %12019 = vdwg.mxu0
        %12020 = vmatpush.bf16.msra.mxu0 %v11912
        %12021 = vmatpush.bf16.msra.mxu0 %v11910
        %12022 = vmatpush.bf16.msra.mxu0 %v11908
        %12023 = vmatpush.bf16.msra.mxu0 %v11906
        %12024 = vmatpush.bf16.msra.mxu0 %v11904
        %12025 = vmatpush.bf16.msra.mxu0 %v11902
        %12026 = vmatpush.bf16.msra.mxu0 %v11900
        %12027 = vmatpush.bf16.msra.mxu0 %v11898
        %12028 = vmatmul.bf16.gmra.mxu0 %v11607
        %v12029 = vpop.f32.mrf.mxu0
        %v12030 = vadd.f32 %v12017, %v12029
        %v12031 = vpop.f32.mrf.mxu0
        %12032 = vdwg.mxu0
        %12033 = vmatpush.bf16.msra.mxu0 %v11928
        %12034 = vmatpush.bf16.msra.mxu0 %v11926
        %12035 = vmatpush.bf16.msra.mxu0 %v11924
        %12036 = vmatpush.bf16.msra.mxu0 %v11922
        %12037 = vmatpush.bf16.msra.mxu0 %v11920
        %12038 = vmatpush.bf16.msra.mxu0 %v11918
        %12039 = vmatpush.bf16.msra.mxu0 %v11916
        %12040 = vmatpush.bf16.msra.mxu0 %v11914
        %12041 = vmatmul.bf16.gmra.mxu0 %v11608
        %v12042 = vpop.f32.mrf.mxu0
        %v12043 = vadd.f32 %v12030, %v12042
        %v12044 = vpop.f32.mrf.mxu0
        %12045 = vdwg.mxu0
        %12046 = vmatpush.bf16.msra.mxu0 %v11881
        %12047 = vmatpush.bf16.msra.mxu0 %v11879
        %12048 = vmatpush.bf16.msra.mxu0 %v11877
        %12049 = vmatpush.bf16.msra.mxu0 %v11875
        %12050 = vmatpush.bf16.msra.mxu0 %v11873
        %12051 = vmatpush.bf16.msra.mxu0 %v11871
        %12052 = vmatpush.bf16.msra.mxu0 %v11869
        %12053 = vmatpush.bf16.msra.mxu0 %v11867
        %12054 = vmatmul.bf16.gmra.mxu0 %v11605
        %v12055 = vpop.f32.mrf.mxu0
        %v12056 = vadd.f32 0.0, %v12055
        %v12057 = vpop.f32.mrf.mxu0
        %12058 = vdwg.mxu0
        %12059 = vmatpush.bf16.msra.mxu0 %v11897
        %12060 = vmatpush.bf16.msra.mxu0 %v11895
        %12061 = vmatpush.bf16.msra.mxu0 %v11893
        %12062 = vmatpush.bf16.msra.mxu0 %v11891
        %12063 = vmatpush.bf16.msra.mxu0 %v11889
        %12064 = vmatpush.bf16.msra.mxu0 %v11887
        %12065 = vmatpush.bf16.msra.mxu0 %v11885
        %12066 = vmatpush.bf16.msra.mxu0 %v11883
        %12067 = vmatmul.bf16.gmra.mxu0 %v11606
        %v12068 = vpop.f32.mrf.mxu0
        %v12069 = vadd.f32 %v12056, %v12068
        %v12070 = vpop.f32.mrf.mxu0
        %12071 = vdwg.mxu0
        %12072 = vmatpush.bf16.msra.mxu0 %v11913
        %12073 = vmatpush.bf16.msra.mxu0 %v11911
        %12074 = vmatpush.bf16.msra.mxu0 %v11909
        %12075 = vmatpush.bf16.msra.mxu0 %v11907
        %12076 = vmatpush.bf16.msra.mxu0 %v11905
        %12077 = vmatpush.bf16.msra.mxu0 %v11903
        %12078 = vmatpush.bf16.msra.mxu0 %v11901
        %12079 = vmatpush.bf16.msra.mxu0 %v11899
        %12080 = vmatmul.bf16.gmra.mxu0 %v11607
        %v12081 = vpop.f32.mrf.mxu0
        %v12082 = vadd.f32 %v12069, %v12081
        %v12083 = vpop.f32.mrf.mxu0
        %12084 = vdwg.mxu0
        %12085 = vmatpush.bf16.msra.mxu0 %v11929
        %12086 = vmatpush.bf16.msra.mxu0 %v11927
        %12087 = vmatpush.bf16.msra.mxu0 %v11925
        %12088 = vmatpush.bf16.msra.mxu0 %v11923
        %12089 = vmatpush.bf16.msra.mxu0 %v11921
        %12090 = vmatpush.bf16.msra.mxu0 %v11919
        %12091 = vmatpush.bf16.msra.mxu0 %v11917
        %12092 = vmatpush.bf16.msra.mxu0 %v11915
        %12093 = vmatmul.bf16.gmra.mxu0 %v11608
        %v12094 = vpop.f32.mrf.mxu0
        %v12095 = vadd.f32 %v12082, %v12094
        %v12096 = vpop.f32.mrf.mxu0
        %12097 = vdwg.mxu0
        %v12098 = vadd.f32 %v11589, %v12043
        %v12099 = vadd.f32 %v11590, %v12095
        %v12100 = vld [vmem:[#allocation13] sm:$0x3]
        %v12102 = vperm.slane %v12100, 0
        %v12103 = vperm.slane %v12100, 1
        %v12106 = vadd.f32 %v12098, %v12102
        %v12107 = vadd.f32 %v12099, %v12103
        %v12108 = vmax.f32 %v12106, 0.0
        %v12109 = vmax.f32 %v12107, 0.0
        %v12110 = vpack.c.bf16 %v12108, %v12108
        %v12111 = vpack.c.bf16 %v12109, %v12109
        %v12112 = vld [vmem:[#allocation15] sm:$0xff]
        %v12113 = vld [vmem:[#allocation15 + $0x8] sm:$0xff]
        %v12114 = vld [vmem:[#allocation15 + $0x10] sm:$0xff]
        %v12115 = vld [vmem:[#allocation15 + $0x18] sm:$0xff]
        %v12116 = vld [vmem:[#allocation15 + $0x20] sm:$0xff]
        %v12117 = vld [vmem:[#allocation15 + $0x28] sm:$0xff]
        %v12118 = vld [vmem:[#allocation15 + $0x30] sm:$0xff]
        %v12119 = vld [vmem:[#allocation15 + $0x38] sm:$0xff]
        %v12120 = vld [vmem:[#allocation15 + $0x40] sm:$0xff]
        %v12121 = vld [vmem:[#allocation15 + $0x48] sm:$0xff]
        %v12122 = vld [vmem:[#allocation15 + $0x50] sm:$0xff]
        %v12123 = vld [vmem:[#allocation15 + $0x58] sm:$0xff]
        %v12124 = vld [vmem:[#allocation15 + $0x60] sm:$0xff]
        %v12125 = vld [vmem:[#allocation15 + $0x68] sm:$0xff]
        %v12126 = vld [vmem:[#allocation15 + $0x70] sm:$0xff]
        %v12127 = vld [vmem:[#allocation15 + $0x78] sm:$0xff]
        %v12128 = vld [vmem:[#allocation15 + $0x80] sm:$0xff]
        %v12129 = vld [vmem:[#allocation15 + $0x88] sm:$0xff]
        %v12130 = vld [vmem:[#allocation15 + $0x90] sm:$0xff]
        %v12131 = vld [vmem:[#allocation15 + $0x98] sm:$0xff]
        %v12132 = vld [vmem:[#allocation15 + $0xa0] sm:$0xff]
        %v12133 = vld [vmem:[#allocation15 + $0xa8] sm:$0xff]
        %v12134 = vld [vmem:[#allocation15 + $0xb0] sm:$0xff]
        %v12135 = vld [vmem:[#allocation15 + $0xb8] sm:$0xff]
        %v12136 = vld [vmem:[#allocation15 + $0xc0] sm:$0xff]
        %v12137 = vld [vmem:[#allocation15 + $0xc8] sm:$0xff]
        %v12138 = vld [vmem:[#allocation15 + $0xd0] sm:$0xff]
        %v12139 = vld [vmem:[#allocation15 + $0xd8] sm:$0xff]
        %v12140 = vld [vmem:[#allocation15 + $0xe0] sm:$0xff]
        %v12141 = vld [vmem:[#allocation15 + $0xe8] sm:$0xff]
        %v12142 = vld [vmem:[#allocation15 + $0xf0] sm:$0xff]
        %v12143 = vld [vmem:[#allocation15 + $0xf8] sm:$0xff]
        %v12144 = vld [vmem:[#allocation16] sm:$0x3]
        %v12177 = vunpack.c.l.b16 %v12112
        %v12178 = vunpack.c.h.b16 %v12112
        %v12179 = vunpack.c.l.b16 %v12113
        %v12180 = vunpack.c.h.b16 %v12113
        %v12181 = vunpack.c.l.b16 %v12114
        %v12182 = vunpack.c.h.b16 %v12114
        %v12183 = vunpack.c.l.b16 %v12115
        %v12184 = vunpack.c.h.b16 %v12115
        %v12185 = vunpack.c.l.b16 %v12116
        %v12186 = vunpack.c.h.b16 %v12116
        %v12187 = vunpack.c.l.b16 %v12117
        %v12188 = vunpack.c.h.b16 %v12117
        %v12189 = vunpack.c.l.b16 %v12118
        %v12190 = vunpack.c.h.b16 %v12118
        %v12191 = vunpack.c.l.b16 %v12119
        %v12192 = vunpack.c.h.b16 %v12119
        %v12193 = vunpack.c.l.b16 %v12120
        %v12194 = vunpack.c.h.b16 %v12120
        %v12195 = vunpack.c.l.b16 %v12121
        %v12196 = vunpack.c.h.b16 %v12121
        %v12197 = vunpack.c.l.b16 %v12122
        %v12198 = vunpack.c.h.b16 %v12122
        %v12199 = vunpack.c.l.b16 %v12123
        %v12200 = vunpack.c.h.b16 %v12123
        %v12201 = vunpack.c.l.b16 %v12124
        %v12202 = vunpack.c.h.b16 %v12124
        %v12203 = vunpack.c.l.b16 %v12125
        %v12204 = vunpack.c.h.b16 %v12125
        %v12205 = vunpack.c.l.b16 %v12126
        %v12206 = vunpack.c.h.b16 %v12126
        %v12207 = vunpack.c.l.b16 %v12127
        %v12208 = vunpack.c.h.b16 %v12127
        %v12209 = vunpack.c.l.b16 %v12128
        %v12210 = vunpack.c.h.b16 %v12128
        %v12211 = vunpack.c.l.b16 %v12129
        %v12212 = vunpack.c.h.b16 %v12129
        %v12213 = vunpack.c.l.b16 %v12130
        %v12214 = vunpack.c.h.b16 %v12130
        %v12215 = vunpack.c.l.b16 %v12131
        %v12216 = vunpack.c.h.b16 %v12131
        %v12217 = vunpack.c.l.b16 %v12132
        %v12218 = vunpack.c.h.b16 %v12132
        %v12219 = vunpack.c.l.b16 %v12133
        %v12220 = vunpack.c.h.b16 %v12133
        %v12221 = vunpack.c.l.b16 %v12134
        %v12222 = vunpack.c.h.b16 %v12134
        %v12223 = vunpack.c.l.b16 %v12135
        %v12224 = vunpack.c.h.b16 %v12135
        %v12225 = vunpack.c.l.b16 %v12136
        %v12226 = vunpack.c.h.b16 %v12136
        %v12227 = vunpack.c.l.b16 %v12137
        %v12228 = vunpack.c.h.b16 %v12137
        %v12229 = vunpack.c.l.b16 %v12138
        %v12230 = vunpack.c.h.b16 %v12138
        %v12231 = vunpack.c.l.b16 %v12139
        %v12232 = vunpack.c.h.b16 %v12139
        %v12233 = vunpack.c.l.b16 %v12140
        %v12234 = vunpack.c.h.b16 %v12140
        %v12235 = vunpack.c.l.b16 %v12141
        %v12236 = vunpack.c.h.b16 %v12141
        %v12237 = vunpack.c.l.b16 %v12142
        %v12238 = vunpack.c.h.b16 %v12142
        %v12239 = vunpack.c.l.b16 %v12143
        %v12240 = vunpack.c.h.b16 %v12143
        %v12241 = vpack.c.b16 %v12179, %v12177
        %v12242 = vpack.c.b16 %v12180, %v12178
        %v12243 = vpack.c.b16 %v12183, %v12181
        %v12244 = vpack.c.b16 %v12184, %v12182
        %v12245 = vpack.c.b16 %v12187, %v12185
        %v12246 = vpack.c.b16 %v12188, %v12186
        %v12247 = vpack.c.b16 %v12191, %v12189
        %v12248 = vpack.c.b16 %v12192, %v12190
        %v12249 = vpack.c.b16 %v12195, %v12193
        %v12250 = vpack.c.b16 %v12196, %v12194
        %v12251 = vpack.c.b16 %v12199, %v12197
        %v12252 = vpack.c.b16 %v12200, %v12198
        %v12253 = vpack.c.b16 %v12203, %v12201
        %v12254 = vpack.c.b16 %v12204, %v12202
        %v12255 = vpack.c.b16 %v12207, %v12205
        %v12256 = vpack.c.b16 %v12208, %v12206
        %v12257 = vpack.c.b16 %v12211, %v12209
        %v12258 = vpack.c.b16 %v12212, %v12210
        %v12259 = vpack.c.b16 %v12215, %v12213
        %v12260 = vpack.c.b16 %v12216, %v12214
        %v12261 = vpack.c.b16 %v12219, %v12217
        %v12262 = vpack.c.b16 %v12220, %v12218
        %v12263 = vpack.c.b16 %v12223, %v12221
        %v12264 = vpack.c.b16 %v12224, %v12222
        %v12265 = vpack.c.b16 %v12227, %v12225
        %v12266 = vpack.c.b16 %v12228, %v12226
        %v12267 = vpack.c.b16 %v12231, %v12229
        %v12268 = vpack.c.b16 %v12232, %v12230
        %v12269 = vpack.c.b16 %v12235, %v12233
        %v12270 = vpack.c.b16 %v12236, %v12234
        %v12271 = vpack.c.b16 %v12239, %v12237
        %v12272 = vpack.c.b16 %v12240, %v12238
        %v12306 = vperm.slane %v12144, 0
        %v12307 = vperm.slane %v12144, 1
        %12310 = vmatpush.bf16.msra.mxu0 %v12255
        %12311 = vmatpush.bf16.msra.mxu0 %v12253
        %12312 = vmatpush.bf16.msra.mxu0 %v12251
        %12313 = vmatpush.bf16.msra.mxu0 %v12249
        %12314 = vmatpush.bf16.msra.mxu0 %v12247
        %12315 = vmatpush.bf16.msra.mxu0 %v12245
        %12316 = vmatpush.bf16.msra.mxu0 %v12243
        %12317 = vmatpush.bf16.msra.mxu0 %v12241
        %12318 = vmatmul.bf16.gmra.mxu0 %v12110
        %v12319 = vpop.f32.mrf.mxu0
        %v12320 = vadd.f32 %v12306, %v12319
        %v12321 = vpop.f32.mrf.mxu0
        %12322 = vdwg.mxu0
        %12323 = vmatpush.bf16.msra.mxu0 %v12271
        %12324 = vmatpush.bf16.msra.mxu0 %v12269
        %12325 = vmatpush.bf16.msra.mxu0 %v12267
        %12326 = vmatpush.bf16.msra.mxu0 %v12265
        %12327 = vmatpush.bf16.msra.mxu0 %v12263
        %12328 = vmatpush.bf16.msra.mxu0 %v12261
        %12329 = vmatpush.bf16.msra.mxu0 %v12259
        %12330 = vmatpush.bf16.msra.mxu0 %v12257
        %12331 = vmatmul.bf16.gmra.mxu0 %v12111
        %v12332 = vpop.f32.mrf.mxu0
        %v12333 = vadd.f32 %v12320, %v12332
        %v12334 = vpop.f32.mrf.mxu0
        %12335 = vdwg.mxu0
        %12336 = vmatpush.bf16.msra.mxu0 %v12256
        %12337 = vmatpush.bf16.msra.mxu0 %v12254
        %12338 = vmatpush.bf16.msra.mxu0 %v12252
        %12339 = vmatpush.bf16.msra.mxu0 %v12250
        %12340 = vmatpush.bf16.msra.mxu0 %v12248
        %12341 = vmatpush.bf16.msra.mxu0 %v12246
        %12342 = vmatpush.bf16.msra.mxu0 %v12244
        %12343 = vmatpush.bf16.msra.mxu0 %v12242
        %12344 = vmatmul.bf16.gmra.mxu0 %v12110
        %v12345 = vpop.f32.mrf.mxu0
        %v12346 = vadd.f32 %v12307, %v12345
        %v12347 = vpop.f32.mrf.mxu0
        %12348 = vdwg.mxu0
        %12349 = vmatpush.bf16.msra.mxu0 %v12272
        %12350 = vmatpush.bf16.msra.mxu0 %v12270
        %12351 = vmatpush.bf16.msra.mxu0 %v12268
        %12352 = vmatpush.bf16.msra.mxu0 %v12266
        %12353 = vmatpush.bf16.msra.mxu0 %v12264
        %12354 = vmatpush.bf16.msra.mxu0 %v12262
        %12355 = vmatpush.bf16.msra.mxu0 %v12260
        %12356 = vmatpush.bf16.msra.mxu0 %v12258
        %12357 = vmatmul.bf16.gmra.mxu0 %v12111
        %v12358 = vpop.f32.mrf.mxu0
        %v12359 = vadd.f32 %v12346, %v12358
        %v12360 = vpop.f32.mrf.mxu0
        %12361 = vdwg.mxu0
        %v12362 = vmax.f32 %v12333, 0.0
        %v12363 = vmax.f32 %v12359, 0.0
        %v12364 = vpack.c.bf16 %v12362, %v12362
        %v12365 = vpack.c.bf16 %v12363, %v12363
        %v12366 = vld [vmem:[#allocation18] sm:$0xf]
        %v12367 = vld [vmem:[#allocation18 + $0x4] sm:$0xf]
        %v12368 = vld [vmem:[#allocation18 + $0x8] sm:$0xf]
        %v12369 = vld [vmem:[#allocation18 + $0xc] sm:$0xf]
        %v12370 = vld [vmem:[#allocation18 + $0x10] sm:$0xf]
        %v12371 = vld [vmem:[#allocation18 + $0x14] sm:$0xf]
        %v12372 = vld [vmem:[#allocation18 + $0x18] sm:$0xf]
        %v12373 = vld [vmem:[#allocation18 + $0x1c] sm:$0xf]
        %v12374 = vld [vmem:[#allocation18 + $0x20] sm:$0xf]
        %v12375 = vld [vmem:[#allocation18 + $0x24] sm:$0xf]
        %v12376 = vld [vmem:[#allocation18 + $0x28] sm:$0xf]
        %v12377 = vld [vmem:[#allocation18 + $0x2c] sm:$0xf]
        %v12378 = vld [vmem:[#allocation18 + $0x30] sm:$0xf]
        %v12379 = vld [vmem:[#allocation18 + $0x34] sm:$0xf]
        %v12380 = vld [vmem:[#allocation18 + $0x38] sm:$0xf]
        %v12381 = vld [vmem:[#allocation18 + $0x3c] sm:$0xf]
        %v12382 = vld [vmem:[#allocation18 + $0x40] sm:$0xf]
        %v12383 = vld [vmem:[#allocation18 + $0x44] sm:$0xf]
        %v12384 = vld [vmem:[#allocation18 + $0x48] sm:$0xf]
        %v12385 = vld [vmem:[#allocation18 + $0x4c] sm:$0xf]
        %v12386 = vld [vmem:[#allocation18 + $0x50] sm:$0xf]
        %v12387 = vld [vmem:[#allocation18 + $0x54] sm:$0xf]
        %v12388 = vld [vmem:[#allocation18 + $0x58] sm:$0xf]
        %v12389 = vld [vmem:[#allocation18 + $0x5c] sm:$0xf]
        %v12390 = vld [vmem:[#allocation18 + $0x60] sm:$0xf]
        %v12391 = vld [vmem:[#allocation18 + $0x64] sm:$0xf]
        %v12392 = vld [vmem:[#allocation18 + $0x68] sm:$0xf]
        %v12393 = vld [vmem:[#allocation18 + $0x6c] sm:$0xf]
        %v12394 = vld [vmem:[#allocation18 + $0x70] sm:$0xf]
        %v12395 = vld [vmem:[#allocation18 + $0x74] sm:$0xf]
        %v12396 = vld [vmem:[#allocation18 + $0x78] sm:$0xf]
        %v12397 = vld [vmem:[#allocation18 + $0x7c] sm:$0xf]
        %v12398 = vld [vmem:[#allocation19] sm:$0x1]
        %v12431 = vunpack.c.l.b16 %v12366
        %v12432 = vunpack.c.l.b16 %v12367
        %v12433 = vunpack.c.l.b16 %v12368
        %v12434 = vunpack.c.l.b16 %v12369
        %v12435 = vunpack.c.l.b16 %v12370
        %v12436 = vunpack.c.l.b16 %v12371
        %v12437 = vunpack.c.l.b16 %v12372
        %v12438 = vunpack.c.l.b16 %v12373
        %v12439 = vunpack.c.l.b16 %v12374
        %v12440 = vunpack.c.l.b16 %v12375
        %v12441 = vunpack.c.l.b16 %v12376
        %v12442 = vunpack.c.l.b16 %v12377
        %v12443 = vunpack.c.l.b16 %v12378
        %v12444 = vunpack.c.l.b16 %v12379
        %v12445 = vunpack.c.l.b16 %v12380
        %v12446 = vunpack.c.l.b16 %v12381
        %v12447 = vunpack.c.l.b16 %v12382
        %v12448 = vunpack.c.l.b16 %v12383
        %v12449 = vunpack.c.l.b16 %v12384
        %v12450 = vunpack.c.l.b16 %v12385
        %v12451 = vunpack.c.l.b16 %v12386
        %v12452 = vunpack.c.l.b16 %v12387
        %v12453 = vunpack.c.l.b16 %v12388
        %v12454 = vunpack.c.l.b16 %v12389
        %v12455 = vunpack.c.l.b16 %v12390
        %v12456 = vunpack.c.l.b16 %v12391
        %v12457 = vunpack.c.l.b16 %v12392
        %v12458 = vunpack.c.l.b16 %v12393
        %v12459 = vunpack.c.l.b16 %v12394
        %v12460 = vunpack.c.l.b16 %v12395
        %v12461 = vunpack.c.l.b16 %v12396
        %v12462 = vunpack.c.l.b16 %v12397
        %v12463 = vpack.c.b16 %v12432, %v12431
        %v12464 = vpack.c.b16 %v12434, %v12433
        %v12465 = vpack.c.b16 %v12436, %v12435
        %v12466 = vpack.c.b16 %v12438, %v12437
        %v12467 = vpack.c.b16 %v12440, %v12439
        %v12468 = vpack.c.b16 %v12442, %v12441
        %v12469 = vpack.c.b16 %v12444, %v12443
        %v12470 = vpack.c.b16 %v12446, %v12445
        %v12471 = vpack.c.b16 %v12448, %v12447
        %v12472 = vpack.c.b16 %v12450, %v12449
        %v12473 = vpack.c.b16 %v12452, %v12451
        %v12474 = vpack.c.b16 %v12454, %v12453
        %v12475 = vpack.c.b16 %v12456, %v12455
        %v12476 = vpack.c.b16 %v12458, %v12457
        %v12477 = vpack.c.b16 %v12460, %v12459
        %v12478 = vpack.c.b16 %v12462, %v12461
        %12495 = vmatpush.bf16.msra.mxu0 %v12470
        %12496 = vmatpush.bf16.msra.mxu0 %v12469
        %12497 = vmatpush.bf16.msra.mxu0 %v12468
        %12498 = vmatpush.bf16.msra.mxu0 %v12467
        %12499 = vmatpush.bf16.msra.mxu0 %v12466
        %12500 = vmatpush.bf16.msra.mxu0 %v12465
        %12501 = vmatpush.bf16.msra.mxu0 %v12464
        %12502 = vmatpush.bf16.msra.mxu0 %v12463
        %12503 = vmatmul.bf16.gmra.mxu0 %v12364
        %v12504 = vpop.f32.mrf.mxu0
        %v12505 = vadd.f32 %v12398, %v12504
        %v12506 = vpop.f32.mrf.mxu0
        %12507 = vdwg.mxu0
        %12508 = vmatpush.bf16.msra.mxu0 %v12478
        %12509 = vmatpush.bf16.msra.mxu0 %v12477
        %12510 = vmatpush.bf16.msra.mxu0 %v12476
        %12511 = vmatpush.bf16.msra.mxu0 %v12475
        %12512 = vmatpush.bf16.msra.mxu0 %v12474
        %12513 = vmatpush.bf16.msra.mxu0 %v12473
        %12514 = vmatpush.bf16.msra.mxu0 %v12472
        %12515 = vmatpush.bf16.msra.mxu0 %v12471
        %12516 = vmatmul.bf16.gmra.mxu0 %v12365
        %v12517 = vpop.f32.mrf.mxu0
        %v12518 = vadd.f32 %v12505, %v12517
        %v12519 = vpop.f32.mrf.mxu0
        %12520 = vdwg.mxu0
        %12521 = vst [vmem:[%s576] sm:$0x1] %v12518
        %s12522 = sand.u32 %s302, 1
        %s12523 = scalar_lea.sflag [#allocation6], %s12522
        %s12524 = sand.u32 %s302, 1
        %s12525 = scalar_lea.vmem [#allocation21], %s12524
        // Predicated region
        $region109: #{cnn_net_forward.1} parent=67 // pred_check
          %p12526 = pneg %p312
        $region110: #{cnn_net_forward.1} parent=67 // pred_check_branch
          %12528 = sbr.rel (%p12526) target = $region112
        $region111: #{cnn_net_forward.1} parent=67 // pred_region
          %12530 = vsyncadd %s12523, 0
          %s12531 = scalar_lea.hbm %s12, %s32
          %s12533 = sshll.u32 %s12525, 4
          %s12534 = int_to_ptr.vmem [resolvable:$true] %s12533
          %s12535 = sshll.u32 %s12531, 4
          %s12536 = int_to_ptr.hbm [resolvable:$true] %s12535
          %12538 = dma.vmem_to_hbm [thread:$0]  %s12534, 16, %s12536, %s12523
        $region112: #{cnn_net_forward.1} parent=67 // pred_fallthru
          _
      $region68: #{cnn_net_forward.1} parent=5 // pred_fallthru
        _
      %p12539 = scmp.le.s32.totalorder 2, %s27
      // Predicated region
      $region113: #{cnn_net_forward.1} parent=5 // pred_check
        %p12540 = pneg %p12539
      $region114: #{cnn_net_forward.1} parent=5 // pred_check_branch
        %12542 = sbr.rel (%p12540) target = $region116
      $region115: #{cnn_net_forward.1} parent=5 // pred_region
        %s12543 = ssub.s32 %s27, 2
        // Predicated region
        $region117: #{cnn_net_forward.1} parent=115 // pred_check
          %p12544 = pneg %p318
        $region118: #{cnn_net_forward.1} parent=115 // pred_check_branch
          %12546 = sbr.rel (%p12544) target = $region120
        $region119: #{cnn_net_forward.1} parent=115 // pred_region
          %s12547 = sand.u32 %s303, 1
          %s12548 = scalar_lea.sflag [#allocation6], %s12547
          %s12549 = sand.u32 %s303, 1
          %s12550 = scalar_lea.vmem [#allocation21], %s12549
          %12552 = dma.done %s12548, 16
        $region120: #{cnn_net_forward.1} parent=115 // pred_fallthru
          _
      $region116: #{cnn_net_forward.1} parent=5 // pred_fallthru
        _
    $region6: #{cnn_net_forward.1} parent=1 // loop_footer
      %s31 = sadd.s32 1, %s27
    $region7: #{cnn_net_forward.1} parent=1 // loop_footer_branch
      %26 = sbr.rel target = $region3
    $region8: #{cnn_net_forward.1} parent=1 // loop_exit
      _
    %12553 = vsyncpa [#allocation5], 1
    %s12554 = scalar_lea.sflag [#allocation5], 1
    %12555 = vsyncpa %s12554, 1
    %12556 = vsyncpa [#allocation8], 1
    %12557 = vsyncpa [#allocation11], 1
    %12558 = vsyncpa [#allocation14], 1
    %12559 = vsyncpa [#allocation17], 1
    %12560 = vsyncpa [#allocation20], 1
    %12561 = vsyncpa [#allocation6], 1
    %s12562 = scalar_lea.sflag [#allocation6], 1
    %12563 = vsyncpa %s12562, 1

</llo_original>
